<compile_context>
chip_gen: v7x
topology: tpu7x:2x2x1
jax: 0.10.0
libtpu: 0.0.40
codegen_flags: <defaults>
</compile_context>

<pallas_src>
import jax
import jax.numpy as jnp
import numpy as np
from jax.experimental import pallas as pl
from jax.experimental.pallas import tpu as pltpu

NEG_SLOPE = 0.01            # nn.LeakyReLU default negative_slope
BN_EPS = 1e-5               # nn.BatchNorm2d default eps
MXU_DTYPE = jnp.bfloat16    # MXU operand dtype (f32 accumulation); BN/activation math stays f32


def _leaky_relu(y):
    return jnp.where(y >= 0, y, NEG_SLOPE * y)


def _bn_train_fused(y, gamma, beta):
    # y: (P, C) f32. Train-mode BatchNorm2d (biased variance), folded into a single
    # per-channel scale/shift FMA sweep after one sum / sum-of-squares reduction pass.
    p = y.shape[0]
    inv_p = 1.0 / p
    mean = jnp.sum(y, axis=0, keepdims=True) * inv_p
    ex2 = jnp.sum(y * y, axis=0, keepdims=True) * inv_p
    var = ex2 - mean * mean
    scale = gamma * jax.lax.rsqrt(var + BN_EPS)     # rsqrt -> EUP slot (free-ish)
    shift = beta - mean * scale
    return y * scale + shift


def _convT3x3_s1(xpad_ref, patches_ref, w_ref, n, h, w, c):
    # ConvTranspose2d(k=3, stride=1, padding=1, bias=False) as a single im2col MXU matmul.
    #   xpad_ref:    (N, H+2, W+2, C) f32 VMEM scratch; halo already zero, interior = input.
    #   patches_ref: (N*H*W, 9*C)     bf16 VMEM scratch (im2col patch matrix).
    #   w_ref:       (9*C, Cout)      bf16 VMEM ref (wrapper pre-flipped / reshaped weight).
    p = n * h * w
    for kh in range(3):                 # static 3x3 unroll: 9 tap copies, ONE matmul
        for kw in range(3):
            t = kh * 3 + kw
            tap = xpad_ref[:, kh:kh + h, kw:kw + w, :]      # static ref-slice (direct load)
            patches_ref[:, t * c:(t + 1) * c] = tap.reshape(p, c).astype(patches_ref.dtype)
    return jnp.dot(patches_ref[...], w_ref[...],
                   preferred_element_type=jnp.float32)       # (P, Cout) f32


def _basic_dec_block_kernel(x_ref, w2_ref, g2_ref, b2_ref, w1_ref, g1_ref, b1_ref,
                            out_ref, xpad_ref, patches_ref):
    n, h, w, c = x_ref.shape
    p = n * h * w

    # Zero the padded scratch once; the 1-pixel halo stays zero across BOTH convs because
    # only the interior window is overwritten below.
    xpad_ref[...] = jnp.zeros(xpad_ref.shape, xpad_ref.dtype)

    # --- out = LeakyReLU(bn2(conv2(x))) ---
    xpad_ref[:, 1:h + 1, 1:w + 1, :] = x_ref[...]
    y = _convT3x3_s1(xpad_ref, patches_ref, w2_ref, n, h, w, c)          # (P, C) f32
    y = _leaky_relu(_bn_train_fused(y, g2_ref[...], b2_ref[...]))

    # --- out = bn1(conv1(out)) ---
    xpad_ref[:, 1:h + 1, 1:w + 1, :] = y.reshape(n, h, w, c)
    y = _convT3x3_s1(xpad_ref, patches_ref, w1_ref, n, h, w, c)
    y = _bn_train_fused(y, g1_ref[...], b1_ref[...])

    # --- out = LeakyReLU(out + x) ---   (residual re-read from VMEM; keeps live ranges short)
    y = _leaky_relu(y + x_ref[...].reshape(p, c))
    out_ref[...] = y.reshape(n, h, w, c).astype(out_ref.dtype)


def basic_dec_block(x_nchw, w2, g2, b2, w1, g1, b1):
    """BasicDecBlock forward (stride=1, upsample=None).
    x_nchw: (N, C, H, W); conv weights in PyTorch ConvTranspose2d layout (Cin, Cout, 3, 3);
    BN affine params shape (C,)."""
    n, c, h, w = x_nchw.shape
    x_nhwc = jnp.transpose(x_nchw, (0, 2, 3, 1)).astype(jnp.float32)

    def to_im2col(wt):
        # ConvTranspose2d weight (Cin, Cout, 3, 3) -> spatially-flipped correlation kernel
        # (kh, kw, Cin, Cout) -> im2col layout (9*Cin, Cout), cast to the MXU operand dtype.
        cin, cout = wt.shape[0], wt.shape[1]
        wc = jnp.transpose(jnp.flip(wt, (2, 3)), (2, 3, 0, 1))
        return wc.reshape(9 * cin, cout).astype(MXU_DTYPE)

    args = (x_nhwc,
            to_im2col(w2), g2.reshape(1, c).astype(jnp.float32),
            b2.reshape(1, c).astype(jnp.float32),
            to_im2col(w1), g1.reshape(1, c).astype(jnp.float32),
            b1.reshape(1, c).astype(jnp.float32))

    # VMEM budget derived from the actual buffer sizes (plus generous headroom for
    # intermediates), and an advisory cost estimate for the XLA scheduler.
    mxu_isz = jnp.dtype(MXU_DTYPE).itemsize
    x_bytes = n * h * w * c * 4
    xpad_bytes = n * (h + 2) * (w + 2) * c * 4
    patch_bytes = n * h * w * 9 * c * mxu_isz
    w_bytes = 2 * 9 * c * c * mxu_isz
    vmem_limit = int(min(100 * 1024 * 1024,
                         4 * (2 * x_bytes + xpad_bytes + patch_bytes + w_bytes) + (8 << 20)))

    cost = pl.CostEstimate(
        flops=4 * 9 * c * c * n * h * w,                 # 2 convs, 2*K*Cout flops / output elem
        transcendentals=2 * c,                           # per-channel rsqrt (x2 BN)
        bytes_accessed=2 * x_bytes + w_bytes + 4 * c * 4)

    out_nhwc = pl.pallas_call(
        _basic_dec_block_kernel,
        out_shape=jax.ShapeDtypeStruct((n, h, w, c), jnp.float32),
        in_specs=[pl.BlockSpec(memory_space=pltpu.MemorySpace.VMEM)] * 7,
        out_specs=pl.BlockSpec(memory_space=pltpu.MemorySpace.VMEM),
        scratch_shapes=[pltpu.VMEM((n, h + 2, w + 2, c), jnp.float32),   # zero-haloed input
                        pltpu.VMEM((n * h * w, 9 * c), MXU_DTYPE)],      # im2col patch matrix
        compiler_params=pltpu.CompilerParams(vmem_limit_bytes=vmem_limit),
        cost_estimate=cost,
    )(*args)
    return jnp.transpose(out_nhwc, (0, 3, 1, 2))


def _ref_forward(x, w2, g2, b2, w1, g1, b1, mxu_dtype=None):
    # Pure-JAX NCHW reference. With mxu_dtype=bf16 it mirrors the kernel's quantization points
    # (bf16 conv operands, f32 accumulation, f32 BN/activation) for a tight-tolerance check.
    def cast(a):
        return a.astype(mxu_dtype) if mxu_dtype is not None else a

    def convT(xx, wt):
        w_std = jnp.transpose(jnp.flip(wt, (2, 3)), (1, 0, 2, 3))  # (Cout, Cin, kh, kw)
        return jax.lax.conv_general_dilated(
            cast(xx), cast(w_std), (1, 1), ((1, 1), (1, 1)),
            dimension_numbers=('NCHW', 'OIHW', 'NCHW'),
            preferred_element_type=jnp.float32,
            precision=jax.lax.Precision.HIGHEST)

    def bn(y, g, b):
        m = jnp.mean(y, axis=(0, 2, 3), keepdims=True)
        v = jnp.mean((y - m) ** 2, axis=(0, 2, 3), keepdims=True)
        return (y - m) / jnp.sqrt(v + BN_EPS) * g.reshape(1, -1, 1, 1) + b.reshape(1, -1, 1, 1)

    def lrelu(y):
        return jnp.where(y >= 0, y, NEG_SLOPE * y)

    out = lrelu(bn(convT(x, w2), g2, b2))
    out = bn(convT(out, w1), g1, b1)
    return lrelu(out + x)


if __name__ == "__main__":
    key = jax.random.PRNGKey(0)
    N, C, H, W = 2, 4, 16, 16        # inplanes = planes = 4, stride = 1, upsample = None
    ks = jax.random.split(key, 7)
    x = jax.random.normal(ks[0], (N, C, H, W), jnp.float32)
    w2 = jax.random.normal(ks[1], (C, C, 3, 3), jnp.float32) * 0.2   # conv2 weight (planes, planes, 3, 3)
    w1 = jax.random.normal(ks[2], (C, C, 3, 3), jnp.float32) * 0.2   # conv1 weight (planes, inplanes, 3, 3)
    g2 = jax.random.uniform(ks[3], (C,), jnp.float32, 0.5, 1.5)
    b2 = jax.random.normal(ks[4], (C,), jnp.float32) * 0.1
    g1 = jax.random.uniform(ks[5], (C,), jnp.float32, 0.5, 1.5)
    b1 = jax.random.normal(ks[6], (C,), jnp.float32) * 0.1

    out = jax.block_until_ready(basic_dec_block(x, w2, g2, b2, w1, g1, b1))

    # Tight check against a reference with matching bf16-operand accumulation ...
    ref_matched = jax.block_until_ready(
        _ref_forward(x, w2, g2, b2, w1, g1, b1, mxu_dtype=MXU_DTYPE))
    np.testing.assert_allclose(np.asarray(out), np.asarray(ref_matched), rtol=5e-3, atol=5e-3)

    # ... and a looser check against the true full-f32 module semantics
    # (slack covers the bf16 MXU-operand quantization).
    ref_f32 = jax.block_until_ready(_ref_forward(x, w2, g2, b2, w1, g1, b1))
    np.testing.assert_allclose(np.asarray(out), np.asarray(ref_f32), rtol=3e-2, atol=3e-2)

    print("KERNEL_OK")
</pallas_src>

<mosaic_0001>
module attributes {stable_mosaic.version = 11 : i64} {
  func.func @_basic_dec_block_kernel(%arg0: memref<2x16x16x4xf32, #tpu.memory_space<vmem>>, %arg1: memref<36x4xbf16, #tpu.memory_space<vmem>>, %arg2: memref<1x4xf32, #tpu.memory_space<vmem>>, %arg3: memref<1x4xf32, #tpu.memory_space<vmem>>, %arg4: memref<36x4xbf16, #tpu.memory_space<vmem>>, %arg5: memref<1x4xf32, #tpu.memory_space<vmem>>, %arg6: memref<1x4xf32, #tpu.memory_space<vmem>>, %arg7: memref<2x16x16x4xf32, #tpu.memory_space<vmem>>, %arg8: memref<2x18x18x4xf32, #tpu.memory_space<vmem>>, %arg9: memref<512x36xbf16, #tpu.memory_space<vmem>>) attributes {dimension_semantics = [], scalar_prefetch = 0 : i64, scratch_operands = 2 : i64, tpu.core_type = #tpu.core_type<tc>} {
    %cst = arith.constant 0.000000e+00 : f32
    %0 = vector.broadcast %cst : f32 to vector<2x18x18x4xf32>
    %c0 = arith.constant 0 : index
    %c0_0 = arith.constant 0 : index
    %c0_1 = arith.constant 0 : index
    %c0_2 = arith.constant 0 : index
    %1 = vector.load %arg8[%c0, %c0_0, %c0_1, %c0_2] : memref<2x18x18x4xf32, #tpu.memory_space<vmem>>, vector<2x18x18x4xf32>
    tpu.vector_store %arg8[%c0, %c0_0, %c0_1, %c0_2], %0 {strides = array<i32>} : memref<2x18x18x4xf32, #tpu.memory_space<vmem>>, vector<2x18x18x4xf32>,
    %c0_3 = arith.constant 0 : index
    %c0_4 = arith.constant 0 : index
    %c0_5 = arith.constant 0 : index
    %c0_6 = arith.constant 0 : index
    %2 = vector.load %arg0[%c0_3, %c0_4, %c0_5, %c0_6] : memref<2x16x16x4xf32, #tpu.memory_space<vmem>>, vector<2x16x16x4xf32>
    %c0_7 = arith.constant 0 : index
    %c1 = arith.constant 1 : index
    %c1_8 = arith.constant 1 : index
    %c0_9 = arith.constant 0 : index
    %3 = vector.load %arg8[%c0_7, %c1, %c1_8, %c0_9] : memref<2x18x18x4xf32, #tpu.memory_space<vmem>>, vector<2x16x16x4xf32>
    tpu.vector_store %arg8[%c0_7, %c1, %c1_8, %c0_9], %2 {strides = array<i32>} : memref<2x18x18x4xf32, #tpu.memory_space<vmem>>, vector<2x16x16x4xf32>,
    %c0_10 = arith.constant 0 : index
    %c0_11 = arith.constant 0 : index
    %c0_12 = arith.constant 0 : index
    %c0_13 = arith.constant 0 : index
    %4 = vector.load %arg8[%c0_10, %c0_11, %c0_12, %c0_13] : memref<2x18x18x4xf32, #tpu.memory_space<vmem>>, vector<2x16x16x4xf32>
    %5 = vector.shape_cast %4 : vector<2x16x16x4xf32> to vector<512x4xf32>
    %6 = arith.truncf %5 : vector<512x4xf32> to vector<512x4xbf16>
    %c0_14 = arith.constant 0 : index
    %c0_15 = arith.constant 0 : index
    %7 = vector.load %arg9[%c0_14, %c0_15] : memref<512x36xbf16, #tpu.memory_space<vmem>>, vector<512x4xbf16>
    tpu.vector_store %arg9[%c0_14, %c0_15], %6 {strides = array<i32>} : memref<512x36xbf16, #tpu.memory_space<vmem>>, vector<512x4xbf16>,
    %c0_16 = arith.constant 0 : index
    %c0_17 = arith.constant 0 : index
    %c1_18 = arith.constant 1 : index
    %c0_19 = arith.constant 0 : index
    %8 = vector.load %arg8[%c0_16, %c0_17, %c1_18, %c0_19] : memref<2x18x18x4xf32, #tpu.memory_space<vmem>>, vector<2x16x16x4xf32>
    %9 = vector.shape_cast %8 : vector<2x16x16x4xf32> to vector<512x4xf32>
    %10 = arith.truncf %9 : vector<512x4xf32> to vector<512x4xbf16>
    %c0_20 = arith.constant 0 : index
    %c4 = arith.constant 4 : index
    %11 = vector.load %arg9[%c0_20, %c4] : memref<512x36xbf16, #tpu.memory_space<vmem>>, vector<512x4xbf16>
    tpu.vector_store %arg9[%c0_20, %c4], %10 {strides = array<i32>} : memref<512x36xbf16, #tpu.memory_space<vmem>>, vector<512x4xbf16>,
    %c0_21 = arith.constant 0 : index
    %c0_22 = arith.constant 0 : index
    %c2 = arith.constant 2 : index
    %c0_23 = arith.constant 0 : index
    %12 = vector.load %arg8[%c0_21, %c0_22, %c2, %c0_23] : memref<2x18x18x4xf32, #tpu.memory_space<vmem>>, vector<2x16x16x4xf32>
    %13 = vector.shape_cast %12 : vector<2x16x16x4xf32> to vector<512x4xf32>
    %14 = arith.truncf %13 : vector<512x4xf32> to vector<512x4xbf16>
    %c0_24 = arith.constant 0 : index
    %c8 = arith.constant 8 : index
    %15 = vector.load %arg9[%c0_24, %c8] : memref<512x36xbf16, #tpu.memory_space<vmem>>, vector<512x4xbf16>
    tpu.vector_store %arg9[%c0_24, %c8], %14 {strides = array<i32>} : memref<512x36xbf16, #tpu.memory_space<vmem>>, vector<512x4xbf16>,
    %c0_25 = arith.constant 0 : index
    %c1_26 = arith.constant 1 : index
    %c0_27 = arith.constant 0 : index
    %c0_28 = arith.constant 0 : index
    %16 = vector.load %arg8[%c0_25, %c1_26, %c0_27, %c0_28] : memref<2x18x18x4xf32, #tpu.memory_space<vmem>>, vector<2x16x16x4xf32>
    %17 = vector.shape_cast %16 : vector<2x16x16x4xf32> to vector<512x4xf32>
    %18 = arith.truncf %17 : vector<512x4xf32> to vector<512x4xbf16>
    %c0_29 = arith.constant 0 : index
    %c12 = arith.constant 12 : index
    %19 = vector.load %arg9[%c0_29, %c12] : memref<512x36xbf16, #tpu.memory_space<vmem>>, vector<512x4xbf16>
    tpu.vector_store %arg9[%c0_29, %c12], %18 {strides = array<i32>} : memref<512x36xbf16, #tpu.memory_space<vmem>>, vector<512x4xbf16>,
    %c0_30 = arith.constant 0 : index
    %c1_31 = arith.constant 1 : index
    %c1_32 = arith.constant 1 : index
    %c0_33 = arith.constant 0 : index
    %20 = vector.load %arg8[%c0_30, %c1_31, %c1_32, %c0_33] : memref<2x18x18x4xf32, #tpu.memory_space<vmem>>, vector<2x16x16x4xf32>
    %21 = vector.shape_cast %20 : vector<2x16x16x4xf32> to vector<512x4xf32>
    %22 = arith.truncf %21 : vector<512x4xf32> to vector<512x4xbf16>
    %c0_34 = arith.constant 0 : index
    %c16 = arith.constant 16 : index
    %23 = vector.load %arg9[%c0_34, %c16] : memref<512x36xbf16, #tpu.memory_space<vmem>>, vector<512x4xbf16>
    tpu.vector_store %arg9[%c0_34, %c16], %22 {strides = array<i32>} : memref<512x36xbf16, #tpu.memory_space<vmem>>, vector<512x4xbf16>,
    %c0_35 = arith.constant 0 : index
    %c1_36 = arith.constant 1 : index
    %c2_37 = arith.constant 2 : index
    %c0_38 = arith.constant 0 : index
    %24 = vector.load %arg8[%c0_35, %c1_36, %c2_37, %c0_38] : memref<2x18x18x4xf32, #tpu.memory_space<vmem>>, vector<2x16x16x4xf32>
    %25 = vector.shape_cast %24 : vector<2x16x16x4xf32> to vector<512x4xf32>
    %26 = arith.truncf %25 : vector<512x4xf32> to vector<512x4xbf16>
    %c0_39 = arith.constant 0 : index
    %c20 = arith.constant 20 : index
    %27 = vector.load %arg9[%c0_39, %c20] : memref<512x36xbf16, #tpu.memory_space<vmem>>, vector<512x4xbf16>
    tpu.vector_store %arg9[%c0_39, %c20], %26 {strides = array<i32>} : memref<512x36xbf16, #tpu.memory_space<vmem>>, vector<512x4xbf16>,
    %c0_40 = arith.constant 0 : index
    %c2_41 = arith.constant 2 : index
    %c0_42 = arith.constant 0 : index
    %c0_43 = arith.constant 0 : index
    %28 = vector.load %arg8[%c0_40, %c2_41, %c0_42, %c0_43] : memref<2x18x18x4xf32, #tpu.memory_space<vmem>>, vector<2x16x16x4xf32>
    %29 = vector.shape_cast %28 : vector<2x16x16x4xf32> to vector<512x4xf32>
    %30 = arith.truncf %29 : vector<512x4xf32> to vector<512x4xbf16>
    %c0_44 = arith.constant 0 : index
    %c24 = arith.constant 24 : index
    %31 = vector.load %arg9[%c0_44, %c24] : memref<512x36xbf16, #tpu.memory_space<vmem>>, vector<512x4xbf16>
    tpu.vector_store %arg9[%c0_44, %c24], %30 {strides = array<i32>} : memref<512x36xbf16, #tpu.memory_space<vmem>>, vector<512x4xbf16>,
    %c0_45 = arith.constant 0 : index
    %c2_46 = arith.constant 2 : index
    %c1_47 = arith.constant 1 : index
    %c0_48 = arith.constant 0 : index
    %32 = vector.load %arg8[%c0_45, %c2_46, %c1_47, %c0_48] : memref<2x18x18x4xf32, #tpu.memory_space<vmem>>, vector<2x16x16x4xf32>
    %33 = vector.shape_cast %32 : vector<2x16x16x4xf32> to vector<512x4xf32>
    %34 = arith.truncf %33 : vector<512x4xf32> to vector<512x4xbf16>
    %c0_49 = arith.constant 0 : index
    %c28 = arith.constant 28 : index
    %35 = vector.load %arg9[%c0_49, %c28] : memref<512x36xbf16, #tpu.memory_space<vmem>>, vector<512x4xbf16>
    tpu.vector_store %arg9[%c0_49, %c28], %34 {strides = array<i32>} : memref<512x36xbf16, #tpu.memory_space<vmem>>, vector<512x4xbf16>,
    %c0_50 = arith.constant 0 : index
    %c2_51 = arith.constant 2 : index
    %c2_52 = arith.constant 2 : index
    %c0_53 = arith.constant 0 : index
    %36 = vector.load %arg8[%c0_50, %c2_51, %c2_52, %c0_53] : memref<2x18x18x4xf32, #tpu.memory_space<vmem>>, vector<2x16x16x4xf32>
    %37 = vector.shape_cast %36 : vector<2x16x16x4xf32> to vector<512x4xf32>
    %38 = arith.truncf %37 : vector<512x4xf32> to vector<512x4xbf16>
    %c0_54 = arith.constant 0 : index
    %c32 = arith.constant 32 : index
    %39 = vector.load %arg9[%c0_54, %c32] : memref<512x36xbf16, #tpu.memory_space<vmem>>, vector<512x4xbf16>
    tpu.vector_store %arg9[%c0_54, %c32], %38 {strides = array<i32>} : memref<512x36xbf16, #tpu.memory_space<vmem>>, vector<512x4xbf16>,
    %c0_55 = arith.constant 0 : index
    %c0_56 = arith.constant 0 : index
    %40 = vector.load %arg9[%c0_55, %c0_56] : memref<512x36xbf16, #tpu.memory_space<vmem>>, vector<512x36xbf16>
    %c0_57 = arith.constant 0 : index
    %c0_58 = arith.constant 0 : index
    %41 = vector.load %arg1[%c0_57, %c0_58] : memref<36x4xbf16, #tpu.memory_space<vmem>>, vector<36x4xbf16>
    %cst_59 = arith.constant dense<0.000000e+00> : vector<512x4xf32>
    %42 = tpu.matmul %40, %41, %cst_59 {dimension_numbers = #tpu.dot_dimension_numbers<[1], [0], [0], [1], [0, 0, 1, 1], [], []>} : vector<512x36xbf16>, vector<36x4xbf16>, vector<512x4xf32> -> vector<512x4xf32>
    %c0_60 = arith.constant 0 : index
    %c0_61 = arith.constant 0 : index
    %43 = vector.load %arg2[%c0_60, %c0_61] : memref<1x4xf32, #tpu.memory_space<vmem>>, vector<1x4xf32>
    %c0_62 = arith.constant 0 : index
    %c0_63 = arith.constant 0 : index
    %44 = vector.load %arg3[%c0_62, %c0_63] : memref<1x4xf32, #tpu.memory_space<vmem>>, vector<1x4xf32>
    %cst_64 = arith.constant dense<0.000000e+00> : vector<4xf32>
    %45 = vector.multi_reduction <add>, %42, %cst_64 [0] : vector<512x4xf32> to vector<4xf32>
    %46 = vector.shape_cast %45 : vector<4xf32> to vector<1x4xf32>
    %cst_65 = arith.constant 0.001953125 : f32
    %47 = vector.broadcast %cst_65 : f32 to vector<1x4xf32>
    %48 = arith.mulf %46, %47 : vector<1x4xf32>
    %49 = arith.mulf %42, %42 : vector<512x4xf32>
    %cst_66 = arith.constant dense<0.000000e+00> : vector<4xf32>
    %50 = vector.multi_reduction <add>, %49, %cst_66 [0] : vector<512x4xf32> to vector<4xf32>
    %51 = vector.shape_cast %50 : vector<4xf32> to vector<1x4xf32>
    %cst_67 = arith.constant 0.001953125 : f32
    %52 = vector.broadcast %cst_67 : f32 to vector<1x4xf32>
    %53 = arith.mulf %51, %52 : vector<1x4xf32>
    %54 = arith.mulf %48, %48 : vector<1x4xf32>
    %55 = arith.subf %53, %54 : vector<1x4xf32>
    %cst_68 = arith.constant 9.99999974E-6 : f32
    %56 = vector.broadcast %cst_68 : f32 to vector<1x4xf32>
    %57 = arith.addf %55, %56 : vector<1x4xf32>
    %58 = math.rsqrt %57 : vector<1x4xf32>
    %59 = arith.mulf %43, %58 : vector<1x4xf32>
    %60 = arith.mulf %48, %59 : vector<1x4xf32>
    %61 = arith.subf %44, %60 : vector<1x4xf32>
    %62 = vector.broadcast %59 : vector<1x4xf32> to vector<512x4xf32>
    %63 = arith.mulf %42, %62 : vector<512x4xf32>
    %64 = vector.broadcast %61 : vector<1x4xf32> to vector<512x4xf32>
    %65 = arith.addf %63, %64 : vector<512x4xf32>
    %cst_69 = arith.constant 0.000000e+00 : f32
    %66 = vector.broadcast %cst_69 : f32 to vector<512x4xf32>
    %67 = arith.cmpf oge, %65, %66 : vector<512x4xf32>
    %cst_70 = arith.constant 0.00999999977 : f32
    %68 = vector.broadcast %cst_70 : f32 to vector<512x4xf32>
    %69 = arith.mulf %68, %65 : vector<512x4xf32>
    %70 = arith.select %67, %65, %69 : vector<512x4xi1>, vector<512x4xf32>
    %71 = vector.shape_cast %70 : vector<512x4xf32> to vector<2x16x16x4xf32>
    %c0_71 = arith.constant 0 : index
    %c1_72 = arith.constant 1 : index
    %c1_73 = arith.constant 1 : index
    %c0_74 = arith.constant 0 : index
    %72 = vector.load %arg8[%c0_71, %c1_72, %c1_73, %c0_74] : memref<2x18x18x4xf32, #tpu.memory_space<vmem>>, vector<2x16x16x4xf32>
    tpu.vector_store %arg8[%c0_71, %c1_72, %c1_73, %c0_74], %71 {strides = array<i32>} : memref<2x18x18x4xf32, #tpu.memory_space<vmem>>, vector<2x16x16x4xf32>,
    %c0_75 = arith.constant 0 : index
    %c0_76 = arith.constant 0 : index
    %c0_77 = arith.constant 0 : index
    %c0_78 = arith.constant 0 : index
    %73 = vector.load %arg8[%c0_75, %c0_76, %c0_77, %c0_78] : memref<2x18x18x4xf32, #tpu.memory_space<vmem>>, vector<2x16x16x4xf32>
    %74 = vector.shape_cast %73 : vector<2x16x16x4xf32> to vector<512x4xf32>
    %75 = arith.truncf %74 : vector<512x4xf32> to vector<512x4xbf16>
    %c0_79 = arith.constant 0 : index
    %c0_80 = arith.constant 0 : index
    %76 = vector.load %arg9[%c0_79, %c0_80] : memref<512x36xbf16, #tpu.memory_space<vmem>>, vector<512x4xbf16>
    tpu.vector_store %arg9[%c0_79, %c0_80], %75 {strides = array<i32>} : memref<512x36xbf16, #tpu.memory_space<vmem>>, vector<512x4xbf16>,
    %c0_81 = arith.constant 0 : index
    %c0_82 = arith.constant 0 : index
    %c1_83 = arith.constant 1 : index
    %c0_84 = arith.constant 0 : index
    %77 = vector.load %arg8[%c0_81, %c0_82, %c1_83, %c0_84] : memref<2x18x18x4xf32, #tpu.memory_space<vmem>>, vector<2x16x16x4xf32>
    %78 = vector.shape_cast %77 : vector<2x16x16x4xf32> to vector<512x4xf32>
    %79 = arith.truncf %78 : vector<512x4xf32> to vector<512x4xbf16>
    %c0_85 = arith.constant 0 : index
    %c4_86 = arith.constant 4 : index
    %80 = vector.load %arg9[%c0_85, %c4_86] : memref<512x36xbf16, #tpu.memory_space<vmem>>, vector<512x4xbf16>
    tpu.vector_store %arg9[%c0_85, %c4_86], %79 {strides = array<i32>} : memref<512x36xbf16, #tpu.memory_space<vmem>>, vector<512x4xbf16>,
    %c0_87 = arith.constant 0 : index
    %c0_88 = arith.constant 0 : index
    %c2_89 = arith.constant 2 : index
    %c0_90 = arith.constant 0 : index
    %81 = vector.load %arg8[%c0_87, %c0_88, %c2_89, %c0_90] : memref<2x18x18x4xf32, #tpu.memory_space<vmem>>, vector<2x16x16x4xf32>
    %82 = vector.shape_cast %81 : vector<2x16x16x4xf32> to vector<512x4xf32>
    %83 = arith.truncf %82 : vector<512x4xf32> to vector<512x4xbf16>
    %c0_91 = arith.constant 0 : index
    %c8_92 = arith.constant 8 : index
    %84 = vector.load %arg9[%c0_91, %c8_92] : memref<512x36xbf16, #tpu.memory_space<vmem>>, vector<512x4xbf16>
    tpu.vector_store %arg9[%c0_91, %c8_92], %83 {strides = array<i32>} : memref<512x36xbf16, #tpu.memory_space<vmem>>, vector<512x4xbf16>,
    %c0_93 = arith.constant 0 : index
    %c1_94 = arith.constant 1 : index
    %c0_95 = arith.constant 0 : index
    %c0_96 = arith.constant 0 : index
    %85 = vector.load %arg8[%c0_93, %c1_94, %c0_95, %c0_96] : memref<2x18x18x4xf32, #tpu.memory_space<vmem>>, vector<2x16x16x4xf32>
    %86 = vector.shape_cast %85 : vector<2x16x16x4xf32> to vector<512x4xf32>
    %87 = arith.truncf %86 : vector<512x4xf32> to vector<512x4xbf16>
    %c0_97 = arith.constant 0 : index
    %c12_98 = arith.constant 12 : index
    %88 = vector.load %arg9[%c0_97, %c12_98] : memref<512x36xbf16, #tpu.memory_space<vmem>>, vector<512x4xbf16>
    tpu.vector_store %arg9[%c0_97, %c12_98], %87 {strides = array<i32>} : memref<512x36xbf16, #tpu.memory_space<vmem>>, vector<512x4xbf16>,
    %c0_99 = arith.constant 0 : index
    %c1_100 = arith.constant 1 : index
    %c1_101 = arith.constant 1 : index
    %c0_102 = arith.constant 0 : index
    %89 = vector.load %arg8[%c0_99, %c1_100, %c1_101, %c0_102] : memref<2x18x18x4xf32, #tpu.memory_space<vmem>>, vector<2x16x16x4xf32>
    %90 = vector.shape_cast %89 : vector<2x16x16x4xf32> to vector<512x4xf32>
    %91 = arith.truncf %90 : vector<512x4xf32> to vector<512x4xbf16>
    %c0_103 = arith.constant 0 : index
    %c16_104 = arith.constant 16 : index
    %92 = vector.load %arg9[%c0_103, %c16_104] : memref<512x36xbf16, #tpu.memory_space<vmem>>, vector<512x4xbf16>
    tpu.vector_store %arg9[%c0_103, %c16_104], %91 {strides = array<i32>} : memref<512x36xbf16, #tpu.memory_space<vmem>>, vector<512x4xbf16>,
    %c0_105 = arith.constant 0 : index
    %c1_106 = arith.constant 1 : index
    %c2_107 = arith.constant 2 : index
    %c0_108 = arith.constant 0 : index
    %93 = vector.load %arg8[%c0_105, %c1_106, %c2_107, %c0_108] : memref<2x18x18x4xf32, #tpu.memory_space<vmem>>, vector<2x16x16x4xf32>
    %94 = vector.shape_cast %93 : vector<2x16x16x4xf32> to vector<512x4xf32>
    %95 = arith.truncf %94 : vector<512x4xf32> to vector<512x4xbf16>
    %c0_109 = arith.constant 0 : index
    %c20_110 = arith.constant 20 : index
    %96 = vector.load %arg9[%c0_109, %c20_110] : memref<512x36xbf16, #tpu.memory_space<vmem>>, vector<512x4xbf16>
    tpu.vector_store %arg9[%c0_109, %c20_110], %95 {strides = array<i32>} : memref<512x36xbf16, #tpu.memory_space<vmem>>, vector<512x4xbf16>,
    %c0_111 = arith.constant 0 : index
    %c2_112 = arith.constant 2 : index
    %c0_113 = arith.constant 0 : index
    %c0_114 = arith.constant 0 : index
    %97 = vector.load %arg8[%c0_111, %c2_112, %c0_113, %c0_114] : memref<2x18x18x4xf32, #tpu.memory_space<vmem>>, vector<2x16x16x4xf32>
    %98 = vector.shape_cast %97 : vector<2x16x16x4xf32> to vector<512x4xf32>
    %99 = arith.truncf %98 : vector<512x4xf32> to vector<512x4xbf16>
    %c0_115 = arith.constant 0 : index
    %c24_116 = arith.constant 24 : index
    %100 = vector.load %arg9[%c0_115, %c24_116] : memref<512x36xbf16, #tpu.memory_space<vmem>>, vector<512x4xbf16>
    tpu.vector_store %arg9[%c0_115, %c24_116], %99 {strides = array<i32>} : memref<512x36xbf16, #tpu.memory_space<vmem>>, vector<512x4xbf16>,
    %c0_117 = arith.constant 0 : index
    %c2_118 = arith.constant 2 : index
    %c1_119 = arith.constant 1 : index
    %c0_120 = arith.constant 0 : index
    %101 = vector.load %arg8[%c0_117, %c2_118, %c1_119, %c0_120] : memref<2x18x18x4xf32, #tpu.memory_space<vmem>>, vector<2x16x16x4xf32>
    %102 = vector.shape_cast %101 : vector<2x16x16x4xf32> to vector<512x4xf32>
    %103 = arith.truncf %102 : vector<512x4xf32> to vector<512x4xbf16>
    %c0_121 = arith.constant 0 : index
    %c28_122 = arith.constant 28 : index
    %104 = vector.load %arg9[%c0_121, %c28_122] : memref<512x36xbf16, #tpu.memory_space<vmem>>, vector<512x4xbf16>
    tpu.vector_store %arg9[%c0_121, %c28_122], %103 {strides = array<i32>} : memref<512x36xbf16, #tpu.memory_space<vmem>>, vector<512x4xbf16>,
    %c0_123 = arith.constant 0 : index
    %c2_124 = arith.constant 2 : index
    %c2_125 = arith.constant 2 : index
    %c0_126 = arith.constant 0 : index
    %105 = vector.load %arg8[%c0_123, %c2_124, %c2_125, %c0_126] : memref<2x18x18x4xf32, #tpu.memory_space<vmem>>, vector<2x16x16x4xf32>
    %106 = vector.shape_cast %105 : vector<2x16x16x4xf32> to vector<512x4xf32>
    %107 = arith.truncf %106 : vector<512x4xf32> to vector<512x4xbf16>
    %c0_127 = arith.constant 0 : index
    %c32_128 = arith.constant 32 : index
    %108 = vector.load %arg9[%c0_127, %c32_128] : memref<512x36xbf16, #tpu.memory_space<vmem>>, vector<512x4xbf16>
    tpu.vector_store %arg9[%c0_127, %c32_128], %107 {strides = array<i32>} : memref<512x36xbf16, #tpu.memory_space<vmem>>, vector<512x4xbf16>,
    %c0_129 = arith.constant 0 : index
    %c0_130 = arith.constant 0 : index
    %109 = vector.load %arg9[%c0_129, %c0_130] : memref<512x36xbf16, #tpu.memory_space<vmem>>, vector<512x36xbf16>
    %c0_131 = arith.constant 0 : index
    %c0_132 = arith.constant 0 : index
    %110 = vector.load %arg4[%c0_131, %c0_132] : memref<36x4xbf16, #tpu.memory_space<vmem>>, vector<36x4xbf16>
    %cst_133 = arith.constant dense<0.000000e+00> : vector<512x4xf32>
    %111 = tpu.matmul %109, %110, %cst_133 {dimension_numbers = #tpu.dot_dimension_numbers<[1], [0], [0], [1], [0, 0, 1, 1], [], []>} : vector<512x36xbf16>, vector<36x4xbf16>, vector<512x4xf32> -> vector<512x4xf32>
    %c0_134 = arith.constant 0 : index
    %c0_135 = arith.constant 0 : index
    %112 = vector.load %arg5[%c0_134, %c0_135] : memref<1x4xf32, #tpu.memory_space<vmem>>, vector<1x4xf32>
    %c0_136 = arith.constant 0 : index
    %c0_137 = arith.constant 0 : index
    %113 = vector.load %arg6[%c0_136, %c0_137] : memref<1x4xf32, #tpu.memory_space<vmem>>, vector<1x4xf32>
    %cst_138 = arith.constant dense<0.000000e+00> : vector<4xf32>
    %114 = vector.multi_reduction <add>, %111, %cst_138 [0] : vector<512x4xf32> to vector<4xf32>
    %115 = vector.shape_cast %114 : vector<4xf32> to vector<1x4xf32>
    %cst_139 = arith.constant 0.001953125 : f32
    %116 = vector.broadcast %cst_139 : f32 to vector<1x4xf32>
    %117 = arith.mulf %115, %116 : vector<1x4xf32>
    %118 = arith.mulf %111, %111 : vector<512x4xf32>
    %cst_140 = arith.constant dense<0.000000e+00> : vector<4xf32>
    %119 = vector.multi_reduction <add>, %118, %cst_140 [0] : vector<512x4xf32> to vector<4xf32>
    %120 = vector.shape_cast %119 : vector<4xf32> to vector<1x4xf32>
    %cst_141 = arith.constant 0.001953125 : f32
    %121 = vector.broadcast %cst_141 : f32 to vector<1x4xf32>
    %122 = arith.mulf %120, %121 : vector<1x4xf32>
    %123 = arith.mulf %117, %117 : vector<1x4xf32>
    %124 = arith.subf %122, %123 : vector<1x4xf32>
    %cst_142 = arith.constant 9.99999974E-6 : f32
    %125 = vector.broadcast %cst_142 : f32 to vector<1x4xf32>
    %126 = arith.addf %124, %125 : vector<1x4xf32>
    %127 = math.rsqrt %126 : vector<1x4xf32>
    %128 = arith.mulf %112, %127 : vector<1x4xf32>
    %129 = arith.mulf %117, %128 : vector<1x4xf32>
    %130 = arith.subf %113, %129 : vector<1x4xf32>
    %131 = vector.broadcast %128 : vector<1x4xf32> to vector<512x4xf32>
    %132 = arith.mulf %111, %131 : vector<512x4xf32>
    %133 = vector.broadcast %130 : vector<1x4xf32> to vector<512x4xf32>
    %134 = arith.addf %132, %133 : vector<512x4xf32>
    %c0_143 = arith.constant 0 : index
    %c0_144 = arith.constant 0 : index
    %c0_145 = arith.constant 0 : index
    %c0_146 = arith.constant 0 : index
    %135 = vector.load %arg0[%c0_143, %c0_144, %c0_145, %c0_146] : memref<2x16x16x4xf32, #tpu.memory_space<vmem>>, vector<2x16x16x4xf32>
    %136 = vector.shape_cast %135 : vector<2x16x16x4xf32> to vector<512x4xf32>
    %137 = arith.addf %134, %136 : vector<512x4xf32>
    %cst_147 = arith.constant 0.000000e+00 : f32
    %138 = vector.broadcast %cst_147 : f32 to vector<512x4xf32>
    %139 = arith.cmpf oge, %137, %138 : vector<512x4xf32>
    %cst_148 = arith.constant 0.00999999977 : f32
    %140 = vector.broadcast %cst_148 : f32 to vector<512x4xf32>
    %141 = arith.mulf %140, %137 : vector<512x4xf32>
    %142 = arith.select %139, %137, %141 : vector<512x4xi1>, vector<512x4xf32>
    %143 = vector.shape_cast %142 : vector<512x4xf32> to vector<2x16x16x4xf32>
    %c0_149 = arith.constant 0 : index
    %c0_150 = arith.constant 0 : index
    %c0_151 = arith.constant 0 : index
    %c0_152 = arith.constant 0 : index
    %144 = vector.load %arg7[%c0_149, %c0_150, %c0_151, %c0_152] : memref<2x16x16x4xf32, #tpu.memory_space<vmem>>, vector<2x16x16x4xf32>
    tpu.vector_store %arg7[%c0_149, %c0_150, %c0_151, %c0_152], %143 {strides = array<i32>} : memref<2x16x16x4xf32, #tpu.memory_space<vmem>>, vector<2x16x16x4xf32>,
    return
  }
}

</mosaic_0001>

<llo_original>
// kernel: tpu_custom_call.1
$region0: #{tpu_custom_call.1}
  #allocation0 [shape = 'u32[]', space=smem, size = 0x4, offset = 0x4, fixed_abs, tag = 'smem constant byte address 0x4 - core index']
  #allocation1 [shape = 'u32[144,128]{1,0:T(1,128)}', space=vmem, size = 0x12000, scoped, tag = 'internal scratch']
  #allocation2 [shape = 'f32[2,18,18,4]{3,2,1,0:T(8,128)}', space=vmem, size = 0x6c000, scoped, tag = 'scratch operand']
  #allocation3 [shape = 'bf16[512,36]{1,0:T(16,128)(2,1)}', space=vmem, size = 0x20000, scoped, tag = 'scratch operand']
  %s0 = inlined_call_operand.vmem [shape: f32[2,16,16,4], index: 0, kind: input, shape index: {}]
  %s1 = inlined_call_operand.vmem [shape: bf16[36,4], index: 1, kind: input, shape index: {}]
  %s2 = inlined_call_operand.vmem [shape: f32[1,4], index: 2, kind: input, shape index: {}]
  %s3 = inlined_call_operand.vmem [shape: f32[1,4], index: 3, kind: input, shape index: {}]
  %s4 = inlined_call_operand.vmem [shape: bf16[36,4], index: 4, kind: input, shape index: {}]
  %s5 = inlined_call_operand.vmem [shape: f32[1,4], index: 5, kind: input, shape index: {}]
  %s6 = inlined_call_operand.vmem [shape: f32[1,4], index: 6, kind: input, shape index: {}]
  %s7 = inlined_call_operand.vmem [shape: f32[2,16,16,4], index: 7, kind: output, shape index: {}]
  %s8 = sld [smem:[#allocation0]]
  $region38: #{tpu_custom_call.1} parent=0
    _
  %s10 = ssub.s32 1, %s8
  %s11 = scalar_select 0, %s10, %s8
  // Predicated region
  $region2: #{tpu_custom_call.1} parent=0 // pred_check
    _
  $region3: #{tpu_custom_call.1} parent=0 // pred_check_branch
    %13 = sbr.rel (0) target = $region5
  $region4: #{tpu_custom_call.1} parent=0 // pred_region
    _
  $region5: #{tpu_custom_call.1} parent=0 // pred_fallthru
    _
  // Predicated region
  $region6: #{tpu_custom_call.1} parent=0 // pred_check
    _
  $region7: #{tpu_custom_call.1} parent=0 // pred_check_branch
    %15 = sbr.rel (0) target = $region9
  $region8: #{tpu_custom_call.1} parent=0 // pred_region
    _
  $region9: #{tpu_custom_call.1} parent=0 // pred_fallthru
    _
  // Predicated region
  $region10: #{tpu_custom_call.1} parent=0 // pred_check
    _
  $region11: #{tpu_custom_call.1} parent=0 // pred_check_branch
    %17 = sbr.rel (0) target = $region13
  $region12: #{tpu_custom_call.1} parent=0 // pred_region
    _
  $region13: #{tpu_custom_call.1} parent=0 // pred_fallthru
    _
  // Predicated region
  $region14: #{tpu_custom_call.1} parent=0 // pred_check
    _
  $region15: #{tpu_custom_call.1} parent=0 // pred_check_branch
    %19 = sbr.rel (0) target = $region17
  $region16: #{tpu_custom_call.1} parent=0 // pred_region
    _
  $region17: #{tpu_custom_call.1} parent=0 // pred_fallthru
    _
  // Predicated region
  $region18: #{tpu_custom_call.1} parent=0 // pred_check
    _
  $region19: #{tpu_custom_call.1} parent=0 // pred_check_branch
    %21 = sbr.rel (0) target = $region21
  $region20: #{tpu_custom_call.1} parent=0 // pred_region
    _
  $region21: #{tpu_custom_call.1} parent=0 // pred_fallthru
    _
  // Predicated region
  $region22: #{tpu_custom_call.1} parent=0 // pred_check
    _
  $region23: #{tpu_custom_call.1} parent=0 // pred_check_branch
    %23 = sbr.rel (0) target = $region25
  $region24: #{tpu_custom_call.1} parent=0 // pred_region
    _
  $region25: #{tpu_custom_call.1} parent=0 // pred_fallthru
    _
  // Predicated region
  $region26: #{tpu_custom_call.1} parent=0 // pred_check
    _
  $region27: #{tpu_custom_call.1} parent=0 // pred_check_branch
    %25 = sbr.rel (0) target = $region29
  $region28: #{tpu_custom_call.1} parent=0 // pred_region
    _
  $region29: #{tpu_custom_call.1} parent=0 // pred_fallthru
    _
  %vm27 = vcmask 31744
  %28 = vst.msk [vmem:[#allocation2] sm:$0xff] %vm27, 0.0
  %29 = vst.msk [vmem:[#allocation2 + $0x8] sm:$0xff] %vm27, 0.0
  %vm30 = vcmask 25600
  %31 = vst.msk [vmem:[#allocation2 + $0x10] sm:$0x3] %vm30, 0.0
  %32 = vst.msk [vmem:[#allocation2 + $0x18] sm:$0xff] %vm27, 0.0
  %33 = vst.msk [vmem:[#allocation2 + $0x20] sm:$0xff] %vm27, 0.0
  %34 = vst.msk [vmem:[#allocation2 + $0x28] sm:$0x3] %vm30, 0.0
  %35 = vst.msk [vmem:[#allocation2 + $0x30] sm:$0xff] %vm27, 0.0
  %36 = vst.msk [vmem:[#allocation2 + $0x38] sm:$0xff] %vm27, 0.0
  %37 = vst.msk [vmem:[#allocation2 + $0x40] sm:$0x3] %vm30, 0.0
  %38 = vst.msk [vmem:[#allocation2 + $0x48] sm:$0xff] %vm27, 0.0
  %39 = vst.msk [vmem:[#allocation2 + $0x50] sm:$0xff] %vm27, 0.0
  %40 = vst.msk [vmem:[#allocation2 + $0x58] sm:$0x3] %vm30, 0.0
  %41 = vst.msk [vmem:[#allocation2 + $0x60] sm:$0xff] %vm27, 0.0
  %42 = vst.msk [vmem:[#allocation2 + $0x68] sm:$0xff] %vm27, 0.0
  %43 = vst.msk [vmem:[#allocation2 + $0x70] sm:$0x3] %vm30, 0.0
  %44 = vst.msk [vmem:[#allocation2 + $0x78] sm:$0xff] %vm27, 0.0
  %45 = vst.msk [vmem:[#allocation2 + $0x80] sm:$0xff] %vm27, 0.0
  %46 = vst.msk [vmem:[#allocation2 + $0x88] sm:$0x3] %vm30, 0.0
  %47 = vst.msk [vmem:[#allocation2 + $0x90] sm:$0xff] %vm27, 0.0
  %48 = vst.msk [vmem:[#allocation2 + $0x98] sm:$0xff] %vm27, 0.0
  %49 = vst.msk [vmem:[#allocation2 + $0xa0] sm:$0x3] %vm30, 0.0
  %50 = vst.msk [vmem:[#allocation2 + $0xa8] sm:$0xff] %vm27, 0.0
  %51 = vst.msk [vmem:[#allocation2 + $0xb0] sm:$0xff] %vm27, 0.0
  %52 = vst.msk [vmem:[#allocation2 + $0xb8] sm:$0x3] %vm30, 0.0
  %53 = vst.msk [vmem:[#allocation2 + $0xc0] sm:$0xff] %vm27, 0.0
  %54 = vst.msk [vmem:[#allocation2 + $0xc8] sm:$0xff] %vm27, 0.0
  %55 = vst.msk [vmem:[#allocation2 + $0xd0] sm:$0x3] %vm30, 0.0
  %56 = vst.msk [vmem:[#allocation2 + $0xd8] sm:$0xff] %vm27, 0.0
  %57 = vst.msk [vmem:[#allocation2 + $0xe0] sm:$0xff] %vm27, 0.0
  %58 = vst.msk [vmem:[#allocation2 + $0xe8] sm:$0x3] %vm30, 0.0
  %59 = vst.msk [vmem:[#allocation2 + $0xf0] sm:$0xff] %vm27, 0.0
  %60 = vst.msk [vmem:[#allocation2 + $0xf8] sm:$0xff] %vm27, 0.0
  %61 = vst.msk [vmem:[#allocation2 + $0x100] sm:$0x3] %vm30, 0.0
  %62 = vst.msk [vmem:[#allocation2 + $0x108] sm:$0xff] %vm27, 0.0
  %63 = vst.msk [vmem:[#allocation2 + $0x110] sm:$0xff] %vm27, 0.0
  %64 = vst.msk [vmem:[#allocation2 + $0x118] sm:$0x3] %vm30, 0.0
  %65 = vst.msk [vmem:[#allocation2 + $0x120] sm:$0xff] %vm27, 0.0
  %66 = vst.msk [vmem:[#allocation2 + $0x128] sm:$0xff] %vm27, 0.0
  %67 = vst.msk [vmem:[#allocation2 + $0x130] sm:$0x3] %vm30, 0.0
  %68 = vst.msk [vmem:[#allocation2 + $0x138] sm:$0xff] %vm27, 0.0
  %69 = vst.msk [vmem:[#allocation2 + $0x140] sm:$0xff] %vm27, 0.0
  %70 = vst.msk [vmem:[#allocation2 + $0x148] sm:$0x3] %vm30, 0.0
  %71 = vst.msk [vmem:[#allocation2 + $0x150] sm:$0xff] %vm27, 0.0
  %72 = vst.msk [vmem:[#allocation2 + $0x158] sm:$0xff] %vm27, 0.0
  %73 = vst.msk [vmem:[#allocation2 + $0x160] sm:$0x3] %vm30, 0.0
  %74 = vst.msk [vmem:[#allocation2 + $0x168] sm:$0xff] %vm27, 0.0
  %75 = vst.msk [vmem:[#allocation2 + $0x170] sm:$0xff] %vm27, 0.0
  %76 = vst.msk [vmem:[#allocation2 + $0x178] sm:$0x3] %vm30, 0.0
  %77 = vst.msk [vmem:[#allocation2 + $0x180] sm:$0xff] %vm27, 0.0
  %78 = vst.msk [vmem:[#allocation2 + $0x188] sm:$0xff] %vm27, 0.0
  %79 = vst.msk [vmem:[#allocation2 + $0x190] sm:$0x3] %vm30, 0.0
  %80 = vst.msk [vmem:[#allocation2 + $0x198] sm:$0xff] %vm27, 0.0
  %81 = vst.msk [vmem:[#allocation2 + $0x1a0] sm:$0xff] %vm27, 0.0
  %82 = vst.msk [vmem:[#allocation2 + $0x1a8] sm:$0x3] %vm30, 0.0
  %83 = vst.msk [vmem:[#allocation2 + $0x1b0] sm:$0xff] %vm27, 0.0
  %84 = vst.msk [vmem:[#allocation2 + $0x1b8] sm:$0xff] %vm27, 0.0
  %85 = vst.msk [vmem:[#allocation2 + $0x1c0] sm:$0x3] %vm30, 0.0
  %86 = vst.msk [vmem:[#allocation2 + $0x1c8] sm:$0xff] %vm27, 0.0
  %87 = vst.msk [vmem:[#allocation2 + $0x1d0] sm:$0xff] %vm27, 0.0
  %88 = vst.msk [vmem:[#allocation2 + $0x1d8] sm:$0x3] %vm30, 0.0
  %89 = vst.msk [vmem:[#allocation2 + $0x1e0] sm:$0xff] %vm27, 0.0
  %90 = vst.msk [vmem:[#allocation2 + $0x1e8] sm:$0xff] %vm27, 0.0
  %91 = vst.msk [vmem:[#allocation2 + $0x1f0] sm:$0x3] %vm30, 0.0
  %92 = vst.msk [vmem:[#allocation2 + $0x1f8] sm:$0xff] %vm27, 0.0
  %93 = vst.msk [vmem:[#allocation2 + $0x200] sm:$0xff] %vm27, 0.0
  %94 = vst.msk [vmem:[#allocation2 + $0x208] sm:$0x3] %vm30, 0.0
  %95 = vst.msk [vmem:[#allocation2 + $0x210] sm:$0xff] %vm27, 0.0
  %96 = vst.msk [vmem:[#allocation2 + $0x218] sm:$0xff] %vm27, 0.0
  %97 = vst.msk [vmem:[#allocation2 + $0x220] sm:$0x3] %vm30, 0.0
  %98 = vst.msk [vmem:[#allocation2 + $0x228] sm:$0xff] %vm27, 0.0
  %99 = vst.msk [vmem:[#allocation2 + $0x230] sm:$0xff] %vm27, 0.0
  %100 = vst.msk [vmem:[#allocation2 + $0x238] sm:$0x3] %vm30, 0.0
  %101 = vst.msk [vmem:[#allocation2 + $0x240] sm:$0xff] %vm27, 0.0
  %102 = vst.msk [vmem:[#allocation2 + $0x248] sm:$0xff] %vm27, 0.0
  %103 = vst.msk [vmem:[#allocation2 + $0x250] sm:$0x3] %vm30, 0.0
  %104 = vst.msk [vmem:[#allocation2 + $0x258] sm:$0xff] %vm27, 0.0
  %105 = vst.msk [vmem:[#allocation2 + $0x260] sm:$0xff] %vm27, 0.0
  %106 = vst.msk [vmem:[#allocation2 + $0x268] sm:$0x3] %vm30, 0.0
  %107 = vst.msk [vmem:[#allocation2 + $0x270] sm:$0xff] %vm27, 0.0
  %108 = vst.msk [vmem:[#allocation2 + $0x278] sm:$0xff] %vm27, 0.0
  %109 = vst.msk [vmem:[#allocation2 + $0x280] sm:$0x3] %vm30, 0.0
  %110 = vst.msk [vmem:[#allocation2 + $0x288] sm:$0xff] %vm27, 0.0
  %111 = vst.msk [vmem:[#allocation2 + $0x290] sm:$0xff] %vm27, 0.0
  %112 = vst.msk [vmem:[#allocation2 + $0x298] sm:$0x3] %vm30, 0.0
  %113 = vst.msk [vmem:[#allocation2 + $0x2a0] sm:$0xff] %vm27, 0.0
  %114 = vst.msk [vmem:[#allocation2 + $0x2a8] sm:$0xff] %vm27, 0.0
  %115 = vst.msk [vmem:[#allocation2 + $0x2b0] sm:$0x3] %vm30, 0.0
  %116 = vst.msk [vmem:[#allocation2 + $0x2b8] sm:$0xff] %vm27, 0.0
  %117 = vst.msk [vmem:[#allocation2 + $0x2c0] sm:$0xff] %vm27, 0.0
  %118 = vst.msk [vmem:[#allocation2 + $0x2c8] sm:$0x3] %vm30, 0.0
  %119 = vst.msk [vmem:[#allocation2 + $0x2d0] sm:$0xff] %vm27, 0.0
  %120 = vst.msk [vmem:[#allocation2 + $0x2d8] sm:$0xff] %vm27, 0.0
  %121 = vst.msk [vmem:[#allocation2 + $0x2e0] sm:$0x3] %vm30, 0.0
  %122 = vst.msk [vmem:[#allocation2 + $0x2e8] sm:$0xff] %vm27, 0.0
  %123 = vst.msk [vmem:[#allocation2 + $0x2f0] sm:$0xff] %vm27, 0.0
  %124 = vst.msk [vmem:[#allocation2 + $0x2f8] sm:$0x3] %vm30, 0.0
  %125 = vst.msk [vmem:[#allocation2 + $0x300] sm:$0xff] %vm27, 0.0
  %126 = vst.msk [vmem:[#allocation2 + $0x308] sm:$0xff] %vm27, 0.0
  %127 = vst.msk [vmem:[#allocation2 + $0x310] sm:$0x3] %vm30, 0.0
  %128 = vst.msk [vmem:[#allocation2 + $0x318] sm:$0xff] %vm27, 0.0
  %129 = vst.msk [vmem:[#allocation2 + $0x320] sm:$0xff] %vm27, 0.0
  %130 = vst.msk [vmem:[#allocation2 + $0x328] sm:$0x3] %vm30, 0.0
  %131 = vst.msk [vmem:[#allocation2 + $0x330] sm:$0xff] %vm27, 0.0
  %132 = vst.msk [vmem:[#allocation2 + $0x338] sm:$0xff] %vm27, 0.0
  %133 = vst.msk [vmem:[#allocation2 + $0x340] sm:$0x3] %vm30, 0.0
  %134 = vst.msk [vmem:[#allocation2 + $0x348] sm:$0xff] %vm27, 0.0
  %135 = vst.msk [vmem:[#allocation2 + $0x350] sm:$0xff] %vm27, 0.0
  %136 = vst.msk [vmem:[#allocation2 + $0x358] sm:$0x3] %vm30, 0.0
  %v137 = vld [vmem:[%s0] sm:$0xff]
  %v138 = vld [vmem:[%s0 + $0x8] sm:$0xff]
  %v139 = vld [vmem:[%s0 + $0x10] sm:$0xff]
  %v140 = vld [vmem:[%s0 + $0x18] sm:$0xff]
  %v141 = vld [vmem:[%s0 + $0x20] sm:$0xff]
  %v142 = vld [vmem:[%s0 + $0x28] sm:$0xff]
  %v143 = vld [vmem:[%s0 + $0x30] sm:$0xff]
  %v144 = vld [vmem:[%s0 + $0x38] sm:$0xff]
  %v145 = vld [vmem:[%s0 + $0x40] sm:$0xff]
  %v146 = vld [vmem:[%s0 + $0x48] sm:$0xff]
  %v147 = vld [vmem:[%s0 + $0x50] sm:$0xff]
  %v148 = vld [vmem:[%s0 + $0x58] sm:$0xff]
  %v149 = vld [vmem:[%s0 + $0x60] sm:$0xff]
  %v150 = vld [vmem:[%s0 + $0x68] sm:$0xff]
  %v151 = vld [vmem:[%s0 + $0x70] sm:$0xff]
  %v152 = vld [vmem:[%s0 + $0x78] sm:$0xff]
  %v153 = vld [vmem:[%s0 + $0x80] sm:$0xff]
  %v154 = vld [vmem:[%s0 + $0x88] sm:$0xff]
  %v155 = vld [vmem:[%s0 + $0x90] sm:$0xff]
  %v156 = vld [vmem:[%s0 + $0x98] sm:$0xff]
  %v157 = vld [vmem:[%s0 + $0xa0] sm:$0xff]
  %v158 = vld [vmem:[%s0 + $0xa8] sm:$0xff]
  %v159 = vld [vmem:[%s0 + $0xb0] sm:$0xff]
  %v160 = vld [vmem:[%s0 + $0xb8] sm:$0xff]
  %v161 = vld [vmem:[%s0 + $0xc0] sm:$0xff]
  %v162 = vld [vmem:[%s0 + $0xc8] sm:$0xff]
  %v163 = vld [vmem:[%s0 + $0xd0] sm:$0xff]
  %v164 = vld [vmem:[%s0 + $0xd8] sm:$0xff]
  %v165 = vld [vmem:[%s0 + $0xe0] sm:$0xff]
  %v166 = vld [vmem:[%s0 + $0xe8] sm:$0xff]
  %v167 = vld [vmem:[%s0 + $0xf0] sm:$0xff]
  %v168 = vld [vmem:[%s0 + $0xf8] sm:$0xff]
  %v169 = vld [vmem:[%s0 + $0x100] sm:$0xff]
  %v170 = vld [vmem:[%s0 + $0x108] sm:$0xff]
  %v171 = vld [vmem:[%s0 + $0x110] sm:$0xff]
  %v172 = vld [vmem:[%s0 + $0x118] sm:$0xff]
  %v173 = vld [vmem:[%s0 + $0x120] sm:$0xff]
  %v174 = vld [vmem:[%s0 + $0x128] sm:$0xff]
  %v175 = vld [vmem:[%s0 + $0x130] sm:$0xff]
  %v176 = vld [vmem:[%s0 + $0x138] sm:$0xff]
  %v177 = vld [vmem:[%s0 + $0x140] sm:$0xff]
  %v178 = vld [vmem:[%s0 + $0x148] sm:$0xff]
  %v179 = vld [vmem:[%s0 + $0x150] sm:$0xff]
  %v180 = vld [vmem:[%s0 + $0x158] sm:$0xff]
  %v181 = vld [vmem:[%s0 + $0x160] sm:$0xff]
  %v182 = vld [vmem:[%s0 + $0x168] sm:$0xff]
  %v183 = vld [vmem:[%s0 + $0x170] sm:$0xff]
  %v184 = vld [vmem:[%s0 + $0x178] sm:$0xff]
  %v185 = vld [vmem:[%s0 + $0x180] sm:$0xff]
  %v186 = vld [vmem:[%s0 + $0x188] sm:$0xff]
  %v187 = vld [vmem:[%s0 + $0x190] sm:$0xff]
  %v188 = vld [vmem:[%s0 + $0x198] sm:$0xff]
  %v189 = vld [vmem:[%s0 + $0x1a0] sm:$0xff]
  %v190 = vld [vmem:[%s0 + $0x1a8] sm:$0xff]
  %v191 = vld [vmem:[%s0 + $0x1b0] sm:$0xff]
  %v192 = vld [vmem:[%s0 + $0x1b8] sm:$0xff]
  %v193 = vld [vmem:[%s0 + $0x1c0] sm:$0xff]
  %v194 = vld [vmem:[%s0 + $0x1c8] sm:$0xff]
  %v195 = vld [vmem:[%s0 + $0x1d0] sm:$0xff]
  %v196 = vld [vmem:[%s0 + $0x1d8] sm:$0xff]
  %v197 = vld [vmem:[%s0 + $0x1e0] sm:$0xff]
  %v198 = vld [vmem:[%s0 + $0x1e8] sm:$0xff]
  %v199 = vld [vmem:[%s0 + $0x1f0] sm:$0xff]
  %v200 = vld [vmem:[%s0 + $0x1f8] sm:$0xff]
  %s201 = scalar_lea.vmem [#allocation2], 24
  %202 = vst.msk [vmem:[%s201 + $0x1] sm:$0xff] %vm27, %v137
  %203 = vst.msk [vmem:[%s201 + $0x9] sm:$0xff] %vm27, %v138
  %204 = vst.msk [vmem:[%s201 + $0x19] sm:$0xff] %vm27, %v139
  %205 = vst.msk [vmem:[%s201 + $0x21] sm:$0xff] %vm27, %v140
  %206 = vst.msk [vmem:[%s201 + $0x31] sm:$0xff] %vm27, %v141
  %207 = vst.msk [vmem:[%s201 + $0x39] sm:$0xff] %vm27, %v142
  %208 = vst.msk [vmem:[%s201 + $0x49] sm:$0xff] %vm27, %v143
  %209 = vst.msk [vmem:[%s201 + $0x51] sm:$0xff] %vm27, %v144
  %210 = vst.msk [vmem:[%s201 + $0x61] sm:$0xff] %vm27, %v145
  %211 = vst.msk [vmem:[%s201 + $0x69] sm:$0xff] %vm27, %v146
  %212 = vst.msk [vmem:[%s201 + $0x79] sm:$0xff] %vm27, %v147
  %213 = vst.msk [vmem:[%s201 + $0x81] sm:$0xff] %vm27, %v148
  %214 = vst.msk [vmem:[%s201 + $0x91] sm:$0xff] %vm27, %v149
  %215 = vst.msk [vmem:[%s201 + $0x99] sm:$0xff] %vm27, %v150
  %216 = vst.msk [vmem:[%s201 + $0xa9] sm:$0xff] %vm27, %v151
  %217 = vst.msk [vmem:[%s201 + $0xb1] sm:$0xff] %vm27, %v152
  %218 = vst.msk [vmem:[%s201 + $0xc1] sm:$0xff] %vm27, %v153
  %219 = vst.msk [vmem:[%s201 + $0xc9] sm:$0xff] %vm27, %v154
  %220 = vst.msk [vmem:[%s201 + $0xd9] sm:$0xff] %vm27, %v155
  %221 = vst.msk [vmem:[%s201 + $0xe1] sm:$0xff] %vm27, %v156
  %222 = vst.msk [vmem:[%s201 + $0xf1] sm:$0xff] %vm27, %v157
  %223 = vst.msk [vmem:[%s201 + $0xf9] sm:$0xff] %vm27, %v158
  %224 = vst.msk [vmem:[%s201 + $0x109] sm:$0xff] %vm27, %v159
  %225 = vst.msk [vmem:[%s201 + $0x111] sm:$0xff] %vm27, %v160
  %226 = vst.msk [vmem:[%s201 + $0x121] sm:$0xff] %vm27, %v161
  %227 = vst.msk [vmem:[%s201 + $0x129] sm:$0xff] %vm27, %v162
  %228 = vst.msk [vmem:[%s201 + $0x139] sm:$0xff] %vm27, %v163
  %229 = vst.msk [vmem:[%s201 + $0x141] sm:$0xff] %vm27, %v164
  %230 = vst.msk [vmem:[%s201 + $0x151] sm:$0xff] %vm27, %v165
  %231 = vst.msk [vmem:[%s201 + $0x159] sm:$0xff] %vm27, %v166
  %232 = vst.msk [vmem:[%s201 + $0x169] sm:$0xff] %vm27, %v167
  %233 = vst.msk [vmem:[%s201 + $0x171] sm:$0xff] %vm27, %v168
  %234 = vst.msk [vmem:[%s201 + $0x1b1] sm:$0xff] %vm27, %v169
  %235 = vst.msk [vmem:[%s201 + $0x1b9] sm:$0xff] %vm27, %v170
  %236 = vst.msk [vmem:[%s201 + $0x1c9] sm:$0xff] %vm27, %v171
  %237 = vst.msk [vmem:[%s201 + $0x1d1] sm:$0xff] %vm27, %v172
  %238 = vst.msk [vmem:[%s201 + $0x1e1] sm:$0xff] %vm27, %v173
  %239 = vst.msk [vmem:[%s201 + $0x1e9] sm:$0xff] %vm27, %v174
  %240 = vst.msk [vmem:[%s201 + $0x1f9] sm:$0xff] %vm27, %v175
  %241 = vst.msk [vmem:[%s201 + $0x201] sm:$0xff] %vm27, %v176
  %242 = vst.msk [vmem:[%s201 + $0x211] sm:$0xff] %vm27, %v177
  %243 = vst.msk [vmem:[%s201 + $0x219] sm:$0xff] %vm27, %v178
  %244 = vst.msk [vmem:[%s201 + $0x229] sm:$0xff] %vm27, %v179
  %245 = vst.msk [vmem:[%s201 + $0x231] sm:$0xff] %vm27, %v180
  %246 = vst.msk [vmem:[%s201 + $0x241] sm:$0xff] %vm27, %v181
  %247 = vst.msk [vmem:[%s201 + $0x249] sm:$0xff] %vm27, %v182
  %248 = vst.msk [vmem:[%s201 + $0x259] sm:$0xff] %vm27, %v183
  %249 = vst.msk [vmem:[%s201 + $0x261] sm:$0xff] %vm27, %v184
  %250 = vst.msk [vmem:[%s201 + $0x271] sm:$0xff] %vm27, %v185
  %251 = vst.msk [vmem:[%s201 + $0x279] sm:$0xff] %vm27, %v186
  %252 = vst.msk [vmem:[%s201 + $0x289] sm:$0xff] %vm27, %v187
  %253 = vst.msk [vmem:[%s201 + $0x291] sm:$0xff] %vm27, %v188
  %254 = vst.msk [vmem:[%s201 + $0x2a1] sm:$0xff] %vm27, %v189
  %255 = vst.msk [vmem:[%s201 + $0x2a9] sm:$0xff] %vm27, %v190
  %256 = vst.msk [vmem:[%s201 + $0x2b9] sm:$0xff] %vm27, %v191
  %257 = vst.msk [vmem:[%s201 + $0x2c1] sm:$0xff] %vm27, %v192
  %258 = vst.msk [vmem:[%s201 + $0x2d1] sm:$0xff] %vm27, %v193
  %259 = vst.msk [vmem:[%s201 + $0x2d9] sm:$0xff] %vm27, %v194
  %260 = vst.msk [vmem:[%s201 + $0x2e9] sm:$0xff] %vm27, %v195
  %261 = vst.msk [vmem:[%s201 + $0x2f1] sm:$0xff] %vm27, %v196
  %262 = vst.msk [vmem:[%s201 + $0x301] sm:$0xff] %vm27, %v197
  %263 = vst.msk [vmem:[%s201 + $0x309] sm:$0xff] %vm27, %v198
  %264 = vst.msk [vmem:[%s201 + $0x319] sm:$0xff] %vm27, %v199
  %265 = vst.msk [vmem:[%s201 + $0x321] sm:$0xff] %vm27, %v200
  %v266 = vld [vmem:[#allocation2] sm:$0xff]
  %v267 = vld [vmem:[#allocation2 + $0x8] sm:$0xff]
  %v268 = vld [vmem:[#allocation2 + $0x18] sm:$0xff]
  %v269 = vld [vmem:[#allocation2 + $0x20] sm:$0xff]
  %v270 = vld [vmem:[#allocation2 + $0x30] sm:$0xff]
  %v271 = vld [vmem:[#allocation2 + $0x38] sm:$0xff]
  %v272 = vld [vmem:[#allocation2 + $0x48] sm:$0xff]
  %v273 = vld [vmem:[#allocation2 + $0x50] sm:$0xff]
  %v274 = vld [vmem:[#allocation2 + $0x60] sm:$0xff]
  %v275 = vld [vmem:[#allocation2 + $0x68] sm:$0xff]
  %v276 = vld [vmem:[#allocation2 + $0x78] sm:$0xff]
  %v277 = vld [vmem:[#allocation2 + $0x80] sm:$0xff]
  %v278 = vld [vmem:[#allocation2 + $0x90] sm:$0xff]
  %v279 = vld [vmem:[#allocation2 + $0x98] sm:$0xff]
  %v280 = vld [vmem:[#allocation2 + $0xa8] sm:$0xff]
  %v281 = vld [vmem:[#allocation2 + $0xb0] sm:$0xff]
  %v282 = vld [vmem:[#allocation2 + $0xc0] sm:$0xff]
  %v283 = vld [vmem:[#allocation2 + $0xc8] sm:$0xff]
  %v284 = vld [vmem:[#allocation2 + $0xd8] sm:$0xff]
  %v285 = vld [vmem:[#allocation2 + $0xe0] sm:$0xff]
  %v286 = vld [vmem:[#allocation2 + $0xf0] sm:$0xff]
  %v287 = vld [vmem:[#allocation2 + $0xf8] sm:$0xff]
  %v288 = vld [vmem:[#allocation2 + $0x108] sm:$0xff]
  %v289 = vld [vmem:[#allocation2 + $0x110] sm:$0xff]
  %v290 = vld [vmem:[#allocation2 + $0x120] sm:$0xff]
  %v291 = vld [vmem:[#allocation2 + $0x128] sm:$0xff]
  %v292 = vld [vmem:[#allocation2 + $0x138] sm:$0xff]
  %v293 = vld [vmem:[#allocation2 + $0x140] sm:$0xff]
  %v294 = vld [vmem:[#allocation2 + $0x150] sm:$0xff]
  %v295 = vld [vmem:[#allocation2 + $0x158] sm:$0xff]
  %v296 = vld [vmem:[#allocation2 + $0x168] sm:$0xff]
  %v297 = vld [vmem:[#allocation2 + $0x170] sm:$0xff]
  %v298 = vld [vmem:[#allocation2 + $0x1b0] sm:$0xff]
  %v299 = vld [vmem:[#allocation2 + $0x1b8] sm:$0xff]
  %v300 = vld [vmem:[#allocation2 + $0x1c8] sm:$0xff]
  %v301 = vld [vmem:[#allocation2 + $0x1d0] sm:$0xff]
  %v302 = vld [vmem:[#allocation2 + $0x1e0] sm:$0xff]
  %v303 = vld [vmem:[#allocation2 + $0x1e8] sm:$0xff]
  %v304 = vld [vmem:[#allocation2 + $0x1f8] sm:$0xff]
  %v305 = vld [vmem:[#allocation2 + $0x200] sm:$0xff]
  %v306 = vld [vmem:[#allocation2 + $0x210] sm:$0xff]
  %v307 = vld [vmem:[#allocation2 + $0x218] sm:$0xff]
  %v308 = vld [vmem:[#allocation2 + $0x228] sm:$0xff]
  %v309 = vld [vmem:[#allocation2 + $0x230] sm:$0xff]
  %v310 = vld [vmem:[#allocation2 + $0x240] sm:$0xff]
  %v311 = vld [vmem:[#allocation2 + $0x248] sm:$0xff]
  %v312 = vld [vmem:[#allocation2 + $0x258] sm:$0xff]
  %v313 = vld [vmem:[#allocation2 + $0x260] sm:$0xff]
  %v314 = vld [vmem:[#allocation2 + $0x270] sm:$0xff]
  %v315 = vld [vmem:[#allocation2 + $0x278] sm:$0xff]
  %v316 = vld [vmem:[#allocation2 + $0x288] sm:$0xff]
  %v317 = vld [vmem:[#allocation2 + $0x290] sm:$0xff]
  %v318 = vld [vmem:[#allocation2 + $0x2a0] sm:$0xff]
  %v319 = vld [vmem:[#allocation2 + $0x2a8] sm:$0xff]
  %v320 = vld [vmem:[#allocation2 + $0x2b8] sm:$0xff]
  %v321 = vld [vmem:[#allocation2 + $0x2c0] sm:$0xff]
  %v322 = vld [vmem:[#allocation2 + $0x2d0] sm:$0xff]
  %v323 = vld [vmem:[#allocation2 + $0x2d8] sm:$0xff]
  %v324 = vld [vmem:[#allocation2 + $0x2e8] sm:$0xff]
  %v325 = vld [vmem:[#allocation2 + $0x2f0] sm:$0xff]
  %v326 = vld [vmem:[#allocation2 + $0x300] sm:$0xff]
  %v327 = vld [vmem:[#allocation2 + $0x308] sm:$0xff]
  %v328 = vld [vmem:[#allocation2 + $0x318] sm:$0xff]
  %v329 = vld [vmem:[#allocation2 + $0x320] sm:$0xff]
  %v330 = vpack.c.bf16 %v267, %v266
  %v331 = vpack.c.bf16 %v269, %v268
  %v332 = vpack.c.bf16 %v271, %v270
  %v333 = vpack.c.bf16 %v273, %v272
  %v334 = vpack.c.bf16 %v275, %v274
  %v335 = vpack.c.bf16 %v277, %v276
  %v336 = vpack.c.bf16 %v279, %v278
  %v337 = vpack.c.bf16 %v281, %v280
  %v338 = vpack.c.bf16 %v283, %v282
  %v339 = vpack.c.bf16 %v285, %v284
  %v340 = vpack.c.bf16 %v287, %v286
  %v341 = vpack.c.bf16 %v289, %v288
  %v342 = vpack.c.bf16 %v291, %v290
  %v343 = vpack.c.bf16 %v293, %v292
  %v344 = vpack.c.bf16 %v295, %v294
  %v345 = vpack.c.bf16 %v297, %v296
  %v346 = vpack.c.bf16 %v299, %v298
  %v347 = vpack.c.bf16 %v301, %v300
  %v348 = vpack.c.bf16 %v303, %v302
  %v349 = vpack.c.bf16 %v305, %v304
  %v350 = vpack.c.bf16 %v307, %v306
  %v351 = vpack.c.bf16 %v309, %v308
  %v352 = vpack.c.bf16 %v311, %v310
  %v353 = vpack.c.bf16 %v313, %v312
  %v354 = vpack.c.bf16 %v315, %v314
  %v355 = vpack.c.bf16 %v317, %v316
  %v356 = vpack.c.bf16 %v319, %v318
  %v357 = vpack.c.bf16 %v321, %v320
  %v358 = vpack.c.bf16 %v323, %v322
  %v359 = vpack.c.bf16 %v325, %v324
  %v360 = vpack.c.bf16 %v327, %v326
  %v361 = vpack.c.bf16 %v329, %v328
  %362 = vst.msk [vmem:[#allocation3] sm:$0xff] %vm27, %v330
  %363 = vst.msk [vmem:[#allocation3 + $0x8] sm:$0xff] %vm27, %v331
  %364 = vst.msk [vmem:[#allocation3 + $0x10] sm:$0xff] %vm27, %v332
  %365 = vst.msk [vmem:[#allocation3 + $0x18] sm:$0xff] %vm27, %v333
  %366 = vst.msk [vmem:[#allocation3 + $0x20] sm:$0xff] %vm27, %v334
  %367 = vst.msk [vmem:[#allocation3 + $0x28] sm:$0xff] %vm27, %v335
  %368 = vst.msk [vmem:[#allocation3 + $0x30] sm:$0xff] %vm27, %v336
  %369 = vst.msk [vmem:[#allocation3 + $0x38] sm:$0xff] %vm27, %v337
  %370 = vst.msk [vmem:[#allocation3 + $0x40] sm:$0xff] %vm27, %v338
  %371 = vst.msk [vmem:[#allocation3 + $0x48] sm:$0xff] %vm27, %v339
  %372 = vst.msk [vmem:[#allocation3 + $0x50] sm:$0xff] %vm27, %v340
  %373 = vst.msk [vmem:[#allocation3 + $0x58] sm:$0xff] %vm27, %v341
  %374 = vst.msk [vmem:[#allocation3 + $0x60] sm:$0xff] %vm27, %v342
  %375 = vst.msk [vmem:[#allocation3 + $0x68] sm:$0xff] %vm27, %v343
  %376 = vst.msk [vmem:[#allocation3 + $0x70] sm:$0xff] %vm27, %v344
  %377 = vst.msk [vmem:[#allocation3 + $0x78] sm:$0xff] %vm27, %v345
  %378 = vst.msk [vmem:[#allocation3 + $0x80] sm:$0xff] %vm27, %v346
  %379 = vst.msk [vmem:[#allocation3 + $0x88] sm:$0xff] %vm27, %v347
  %380 = vst.msk [vmem:[#allocation3 + $0x90] sm:$0xff] %vm27, %v348
  %381 = vst.msk [vmem:[#allocation3 + $0x98] sm:$0xff] %vm27, %v349
  %382 = vst.msk [vmem:[#allocation3 + $0xa0] sm:$0xff] %vm27, %v350
  %383 = vst.msk [vmem:[#allocation3 + $0xa8] sm:$0xff] %vm27, %v351
  %384 = vst.msk [vmem:[#allocation3 + $0xb0] sm:$0xff] %vm27, %v352
  %385 = vst.msk [vmem:[#allocation3 + $0xb8] sm:$0xff] %vm27, %v353
  %386 = vst.msk [vmem:[#allocation3 + $0xc0] sm:$0xff] %vm27, %v354
  %387 = vst.msk [vmem:[#allocation3 + $0xc8] sm:$0xff] %vm27, %v355
  %388 = vst.msk [vmem:[#allocation3 + $0xd0] sm:$0xff] %vm27, %v356
  %389 = vst.msk [vmem:[#allocation3 + $0xd8] sm:$0xff] %vm27, %v357
  %390 = vst.msk [vmem:[#allocation3 + $0xe0] sm:$0xff] %vm27, %v358
  %391 = vst.msk [vmem:[#allocation3 + $0xe8] sm:$0xff] %vm27, %v359
  %392 = vst.msk [vmem:[#allocation3 + $0xf0] sm:$0xff] %vm27, %v360
  %393 = vst.msk [vmem:[#allocation3 + $0xf8] sm:$0xff] %vm27, %v361
  %v394 = vld [vmem:[#allocation2 + $0x1] sm:$0xff]
  %v395 = vld [vmem:[#allocation2 + $0x9] sm:$0xff]
  %v396 = vld [vmem:[#allocation2 + $0x19] sm:$0xff]
  %v397 = vld [vmem:[#allocation2 + $0x21] sm:$0xff]
  %v398 = vld [vmem:[#allocation2 + $0x31] sm:$0xff]
  %v399 = vld [vmem:[#allocation2 + $0x39] sm:$0xff]
  %v400 = vld [vmem:[#allocation2 + $0x49] sm:$0xff]
  %v401 = vld [vmem:[#allocation2 + $0x51] sm:$0xff]
  %v402 = vld [vmem:[#allocation2 + $0x61] sm:$0xff]
  %v403 = vld [vmem:[#allocation2 + $0x69] sm:$0xff]
  %v404 = vld [vmem:[#allocation2 + $0x79] sm:$0xff]
  %v405 = vld [vmem:[#allocation2 + $0x81] sm:$0xff]
  %v406 = vld [vmem:[#allocation2 + $0x91] sm:$0xff]
  %v407 = vld [vmem:[#allocation2 + $0x99] sm:$0xff]
  %v408 = vld [vmem:[#allocation2 + $0xa9] sm:$0xff]
  %v409 = vld [vmem:[#allocation2 + $0xb1] sm:$0xff]
  %v410 = vld [vmem:[#allocation2 + $0xc1] sm:$0xff]
  %v411 = vld [vmem:[#allocation2 + $0xc9] sm:$0xff]
  %v412 = vld [vmem:[#allocation2 + $0xd9] sm:$0xff]
  %v413 = vld [vmem:[#allocation2 + $0xe1] sm:$0xff]
  %v414 = vld [vmem:[#allocation2 + $0xf1] sm:$0xff]
  %v415 = vld [vmem:[#allocation2 + $0xf9] sm:$0xff]
  %v416 = vld [vmem:[#allocation2 + $0x109] sm:$0xff]
  %v417 = vld [vmem:[#allocation2 + $0x111] sm:$0xff]
  %v418 = vld [vmem:[#allocation2 + $0x121] sm:$0xff]
  %v419 = vld [vmem:[#allocation2 + $0x129] sm:$0xff]
  %v420 = vld [vmem:[#allocation2 + $0x139] sm:$0xff]
  %v421 = vld [vmem:[#allocation2 + $0x141] sm:$0xff]
  %v422 = vld [vmem:[#allocation2 + $0x151] sm:$0xff]
  %v423 = vld [vmem:[#allocation2 + $0x159] sm:$0xff]
  %v424 = vld [vmem:[#allocation2 + $0x169] sm:$0xff]
  %v425 = vld [vmem:[#allocation2 + $0x171] sm:$0xff]
  %v426 = vld [vmem:[#allocation2 + $0x1b1] sm:$0xff]
  %v427 = vld [vmem:[#allocation2 + $0x1b9] sm:$0xff]
  %v428 = vld [vmem:[#allocation2 + $0x1c9] sm:$0xff]
  %v429 = vld [vmem:[#allocation2 + $0x1d1] sm:$0xff]
  %v430 = vld [vmem:[#allocation2 + $0x1e1] sm:$0xff]
  %v431 = vld [vmem:[#allocation2 + $0x1e9] sm:$0xff]
  %v432 = vld [vmem:[#allocation2 + $0x1f9] sm:$0xff]
  %v433 = vld [vmem:[#allocation2 + $0x201] sm:$0xff]
  %v434 = vld [vmem:[#allocation2 + $0x211] sm:$0xff]
  %v435 = vld [vmem:[#allocation2 + $0x219] sm:$0xff]
  %v436 = vld [vmem:[#allocation2 + $0x229] sm:$0xff]
  %v437 = vld [vmem:[#allocation2 + $0x231] sm:$0xff]
  %v438 = vld [vmem:[#allocation2 + $0x241] sm:$0xff]
  %v439 = vld [vmem:[#allocation2 + $0x249] sm:$0xff]
  %v440 = vld [vmem:[#allocation2 + $0x259] sm:$0xff]
  %v441 = vld [vmem:[#allocation2 + $0x261] sm:$0xff]
  %v442 = vld [vmem:[#allocation2 + $0x271] sm:$0xff]
  %v443 = vld [vmem:[#allocation2 + $0x279] sm:$0xff]
  %v444 = vld [vmem:[#allocation2 + $0x289] sm:$0xff]
  %v445 = vld [vmem:[#allocation2 + $0x291] sm:$0xff]
  %v446 = vld [vmem:[#allocation2 + $0x2a1] sm:$0xff]
  %v447 = vld [vmem:[#allocation2 + $0x2a9] sm:$0xff]
  %v448 = vld [vmem:[#allocation2 + $0x2b9] sm:$0xff]
  %v449 = vld [vmem:[#allocation2 + $0x2c1] sm:$0xff]
  %v450 = vld [vmem:[#allocation2 + $0x2d1] sm:$0xff]
  %v451 = vld [vmem:[#allocation2 + $0x2d9] sm:$0xff]
  %v452 = vld [vmem:[#allocation2 + $0x2e9] sm:$0xff]
  %v453 = vld [vmem:[#allocation2 + $0x2f1] sm:$0xff]
  %v454 = vld [vmem:[#allocation2 + $0x301] sm:$0xff]
  %v455 = vld [vmem:[#allocation2 + $0x309] sm:$0xff]
  %v456 = vld [vmem:[#allocation2 + $0x319] sm:$0xff]
  %v457 = vld [vmem:[#allocation2 + $0x321] sm:$0xff]
  %v458 = vpack.c.bf16 %v395, %v394
  %v459 = vpack.c.bf16 %v397, %v396
  %v460 = vpack.c.bf16 %v399, %v398
  %v461 = vpack.c.bf16 %v401, %v400
  %v462 = vpack.c.bf16 %v403, %v402
  %v463 = vpack.c.bf16 %v405, %v404
  %v464 = vpack.c.bf16 %v407, %v406
  %v465 = vpack.c.bf16 %v409, %v408
  %v466 = vpack.c.bf16 %v411, %v410
  %v467 = vpack.c.bf16 %v413, %v412
  %v468 = vpack.c.bf16 %v415, %v414
  %v469 = vpack.c.bf16 %v417, %v416
  %v470 = vpack.c.bf16 %v419, %v418
  %v471 = vpack.c.bf16 %v421, %v420
  %v472 = vpack.c.bf16 %v423, %v422
  %v473 = vpack.c.bf16 %v425, %v424
  %v474 = vpack.c.bf16 %v427, %v426
  %v475 = vpack.c.bf16 %v429, %v428
  %v476 = vpack.c.bf16 %v431, %v430
  %v477 = vpack.c.bf16 %v433, %v432
  %v478 = vpack.c.bf16 %v435, %v434
  %v479 = vpack.c.bf16 %v437, %v436
  %v480 = vpack.c.bf16 %v439, %v438
  %v481 = vpack.c.bf16 %v441, %v440
  %v482 = vpack.c.bf16 %v443, %v442
  %v483 = vpack.c.bf16 %v445, %v444
  %v484 = vpack.c.bf16 %v447, %v446
  %v485 = vpack.c.bf16 %v449, %v448
  %v486 = vpack.c.bf16 %v451, %v450
  %v487 = vpack.c.bf16 %v453, %v452
  %v488 = vpack.c.bf16 %v455, %v454
  %v489 = vpack.c.bf16 %v457, %v456
  %522 = vrot.lane.b32.xlu0 %v458, 4
  %v523 = vpop.permute.xlu0 %522
  %524 = vrot.lane.b32.xlu0 %v459, 4
  %v525 = vpop.permute.xlu0 %524
  %526 = vrot.lane.b32.xlu0 %v460, 4
  %v527 = vpop.permute.xlu0 %526
  %528 = vrot.lane.b32.xlu0 %v461, 4
  %v529 = vpop.permute.xlu0 %528
  %530 = vrot.lane.b32.xlu0 %v462, 4
  %v531 = vpop.permute.xlu0 %530
  %532 = vrot.lane.b32.xlu0 %v463, 4
  %v533 = vpop.permute.xlu0 %532
  %534 = vrot.lane.b32.xlu0 %v464, 4
  %v535 = vpop.permute.xlu0 %534
  %536 = vrot.lane.b32.xlu0 %v465, 4
  %v537 = vpop.permute.xlu0 %536
  %538 = vrot.lane.b32.xlu0 %v466, 4
  %v539 = vpop.permute.xlu0 %538
  %540 = vrot.lane.b32.xlu0 %v467, 4
  %v541 = vpop.permute.xlu0 %540
  %542 = vrot.lane.b32.xlu0 %v468, 4
  %v543 = vpop.permute.xlu0 %542
  %544 = vrot.lane.b32.xlu0 %v469, 4
  %v545 = vpop.permute.xlu0 %544
  %546 = vrot.lane.b32.xlu0 %v470, 4
  %v547 = vpop.permute.xlu0 %546
  %548 = vrot.lane.b32.xlu0 %v471, 4
  %v549 = vpop.permute.xlu0 %548
  %550 = vrot.lane.b32.xlu0 %v472, 4
  %v551 = vpop.permute.xlu0 %550
  %552 = vrot.lane.b32.xlu0 %v473, 4
  %v553 = vpop.permute.xlu0 %552
  %554 = vrot.lane.b32.xlu0 %v474, 4
  %v555 = vpop.permute.xlu0 %554
  %556 = vrot.lane.b32.xlu0 %v475, 4
  %v557 = vpop.permute.xlu0 %556
  %558 = vrot.lane.b32.xlu0 %v476, 4
  %v559 = vpop.permute.xlu0 %558
  %560 = vrot.lane.b32.xlu0 %v477, 4
  %v561 = vpop.permute.xlu0 %560
  %562 = vrot.lane.b32.xlu0 %v478, 4
  %v563 = vpop.permute.xlu0 %562
  %564 = vrot.lane.b32.xlu0 %v479, 4
  %v565 = vpop.permute.xlu0 %564
  %566 = vrot.lane.b32.xlu0 %v480, 4
  %v567 = vpop.permute.xlu0 %566
  %568 = vrot.lane.b32.xlu0 %v481, 4
  %v569 = vpop.permute.xlu0 %568
  %570 = vrot.lane.b32.xlu0 %v482, 4
  %v571 = vpop.permute.xlu0 %570
  %572 = vrot.lane.b32.xlu0 %v483, 4
  %v573 = vpop.permute.xlu0 %572
  %574 = vrot.lane.b32.xlu0 %v484, 4
  %v575 = vpop.permute.xlu0 %574
  %576 = vrot.lane.b32.xlu0 %v485, 4
  %v577 = vpop.permute.xlu0 %576
  %578 = vrot.lane.b32.xlu0 %v486, 4
  %v579 = vpop.permute.xlu0 %578
  %580 = vrot.lane.b32.xlu0 %v487, 4
  %v581 = vpop.permute.xlu0 %580
  %582 = vrot.lane.b32.xlu0 %v488, 4
  %v583 = vpop.permute.xlu0 %582
  %584 = vrot.lane.b32.xlu0 %v489, 4
  %v585 = vpop.permute.xlu0 %584
  %vm618 = vcmask 64544
  %619 = vst.msk [vmem:[#allocation3] sm:$0xff] %vm618, %v523
  %620 = vst.msk [vmem:[#allocation3 + $0x8] sm:$0xff] %vm618, %v525
  %621 = vst.msk [vmem:[#allocation3 + $0x10] sm:$0xff] %vm618, %v527
  %622 = vst.msk [vmem:[#allocation3 + $0x18] sm:$0xff] %vm618, %v529
  %623 = vst.msk [vmem:[#allocation3 + $0x20] sm:$0xff] %vm618, %v531
  %624 = vst.msk [vmem:[#allocation3 + $0x28] sm:$0xff] %vm618, %v533
  %625 = vst.msk [vmem:[#allocation3 + $0x30] sm:$0xff] %vm618, %v535
  %626 = vst.msk [vmem:[#allocation3 + $0x38] sm:$0xff] %vm618, %v537
  %627 = vst.msk [vmem:[#allocation3 + $0x40] sm:$0xff] %vm618, %v539
  %628 = vst.msk [vmem:[#allocation3 + $0x48] sm:$0xff] %vm618, %v541
  %629 = vst.msk [vmem:[#allocation3 + $0x50] sm:$0xff] %vm618, %v543
  %630 = vst.msk [vmem:[#allocation3 + $0x58] sm:$0xff] %vm618, %v545
  %631 = vst.msk [vmem:[#allocation3 + $0x60] sm:$0xff] %vm618, %v547
  %632 = vst.msk [vmem:[#allocation3 + $0x68] sm:$0xff] %vm618, %v549
  %633 = vst.msk [vmem:[#allocation3 + $0x70] sm:$0xff] %vm618, %v551
  %634 = vst.msk [vmem:[#allocation3 + $0x78] sm:$0xff] %vm618, %v553
  %635 = vst.msk [vmem:[#allocation3 + $0x80] sm:$0xff] %vm618, %v555
  %636 = vst.msk [vmem:[#allocation3 + $0x88] sm:$0xff] %vm618, %v557
  %637 = vst.msk [vmem:[#allocation3 + $0x90] sm:$0xff] %vm618, %v559
  %638 = vst.msk [vmem:[#allocation3 + $0x98] sm:$0xff] %vm618, %v561
  %639 = vst.msk [vmem:[#allocation3 + $0xa0] sm:$0xff] %vm618, %v563
  %640 = vst.msk [vmem:[#allocation3 + $0xa8] sm:$0xff] %vm618, %v565
  %641 = vst.msk [vmem:[#allocation3 + $0xb0] sm:$0xff] %vm618, %v567
  %642 = vst.msk [vmem:[#allocation3 + $0xb8] sm:$0xff] %vm618, %v569
  %643 = vst.msk [vmem:[#allocation3 + $0xc0] sm:$0xff] %vm618, %v571
  %644 = vst.msk [vmem:[#allocation3 + $0xc8] sm:$0xff] %vm618, %v573
  %645 = vst.msk [vmem:[#allocation3 + $0xd0] sm:$0xff] %vm618, %v575
  %646 = vst.msk [vmem:[#allocation3 + $0xd8] sm:$0xff] %vm618, %v577
  %647 = vst.msk [vmem:[#allocation3 + $0xe0] sm:$0xff] %vm618, %v579
  %648 = vst.msk [vmem:[#allocation3 + $0xe8] sm:$0xff] %vm618, %v581
  %649 = vst.msk [vmem:[#allocation3 + $0xf0] sm:$0xff] %vm618, %v583
  %650 = vst.msk [vmem:[#allocation3 + $0xf8] sm:$0xff] %vm618, %v585
  %v651 = vld [vmem:[#allocation2 + $0x2] sm:$0xff]
  %v652 = vld [vmem:[#allocation2 + $0xa] sm:$0xff]
  %v653 = vld [vmem:[#allocation2 + $0x1a] sm:$0xff]
  %v654 = vld [vmem:[#allocation2 + $0x22] sm:$0xff]
  %v655 = vld [vmem:[#allocation2 + $0x32] sm:$0xff]
  %v656 = vld [vmem:[#allocation2 + $0x3a] sm:$0xff]
  %v657 = vld [vmem:[#allocation2 + $0x4a] sm:$0xff]
  %v658 = vld [vmem:[#allocation2 + $0x52] sm:$0xff]
  %v659 = vld [vmem:[#allocation2 + $0x62] sm:$0xff]
  %v660 = vld [vmem:[#allocation2 + $0x6a] sm:$0xff]
  %v661 = vld [vmem:[#allocation2 + $0x7a] sm:$0xff]
  %v662 = vld [vmem:[#allocation2 + $0x82] sm:$0xff]
  %v663 = vld [vmem:[#allocation2 + $0x92] sm:$0xff]
  %v664 = vld [vmem:[#allocation2 + $0x9a] sm:$0xff]
  %v665 = vld [vmem:[#allocation2 + $0xaa] sm:$0xff]
  %v666 = vld [vmem:[#allocation2 + $0xb2] sm:$0xff]
  %v667 = vld [vmem:[#allocation2 + $0xc2] sm:$0xff]
  %v668 = vld [vmem:[#allocation2 + $0xca] sm:$0xff]
  %v669 = vld [vmem:[#allocation2 + $0xda] sm:$0xff]
  %v670 = vld [vmem:[#allocation2 + $0xe2] sm:$0xff]
  %v671 = vld [vmem:[#allocation2 + $0xf2] sm:$0xff]
  %v672 = vld [vmem:[#allocation2 + $0xfa] sm:$0xff]
  %v673 = vld [vmem:[#allocation2 + $0x10a] sm:$0xff]
  %v674 = vld [vmem:[#allocation2 + $0x112] sm:$0xff]
  %v675 = vld [vmem:[#allocation2 + $0x122] sm:$0xff]
  %v676 = vld [vmem:[#allocation2 + $0x12a] sm:$0xff]
  %v677 = vld [vmem:[#allocation2 + $0x13a] sm:$0xff]
  %v678 = vld [vmem:[#allocation2 + $0x142] sm:$0xff]
  %v679 = vld [vmem:[#allocation2 + $0x152] sm:$0xff]
  %v680 = vld [vmem:[#allocation2 + $0x15a] sm:$0xff]
  %v681 = vld [vmem:[#allocation2 + $0x16a] sm:$0xff]
  %v682 = vld [vmem:[#allocation2 + $0x172] sm:$0xff]
  %v683 = vld [vmem:[#allocation2 + $0x1b2] sm:$0xff]
  %v684 = vld [vmem:[#allocation2 + $0x1ba] sm:$0xff]
  %v685 = vld [vmem:[#allocation2 + $0x1ca] sm:$0xff]
  %v686 = vld [vmem:[#allocation2 + $0x1d2] sm:$0xff]
  %v687 = vld [vmem:[#allocation2 + $0x1e2] sm:$0xff]
  %v688 = vld [vmem:[#allocation2 + $0x1ea] sm:$0xff]
  %v689 = vld [vmem:[#allocation2 + $0x1fa] sm:$0xff]
  %v690 = vld [vmem:[#allocation2 + $0x202] sm:$0xff]
  %v691 = vld [vmem:[#allocation2 + $0x212] sm:$0xff]
  %v692 = vld [vmem:[#allocation2 + $0x21a] sm:$0xff]
  %v693 = vld [vmem:[#allocation2 + $0x22a] sm:$0xff]
  %v694 = vld [vmem:[#allocation2 + $0x232] sm:$0xff]
  %v695 = vld [vmem:[#allocation2 + $0x242] sm:$0xff]
  %v696 = vld [vmem:[#allocation2 + $0x24a] sm:$0xff]
  %v697 = vld [vmem:[#allocation2 + $0x25a] sm:$0xff]
  %v698 = vld [vmem:[#allocation2 + $0x262] sm:$0xff]
  %v699 = vld [vmem:[#allocation2 + $0x272] sm:$0xff]
  %v700 = vld [vmem:[#allocation2 + $0x27a] sm:$0xff]
  %v701 = vld [vmem:[#allocation2 + $0x28a] sm:$0xff]
  %v702 = vld [vmem:[#allocation2 + $0x292] sm:$0xff]
  %v703 = vld [vmem:[#allocation2 + $0x2a2] sm:$0xff]
  %v704 = vld [vmem:[#allocation2 + $0x2aa] sm:$0xff]
  %v705 = vld [vmem:[#allocation2 + $0x2ba] sm:$0xff]
  %v706 = vld [vmem:[#allocation2 + $0x2c2] sm:$0xff]
  %v707 = vld [vmem:[#allocation2 + $0x2d2] sm:$0xff]
  %v708 = vld [vmem:[#allocation2 + $0x2da] sm:$0xff]
  %v709 = vld [vmem:[#allocation2 + $0x2ea] sm:$0xff]
  %v710 = vld [vmem:[#allocation2 + $0x2f2] sm:$0xff]
  %v711 = vld [vmem:[#allocation2 + $0x302] sm:$0xff]
  %v712 = vld [vmem:[#allocation2 + $0x30a] sm:$0xff]
  %v713 = vld [vmem:[#allocation2 + $0x31a] sm:$0xff]
  %v714 = vld [vmem:[#allocation2 + $0x322] sm:$0xff]
  %v715 = vpack.c.bf16 %v652, %v651
  %v716 = vpack.c.bf16 %v654, %v653
  %v717 = vpack.c.bf16 %v656, %v655
  %v718 = vpack.c.bf16 %v658, %v657
  %v719 = vpack.c.bf16 %v660, %v659
  %v720 = vpack.c.bf16 %v662, %v661
  %v721 = vpack.c.bf16 %v664, %v663
  %v722 = vpack.c.bf16 %v666, %v665
  %v723 = vpack.c.bf16 %v668, %v667
  %v724 = vpack.c.bf16 %v670, %v669
  %v725 = vpack.c.bf16 %v672, %v671
  %v726 = vpack.c.bf16 %v674, %v673
  %v727 = vpack.c.bf16 %v676, %v675
  %v728 = vpack.c.bf16 %v678, %v677
  %v729 = vpack.c.bf16 %v680, %v679
  %v730 = vpack.c.bf16 %v682, %v681
  %v731 = vpack.c.bf16 %v684, %v683
  %v732 = vpack.c.bf16 %v686, %v685
  %v733 = vpack.c.bf16 %v688, %v687
  %v734 = vpack.c.bf16 %v690, %v689
  %v735 = vpack.c.bf16 %v692, %v691
  %v736 = vpack.c.bf16 %v694, %v693
  %v737 = vpack.c.bf16 %v696, %v695
  %v738 = vpack.c.bf16 %v698, %v697
  %v739 = vpack.c.bf16 %v700, %v699
  %v740 = vpack.c.bf16 %v702, %v701
  %v741 = vpack.c.bf16 %v704, %v703
  %v742 = vpack.c.bf16 %v706, %v705
  %v743 = vpack.c.bf16 %v708, %v707
  %v744 = vpack.c.bf16 %v710, %v709
  %v745 = vpack.c.bf16 %v712, %v711
  %v746 = vpack.c.bf16 %v714, %v713
  %779 = vrot.lane.b32.xlu0 %v715, 8
  %v780 = vpop.permute.xlu0 %779
  %781 = vrot.lane.b32.xlu0 %v716, 8
  %v782 = vpop.permute.xlu0 %781
  %783 = vrot.lane.b32.xlu0 %v717, 8
  %v784 = vpop.permute.xlu0 %783
  %785 = vrot.lane.b32.xlu0 %v718, 8
  %v786 = vpop.permute.xlu0 %785
  %787 = vrot.lane.b32.xlu0 %v719, 8
  %v788 = vpop.permute.xlu0 %787
  %789 = vrot.lane.b32.xlu0 %v720, 8
  %v790 = vpop.permute.xlu0 %789
  %791 = vrot.lane.b32.xlu0 %v721, 8
  %v792 = vpop.permute.xlu0 %791
  %793 = vrot.lane.b32.xlu0 %v722, 8
  %v794 = vpop.permute.xlu0 %793
  %795 = vrot.lane.b32.xlu0 %v723, 8
  %v796 = vpop.permute.xlu0 %795
  %797 = vrot.lane.b32.xlu0 %v724, 8
  %v798 = vpop.permute.xlu0 %797
  %799 = vrot.lane.b32.xlu0 %v725, 8
  %v800 = vpop.permute.xlu0 %799
  %801 = vrot.lane.b32.xlu0 %v726, 8
  %v802 = vpop.permute.xlu0 %801
  %803 = vrot.lane.b32.xlu0 %v727, 8
  %v804 = vpop.permute.xlu0 %803
  %805 = vrot.lane.b32.xlu0 %v728, 8
  %v806 = vpop.permute.xlu0 %805
  %807 = vrot.lane.b32.xlu0 %v729, 8
  %v808 = vpop.permute.xlu0 %807
  %809 = vrot.lane.b32.xlu0 %v730, 8
  %v810 = vpop.permute.xlu0 %809
  %811 = vrot.lane.b32.xlu0 %v731, 8
  %v812 = vpop.permute.xlu0 %811
  %813 = vrot.lane.b32.xlu0 %v732, 8
  %v814 = vpop.permute.xlu0 %813
  %815 = vrot.lane.b32.xlu0 %v733, 8
  %v816 = vpop.permute.xlu0 %815
  %817 = vrot.lane.b32.xlu0 %v734, 8
  %v818 = vpop.permute.xlu0 %817
  %819 = vrot.lane.b32.xlu0 %v735, 8
  %v820 = vpop.permute.xlu0 %819
  %821 = vrot.lane.b32.xlu0 %v736, 8
  %v822 = vpop.permute.xlu0 %821
  %823 = vrot.lane.b32.xlu0 %v737, 8
  %v824 = vpop.permute.xlu0 %823
  %825 = vrot.lane.b32.xlu0 %v738, 8
  %v826 = vpop.permute.xlu0 %825
  %827 = vrot.lane.b32.xlu0 %v739, 8
  %v828 = vpop.permute.xlu0 %827
  %829 = vrot.lane.b32.xlu0 %v740, 8
  %v830 = vpop.permute.xlu0 %829
  %831 = vrot.lane.b32.xlu0 %v741, 8
  %v832 = vpop.permute.xlu0 %831
  %833 = vrot.lane.b32.xlu0 %v742, 8
  %v834 = vpop.permute.xlu0 %833
  %835 = vrot.lane.b32.xlu0 %v743, 8
  %v836 = vpop.permute.xlu0 %835
  %837 = vrot.lane.b32.xlu0 %v744, 8
  %v838 = vpop.permute.xlu0 %837
  %839 = vrot.lane.b32.xlu0 %v745, 8
  %v840 = vpop.permute.xlu0 %839
  %841 = vrot.lane.b32.xlu0 %v746, 8
  %v842 = vpop.permute.xlu0 %841
  %vm875 = vcmask 97344
  %876 = vst.msk [vmem:[#allocation3] sm:$0xff] %vm875, %v780
  %877 = vst.msk [vmem:[#allocation3 + $0x8] sm:$0xff] %vm875, %v782
  %878 = vst.msk [vmem:[#allocation3 + $0x10] sm:$0xff] %vm875, %v784
  %879 = vst.msk [vmem:[#allocation3 + $0x18] sm:$0xff] %vm875, %v786
  %880 = vst.msk [vmem:[#allocation3 + $0x20] sm:$0xff] %vm875, %v788
  %881 = vst.msk [vmem:[#allocation3 + $0x28] sm:$0xff] %vm875, %v790
  %882 = vst.msk [vmem:[#allocation3 + $0x30] sm:$0xff] %vm875, %v792
  %883 = vst.msk [vmem:[#allocation3 + $0x38] sm:$0xff] %vm875, %v794
  %884 = vst.msk [vmem:[#allocation3 + $0x40] sm:$0xff] %vm875, %v796
  %885 = vst.msk [vmem:[#allocation3 + $0x48] sm:$0xff] %vm875, %v798
  %886 = vst.msk [vmem:[#allocation3 + $0x50] sm:$0xff] %vm875, %v800
  %887 = vst.msk [vmem:[#allocation3 + $0x58] sm:$0xff] %vm875, %v802
  %888 = vst.msk [vmem:[#allocation3 + $0x60] sm:$0xff] %vm875, %v804
  %889 = vst.msk [vmem:[#allocation3 + $0x68] sm:$0xff] %vm875, %v806
  %890 = vst.msk [vmem:[#allocation3 + $0x70] sm:$0xff] %vm875, %v808
  %891 = vst.msk [vmem:[#allocation3 + $0x78] sm:$0xff] %vm875, %v810
  %892 = vst.msk [vmem:[#allocation3 + $0x80] sm:$0xff] %vm875, %v812
  %893 = vst.msk [vmem:[#allocation3 + $0x88] sm:$0xff] %vm875, %v814
  %894 = vst.msk [vmem:[#allocation3 + $0x90] sm:$0xff] %vm875, %v816
  %895 = vst.msk [vmem:[#allocation3 + $0x98] sm:$0xff] %vm875, %v818
  %896 = vst.msk [vmem:[#allocation3 + $0xa0] sm:$0xff] %vm875, %v820
  %897 = vst.msk [vmem:[#allocation3 + $0xa8] sm:$0xff] %vm875, %v822
  %898 = vst.msk [vmem:[#allocation3 + $0xb0] sm:$0xff] %vm875, %v824
  %899 = vst.msk [vmem:[#allocation3 + $0xb8] sm:$0xff] %vm875, %v826
  %900 = vst.msk [vmem:[#allocation3 + $0xc0] sm:$0xff] %vm875, %v828
  %901 = vst.msk [vmem:[#allocation3 + $0xc8] sm:$0xff] %vm875, %v830
  %902 = vst.msk [vmem:[#allocation3 + $0xd0] sm:$0xff] %vm875, %v832
  %903 = vst.msk [vmem:[#allocation3 + $0xd8] sm:$0xff] %vm875, %v834
  %904 = vst.msk [vmem:[#allocation3 + $0xe0] sm:$0xff] %vm875, %v836
  %905 = vst.msk [vmem:[#allocation3 + $0xe8] sm:$0xff] %vm875, %v838
  %906 = vst.msk [vmem:[#allocation3 + $0xf0] sm:$0xff] %vm875, %v840
  %907 = vst.msk [vmem:[#allocation3 + $0xf8] sm:$0xff] %vm875, %v842
  %v908 = vld [vmem:[%s201] sm:$0xff]
  %v909 = vld [vmem:[%s201 + $0x8] sm:$0xff]
  %v910 = vld [vmem:[%s201 + $0x18] sm:$0xff]
  %v911 = vld [vmem:[%s201 + $0x20] sm:$0xff]
  %v912 = vld [vmem:[%s201 + $0x30] sm:$0xff]
  %v913 = vld [vmem:[%s201 + $0x38] sm:$0xff]
  %v914 = vld [vmem:[%s201 + $0x48] sm:$0xff]
  %v915 = vld [vmem:[%s201 + $0x50] sm:$0xff]
  %v916 = vld [vmem:[%s201 + $0x60] sm:$0xff]
  %v917 = vld [vmem:[%s201 + $0x68] sm:$0xff]
  %v918 = vld [vmem:[%s201 + $0x78] sm:$0xff]
  %v919 = vld [vmem:[%s201 + $0x80] sm:$0xff]
  %v920 = vld [vmem:[%s201 + $0x90] sm:$0xff]
  %v921 = vld [vmem:[%s201 + $0x98] sm:$0xff]
  %v922 = vld [vmem:[%s201 + $0xa8] sm:$0xff]
  %v923 = vld [vmem:[%s201 + $0xb0] sm:$0xff]
  %v924 = vld [vmem:[%s201 + $0xc0] sm:$0xff]
  %v925 = vld [vmem:[%s201 + $0xc8] sm:$0xff]
  %v926 = vld [vmem:[%s201 + $0xd8] sm:$0xff]
  %v927 = vld [vmem:[%s201 + $0xe0] sm:$0xff]
  %v928 = vld [vmem:[%s201 + $0xf0] sm:$0xff]
  %v929 = vld [vmem:[%s201 + $0xf8] sm:$0xff]
  %v930 = vld [vmem:[%s201 + $0x108] sm:$0xff]
  %v931 = vld [vmem:[%s201 + $0x110] sm:$0xff]
  %v932 = vld [vmem:[%s201 + $0x120] sm:$0xff]
  %v933 = vld [vmem:[%s201 + $0x128] sm:$0xff]
  %v934 = vld [vmem:[%s201 + $0x138] sm:$0xff]
  %v935 = vld [vmem:[%s201 + $0x140] sm:$0xff]
  %v936 = vld [vmem:[%s201 + $0x150] sm:$0xff]
  %v937 = vld [vmem:[%s201 + $0x158] sm:$0xff]
  %v938 = vld [vmem:[%s201 + $0x168] sm:$0xff]
  %v939 = vld [vmem:[%s201 + $0x170] sm:$0xff]
  %v940 = vld [vmem:[%s201 + $0x1b0] sm:$0xff]
  %v941 = vld [vmem:[%s201 + $0x1b8] sm:$0xff]
  %v942 = vld [vmem:[%s201 + $0x1c8] sm:$0xff]
  %v943 = vld [vmem:[%s201 + $0x1d0] sm:$0xff]
  %v944 = vld [vmem:[%s201 + $0x1e0] sm:$0xff]
  %v945 = vld [vmem:[%s201 + $0x1e8] sm:$0xff]
  %v946 = vld [vmem:[%s201 + $0x1f8] sm:$0xff]
  %v947 = vld [vmem:[%s201 + $0x200] sm:$0xff]
  %v948 = vld [vmem:[%s201 + $0x210] sm:$0xff]
  %v949 = vld [vmem:[%s201 + $0x218] sm:$0xff]
  %v950 = vld [vmem:[%s201 + $0x228] sm:$0xff]
  %v951 = vld [vmem:[%s201 + $0x230] sm:$0xff]
  %v952 = vld [vmem:[%s201 + $0x240] sm:$0xff]
  %v953 = vld [vmem:[%s201 + $0x248] sm:$0xff]
  %v954 = vld [vmem:[%s201 + $0x258] sm:$0xff]
  %v955 = vld [vmem:[%s201 + $0x260] sm:$0xff]
  %v956 = vld [vmem:[%s201 + $0x270] sm:$0xff]
  %v957 = vld [vmem:[%s201 + $0x278] sm:$0xff]
  %v958 = vld [vmem:[%s201 + $0x288] sm:$0xff]
  %v959 = vld [vmem:[%s201 + $0x290] sm:$0xff]
  %v960 = vld [vmem:[%s201 + $0x2a0] sm:$0xff]
  %v961 = vld [vmem:[%s201 + $0x2a8] sm:$0xff]
  %v962 = vld [vmem:[%s201 + $0x2b8] sm:$0xff]
  %v963 = vld [vmem:[%s201 + $0x2c0] sm:$0xff]
  %v964 = vld [vmem:[%s201 + $0x2d0] sm:$0xff]
  %v965 = vld [vmem:[%s201 + $0x2d8] sm:$0xff]
  %v966 = vld [vmem:[%s201 + $0x2e8] sm:$0xff]
  %v967 = vld [vmem:[%s201 + $0x2f0] sm:$0xff]
  %v968 = vld [vmem:[%s201 + $0x300] sm:$0xff]
  %v969 = vld [vmem:[%s201 + $0x308] sm:$0xff]
  %v970 = vld [vmem:[%s201 + $0x318] sm:$0xff]
  %v971 = vld [vmem:[%s201 + $0x320] sm:$0xff]
  %v972 = vpack.c.bf16 %v909, %v908
  %v973 = vpack.c.bf16 %v911, %v910
  %v974 = vpack.c.bf16 %v913, %v912
  %v975 = vpack.c.bf16 %v915, %v914
  %v976 = vpack.c.bf16 %v917, %v916
  %v977 = vpack.c.bf16 %v919, %v918
  %v978 = vpack.c.bf16 %v921, %v920
  %v979 = vpack.c.bf16 %v923, %v922
  %v980 = vpack.c.bf16 %v925, %v924
  %v981 = vpack.c.bf16 %v927, %v926
  %v982 = vpack.c.bf16 %v929, %v928
  %v983 = vpack.c.bf16 %v931, %v930
  %v984 = vpack.c.bf16 %v933, %v932
  %v985 = vpack.c.bf16 %v935, %v934
  %v986 = vpack.c.bf16 %v937, %v936
  %v987 = vpack.c.bf16 %v939, %v938
  %v988 = vpack.c.bf16 %v941, %v940
  %v989 = vpack.c.bf16 %v943, %v942
  %v990 = vpack.c.bf16 %v945, %v944
  %v991 = vpack.c.bf16 %v947, %v946
  %v992 = vpack.c.bf16 %v949, %v948
  %v993 = vpack.c.bf16 %v951, %v950
  %v994 = vpack.c.bf16 %v953, %v952
  %v995 = vpack.c.bf16 %v955, %v954
  %v996 = vpack.c.bf16 %v957, %v956
  %v997 = vpack.c.bf16 %v959, %v958
  %v998 = vpack.c.bf16 %v961, %v960
  %v999 = vpack.c.bf16 %v963, %v962
  %v1000 = vpack.c.bf16 %v965, %v964
  %v1001 = vpack.c.bf16 %v967, %v966
  %v1002 = vpack.c.bf16 %v969, %v968
  %v1003 = vpack.c.bf16 %v971, %v970
  %1036 = vrot.lane.b32.xlu0 %v972, 12
  %v1037 = vpop.permute.xlu0 %1036
  %1038 = vrot.lane.b32.xlu0 %v973, 12
  %v1039 = vpop.permute.xlu0 %1038
  %1040 = vrot.lane.b32.xlu0 %v974, 12
  %v1041 = vpop.permute.xlu0 %1040
  %1042 = vrot.lane.b32.xlu0 %v975, 12
  %v1043 = vpop.permute.xlu0 %1042
  %1044 = vrot.lane.b32.xlu0 %v976, 12
  %v1045 = vpop.permute.xlu0 %1044
  %1046 = vrot.lane.b32.xlu0 %v977, 12
  %v1047 = vpop.permute.xlu0 %1046
  %1048 = vrot.lane.b32.xlu0 %v978, 12
  %v1049 = vpop.permute.xlu0 %1048
  %1050 = vrot.lane.b32.xlu0 %v979, 12
  %v1051 = vpop.permute.xlu0 %1050
  %1052 = vrot.lane.b32.xlu0 %v980, 12
  %v1053 = vpop.permute.xlu0 %1052
  %1054 = vrot.lane.b32.xlu0 %v981, 12
  %v1055 = vpop.permute.xlu0 %1054
  %1056 = vrot.lane.b32.xlu0 %v982, 12
  %v1057 = vpop.permute.xlu0 %1056
  %1058 = vrot.lane.b32.xlu0 %v983, 12
  %v1059 = vpop.permute.xlu0 %1058
  %1060 = vrot.lane.b32.xlu0 %v984, 12
  %v1061 = vpop.permute.xlu0 %1060
  %1062 = vrot.lane.b32.xlu0 %v985, 12
  %v1063 = vpop.permute.xlu0 %1062
  %1064 = vrot.lane.b32.xlu0 %v986, 12
  %v1065 = vpop.permute.xlu0 %1064
  %1066 = vrot.lane.b32.xlu0 %v987, 12
  %v1067 = vpop.permute.xlu0 %1066
  %1068 = vrot.lane.b32.xlu0 %v988, 12
  %v1069 = vpop.permute.xlu0 %1068
  %1070 = vrot.lane.b32.xlu0 %v989, 12
  %v1071 = vpop.permute.xlu0 %1070
  %1072 = vrot.lane.b32.xlu0 %v990, 12
  %v1073 = vpop.permute.xlu0 %1072
  %1074 = vrot.lane.b32.xlu0 %v991, 12
  %v1075 = vpop.permute.xlu0 %1074
  %1076 = vrot.lane.b32.xlu0 %v992, 12
  %v1077 = vpop.permute.xlu0 %1076
  %1078 = vrot.lane.b32.xlu0 %v993, 12
  %v1079 = vpop.permute.xlu0 %1078
  %1080 = vrot.lane.b32.xlu0 %v994, 12
  %v1081 = vpop.permute.xlu0 %1080
  %1082 = vrot.lane.b32.xlu0 %v995, 12
  %v1083 = vpop.permute.xlu0 %1082
  %1084 = vrot.lane.b32.xlu0 %v996, 12
  %v1085 = vpop.permute.xlu0 %1084
  %1086 = vrot.lane.b32.xlu0 %v997, 12
  %v1087 = vpop.permute.xlu0 %1086
  %1088 = vrot.lane.b32.xlu0 %v998, 12
  %v1089 = vpop.permute.xlu0 %1088
  %1090 = vrot.lane.b32.xlu0 %v999, 12
  %v1091 = vpop.permute.xlu0 %1090
  %1092 = vrot.lane.b32.xlu0 %v1000, 12
  %v1093 = vpop.permute.xlu0 %1092
  %1094 = vrot.lane.b32.xlu0 %v1001, 12
  %v1095 = vpop.permute.xlu0 %1094
  %1096 = vrot.lane.b32.xlu0 %v1002, 12
  %v1097 = vpop.permute.xlu0 %1096
  %1098 = vrot.lane.b32.xlu0 %v1003, 12
  %v1099 = vpop.permute.xlu0 %1098
  %vm1132 = vcmask 130144
  %1133 = vst.msk [vmem:[#allocation3] sm:$0xff] %vm1132, %v1037
  %1134 = vst.msk [vmem:[#allocation3 + $0x8] sm:$0xff] %vm1132, %v1039
  %1135 = vst.msk [vmem:[#allocation3 + $0x10] sm:$0xff] %vm1132, %v1041
  %1136 = vst.msk [vmem:[#allocation3 + $0x18] sm:$0xff] %vm1132, %v1043
  %1137 = vst.msk [vmem:[#allocation3 + $0x20] sm:$0xff] %vm1132, %v1045
  %1138 = vst.msk [vmem:[#allocation3 + $0x28] sm:$0xff] %vm1132, %v1047
  %1139 = vst.msk [vmem:[#allocation3 + $0x30] sm:$0xff] %vm1132, %v1049
  %1140 = vst.msk [vmem:[#allocation3 + $0x38] sm:$0xff] %vm1132, %v1051
  %1141 = vst.msk [vmem:[#allocation3 + $0x40] sm:$0xff] %vm1132, %v1053
  %1142 = vst.msk [vmem:[#allocation3 + $0x48] sm:$0xff] %vm1132, %v1055
  %1143 = vst.msk [vmem:[#allocation3 + $0x50] sm:$0xff] %vm1132, %v1057
  %1144 = vst.msk [vmem:[#allocation3 + $0x58] sm:$0xff] %vm1132, %v1059
  %1145 = vst.msk [vmem:[#allocation3 + $0x60] sm:$0xff] %vm1132, %v1061
  %1146 = vst.msk [vmem:[#allocation3 + $0x68] sm:$0xff] %vm1132, %v1063
  %1147 = vst.msk [vmem:[#allocation3 + $0x70] sm:$0xff] %vm1132, %v1065
  %1148 = vst.msk [vmem:[#allocation3 + $0x78] sm:$0xff] %vm1132, %v1067
  %1149 = vst.msk [vmem:[#allocation3 + $0x80] sm:$0xff] %vm1132, %v1069
  %1150 = vst.msk [vmem:[#allocation3 + $0x88] sm:$0xff] %vm1132, %v1071
  %1151 = vst.msk [vmem:[#allocation3 + $0x90] sm:$0xff] %vm1132, %v1073
  %1152 = vst.msk [vmem:[#allocation3 + $0x98] sm:$0xff] %vm1132, %v1075
  %1153 = vst.msk [vmem:[#allocation3 + $0xa0] sm:$0xff] %vm1132, %v1077
  %1154 = vst.msk [vmem:[#allocation3 + $0xa8] sm:$0xff] %vm1132, %v1079
  %1155 = vst.msk [vmem:[#allocation3 + $0xb0] sm:$0xff] %vm1132, %v1081
  %1156 = vst.msk [vmem:[#allocation3 + $0xb8] sm:$0xff] %vm1132, %v1083
  %1157 = vst.msk [vmem:[#allocation3 + $0xc0] sm:$0xff] %vm1132, %v1085
  %1158 = vst.msk [vmem:[#allocation3 + $0xc8] sm:$0xff] %vm1132, %v1087
  %1159 = vst.msk [vmem:[#allocation3 + $0xd0] sm:$0xff] %vm1132, %v1089
  %1160 = vst.msk [vmem:[#allocation3 + $0xd8] sm:$0xff] %vm1132, %v1091
  %1161 = vst.msk [vmem:[#allocation3 + $0xe0] sm:$0xff] %vm1132, %v1093
  %1162 = vst.msk [vmem:[#allocation3 + $0xe8] sm:$0xff] %vm1132, %v1095
  %1163 = vst.msk [vmem:[#allocation3 + $0xf0] sm:$0xff] %vm1132, %v1097
  %1164 = vst.msk [vmem:[#allocation3 + $0xf8] sm:$0xff] %vm1132, %v1099
  %v1165 = vld [vmem:[%s201 + $0x1] sm:$0xff]
  %v1166 = vld [vmem:[%s201 + $0x9] sm:$0xff]
  %v1167 = vld [vmem:[%s201 + $0x19] sm:$0xff]
  %v1168 = vld [vmem:[%s201 + $0x21] sm:$0xff]
  %v1169 = vld [vmem:[%s201 + $0x31] sm:$0xff]
  %v1170 = vld [vmem:[%s201 + $0x39] sm:$0xff]
  %v1171 = vld [vmem:[%s201 + $0x49] sm:$0xff]
  %v1172 = vld [vmem:[%s201 + $0x51] sm:$0xff]
  %v1173 = vld [vmem:[%s201 + $0x61] sm:$0xff]
  %v1174 = vld [vmem:[%s201 + $0x69] sm:$0xff]
  %v1175 = vld [vmem:[%s201 + $0x79] sm:$0xff]
  %v1176 = vld [vmem:[%s201 + $0x81] sm:$0xff]
  %v1177 = vld [vmem:[%s201 + $0x91] sm:$0xff]
  %v1178 = vld [vmem:[%s201 + $0x99] sm:$0xff]
  %v1179 = vld [vmem:[%s201 + $0xa9] sm:$0xff]
  %v1180 = vld [vmem:[%s201 + $0xb1] sm:$0xff]
  %v1181 = vld [vmem:[%s201 + $0xc1] sm:$0xff]
  %v1182 = vld [vmem:[%s201 + $0xc9] sm:$0xff]
  %v1183 = vld [vmem:[%s201 + $0xd9] sm:$0xff]
  %v1184 = vld [vmem:[%s201 + $0xe1] sm:$0xff]
  %v1185 = vld [vmem:[%s201 + $0xf1] sm:$0xff]
  %v1186 = vld [vmem:[%s201 + $0xf9] sm:$0xff]
  %v1187 = vld [vmem:[%s201 + $0x109] sm:$0xff]
  %v1188 = vld [vmem:[%s201 + $0x111] sm:$0xff]
  %v1189 = vld [vmem:[%s201 + $0x121] sm:$0xff]
  %v1190 = vld [vmem:[%s201 + $0x129] sm:$0xff]
  %v1191 = vld [vmem:[%s201 + $0x139] sm:$0xff]
  %v1192 = vld [vmem:[%s201 + $0x141] sm:$0xff]
  %v1193 = vld [vmem:[%s201 + $0x151] sm:$0xff]
  %v1194 = vld [vmem:[%s201 + $0x159] sm:$0xff]
  %v1195 = vld [vmem:[%s201 + $0x169] sm:$0xff]
  %v1196 = vld [vmem:[%s201 + $0x171] sm:$0xff]
  %v1197 = vld [vmem:[%s201 + $0x1b1] sm:$0xff]
  %v1198 = vld [vmem:[%s201 + $0x1b9] sm:$0xff]
  %v1199 = vld [vmem:[%s201 + $0x1c9] sm:$0xff]
  %v1200 = vld [vmem:[%s201 + $0x1d1] sm:$0xff]
  %v1201 = vld [vmem:[%s201 + $0x1e1] sm:$0xff]
  %v1202 = vld [vmem:[%s201 + $0x1e9] sm:$0xff]
  %v1203 = vld [vmem:[%s201 + $0x1f9] sm:$0xff]
  %v1204 = vld [vmem:[%s201 + $0x201] sm:$0xff]
  %v1205 = vld [vmem:[%s201 + $0x211] sm:$0xff]
  %v1206 = vld [vmem:[%s201 + $0x219] sm:$0xff]
  %v1207 = vld [vmem:[%s201 + $0x229] sm:$0xff]
  %v1208 = vld [vmem:[%s201 + $0x231] sm:$0xff]
  %v1209 = vld [vmem:[%s201 + $0x241] sm:$0xff]
  %v1210 = vld [vmem:[%s201 + $0x249] sm:$0xff]
  %v1211 = vld [vmem:[%s201 + $0x259] sm:$0xff]
  %v1212 = vld [vmem:[%s201 + $0x261] sm:$0xff]
  %v1213 = vld [vmem:[%s201 + $0x271] sm:$0xff]
  %v1214 = vld [vmem:[%s201 + $0x279] sm:$0xff]
  %v1215 = vld [vmem:[%s201 + $0x289] sm:$0xff]
  %v1216 = vld [vmem:[%s201 + $0x291] sm:$0xff]
  %v1217 = vld [vmem:[%s201 + $0x2a1] sm:$0xff]
  %v1218 = vld [vmem:[%s201 + $0x2a9] sm:$0xff]
  %v1219 = vld [vmem:[%s201 + $0x2b9] sm:$0xff]
  %v1220 = vld [vmem:[%s201 + $0x2c1] sm:$0xff]
  %v1221 = vld [vmem:[%s201 + $0x2d1] sm:$0xff]
  %v1222 = vld [vmem:[%s201 + $0x2d9] sm:$0xff]
  %v1223 = vld [vmem:[%s201 + $0x2e9] sm:$0xff]
  %v1224 = vld [vmem:[%s201 + $0x2f1] sm:$0xff]
  %v1225 = vld [vmem:[%s201 + $0x301] sm:$0xff]
  %v1226 = vld [vmem:[%s201 + $0x309] sm:$0xff]
  %v1227 = vld [vmem:[%s201 + $0x319] sm:$0xff]
  %v1228 = vld [vmem:[%s201 + $0x321] sm:$0xff]
  %v1229 = vpack.c.bf16 %v1166, %v1165
  %v1230 = vpack.c.bf16 %v1168, %v1167
  %v1231 = vpack.c.bf16 %v1170, %v1169
  %v1232 = vpack.c.bf16 %v1172, %v1171
  %v1233 = vpack.c.bf16 %v1174, %v1173
  %v1234 = vpack.c.bf16 %v1176, %v1175
  %v1235 = vpack.c.bf16 %v1178, %v1177
  %v1236 = vpack.c.bf16 %v1180, %v1179
  %v1237 = vpack.c.bf16 %v1182, %v1181
  %v1238 = vpack.c.bf16 %v1184, %v1183
  %v1239 = vpack.c.bf16 %v1186, %v1185
  %v1240 = vpack.c.bf16 %v1188, %v1187
  %v1241 = vpack.c.bf16 %v1190, %v1189
  %v1242 = vpack.c.bf16 %v1192, %v1191
  %v1243 = vpack.c.bf16 %v1194, %v1193
  %v1244 = vpack.c.bf16 %v1196, %v1195
  %v1245 = vpack.c.bf16 %v1198, %v1197
  %v1246 = vpack.c.bf16 %v1200, %v1199
  %v1247 = vpack.c.bf16 %v1202, %v1201
  %v1248 = vpack.c.bf16 %v1204, %v1203
  %v1249 = vpack.c.bf16 %v1206, %v1205
  %v1250 = vpack.c.bf16 %v1208, %v1207
  %v1251 = vpack.c.bf16 %v1210, %v1209
  %v1252 = vpack.c.bf16 %v1212, %v1211
  %v1253 = vpack.c.bf16 %v1214, %v1213
  %v1254 = vpack.c.bf16 %v1216, %v1215
  %v1255 = vpack.c.bf16 %v1218, %v1217
  %v1256 = vpack.c.bf16 %v1220, %v1219
  %v1257 = vpack.c.bf16 %v1222, %v1221
  %v1258 = vpack.c.bf16 %v1224, %v1223
  %v1259 = vpack.c.bf16 %v1226, %v1225
  %v1260 = vpack.c.bf16 %v1228, %v1227
  %1293 = vrot.lane.b32.xlu0 %v1229, 16
  %v1294 = vpop.permute.xlu0 %1293
  %1295 = vrot.lane.b32.xlu0 %v1230, 16
  %v1296 = vpop.permute.xlu0 %1295
  %1297 = vrot.lane.b32.xlu0 %v1231, 16
  %v1298 = vpop.permute.xlu0 %1297
  %1299 = vrot.lane.b32.xlu0 %v1232, 16
  %v1300 = vpop.permute.xlu0 %1299
  %1301 = vrot.lane.b32.xlu0 %v1233, 16
  %v1302 = vpop.permute.xlu0 %1301
  %1303 = vrot.lane.b32.xlu0 %v1234, 16
  %v1304 = vpop.permute.xlu0 %1303
  %1305 = vrot.lane.b32.xlu0 %v1235, 16
  %v1306 = vpop.permute.xlu0 %1305
  %1307 = vrot.lane.b32.xlu0 %v1236, 16
  %v1308 = vpop.permute.xlu0 %1307
  %1309 = vrot.lane.b32.xlu0 %v1237, 16
  %v1310 = vpop.permute.xlu0 %1309
  %1311 = vrot.lane.b32.xlu0 %v1238, 16
  %v1312 = vpop.permute.xlu0 %1311
  %1313 = vrot.lane.b32.xlu0 %v1239, 16
  %v1314 = vpop.permute.xlu0 %1313
  %1315 = vrot.lane.b32.xlu0 %v1240, 16
  %v1316 = vpop.permute.xlu0 %1315
  %1317 = vrot.lane.b32.xlu0 %v1241, 16
  %v1318 = vpop.permute.xlu0 %1317
  %1319 = vrot.lane.b32.xlu0 %v1242, 16
  %v1320 = vpop.permute.xlu0 %1319
  %1321 = vrot.lane.b32.xlu0 %v1243, 16
  %v1322 = vpop.permute.xlu0 %1321
  %1323 = vrot.lane.b32.xlu0 %v1244, 16
  %v1324 = vpop.permute.xlu0 %1323
  %1325 = vrot.lane.b32.xlu0 %v1245, 16
  %v1326 = vpop.permute.xlu0 %1325
  %1327 = vrot.lane.b32.xlu0 %v1246, 16
  %v1328 = vpop.permute.xlu0 %1327
  %1329 = vrot.lane.b32.xlu0 %v1247, 16
  %v1330 = vpop.permute.xlu0 %1329
  %1331 = vrot.lane.b32.xlu0 %v1248, 16
  %v1332 = vpop.permute.xlu0 %1331
  %1333 = vrot.lane.b32.xlu0 %v1249, 16
  %v1334 = vpop.permute.xlu0 %1333
  %1335 = vrot.lane.b32.xlu0 %v1250, 16
  %v1336 = vpop.permute.xlu0 %1335
  %1337 = vrot.lane.b32.xlu0 %v1251, 16
  %v1338 = vpop.permute.xlu0 %1337
  %1339 = vrot.lane.b32.xlu0 %v1252, 16
  %v1340 = vpop.permute.xlu0 %1339
  %1341 = vrot.lane.b32.xlu0 %v1253, 16
  %v1342 = vpop.permute.xlu0 %1341
  %1343 = vrot.lane.b32.xlu0 %v1254, 16
  %v1344 = vpop.permute.xlu0 %1343
  %1345 = vrot.lane.b32.xlu0 %v1255, 16
  %v1346 = vpop.permute.xlu0 %1345
  %1347 = vrot.lane.b32.xlu0 %v1256, 16
  %v1348 = vpop.permute.xlu0 %1347
  %1349 = vrot.lane.b32.xlu0 %v1257, 16
  %v1350 = vpop.permute.xlu0 %1349
  %1351 = vrot.lane.b32.xlu0 %v1258, 16
  %v1352 = vpop.permute.xlu0 %1351
  %1353 = vrot.lane.b32.xlu0 %v1259, 16
  %v1354 = vpop.permute.xlu0 %1353
  %1355 = vrot.lane.b32.xlu0 %v1260, 16
  %v1356 = vpop.permute.xlu0 %1355
  %vm1389 = vcmask 162944
  %1390 = vst.msk [vmem:[#allocation3] sm:$0xff] %vm1389, %v1294
  %1391 = vst.msk [vmem:[#allocation3 + $0x8] sm:$0xff] %vm1389, %v1296
  %1392 = vst.msk [vmem:[#allocation3 + $0x10] sm:$0xff] %vm1389, %v1298
  %1393 = vst.msk [vmem:[#allocation3 + $0x18] sm:$0xff] %vm1389, %v1300
  %1394 = vst.msk [vmem:[#allocation3 + $0x20] sm:$0xff] %vm1389, %v1302
  %1395 = vst.msk [vmem:[#allocation3 + $0x28] sm:$0xff] %vm1389, %v1304
  %1396 = vst.msk [vmem:[#allocation3 + $0x30] sm:$0xff] %vm1389, %v1306
  %1397 = vst.msk [vmem:[#allocation3 + $0x38] sm:$0xff] %vm1389, %v1308
  %1398 = vst.msk [vmem:[#allocation3 + $0x40] sm:$0xff] %vm1389, %v1310
  %1399 = vst.msk [vmem:[#allocation3 + $0x48] sm:$0xff] %vm1389, %v1312
  %1400 = vst.msk [vmem:[#allocation3 + $0x50] sm:$0xff] %vm1389, %v1314
  %1401 = vst.msk [vmem:[#allocation3 + $0x58] sm:$0xff] %vm1389, %v1316
  %1402 = vst.msk [vmem:[#allocation3 + $0x60] sm:$0xff] %vm1389, %v1318
  %1403 = vst.msk [vmem:[#allocation3 + $0x68] sm:$0xff] %vm1389, %v1320
  %1404 = vst.msk [vmem:[#allocation3 + $0x70] sm:$0xff] %vm1389, %v1322
  %1405 = vst.msk [vmem:[#allocation3 + $0x78] sm:$0xff] %vm1389, %v1324
  %1406 = vst.msk [vmem:[#allocation3 + $0x80] sm:$0xff] %vm1389, %v1326
  %1407 = vst.msk [vmem:[#allocation3 + $0x88] sm:$0xff] %vm1389, %v1328
  %1408 = vst.msk [vmem:[#allocation3 + $0x90] sm:$0xff] %vm1389, %v1330
  %1409 = vst.msk [vmem:[#allocation3 + $0x98] sm:$0xff] %vm1389, %v1332
  %1410 = vst.msk [vmem:[#allocation3 + $0xa0] sm:$0xff] %vm1389, %v1334
  %1411 = vst.msk [vmem:[#allocation3 + $0xa8] sm:$0xff] %vm1389, %v1336
  %1412 = vst.msk [vmem:[#allocation3 + $0xb0] sm:$0xff] %vm1389, %v1338
  %1413 = vst.msk [vmem:[#allocation3 + $0xb8] sm:$0xff] %vm1389, %v1340
  %1414 = vst.msk [vmem:[#allocation3 + $0xc0] sm:$0xff] %vm1389, %v1342
  %1415 = vst.msk [vmem:[#allocation3 + $0xc8] sm:$0xff] %vm1389, %v1344
  %1416 = vst.msk [vmem:[#allocation3 + $0xd0] sm:$0xff] %vm1389, %v1346
  %1417 = vst.msk [vmem:[#allocation3 + $0xd8] sm:$0xff] %vm1389, %v1348
  %1418 = vst.msk [vmem:[#allocation3 + $0xe0] sm:$0xff] %vm1389, %v1350
  %1419 = vst.msk [vmem:[#allocation3 + $0xe8] sm:$0xff] %vm1389, %v1352
  %1420 = vst.msk [vmem:[#allocation3 + $0xf0] sm:$0xff] %vm1389, %v1354
  %1421 = vst.msk [vmem:[#allocation3 + $0xf8] sm:$0xff] %vm1389, %v1356
  %v1422 = vld [vmem:[%s201 + $0x2] sm:$0xff]
  %v1423 = vld [vmem:[%s201 + $0xa] sm:$0xff]
  %v1424 = vld [vmem:[%s201 + $0x1a] sm:$0xff]
  %v1425 = vld [vmem:[%s201 + $0x22] sm:$0xff]
  %v1426 = vld [vmem:[%s201 + $0x32] sm:$0xff]
  %v1427 = vld [vmem:[%s201 + $0x3a] sm:$0xff]
  %v1428 = vld [vmem:[%s201 + $0x4a] sm:$0xff]
  %v1429 = vld [vmem:[%s201 + $0x52] sm:$0xff]
  %v1430 = vld [vmem:[%s201 + $0x62] sm:$0xff]
  %v1431 = vld [vmem:[%s201 + $0x6a] sm:$0xff]
  %v1432 = vld [vmem:[%s201 + $0x7a] sm:$0xff]
  %v1433 = vld [vmem:[%s201 + $0x82] sm:$0xff]
  %v1434 = vld [vmem:[%s201 + $0x92] sm:$0xff]
  %v1435 = vld [vmem:[%s201 + $0x9a] sm:$0xff]
  %v1436 = vld [vmem:[%s201 + $0xaa] sm:$0xff]
  %v1437 = vld [vmem:[%s201 + $0xb2] sm:$0xff]
  %v1438 = vld [vmem:[%s201 + $0xc2] sm:$0xff]
  %v1439 = vld [vmem:[%s201 + $0xca] sm:$0xff]
  %v1440 = vld [vmem:[%s201 + $0xda] sm:$0xff]
  %v1441 = vld [vmem:[%s201 + $0xe2] sm:$0xff]
  %v1442 = vld [vmem:[%s201 + $0xf2] sm:$0xff]
  %v1443 = vld [vmem:[%s201 + $0xfa] sm:$0xff]
  %v1444 = vld [vmem:[%s201 + $0x10a] sm:$0xff]
  %v1445 = vld [vmem:[%s201 + $0x112] sm:$0xff]
  %v1446 = vld [vmem:[%s201 + $0x122] sm:$0xff]
  %v1447 = vld [vmem:[%s201 + $0x12a] sm:$0xff]
  %v1448 = vld [vmem:[%s201 + $0x13a] sm:$0xff]
  %v1449 = vld [vmem:[%s201 + $0x142] sm:$0xff]
  %v1450 = vld [vmem:[%s201 + $0x152] sm:$0xff]
  %v1451 = vld [vmem:[%s201 + $0x15a] sm:$0xff]
  %v1452 = vld [vmem:[%s201 + $0x16a] sm:$0xff]
  %v1453 = vld [vmem:[%s201 + $0x172] sm:$0xff]
  %v1454 = vld [vmem:[%s201 + $0x1b2] sm:$0xff]
  %v1455 = vld [vmem:[%s201 + $0x1ba] sm:$0xff]
  %v1456 = vld [vmem:[%s201 + $0x1ca] sm:$0xff]
  %v1457 = vld [vmem:[%s201 + $0x1d2] sm:$0xff]
  %v1458 = vld [vmem:[%s201 + $0x1e2] sm:$0xff]
  %v1459 = vld [vmem:[%s201 + $0x1ea] sm:$0xff]
  %v1460 = vld [vmem:[%s201 + $0x1fa] sm:$0xff]
  %v1461 = vld [vmem:[%s201 + $0x202] sm:$0xff]
  %v1462 = vld [vmem:[%s201 + $0x212] sm:$0xff]
  %v1463 = vld [vmem:[%s201 + $0x21a] sm:$0xff]
  %v1464 = vld [vmem:[%s201 + $0x22a] sm:$0xff]
  %v1465 = vld [vmem:[%s201 + $0x232] sm:$0xff]
  %v1466 = vld [vmem:[%s201 + $0x242] sm:$0xff]
  %v1467 = vld [vmem:[%s201 + $0x24a] sm:$0xff]
  %v1468 = vld [vmem:[%s201 + $0x25a] sm:$0xff]
  %v1469 = vld [vmem:[%s201 + $0x262] sm:$0xff]
  %v1470 = vld [vmem:[%s201 + $0x272] sm:$0xff]
  %v1471 = vld [vmem:[%s201 + $0x27a] sm:$0xff]
  %v1472 = vld [vmem:[%s201 + $0x28a] sm:$0xff]
  %v1473 = vld [vmem:[%s201 + $0x292] sm:$0xff]
  %v1474 = vld [vmem:[%s201 + $0x2a2] sm:$0xff]
  %v1475 = vld [vmem:[%s201 + $0x2aa] sm:$0xff]
  %v1476 = vld [vmem:[%s201 + $0x2ba] sm:$0xff]
  %v1477 = vld [vmem:[%s201 + $0x2c2] sm:$0xff]
  %v1478 = vld [vmem:[%s201 + $0x2d2] sm:$0xff]
  %v1479 = vld [vmem:[%s201 + $0x2da] sm:$0xff]
  %v1480 = vld [vmem:[%s201 + $0x2ea] sm:$0xff]
  %v1481 = vld [vmem:[%s201 + $0x2f2] sm:$0xff]
  %v1482 = vld [vmem:[%s201 + $0x302] sm:$0xff]
  %v1483 = vld [vmem:[%s201 + $0x30a] sm:$0xff]
  %v1484 = vld [vmem:[%s201 + $0x31a] sm:$0xff]
  %v1485 = vld [vmem:[%s201 + $0x322] sm:$0xff]
  %v1486 = vpack.c.bf16 %v1423, %v1422
  %v1487 = vpack.c.bf16 %v1425, %v1424
  %v1488 = vpack.c.bf16 %v1427, %v1426
  %v1489 = vpack.c.bf16 %v1429, %v1428
  %v1490 = vpack.c.bf16 %v1431, %v1430
  %v1491 = vpack.c.bf16 %v1433, %v1432
  %v1492 = vpack.c.bf16 %v1435, %v1434
  %v1493 = vpack.c.bf16 %v1437, %v1436
  %v1494 = vpack.c.bf16 %v1439, %v1438
  %v1495 = vpack.c.bf16 %v1441, %v1440
  %v1496 = vpack.c.bf16 %v1443, %v1442
  %v1497 = vpack.c.bf16 %v1445, %v1444
  %v1498 = vpack.c.bf16 %v1447, %v1446
  %v1499 = vpack.c.bf16 %v1449, %v1448
  %v1500 = vpack.c.bf16 %v1451, %v1450
  %v1501 = vpack.c.bf16 %v1453, %v1452
  %v1502 = vpack.c.bf16 %v1455, %v1454
  %v1503 = vpack.c.bf16 %v1457, %v1456
  %v1504 = vpack.c.bf16 %v1459, %v1458
  %v1505 = vpack.c.bf16 %v1461, %v1460
  %v1506 = vpack.c.bf16 %v1463, %v1462
  %v1507 = vpack.c.bf16 %v1465, %v1464
  %v1508 = vpack.c.bf16 %v1467, %v1466
  %v1509 = vpack.c.bf16 %v1469, %v1468
  %v1510 = vpack.c.bf16 %v1471, %v1470
  %v1511 = vpack.c.bf16 %v1473, %v1472
  %v1512 = vpack.c.bf16 %v1475, %v1474
  %v1513 = vpack.c.bf16 %v1477, %v1476
  %v1514 = vpack.c.bf16 %v1479, %v1478
  %v1515 = vpack.c.bf16 %v1481, %v1480
  %v1516 = vpack.c.bf16 %v1483, %v1482
  %v1517 = vpack.c.bf16 %v1485, %v1484
  %1550 = vrot.lane.b32.xlu0 %v1486, 20
  %v1551 = vpop.permute.xlu0 %1550
  %1552 = vrot.lane.b32.xlu0 %v1487, 20
  %v1553 = vpop.permute.xlu0 %1552
  %1554 = vrot.lane.b32.xlu0 %v1488, 20
  %v1555 = vpop.permute.xlu0 %1554
  %1556 = vrot.lane.b32.xlu0 %v1489, 20
  %v1557 = vpop.permute.xlu0 %1556
  %1558 = vrot.lane.b32.xlu0 %v1490, 20
  %v1559 = vpop.permute.xlu0 %1558
  %1560 = vrot.lane.b32.xlu0 %v1491, 20
  %v1561 = vpop.permute.xlu0 %1560
  %1562 = vrot.lane.b32.xlu0 %v1492, 20
  %v1563 = vpop.permute.xlu0 %1562
  %1564 = vrot.lane.b32.xlu0 %v1493, 20
  %v1565 = vpop.permute.xlu0 %1564
  %1566 = vrot.lane.b32.xlu0 %v1494, 20
  %v1567 = vpop.permute.xlu0 %1566
  %1568 = vrot.lane.b32.xlu0 %v1495, 20
  %v1569 = vpop.permute.xlu0 %1568
  %1570 = vrot.lane.b32.xlu0 %v1496, 20
  %v1571 = vpop.permute.xlu0 %1570
  %1572 = vrot.lane.b32.xlu0 %v1497, 20
  %v1573 = vpop.permute.xlu0 %1572
  %1574 = vrot.lane.b32.xlu0 %v1498, 20
  %v1575 = vpop.permute.xlu0 %1574
  %1576 = vrot.lane.b32.xlu0 %v1499, 20
  %v1577 = vpop.permute.xlu0 %1576
  %1578 = vrot.lane.b32.xlu0 %v1500, 20
  %v1579 = vpop.permute.xlu0 %1578
  %1580 = vrot.lane.b32.xlu0 %v1501, 20
  %v1581 = vpop.permute.xlu0 %1580
  %1582 = vrot.lane.b32.xlu0 %v1502, 20
  %v1583 = vpop.permute.xlu0 %1582
  %1584 = vrot.lane.b32.xlu0 %v1503, 20
  %v1585 = vpop.permute.xlu0 %1584
  %1586 = vrot.lane.b32.xlu0 %v1504, 20
  %v1587 = vpop.permute.xlu0 %1586
  %1588 = vrot.lane.b32.xlu0 %v1505, 20
  %v1589 = vpop.permute.xlu0 %1588
  %1590 = vrot.lane.b32.xlu0 %v1506, 20
  %v1591 = vpop.permute.xlu0 %1590
  %1592 = vrot.lane.b32.xlu0 %v1507, 20
  %v1593 = vpop.permute.xlu0 %1592
  %1594 = vrot.lane.b32.xlu0 %v1508, 20
  %v1595 = vpop.permute.xlu0 %1594
  %1596 = vrot.lane.b32.xlu0 %v1509, 20
  %v1597 = vpop.permute.xlu0 %1596
  %1598 = vrot.lane.b32.xlu0 %v1510, 20
  %v1599 = vpop.permute.xlu0 %1598
  %1600 = vrot.lane.b32.xlu0 %v1511, 20
  %v1601 = vpop.permute.xlu0 %1600
  %1602 = vrot.lane.b32.xlu0 %v1512, 20
  %v1603 = vpop.permute.xlu0 %1602
  %1604 = vrot.lane.b32.xlu0 %v1513, 20
  %v1605 = vpop.permute.xlu0 %1604
  %1606 = vrot.lane.b32.xlu0 %v1514, 20
  %v1607 = vpop.permute.xlu0 %1606
  %1608 = vrot.lane.b32.xlu0 %v1515, 20
  %v1609 = vpop.permute.xlu0 %1608
  %1610 = vrot.lane.b32.xlu0 %v1516, 20
  %v1611 = vpop.permute.xlu0 %1610
  %1612 = vrot.lane.b32.xlu0 %v1517, 20
  %v1613 = vpop.permute.xlu0 %1612
  %vm1646 = vcmask 195744
  %1647 = vst.msk [vmem:[#allocation3] sm:$0xff] %vm1646, %v1551
  %1648 = vst.msk [vmem:[#allocation3 + $0x8] sm:$0xff] %vm1646, %v1553
  %1649 = vst.msk [vmem:[#allocation3 + $0x10] sm:$0xff] %vm1646, %v1555
  %1650 = vst.msk [vmem:[#allocation3 + $0x18] sm:$0xff] %vm1646, %v1557
  %1651 = vst.msk [vmem:[#allocation3 + $0x20] sm:$0xff] %vm1646, %v1559
  %1652 = vst.msk [vmem:[#allocation3 + $0x28] sm:$0xff] %vm1646, %v1561
  %1653 = vst.msk [vmem:[#allocation3 + $0x30] sm:$0xff] %vm1646, %v1563
  %1654 = vst.msk [vmem:[#allocation3 + $0x38] sm:$0xff] %vm1646, %v1565
  %1655 = vst.msk [vmem:[#allocation3 + $0x40] sm:$0xff] %vm1646, %v1567
  %1656 = vst.msk [vmem:[#allocation3 + $0x48] sm:$0xff] %vm1646, %v1569
  %1657 = vst.msk [vmem:[#allocation3 + $0x50] sm:$0xff] %vm1646, %v1571
  %1658 = vst.msk [vmem:[#allocation3 + $0x58] sm:$0xff] %vm1646, %v1573
  %1659 = vst.msk [vmem:[#allocation3 + $0x60] sm:$0xff] %vm1646, %v1575
  %1660 = vst.msk [vmem:[#allocation3 + $0x68] sm:$0xff] %vm1646, %v1577
  %1661 = vst.msk [vmem:[#allocation3 + $0x70] sm:$0xff] %vm1646, %v1579
  %1662 = vst.msk [vmem:[#allocation3 + $0x78] sm:$0xff] %vm1646, %v1581
  %1663 = vst.msk [vmem:[#allocation3 + $0x80] sm:$0xff] %vm1646, %v1583
  %1664 = vst.msk [vmem:[#allocation3 + $0x88] sm:$0xff] %vm1646, %v1585
  %1665 = vst.msk [vmem:[#allocation3 + $0x90] sm:$0xff] %vm1646, %v1587
  %1666 = vst.msk [vmem:[#allocation3 + $0x98] sm:$0xff] %vm1646, %v1589
  %1667 = vst.msk [vmem:[#allocation3 + $0xa0] sm:$0xff] %vm1646, %v1591
  %1668 = vst.msk [vmem:[#allocation3 + $0xa8] sm:$0xff] %vm1646, %v1593
  %1669 = vst.msk [vmem:[#allocation3 + $0xb0] sm:$0xff] %vm1646, %v1595
  %1670 = vst.msk [vmem:[#allocation3 + $0xb8] sm:$0xff] %vm1646, %v1597
  %1671 = vst.msk [vmem:[#allocation3 + $0xc0] sm:$0xff] %vm1646, %v1599
  %1672 = vst.msk [vmem:[#allocation3 + $0xc8] sm:$0xff] %vm1646, %v1601
  %1673 = vst.msk [vmem:[#allocation3 + $0xd0] sm:$0xff] %vm1646, %v1603
  %1674 = vst.msk [vmem:[#allocation3 + $0xd8] sm:$0xff] %vm1646, %v1605
  %1675 = vst.msk [vmem:[#allocation3 + $0xe0] sm:$0xff] %vm1646, %v1607
  %1676 = vst.msk [vmem:[#allocation3 + $0xe8] sm:$0xff] %vm1646, %v1609
  %1677 = vst.msk [vmem:[#allocation3 + $0xf0] sm:$0xff] %vm1646, %v1611
  %1678 = vst.msk [vmem:[#allocation3 + $0xf8] sm:$0xff] %vm1646, %v1613
  %s1679 = scalar_lea.vmem [#allocation2], 48
  %v1680 = vld [vmem:[%s1679] sm:$0xff]
  %v1681 = vld [vmem:[%s1679 + $0x8] sm:$0xff]
  %v1682 = vld [vmem:[%s1679 + $0x18] sm:$0xff]
  %v1683 = vld [vmem:[%s1679 + $0x20] sm:$0xff]
  %v1684 = vld [vmem:[%s1679 + $0x30] sm:$0xff]
  %v1685 = vld [vmem:[%s1679 + $0x38] sm:$0xff]
  %v1686 = vld [vmem:[%s1679 + $0x48] sm:$0xff]
  %v1687 = vld [vmem:[%s1679 + $0x50] sm:$0xff]
  %v1688 = vld [vmem:[%s1679 + $0x60] sm:$0xff]
  %v1689 = vld [vmem:[%s1679 + $0x68] sm:$0xff]
  %v1690 = vld [vmem:[%s1679 + $0x78] sm:$0xff]
  %v1691 = vld [vmem:[%s1679 + $0x80] sm:$0xff]
  %v1692 = vld [vmem:[%s1679 + $0x90] sm:$0xff]
  %v1693 = vld [vmem:[%s1679 + $0x98] sm:$0xff]
  %v1694 = vld [vmem:[%s1679 + $0xa8] sm:$0xff]
  %v1695 = vld [vmem:[%s1679 + $0xb0] sm:$0xff]
  %v1696 = vld [vmem:[%s1679 + $0xc0] sm:$0xff]
  %v1697 = vld [vmem:[%s1679 + $0xc8] sm:$0xff]
  %v1698 = vld [vmem:[%s1679 + $0xd8] sm:$0xff]
  %v1699 = vld [vmem:[%s1679 + $0xe0] sm:$0xff]
  %v1700 = vld [vmem:[%s1679 + $0xf0] sm:$0xff]
  %v1701 = vld [vmem:[%s1679 + $0xf8] sm:$0xff]
  %v1702 = vld [vmem:[%s1679 + $0x108] sm:$0xff]
  %v1703 = vld [vmem:[%s1679 + $0x110] sm:$0xff]
  %v1704 = vld [vmem:[%s1679 + $0x120] sm:$0xff]
  %v1705 = vld [vmem:[%s1679 + $0x128] sm:$0xff]
  %v1706 = vld [vmem:[%s1679 + $0x138] sm:$0xff]
  %v1707 = vld [vmem:[%s1679 + $0x140] sm:$0xff]
  %v1708 = vld [vmem:[%s1679 + $0x150] sm:$0xff]
  %v1709 = vld [vmem:[%s1679 + $0x158] sm:$0xff]
  %v1710 = vld [vmem:[%s1679 + $0x168] sm:$0xff]
  %v1711 = vld [vmem:[%s1679 + $0x170] sm:$0xff]
  %v1712 = vld [vmem:[%s1679 + $0x1b0] sm:$0xff]
  %v1713 = vld [vmem:[%s1679 + $0x1b8] sm:$0xff]
  %v1714 = vld [vmem:[%s1679 + $0x1c8] sm:$0xff]
  %v1715 = vld [vmem:[%s1679 + $0x1d0] sm:$0xff]
  %v1716 = vld [vmem:[%s1679 + $0x1e0] sm:$0xff]
  %v1717 = vld [vmem:[%s1679 + $0x1e8] sm:$0xff]
  %v1718 = vld [vmem:[%s1679 + $0x1f8] sm:$0xff]
  %v1719 = vld [vmem:[%s1679 + $0x200] sm:$0xff]
  %v1720 = vld [vmem:[%s1679 + $0x210] sm:$0xff]
  %v1721 = vld [vmem:[%s1679 + $0x218] sm:$0xff]
  %v1722 = vld [vmem:[%s1679 + $0x228] sm:$0xff]
  %v1723 = vld [vmem:[%s1679 + $0x230] sm:$0xff]
  %v1724 = vld [vmem:[%s1679 + $0x240] sm:$0xff]
  %v1725 = vld [vmem:[%s1679 + $0x248] sm:$0xff]
  %v1726 = vld [vmem:[%s1679 + $0x258] sm:$0xff]
  %v1727 = vld [vmem:[%s1679 + $0x260] sm:$0xff]
  %v1728 = vld [vmem:[%s1679 + $0x270] sm:$0xff]
  %v1729 = vld [vmem:[%s1679 + $0x278] sm:$0xff]
  %v1730 = vld [vmem:[%s1679 + $0x288] sm:$0xff]
  %v1731 = vld [vmem:[%s1679 + $0x290] sm:$0xff]
  %v1732 = vld [vmem:[%s1679 + $0x2a0] sm:$0xff]
  %v1733 = vld [vmem:[%s1679 + $0x2a8] sm:$0xff]
  %v1734 = vld [vmem:[%s1679 + $0x2b8] sm:$0xff]
  %v1735 = vld [vmem:[%s1679 + $0x2c0] sm:$0xff]
  %v1736 = vld [vmem:[%s1679 + $0x2d0] sm:$0xff]
  %v1737 = vld [vmem:[%s1679 + $0x2d8] sm:$0xff]
  %v1738 = vld [vmem:[%s1679 + $0x2e8] sm:$0xff]
  %v1739 = vld [vmem:[%s1679 + $0x2f0] sm:$0xff]
  %v1740 = vld [vmem:[%s1679 + $0x300] sm:$0xff]
  %v1741 = vld [vmem:[%s1679 + $0x308] sm:$0xff]
  %v1742 = vld [vmem:[%s1679 + $0x318] sm:$0xff]
  %v1743 = vld [vmem:[%s1679 + $0x320] sm:$0xff]
  %v1744 = vpack.c.bf16 %v1681, %v1680
  %v1745 = vpack.c.bf16 %v1683, %v1682
  %v1746 = vpack.c.bf16 %v1685, %v1684
  %v1747 = vpack.c.bf16 %v1687, %v1686
  %v1748 = vpack.c.bf16 %v1689, %v1688
  %v1749 = vpack.c.bf16 %v1691, %v1690
  %v1750 = vpack.c.bf16 %v1693, %v1692
  %v1751 = vpack.c.bf16 %v1695, %v1694
  %v1752 = vpack.c.bf16 %v1697, %v1696
  %v1753 = vpack.c.bf16 %v1699, %v1698
  %v1754 = vpack.c.bf16 %v1701, %v1700
  %v1755 = vpack.c.bf16 %v1703, %v1702
  %v1756 = vpack.c.bf16 %v1705, %v1704
  %v1757 = vpack.c.bf16 %v1707, %v1706
  %v1758 = vpack.c.bf16 %v1709, %v1708
  %v1759 = vpack.c.bf16 %v1711, %v1710
  %v1760 = vpack.c.bf16 %v1713, %v1712
  %v1761 = vpack.c.bf16 %v1715, %v1714
  %v1762 = vpack.c.bf16 %v1717, %v1716
  %v1763 = vpack.c.bf16 %v1719, %v1718
  %v1764 = vpack.c.bf16 %v1721, %v1720
  %v1765 = vpack.c.bf16 %v1723, %v1722
  %v1766 = vpack.c.bf16 %v1725, %v1724
  %v1767 = vpack.c.bf16 %v1727, %v1726
  %v1768 = vpack.c.bf16 %v1729, %v1728
  %v1769 = vpack.c.bf16 %v1731, %v1730
  %v1770 = vpack.c.bf16 %v1733, %v1732
  %v1771 = vpack.c.bf16 %v1735, %v1734
  %v1772 = vpack.c.bf16 %v1737, %v1736
  %v1773 = vpack.c.bf16 %v1739, %v1738
  %v1774 = vpack.c.bf16 %v1741, %v1740
  %v1775 = vpack.c.bf16 %v1743, %v1742
  %1808 = vrot.lane.b32.xlu0 %v1744, 24
  %v1809 = vpop.permute.xlu0 %1808
  %1810 = vrot.lane.b32.xlu0 %v1745, 24
  %v1811 = vpop.permute.xlu0 %1810
  %1812 = vrot.lane.b32.xlu0 %v1746, 24
  %v1813 = vpop.permute.xlu0 %1812
  %1814 = vrot.lane.b32.xlu0 %v1747, 24
  %v1815 = vpop.permute.xlu0 %1814
  %1816 = vrot.lane.b32.xlu0 %v1748, 24
  %v1817 = vpop.permute.xlu0 %1816
  %1818 = vrot.lane.b32.xlu0 %v1749, 24
  %v1819 = vpop.permute.xlu0 %1818
  %1820 = vrot.lane.b32.xlu0 %v1750, 24
  %v1821 = vpop.permute.xlu0 %1820
  %1822 = vrot.lane.b32.xlu0 %v1751, 24
  %v1823 = vpop.permute.xlu0 %1822
  %1824 = vrot.lane.b32.xlu0 %v1752, 24
  %v1825 = vpop.permute.xlu0 %1824
  %1826 = vrot.lane.b32.xlu0 %v1753, 24
  %v1827 = vpop.permute.xlu0 %1826
  %1828 = vrot.lane.b32.xlu0 %v1754, 24
  %v1829 = vpop.permute.xlu0 %1828
  %1830 = vrot.lane.b32.xlu0 %v1755, 24
  %v1831 = vpop.permute.xlu0 %1830
  %1832 = vrot.lane.b32.xlu0 %v1756, 24
  %v1833 = vpop.permute.xlu0 %1832
  %1834 = vrot.lane.b32.xlu0 %v1757, 24
  %v1835 = vpop.permute.xlu0 %1834
  %1836 = vrot.lane.b32.xlu0 %v1758, 24
  %v1837 = vpop.permute.xlu0 %1836
  %1838 = vrot.lane.b32.xlu0 %v1759, 24
  %v1839 = vpop.permute.xlu0 %1838
  %1840 = vrot.lane.b32.xlu0 %v1760, 24
  %v1841 = vpop.permute.xlu0 %1840
  %1842 = vrot.lane.b32.xlu0 %v1761, 24
  %v1843 = vpop.permute.xlu0 %1842
  %1844 = vrot.lane.b32.xlu0 %v1762, 24
  %v1845 = vpop.permute.xlu0 %1844
  %1846 = vrot.lane.b32.xlu0 %v1763, 24
  %v1847 = vpop.permute.xlu0 %1846
  %1848 = vrot.lane.b32.xlu0 %v1764, 24
  %v1849 = vpop.permute.xlu0 %1848
  %1850 = vrot.lane.b32.xlu0 %v1765, 24
  %v1851 = vpop.permute.xlu0 %1850
  %1852 = vrot.lane.b32.xlu0 %v1766, 24
  %v1853 = vpop.permute.xlu0 %1852
  %1854 = vrot.lane.b32.xlu0 %v1767, 24
  %v1855 = vpop.permute.xlu0 %1854
  %1856 = vrot.lane.b32.xlu0 %v1768, 24
  %v1857 = vpop.permute.xlu0 %1856
  %1858 = vrot.lane.b32.xlu0 %v1769, 24
  %v1859 = vpop.permute.xlu0 %1858
  %1860 = vrot.lane.b32.xlu0 %v1770, 24
  %v1861 = vpop.permute.xlu0 %1860
  %1862 = vrot.lane.b32.xlu0 %v1771, 24
  %v1863 = vpop.permute.xlu0 %1862
  %1864 = vrot.lane.b32.xlu0 %v1772, 24
  %v1865 = vpop.permute.xlu0 %1864
  %1866 = vrot.lane.b32.xlu0 %v1773, 24
  %v1867 = vpop.permute.xlu0 %1866
  %1868 = vrot.lane.b32.xlu0 %v1774, 24
  %v1869 = vpop.permute.xlu0 %1868
  %1870 = vrot.lane.b32.xlu0 %v1775, 24
  %v1871 = vpop.permute.xlu0 %1870
  %vm1904 = vcmask 228544
  %1905 = vst.msk [vmem:[#allocation3] sm:$0xff] %vm1904, %v1809
  %1906 = vst.msk [vmem:[#allocation3 + $0x8] sm:$0xff] %vm1904, %v1811
  %1907 = vst.msk [vmem:[#allocation3 + $0x10] sm:$0xff] %vm1904, %v1813
  %1908 = vst.msk [vmem:[#allocation3 + $0x18] sm:$0xff] %vm1904, %v1815
  %1909 = vst.msk [vmem:[#allocation3 + $0x20] sm:$0xff] %vm1904, %v1817
  %1910 = vst.msk [vmem:[#allocation3 + $0x28] sm:$0xff] %vm1904, %v1819
  %1911 = vst.msk [vmem:[#allocation3 + $0x30] sm:$0xff] %vm1904, %v1821
  %1912 = vst.msk [vmem:[#allocation3 + $0x38] sm:$0xff] %vm1904, %v1823
  %1913 = vst.msk [vmem:[#allocation3 + $0x40] sm:$0xff] %vm1904, %v1825
  %1914 = vst.msk [vmem:[#allocation3 + $0x48] sm:$0xff] %vm1904, %v1827
  %1915 = vst.msk [vmem:[#allocation3 + $0x50] sm:$0xff] %vm1904, %v1829
  %1916 = vst.msk [vmem:[#allocation3 + $0x58] sm:$0xff] %vm1904, %v1831
  %1917 = vst.msk [vmem:[#allocation3 + $0x60] sm:$0xff] %vm1904, %v1833
  %1918 = vst.msk [vmem:[#allocation3 + $0x68] sm:$0xff] %vm1904, %v1835
  %1919 = vst.msk [vmem:[#allocation3 + $0x70] sm:$0xff] %vm1904, %v1837
  %1920 = vst.msk [vmem:[#allocation3 + $0x78] sm:$0xff] %vm1904, %v1839
  %1921 = vst.msk [vmem:[#allocation3 + $0x80] sm:$0xff] %vm1904, %v1841
  %1922 = vst.msk [vmem:[#allocation3 + $0x88] sm:$0xff] %vm1904, %v1843
  %1923 = vst.msk [vmem:[#allocation3 + $0x90] sm:$0xff] %vm1904, %v1845
  %1924 = vst.msk [vmem:[#allocation3 + $0x98] sm:$0xff] %vm1904, %v1847
  %1925 = vst.msk [vmem:[#allocation3 + $0xa0] sm:$0xff] %vm1904, %v1849
  %1926 = vst.msk [vmem:[#allocation3 + $0xa8] sm:$0xff] %vm1904, %v1851
  %1927 = vst.msk [vmem:[#allocation3 + $0xb0] sm:$0xff] %vm1904, %v1853
  %1928 = vst.msk [vmem:[#allocation3 + $0xb8] sm:$0xff] %vm1904, %v1855
  %1929 = vst.msk [vmem:[#allocation3 + $0xc0] sm:$0xff] %vm1904, %v1857
  %1930 = vst.msk [vmem:[#allocation3 + $0xc8] sm:$0xff] %vm1904, %v1859
  %1931 = vst.msk [vmem:[#allocation3 + $0xd0] sm:$0xff] %vm1904, %v1861
  %1932 = vst.msk [vmem:[#allocation3 + $0xd8] sm:$0xff] %vm1904, %v1863
  %1933 = vst.msk [vmem:[#allocation3 + $0xe0] sm:$0xff] %vm1904, %v1865
  %1934 = vst.msk [vmem:[#allocation3 + $0xe8] sm:$0xff] %vm1904, %v1867
  %1935 = vst.msk [vmem:[#allocation3 + $0xf0] sm:$0xff] %vm1904, %v1869
  %1936 = vst.msk [vmem:[#allocation3 + $0xf8] sm:$0xff] %vm1904, %v1871
  %v1937 = vld [vmem:[%s1679 + $0x1] sm:$0xff]
  %v1938 = vld [vmem:[%s1679 + $0x9] sm:$0xff]
  %v1939 = vld [vmem:[%s1679 + $0x19] sm:$0xff]
  %v1940 = vld [vmem:[%s1679 + $0x21] sm:$0xff]
  %v1941 = vld [vmem:[%s1679 + $0x31] sm:$0xff]
  %v1942 = vld [vmem:[%s1679 + $0x39] sm:$0xff]
  %v1943 = vld [vmem:[%s1679 + $0x49] sm:$0xff]
  %v1944 = vld [vmem:[%s1679 + $0x51] sm:$0xff]
  %v1945 = vld [vmem:[%s1679 + $0x61] sm:$0xff]
  %v1946 = vld [vmem:[%s1679 + $0x69] sm:$0xff]
  %v1947 = vld [vmem:[%s1679 + $0x79] sm:$0xff]
  %v1948 = vld [vmem:[%s1679 + $0x81] sm:$0xff]
  %v1949 = vld [vmem:[%s1679 + $0x91] sm:$0xff]
  %v1950 = vld [vmem:[%s1679 + $0x99] sm:$0xff]
  %v1951 = vld [vmem:[%s1679 + $0xa9] sm:$0xff]
  %v1952 = vld [vmem:[%s1679 + $0xb1] sm:$0xff]
  %v1953 = vld [vmem:[%s1679 + $0xc1] sm:$0xff]
  %v1954 = vld [vmem:[%s1679 + $0xc9] sm:$0xff]
  %v1955 = vld [vmem:[%s1679 + $0xd9] sm:$0xff]
  %v1956 = vld [vmem:[%s1679 + $0xe1] sm:$0xff]
  %v1957 = vld [vmem:[%s1679 + $0xf1] sm:$0xff]
  %v1958 = vld [vmem:[%s1679 + $0xf9] sm:$0xff]
  %v1959 = vld [vmem:[%s1679 + $0x109] sm:$0xff]
  %v1960 = vld [vmem:[%s1679 + $0x111] sm:$0xff]
  %v1961 = vld [vmem:[%s1679 + $0x121] sm:$0xff]
  %v1962 = vld [vmem:[%s1679 + $0x129] sm:$0xff]
  %v1963 = vld [vmem:[%s1679 + $0x139] sm:$0xff]
  %v1964 = vld [vmem:[%s1679 + $0x141] sm:$0xff]
  %v1965 = vld [vmem:[%s1679 + $0x151] sm:$0xff]
  %v1966 = vld [vmem:[%s1679 + $0x159] sm:$0xff]
  %v1967 = vld [vmem:[%s1679 + $0x169] sm:$0xff]
  %v1968 = vld [vmem:[%s1679 + $0x171] sm:$0xff]
  %v1969 = vld [vmem:[%s1679 + $0x1b1] sm:$0xff]
  %v1970 = vld [vmem:[%s1679 + $0x1b9] sm:$0xff]
  %v1971 = vld [vmem:[%s1679 + $0x1c9] sm:$0xff]
  %v1972 = vld [vmem:[%s1679 + $0x1d1] sm:$0xff]
  %v1973 = vld [vmem:[%s1679 + $0x1e1] sm:$0xff]
  %v1974 = vld [vmem:[%s1679 + $0x1e9] sm:$0xff]
  %v1975 = vld [vmem:[%s1679 + $0x1f9] sm:$0xff]
  %v1976 = vld [vmem:[%s1679 + $0x201] sm:$0xff]
  %v1977 = vld [vmem:[%s1679 + $0x211] sm:$0xff]
  %v1978 = vld [vmem:[%s1679 + $0x219] sm:$0xff]
  %v1979 = vld [vmem:[%s1679 + $0x229] sm:$0xff]
  %v1980 = vld [vmem:[%s1679 + $0x231] sm:$0xff]
  %v1981 = vld [vmem:[%s1679 + $0x241] sm:$0xff]
  %v1982 = vld [vmem:[%s1679 + $0x249] sm:$0xff]
  %v1983 = vld [vmem:[%s1679 + $0x259] sm:$0xff]
  %v1984 = vld [vmem:[%s1679 + $0x261] sm:$0xff]
  %v1985 = vld [vmem:[%s1679 + $0x271] sm:$0xff]
  %v1986 = vld [vmem:[%s1679 + $0x279] sm:$0xff]
  %v1987 = vld [vmem:[%s1679 + $0x289] sm:$0xff]
  %v1988 = vld [vmem:[%s1679 + $0x291] sm:$0xff]
  %v1989 = vld [vmem:[%s1679 + $0x2a1] sm:$0xff]
  %v1990 = vld [vmem:[%s1679 + $0x2a9] sm:$0xff]
  %v1991 = vld [vmem:[%s1679 + $0x2b9] sm:$0xff]
  %v1992 = vld [vmem:[%s1679 + $0x2c1] sm:$0xff]
  %v1993 = vld [vmem:[%s1679 + $0x2d1] sm:$0xff]
  %v1994 = vld [vmem:[%s1679 + $0x2d9] sm:$0xff]
  %v1995 = vld [vmem:[%s1679 + $0x2e9] sm:$0xff]
  %v1996 = vld [vmem:[%s1679 + $0x2f1] sm:$0xff]
  %v1997 = vld [vmem:[%s1679 + $0x301] sm:$0xff]
  %v1998 = vld [vmem:[%s1679 + $0x309] sm:$0xff]
  %v1999 = vld [vmem:[%s1679 + $0x319] sm:$0xff]
  %v2000 = vld [vmem:[%s1679 + $0x321] sm:$0xff]
  %v2001 = vpack.c.bf16 %v1938, %v1937
  %v2002 = vpack.c.bf16 %v1940, %v1939
  %v2003 = vpack.c.bf16 %v1942, %v1941
  %v2004 = vpack.c.bf16 %v1944, %v1943
  %v2005 = vpack.c.bf16 %v1946, %v1945
  %v2006 = vpack.c.bf16 %v1948, %v1947
  %v2007 = vpack.c.bf16 %v1950, %v1949
  %v2008 = vpack.c.bf16 %v1952, %v1951
  %v2009 = vpack.c.bf16 %v1954, %v1953
  %v2010 = vpack.c.bf16 %v1956, %v1955
  %v2011 = vpack.c.bf16 %v1958, %v1957
  %v2012 = vpack.c.bf16 %v1960, %v1959
  %v2013 = vpack.c.bf16 %v1962, %v1961
  %v2014 = vpack.c.bf16 %v1964, %v1963
  %v2015 = vpack.c.bf16 %v1966, %v1965
  %v2016 = vpack.c.bf16 %v1968, %v1967
  %v2017 = vpack.c.bf16 %v1970, %v1969
  %v2018 = vpack.c.bf16 %v1972, %v1971
  %v2019 = vpack.c.bf16 %v1974, %v1973
  %v2020 = vpack.c.bf16 %v1976, %v1975
  %v2021 = vpack.c.bf16 %v1978, %v1977
  %v2022 = vpack.c.bf16 %v1980, %v1979
  %v2023 = vpack.c.bf16 %v1982, %v1981
  %v2024 = vpack.c.bf16 %v1984, %v1983
  %v2025 = vpack.c.bf16 %v1986, %v1985
  %v2026 = vpack.c.bf16 %v1988, %v1987
  %v2027 = vpack.c.bf16 %v1990, %v1989
  %v2028 = vpack.c.bf16 %v1992, %v1991
  %v2029 = vpack.c.bf16 %v1994, %v1993
  %v2030 = vpack.c.bf16 %v1996, %v1995
  %v2031 = vpack.c.bf16 %v1998, %v1997
  %v2032 = vpack.c.bf16 %v2000, %v1999
  %2065 = vrot.lane.b32.xlu0 %v2001, 28
  %v2066 = vpop.permute.xlu0 %2065
  %2067 = vrot.lane.b32.xlu0 %v2002, 28
  %v2068 = vpop.permute.xlu0 %2067
  %2069 = vrot.lane.b32.xlu0 %v2003, 28
  %v2070 = vpop.permute.xlu0 %2069
  %2071 = vrot.lane.b32.xlu0 %v2004, 28
  %v2072 = vpop.permute.xlu0 %2071
  %2073 = vrot.lane.b32.xlu0 %v2005, 28
  %v2074 = vpop.permute.xlu0 %2073
  %2075 = vrot.lane.b32.xlu0 %v2006, 28
  %v2076 = vpop.permute.xlu0 %2075
  %2077 = vrot.lane.b32.xlu0 %v2007, 28
  %v2078 = vpop.permute.xlu0 %2077
  %2079 = vrot.lane.b32.xlu0 %v2008, 28
  %v2080 = vpop.permute.xlu0 %2079
  %2081 = vrot.lane.b32.xlu0 %v2009, 28
  %v2082 = vpop.permute.xlu0 %2081
  %2083 = vrot.lane.b32.xlu0 %v2010, 28
  %v2084 = vpop.permute.xlu0 %2083
  %2085 = vrot.lane.b32.xlu0 %v2011, 28
  %v2086 = vpop.permute.xlu0 %2085
  %2087 = vrot.lane.b32.xlu0 %v2012, 28
  %v2088 = vpop.permute.xlu0 %2087
  %2089 = vrot.lane.b32.xlu0 %v2013, 28
  %v2090 = vpop.permute.xlu0 %2089
  %2091 = vrot.lane.b32.xlu0 %v2014, 28
  %v2092 = vpop.permute.xlu0 %2091
  %2093 = vrot.lane.b32.xlu0 %v2015, 28
  %v2094 = vpop.permute.xlu0 %2093
  %2095 = vrot.lane.b32.xlu0 %v2016, 28
  %v2096 = vpop.permute.xlu0 %2095
  %2097 = vrot.lane.b32.xlu0 %v2017, 28
  %v2098 = vpop.permute.xlu0 %2097
  %2099 = vrot.lane.b32.xlu0 %v2018, 28
  %v2100 = vpop.permute.xlu0 %2099
  %2101 = vrot.lane.b32.xlu0 %v2019, 28
  %v2102 = vpop.permute.xlu0 %2101
  %2103 = vrot.lane.b32.xlu0 %v2020, 28
  %v2104 = vpop.permute.xlu0 %2103
  %2105 = vrot.lane.b32.xlu0 %v2021, 28
  %v2106 = vpop.permute.xlu0 %2105
  %2107 = vrot.lane.b32.xlu0 %v2022, 28
  %v2108 = vpop.permute.xlu0 %2107
  %2109 = vrot.lane.b32.xlu0 %v2023, 28
  %v2110 = vpop.permute.xlu0 %2109
  %2111 = vrot.lane.b32.xlu0 %v2024, 28
  %v2112 = vpop.permute.xlu0 %2111
  %2113 = vrot.lane.b32.xlu0 %v2025, 28
  %v2114 = vpop.permute.xlu0 %2113
  %2115 = vrot.lane.b32.xlu0 %v2026, 28
  %v2116 = vpop.permute.xlu0 %2115
  %2117 = vrot.lane.b32.xlu0 %v2027, 28
  %v2118 = vpop.permute.xlu0 %2117
  %2119 = vrot.lane.b32.xlu0 %v2028, 28
  %v2120 = vpop.permute.xlu0 %2119
  %2121 = vrot.lane.b32.xlu0 %v2029, 28
  %v2122 = vpop.permute.xlu0 %2121
  %2123 = vrot.lane.b32.xlu0 %v2030, 28
  %v2124 = vpop.permute.xlu0 %2123
  %2125 = vrot.lane.b32.xlu0 %v2031, 28
  %v2126 = vpop.permute.xlu0 %2125
  %2127 = vrot.lane.b32.xlu0 %v2032, 28
  %v2128 = vpop.permute.xlu0 %2127
  %vm2161 = vcmask 261344
  %2162 = vst.msk [vmem:[#allocation3] sm:$0xff] %vm2161, %v2066
  %2163 = vst.msk [vmem:[#allocation3 + $0x8] sm:$0xff] %vm2161, %v2068
  %2164 = vst.msk [vmem:[#allocation3 + $0x10] sm:$0xff] %vm2161, %v2070
  %2165 = vst.msk [vmem:[#allocation3 + $0x18] sm:$0xff] %vm2161, %v2072
  %2166 = vst.msk [vmem:[#allocation3 + $0x20] sm:$0xff] %vm2161, %v2074
  %2167 = vst.msk [vmem:[#allocation3 + $0x28] sm:$0xff] %vm2161, %v2076
  %2168 = vst.msk [vmem:[#allocation3 + $0x30] sm:$0xff] %vm2161, %v2078
  %2169 = vst.msk [vmem:[#allocation3 + $0x38] sm:$0xff] %vm2161, %v2080
  %2170 = vst.msk [vmem:[#allocation3 + $0x40] sm:$0xff] %vm2161, %v2082
  %2171 = vst.msk [vmem:[#allocation3 + $0x48] sm:$0xff] %vm2161, %v2084
  %2172 = vst.msk [vmem:[#allocation3 + $0x50] sm:$0xff] %vm2161, %v2086
  %2173 = vst.msk [vmem:[#allocation3 + $0x58] sm:$0xff] %vm2161, %v2088
  %2174 = vst.msk [vmem:[#allocation3 + $0x60] sm:$0xff] %vm2161, %v2090
  %2175 = vst.msk [vmem:[#allocation3 + $0x68] sm:$0xff] %vm2161, %v2092
  %2176 = vst.msk [vmem:[#allocation3 + $0x70] sm:$0xff] %vm2161, %v2094
  %2177 = vst.msk [vmem:[#allocation3 + $0x78] sm:$0xff] %vm2161, %v2096
  %2178 = vst.msk [vmem:[#allocation3 + $0x80] sm:$0xff] %vm2161, %v2098
  %2179 = vst.msk [vmem:[#allocation3 + $0x88] sm:$0xff] %vm2161, %v2100
  %2180 = vst.msk [vmem:[#allocation3 + $0x90] sm:$0xff] %vm2161, %v2102
  %2181 = vst.msk [vmem:[#allocation3 + $0x98] sm:$0xff] %vm2161, %v2104
  %2182 = vst.msk [vmem:[#allocation3 + $0xa0] sm:$0xff] %vm2161, %v2106
  %2183 = vst.msk [vmem:[#allocation3 + $0xa8] sm:$0xff] %vm2161, %v2108
  %2184 = vst.msk [vmem:[#allocation3 + $0xb0] sm:$0xff] %vm2161, %v2110
  %2185 = vst.msk [vmem:[#allocation3 + $0xb8] sm:$0xff] %vm2161, %v2112
  %2186 = vst.msk [vmem:[#allocation3 + $0xc0] sm:$0xff] %vm2161, %v2114
  %2187 = vst.msk [vmem:[#allocation3 + $0xc8] sm:$0xff] %vm2161, %v2116
  %2188 = vst.msk [vmem:[#allocation3 + $0xd0] sm:$0xff] %vm2161, %v2118
  %2189 = vst.msk [vmem:[#allocation3 + $0xd8] sm:$0xff] %vm2161, %v2120
  %2190 = vst.msk [vmem:[#allocation3 + $0xe0] sm:$0xff] %vm2161, %v2122
  %2191 = vst.msk [vmem:[#allocation3 + $0xe8] sm:$0xff] %vm2161, %v2124
  %2192 = vst.msk [vmem:[#allocation3 + $0xf0] sm:$0xff] %vm2161, %v2126
  %2193 = vst.msk [vmem:[#allocation3 + $0xf8] sm:$0xff] %vm2161, %v2128
  %v2194 = vld [vmem:[%s1679 + $0x2] sm:$0xff]
  %v2195 = vld [vmem:[%s1679 + $0xa] sm:$0xff]
  %v2196 = vld [vmem:[%s1679 + $0x1a] sm:$0xff]
  %v2197 = vld [vmem:[%s1679 + $0x22] sm:$0xff]
  %v2198 = vld [vmem:[%s1679 + $0x32] sm:$0xff]
  %v2199 = vld [vmem:[%s1679 + $0x3a] sm:$0xff]
  %v2200 = vld [vmem:[%s1679 + $0x4a] sm:$0xff]
  %v2201 = vld [vmem:[%s1679 + $0x52] sm:$0xff]
  %v2202 = vld [vmem:[%s1679 + $0x62] sm:$0xff]
  %v2203 = vld [vmem:[%s1679 + $0x6a] sm:$0xff]
  %v2204 = vld [vmem:[%s1679 + $0x7a] sm:$0xff]
  %v2205 = vld [vmem:[%s1679 + $0x82] sm:$0xff]
  %v2206 = vld [vmem:[%s1679 + $0x92] sm:$0xff]
  %v2207 = vld [vmem:[%s1679 + $0x9a] sm:$0xff]
  %v2208 = vld [vmem:[%s1679 + $0xaa] sm:$0xff]
  %v2209 = vld [vmem:[%s1679 + $0xb2] sm:$0xff]
  %v2210 = vld [vmem:[%s1679 + $0xc2] sm:$0xff]
  %v2211 = vld [vmem:[%s1679 + $0xca] sm:$0xff]
  %v2212 = vld [vmem:[%s1679 + $0xda] sm:$0xff]
  %v2213 = vld [vmem:[%s1679 + $0xe2] sm:$0xff]
  %v2214 = vld [vmem:[%s1679 + $0xf2] sm:$0xff]
  %v2215 = vld [vmem:[%s1679 + $0xfa] sm:$0xff]
  %v2216 = vld [vmem:[%s1679 + $0x10a] sm:$0xff]
  %v2217 = vld [vmem:[%s1679 + $0x112] sm:$0xff]
  %v2218 = vld [vmem:[%s1679 + $0x122] sm:$0xff]
  %v2219 = vld [vmem:[%s1679 + $0x12a] sm:$0xff]
  %v2220 = vld [vmem:[%s1679 + $0x13a] sm:$0xff]
  %v2221 = vld [vmem:[%s1679 + $0x142] sm:$0xff]
  %v2222 = vld [vmem:[%s1679 + $0x152] sm:$0xff]
  %v2223 = vld [vmem:[%s1679 + $0x15a] sm:$0xff]
  %v2224 = vld [vmem:[%s1679 + $0x16a] sm:$0xff]
  %v2225 = vld [vmem:[%s1679 + $0x172] sm:$0xff]
  %v2226 = vld [vmem:[%s1679 + $0x1b2] sm:$0xff]
  %v2227 = vld [vmem:[%s1679 + $0x1ba] sm:$0xff]
  %v2228 = vld [vmem:[%s1679 + $0x1ca] sm:$0xff]
  %v2229 = vld [vmem:[%s1679 + $0x1d2] sm:$0xff]
  %v2230 = vld [vmem:[%s1679 + $0x1e2] sm:$0xff]
  %v2231 = vld [vmem:[%s1679 + $0x1ea] sm:$0xff]
  %v2232 = vld [vmem:[%s1679 + $0x1fa] sm:$0xff]
  %v2233 = vld [vmem:[%s1679 + $0x202] sm:$0xff]
  %v2234 = vld [vmem:[%s1679 + $0x212] sm:$0xff]
  %v2235 = vld [vmem:[%s1679 + $0x21a] sm:$0xff]
  %v2236 = vld [vmem:[%s1679 + $0x22a] sm:$0xff]
  %v2237 = vld [vmem:[%s1679 + $0x232] sm:$0xff]
  %v2238 = vld [vmem:[%s1679 + $0x242] sm:$0xff]
  %v2239 = vld [vmem:[%s1679 + $0x24a] sm:$0xff]
  %v2240 = vld [vmem:[%s1679 + $0x25a] sm:$0xff]
  %v2241 = vld [vmem:[%s1679 + $0x262] sm:$0xff]
  %v2242 = vld [vmem:[%s1679 + $0x272] sm:$0xff]
  %v2243 = vld [vmem:[%s1679 + $0x27a] sm:$0xff]
  %v2244 = vld [vmem:[%s1679 + $0x28a] sm:$0xff]
  %v2245 = vld [vmem:[%s1679 + $0x292] sm:$0xff]
  %v2246 = vld [vmem:[%s1679 + $0x2a2] sm:$0xff]
  %v2247 = vld [vmem:[%s1679 + $0x2aa] sm:$0xff]
  %v2248 = vld [vmem:[%s1679 + $0x2ba] sm:$0xff]
  %v2249 = vld [vmem:[%s1679 + $0x2c2] sm:$0xff]
  %v2250 = vld [vmem:[%s1679 + $0x2d2] sm:$0xff]
  %v2251 = vld [vmem:[%s1679 + $0x2da] sm:$0xff]
  %v2252 = vld [vmem:[%s1679 + $0x2ea] sm:$0xff]
  %v2253 = vld [vmem:[%s1679 + $0x2f2] sm:$0xff]
  %v2254 = vld [vmem:[%s1679 + $0x302] sm:$0xff]
  %v2255 = vld [vmem:[%s1679 + $0x30a] sm:$0xff]
  %v2256 = vld [vmem:[%s1679 + $0x31a] sm:$0xff]
  %v2257 = vld [vmem:[%s1679 + $0x322] sm:$0xff]
  %v2258 = vpack.c.bf16 %v2195, %v2194
  %v2259 = vpack.c.bf16 %v2197, %v2196
  %v2260 = vpack.c.bf16 %v2199, %v2198
  %v2261 = vpack.c.bf16 %v2201, %v2200
  %v2262 = vpack.c.bf16 %v2203, %v2202
  %v2263 = vpack.c.bf16 %v2205, %v2204
  %v2264 = vpack.c.bf16 %v2207, %v2206
  %v2265 = vpack.c.bf16 %v2209, %v2208
  %v2266 = vpack.c.bf16 %v2211, %v2210
  %v2267 = vpack.c.bf16 %v2213, %v2212
  %v2268 = vpack.c.bf16 %v2215, %v2214
  %v2269 = vpack.c.bf16 %v2217, %v2216
  %v2270 = vpack.c.bf16 %v2219, %v2218
  %v2271 = vpack.c.bf16 %v2221, %v2220
  %v2272 = vpack.c.bf16 %v2223, %v2222
  %v2273 = vpack.c.bf16 %v2225, %v2224
  %v2274 = vpack.c.bf16 %v2227, %v2226
  %v2275 = vpack.c.bf16 %v2229, %v2228
  %v2276 = vpack.c.bf16 %v2231, %v2230
  %v2277 = vpack.c.bf16 %v2233, %v2232
  %v2278 = vpack.c.bf16 %v2235, %v2234
  %v2279 = vpack.c.bf16 %v2237, %v2236
  %v2280 = vpack.c.bf16 %v2239, %v2238
  %v2281 = vpack.c.bf16 %v2241, %v2240
  %v2282 = vpack.c.bf16 %v2243, %v2242
  %v2283 = vpack.c.bf16 %v2245, %v2244
  %v2284 = vpack.c.bf16 %v2247, %v2246
  %v2285 = vpack.c.bf16 %v2249, %v2248
  %v2286 = vpack.c.bf16 %v2251, %v2250
  %v2287 = vpack.c.bf16 %v2253, %v2252
  %v2288 = vpack.c.bf16 %v2255, %v2254
  %v2289 = vpack.c.bf16 %v2257, %v2256
  %2322 = vrot.lane.b32.xlu0 %v2258, 32
  %v2323 = vpop.permute.xlu0 %2322
  %2324 = vrot.lane.b32.xlu0 %v2259, 32
  %v2325 = vpop.permute.xlu0 %2324
  %2326 = vrot.lane.b32.xlu0 %v2260, 32
  %v2327 = vpop.permute.xlu0 %2326
  %2328 = vrot.lane.b32.xlu0 %v2261, 32
  %v2329 = vpop.permute.xlu0 %2328
  %2330 = vrot.lane.b32.xlu0 %v2262, 32
  %v2331 = vpop.permute.xlu0 %2330
  %2332 = vrot.lane.b32.xlu0 %v2263, 32
  %v2333 = vpop.permute.xlu0 %2332
  %2334 = vrot.lane.b32.xlu0 %v2264, 32
  %v2335 = vpop.permute.xlu0 %2334
  %2336 = vrot.lane.b32.xlu0 %v2265, 32
  %v2337 = vpop.permute.xlu0 %2336
  %2338 = vrot.lane.b32.xlu0 %v2266, 32
  %v2339 = vpop.permute.xlu0 %2338
  %2340 = vrot.lane.b32.xlu0 %v2267, 32
  %v2341 = vpop.permute.xlu0 %2340
  %2342 = vrot.lane.b32.xlu0 %v2268, 32
  %v2343 = vpop.permute.xlu0 %2342
  %2344 = vrot.lane.b32.xlu0 %v2269, 32
  %v2345 = vpop.permute.xlu0 %2344
  %2346 = vrot.lane.b32.xlu0 %v2270, 32
  %v2347 = vpop.permute.xlu0 %2346
  %2348 = vrot.lane.b32.xlu0 %v2271, 32
  %v2349 = vpop.permute.xlu0 %2348
  %2350 = vrot.lane.b32.xlu0 %v2272, 32
  %v2351 = vpop.permute.xlu0 %2350
  %2352 = vrot.lane.b32.xlu0 %v2273, 32
  %v2353 = vpop.permute.xlu0 %2352
  %2354 = vrot.lane.b32.xlu0 %v2274, 32
  %v2355 = vpop.permute.xlu0 %2354
  %2356 = vrot.lane.b32.xlu0 %v2275, 32
  %v2357 = vpop.permute.xlu0 %2356
  %2358 = vrot.lane.b32.xlu0 %v2276, 32
  %v2359 = vpop.permute.xlu0 %2358
  %2360 = vrot.lane.b32.xlu0 %v2277, 32
  %v2361 = vpop.permute.xlu0 %2360
  %2362 = vrot.lane.b32.xlu0 %v2278, 32
  %v2363 = vpop.permute.xlu0 %2362
  %2364 = vrot.lane.b32.xlu0 %v2279, 32
  %v2365 = vpop.permute.xlu0 %2364
  %2366 = vrot.lane.b32.xlu0 %v2280, 32
  %v2367 = vpop.permute.xlu0 %2366
  %2368 = vrot.lane.b32.xlu0 %v2281, 32
  %v2369 = vpop.permute.xlu0 %2368
  %2370 = vrot.lane.b32.xlu0 %v2282, 32
  %v2371 = vpop.permute.xlu0 %2370
  %2372 = vrot.lane.b32.xlu0 %v2283, 32
  %v2373 = vpop.permute.xlu0 %2372
  %2374 = vrot.lane.b32.xlu0 %v2284, 32
  %v2375 = vpop.permute.xlu0 %2374
  %2376 = vrot.lane.b32.xlu0 %v2285, 32
  %v2377 = vpop.permute.xlu0 %2376
  %2378 = vrot.lane.b32.xlu0 %v2286, 32
  %v2379 = vpop.permute.xlu0 %2378
  %2380 = vrot.lane.b32.xlu0 %v2287, 32
  %v2381 = vpop.permute.xlu0 %2380
  %2382 = vrot.lane.b32.xlu0 %v2288, 32
  %v2383 = vpop.permute.xlu0 %2382
  %2384 = vrot.lane.b32.xlu0 %v2289, 32
  %v2385 = vpop.permute.xlu0 %2384
  %vm2418 = vcmask 294144
  %2419 = vst.msk [vmem:[#allocation3] sm:$0xff] %vm2418, %v2323
  %2420 = vst.msk [vmem:[#allocation3 + $0x8] sm:$0xff] %vm2418, %v2325
  %2421 = vst.msk [vmem:[#allocation3 + $0x10] sm:$0xff] %vm2418, %v2327
  %2422 = vst.msk [vmem:[#allocation3 + $0x18] sm:$0xff] %vm2418, %v2329
  %2423 = vst.msk [vmem:[#allocation3 + $0x20] sm:$0xff] %vm2418, %v2331
  %2424 = vst.msk [vmem:[#allocation3 + $0x28] sm:$0xff] %vm2418, %v2333
  %2425 = vst.msk [vmem:[#allocation3 + $0x30] sm:$0xff] %vm2418, %v2335
  %2426 = vst.msk [vmem:[#allocation3 + $0x38] sm:$0xff] %vm2418, %v2337
  %2427 = vst.msk [vmem:[#allocation3 + $0x40] sm:$0xff] %vm2418, %v2339
  %2428 = vst.msk [vmem:[#allocation3 + $0x48] sm:$0xff] %vm2418, %v2341
  %2429 = vst.msk [vmem:[#allocation3 + $0x50] sm:$0xff] %vm2418, %v2343
  %2430 = vst.msk [vmem:[#allocation3 + $0x58] sm:$0xff] %vm2418, %v2345
  %2431 = vst.msk [vmem:[#allocation3 + $0x60] sm:$0xff] %vm2418, %v2347
  %2432 = vst.msk [vmem:[#allocation3 + $0x68] sm:$0xff] %vm2418, %v2349
  %2433 = vst.msk [vmem:[#allocation3 + $0x70] sm:$0xff] %vm2418, %v2351
  %2434 = vst.msk [vmem:[#allocation3 + $0x78] sm:$0xff] %vm2418, %v2353
  %2435 = vst.msk [vmem:[#allocation3 + $0x80] sm:$0xff] %vm2418, %v2355
  %2436 = vst.msk [vmem:[#allocation3 + $0x88] sm:$0xff] %vm2418, %v2357
  %2437 = vst.msk [vmem:[#allocation3 + $0x90] sm:$0xff] %vm2418, %v2359
  %2438 = vst.msk [vmem:[#allocation3 + $0x98] sm:$0xff] %vm2418, %v2361
  %2439 = vst.msk [vmem:[#allocation3 + $0xa0] sm:$0xff] %vm2418, %v2363
  %2440 = vst.msk [vmem:[#allocation3 + $0xa8] sm:$0xff] %vm2418, %v2365
  %2441 = vst.msk [vmem:[#allocation3 + $0xb0] sm:$0xff] %vm2418, %v2367
  %2442 = vst.msk [vmem:[#allocation3 + $0xb8] sm:$0xff] %vm2418, %v2369
  %2443 = vst.msk [vmem:[#allocation3 + $0xc0] sm:$0xff] %vm2418, %v2371
  %2444 = vst.msk [vmem:[#allocation3 + $0xc8] sm:$0xff] %vm2418, %v2373
  %2445 = vst.msk [vmem:[#allocation3 + $0xd0] sm:$0xff] %vm2418, %v2375
  %2446 = vst.msk [vmem:[#allocation3 + $0xd8] sm:$0xff] %vm2418, %v2377
  %2447 = vst.msk [vmem:[#allocation3 + $0xe0] sm:$0xff] %vm2418, %v2379
  %2448 = vst.msk [vmem:[#allocation3 + $0xe8] sm:$0xff] %vm2418, %v2381
  %2449 = vst.msk [vmem:[#allocation3 + $0xf0] sm:$0xff] %vm2418, %v2383
  %2450 = vst.msk [vmem:[#allocation3 + $0xf8] sm:$0xff] %vm2418, %v2385
  %v2451 = vld [vmem:[#allocation3] sm:$0xff]
  %v2452 = vld [vmem:[#allocation3 + $0x8] sm:$0xff]
  %v2453 = vld [vmem:[#allocation3 + $0x10] sm:$0xff]
  %v2454 = vld [vmem:[#allocation3 + $0x18] sm:$0xff]
  %v2455 = vld [vmem:[#allocation3 + $0x20] sm:$0xff]
  %v2456 = vld [vmem:[#allocation3 + $0x28] sm:$0xff]
  %v2457 = vld [vmem:[#allocation3 + $0x30] sm:$0xff]
  %v2458 = vld [vmem:[#allocation3 + $0x38] sm:$0xff]
  %v2459 = vld [vmem:[#allocation3 + $0x40] sm:$0xff]
  %v2460 = vld [vmem:[#allocation3 + $0x48] sm:$0xff]
  %v2461 = vld [vmem:[#allocation3 + $0x50] sm:$0xff]
  %v2462 = vld [vmem:[#allocation3 + $0x58] sm:$0xff]
  %v2463 = vld [vmem:[#allocation3 + $0x60] sm:$0xff]
  %v2464 = vld [vmem:[#allocation3 + $0x68] sm:$0xff]
  %v2465 = vld [vmem:[#allocation3 + $0x70] sm:$0xff]
  %v2466 = vld [vmem:[#allocation3 + $0x78] sm:$0xff]
  %v2467 = vld [vmem:[#allocation3 + $0x80] sm:$0xff]
  %v2468 = vld [vmem:[#allocation3 + $0x88] sm:$0xff]
  %v2469 = vld [vmem:[#allocation3 + $0x90] sm:$0xff]
  %v2470 = vld [vmem:[#allocation3 + $0x98] sm:$0xff]
  %v2471 = vld [vmem:[#allocation3 + $0xa0] sm:$0xff]
  %v2472 = vld [vmem:[#allocation3 + $0xa8] sm:$0xff]
  %v2473 = vld [vmem:[#allocation3 + $0xb0] sm:$0xff]
  %v2474 = vld [vmem:[#allocation3 + $0xb8] sm:$0xff]
  %v2475 = vld [vmem:[#allocation3 + $0xc0] sm:$0xff]
  %v2476 = vld [vmem:[#allocation3 + $0xc8] sm:$0xff]
  %v2477 = vld [vmem:[#allocation3 + $0xd0] sm:$0xff]
  %v2478 = vld [vmem:[#allocation3 + $0xd8] sm:$0xff]
  %v2479 = vld [vmem:[#allocation3 + $0xe0] sm:$0xff]
  %v2480 = vld [vmem:[#allocation3 + $0xe8] sm:$0xff]
  %v2481 = vld [vmem:[#allocation3 + $0xf0] sm:$0xff]
  %v2482 = vld [vmem:[#allocation3 + $0xf8] sm:$0xff]
  %v2483 = vld [vmem:[%s1] sm:$0xf]
  %v2484 = vld [vmem:[%s1 + $0x4] sm:$0xf]
  %v2485 = vld [vmem:[%s1 + $0x8] sm:$0xf]
  %v2486 = vld [vmem:[%s1 + $0xc] sm:$0xf]
  %v2487 = vld [vmem:[%s1 + $0x10] sm:$0x3]
  %v2493 = vunpack.c.l.b16 %v2483
  %v2494 = vunpack.c.l.b16 %v2484
  %v2495 = vunpack.c.l.b16 %v2485
  %v2496 = vunpack.c.l.b16 %v2486
  %v2497 = vunpack.c.l.b16 %v2487
  %v2498 = vpack.c.b16 %v2494, %v2493
  %v2499 = vpack.c.b16 %v2496, %v2495
  %v2500 = vpack.c.b16 %v2497, %v2497
  %vm2503 = vcmask 293888
  %v2505 = vsel %vm2503, %v2451, 0
  %v2508 = vsel %vm2503, %v2452, 0
  %v2511 = vsel %vm2503, %v2453, 0
  %v2514 = vsel %vm2503, %v2454, 0
  %v2517 = vsel %vm2503, %v2455, 0
  %v2520 = vsel %vm2503, %v2456, 0
  %v2523 = vsel %vm2503, %v2457, 0
  %v2526 = vsel %vm2503, %v2458, 0
  %v2529 = vsel %vm2503, %v2459, 0
  %v2532 = vsel %vm2503, %v2460, 0
  %v2535 = vsel %vm2503, %v2461, 0
  %v2538 = vsel %vm2503, %v2462, 0
  %v2541 = vsel %vm2503, %v2463, 0
  %v2544 = vsel %vm2503, %v2464, 0
  %v2547 = vsel %vm2503, %v2465, 0
  %v2550 = vsel %vm2503, %v2466, 0
  %v2553 = vsel %vm2503, %v2467, 0
  %v2556 = vsel %vm2503, %v2468, 0
  %v2559 = vsel %vm2503, %v2469, 0
  %v2562 = vsel %vm2503, %v2470, 0
  %v2565 = vsel %vm2503, %v2471, 0
  %v2568 = vsel %vm2503, %v2472, 0
  %v2571 = vsel %vm2503, %v2473, 0
  %v2574 = vsel %vm2503, %v2474, 0
  %v2577 = vsel %vm2503, %v2475, 0
  %v2580 = vsel %vm2503, %v2476, 0
  %v2583 = vsel %vm2503, %v2477, 0
  %v2586 = vsel %vm2503, %v2478, 0
  %v2589 = vsel %vm2503, %v2479, 0
  %v2592 = vsel %vm2503, %v2480, 0
  %v2595 = vsel %vm2503, %v2481, 0
  %v2598 = vsel %vm2503, %v2482, 0
  %vm2600 = vcmask 1041408
  %v2602 = vsel %vm2600, %v2500, 0
  %2604 = vmatprep.subr.bf16.mxu0 0
  %2605 = vmatpush1.bf16.msra.mxu0 %v2498
  %2606 = vmatprep.subr.bf16.mxu0 0
  %2607 = vmatpush1.bf16.msra.mxu0 %v2499
  %2608 = vmatprep.subr.bf16.mxu0 0
  %2609 = vmatpush1.bf16.msra.mxu0 %v2602
  %2610 = vmatprep.subr.bf16.mxu0 0
  %2611 = vmatpush1.bf16.msra.mxu0 0
  %2612 = vmatprep.subr.bf16.mxu0 0
  %2613 = vmatpush1.bf16.msra.mxu0 0
  %2614 = vmatprep.subr.bf16.mxu0 0
  %2615 = vmatpush1.bf16.msra.mxu0 0
  %2616 = vmatprep.subr.bf16.mxu0 0
  %2617 = vmatpush1.bf16.msra.mxu0 0
  %2618 = vmatprep.subr.bf16.mxu0 0
  %2619 = vmatpush1.bf16.msra.mxu0 0
  %2620 = vmatprep.subr.bf16.mxu0 0
  %2621 = vmatpush1.bf16.msra.mxu0 0
  %2622 = vmatprep.subr.bf16.mxu0 0
  %2623 = vmatpush1.bf16.msra.mxu0 0
  %2624 = vmatprep.subr.bf16.mxu0 0
  %2625 = vmatpush1.bf16.msra.mxu0 0
  %2626 = vmatprep.subr.bf16.mxu0 0
  %2627 = vmatpush1.bf16.msra.mxu0 0
  %2628 = vmatprep.subr.bf16.mxu0 0
  %2629 = vmatpush1.bf16.msra.mxu0 0
  %2630 = vmatprep.subr.bf16.mxu0 0
  %2631 = vmatpush1.bf16.msra.mxu0 0
  %2632 = vmatprep.subr.bf16.mxu0 0
  %2633 = vmatpush1.bf16.msra.mxu0 0
  %2634 = vmatprep.subr.bf16.mxu0 0
  %2635 = vmatpush1.bf16.msra.mxu0 0
  %2636 = vmatprep.mubr.bf16.mxu0 0
  %2637 = vmatmul.mubr.bf16.gmra.mrb[0].mxu0 %v2505
  %v2638 = vpop.f32.mrb[0].mxu0
  %v2639 = vadd.f32 0.0, %v2638
  %v2640 = vpop.f32.mrb[0].mxu0
  %v2641 = vpop.f32.mrb[0].mxu0
  %v2642 = vadd.f32 0.0, %v2641
  %v2643 = vpop.f32.mrb[0].mxu0
  %2644 = vmatprep.mubr.bf16.mxu0 0
  %2645 = vmatmul.mubr.bf16.gmra.mrb[0].mxu0 %v2508
  %v2646 = vpop.f32.mrb[0].mxu0
  %v2647 = vadd.f32 0.0, %v2646
  %v2648 = vpop.f32.mrb[0].mxu0
  %v2649 = vpop.f32.mrb[0].mxu0
  %v2650 = vadd.f32 0.0, %v2649
  %v2651 = vpop.f32.mrb[0].mxu0
  %2652 = vmatprep.mubr.bf16.mxu0 0
  %2653 = vmatmul.mubr.bf16.gmra.mrb[0].mxu0 %v2511
  %v2654 = vpop.f32.mrb[0].mxu0
  %v2655 = vadd.f32 0.0, %v2654
  %v2656 = vpop.f32.mrb[0].mxu0
  %v2657 = vpop.f32.mrb[0].mxu0
  %v2658 = vadd.f32 0.0, %v2657
  %v2659 = vpop.f32.mrb[0].mxu0
  %2660 = vmatprep.mubr.bf16.mxu0 0
  %2661 = vmatmul.mubr.bf16.gmra.mrb[0].mxu0 %v2514
  %v2662 = vpop.f32.mrb[0].mxu0
  %v2663 = vadd.f32 0.0, %v2662
  %v2664 = vpop.f32.mrb[0].mxu0
  %v2665 = vpop.f32.mrb[0].mxu0
  %v2666 = vadd.f32 0.0, %v2665
  %v2667 = vpop.f32.mrb[0].mxu0
  %2668 = vmatprep.mubr.bf16.mxu0 0
  %2669 = vmatmul.mubr.bf16.gmra.mrb[0].mxu0 %v2517
  %v2670 = vpop.f32.mrb[0].mxu0
  %v2671 = vadd.f32 0.0, %v2670
  %v2672 = vpop.f32.mrb[0].mxu0
  %v2673 = vpop.f32.mrb[0].mxu0
  %v2674 = vadd.f32 0.0, %v2673
  %v2675 = vpop.f32.mrb[0].mxu0
  %2676 = vmatprep.mubr.bf16.mxu0 0
  %2677 = vmatmul.mubr.bf16.gmra.mrb[0].mxu0 %v2520
  %v2678 = vpop.f32.mrb[0].mxu0
  %v2679 = vadd.f32 0.0, %v2678
  %v2680 = vpop.f32.mrb[0].mxu0
  %v2681 = vpop.f32.mrb[0].mxu0
  %v2682 = vadd.f32 0.0, %v2681
  %v2683 = vpop.f32.mrb[0].mxu0
  %2684 = vmatprep.mubr.bf16.mxu0 0
  %2685 = vmatmul.mubr.bf16.gmra.mrb[0].mxu0 %v2523
  %v2686 = vpop.f32.mrb[0].mxu0
  %v2687 = vadd.f32 0.0, %v2686
  %v2688 = vpop.f32.mrb[0].mxu0
  %v2689 = vpop.f32.mrb[0].mxu0
  %v2690 = vadd.f32 0.0, %v2689
  %v2691 = vpop.f32.mrb[0].mxu0
  %2692 = vmatprep.mubr.bf16.mxu0 0
  %2693 = vmatmul.mubr.bf16.gmra.mrb[0].mxu0 %v2526
  %v2694 = vpop.f32.mrb[0].mxu0
  %v2695 = vadd.f32 0.0, %v2694
  %v2696 = vpop.f32.mrb[0].mxu0
  %v2697 = vpop.f32.mrb[0].mxu0
  %v2698 = vadd.f32 0.0, %v2697
  %v2699 = vpop.f32.mrb[0].mxu0
  %2700 = vmatprep.mubr.bf16.mxu0 0
  %2701 = vmatmul.mubr.bf16.gmra.mrb[0].mxu0 %v2529
  %v2702 = vpop.f32.mrb[0].mxu0
  %v2703 = vadd.f32 0.0, %v2702
  %v2704 = vpop.f32.mrb[0].mxu0
  %v2705 = vpop.f32.mrb[0].mxu0
  %v2706 = vadd.f32 0.0, %v2705
  %v2707 = vpop.f32.mrb[0].mxu0
  %2708 = vmatprep.mubr.bf16.mxu0 0
  %2709 = vmatmul.mubr.bf16.gmra.mrb[0].mxu0 %v2532
  %v2710 = vpop.f32.mrb[0].mxu0
  %v2711 = vadd.f32 0.0, %v2710
  %v2712 = vpop.f32.mrb[0].mxu0
  %v2713 = vpop.f32.mrb[0].mxu0
  %v2714 = vadd.f32 0.0, %v2713
  %v2715 = vpop.f32.mrb[0].mxu0
  %2716 = vmatprep.mubr.bf16.mxu0 0
  %2717 = vmatmul.mubr.bf16.gmra.mrb[0].mxu0 %v2535
  %v2718 = vpop.f32.mrb[0].mxu0
  %v2719 = vadd.f32 0.0, %v2718
  %v2720 = vpop.f32.mrb[0].mxu0
  %v2721 = vpop.f32.mrb[0].mxu0
  %v2722 = vadd.f32 0.0, %v2721
  %v2723 = vpop.f32.mrb[0].mxu0
  %2724 = vmatprep.mubr.bf16.mxu0 0
  %2725 = vmatmul.mubr.bf16.gmra.mrb[0].mxu0 %v2538
  %v2726 = vpop.f32.mrb[0].mxu0
  %v2727 = vadd.f32 0.0, %v2726
  %v2728 = vpop.f32.mrb[0].mxu0
  %v2729 = vpop.f32.mrb[0].mxu0
  %v2730 = vadd.f32 0.0, %v2729
  %v2731 = vpop.f32.mrb[0].mxu0
  %2732 = vmatprep.mubr.bf16.mxu0 0
  %2733 = vmatmul.mubr.bf16.gmra.mrb[0].mxu0 %v2541
  %v2734 = vpop.f32.mrb[0].mxu0
  %v2735 = vadd.f32 0.0, %v2734
  %v2736 = vpop.f32.mrb[0].mxu0
  %v2737 = vpop.f32.mrb[0].mxu0
  %v2738 = vadd.f32 0.0, %v2737
  %v2739 = vpop.f32.mrb[0].mxu0
  %2740 = vmatprep.mubr.bf16.mxu0 0
  %2741 = vmatmul.mubr.bf16.gmra.mrb[0].mxu0 %v2544
  %v2742 = vpop.f32.mrb[0].mxu0
  %v2743 = vadd.f32 0.0, %v2742
  %v2744 = vpop.f32.mrb[0].mxu0
  %v2745 = vpop.f32.mrb[0].mxu0
  %v2746 = vadd.f32 0.0, %v2745
  %v2747 = vpop.f32.mrb[0].mxu0
  %2748 = vmatprep.mubr.bf16.mxu0 0
  %2749 = vmatmul.mubr.bf16.gmra.mrb[0].mxu0 %v2547
  %v2750 = vpop.f32.mrb[0].mxu0
  %v2751 = vadd.f32 0.0, %v2750
  %v2752 = vpop.f32.mrb[0].mxu0
  %v2753 = vpop.f32.mrb[0].mxu0
  %v2754 = vadd.f32 0.0, %v2753
  %v2755 = vpop.f32.mrb[0].mxu0
  %2756 = vmatprep.mubr.bf16.mxu0 0
  %2757 = vmatmul.mubr.bf16.gmra.mrb[0].mxu0 %v2550
  %v2758 = vpop.f32.mrb[0].mxu0
  %v2759 = vadd.f32 0.0, %v2758
  %v2760 = vpop.f32.mrb[0].mxu0
  %v2761 = vpop.f32.mrb[0].mxu0
  %v2762 = vadd.f32 0.0, %v2761
  %v2763 = vpop.f32.mrb[0].mxu0
  %2764 = vmatprep.mubr.bf16.mxu0 0
  %2765 = vmatmul.mubr.bf16.gmra.mrb[0].mxu0 %v2553
  %v2766 = vpop.f32.mrb[0].mxu0
  %v2767 = vadd.f32 0.0, %v2766
  %v2768 = vpop.f32.mrb[0].mxu0
  %v2769 = vpop.f32.mrb[0].mxu0
  %v2770 = vadd.f32 0.0, %v2769
  %v2771 = vpop.f32.mrb[0].mxu0
  %2772 = vmatprep.mubr.bf16.mxu0 0
  %2773 = vmatmul.mubr.bf16.gmra.mrb[0].mxu0 %v2556
  %v2774 = vpop.f32.mrb[0].mxu0
  %v2775 = vadd.f32 0.0, %v2774
  %v2776 = vpop.f32.mrb[0].mxu0
  %v2777 = vpop.f32.mrb[0].mxu0
  %v2778 = vadd.f32 0.0, %v2777
  %v2779 = vpop.f32.mrb[0].mxu0
  %2780 = vmatprep.mubr.bf16.mxu0 0
  %2781 = vmatmul.mubr.bf16.gmra.mrb[0].mxu0 %v2559
  %v2782 = vpop.f32.mrb[0].mxu0
  %v2783 = vadd.f32 0.0, %v2782
  %v2784 = vpop.f32.mrb[0].mxu0
  %v2785 = vpop.f32.mrb[0].mxu0
  %v2786 = vadd.f32 0.0, %v2785
  %v2787 = vpop.f32.mrb[0].mxu0
  %2788 = vmatprep.mubr.bf16.mxu0 0
  %2789 = vmatmul.mubr.bf16.gmra.mrb[0].mxu0 %v2562
  %v2790 = vpop.f32.mrb[0].mxu0
  %v2791 = vadd.f32 0.0, %v2790
  %v2792 = vpop.f32.mrb[0].mxu0
  %v2793 = vpop.f32.mrb[0].mxu0
  %v2794 = vadd.f32 0.0, %v2793
  %v2795 = vpop.f32.mrb[0].mxu0
  %2796 = vmatprep.mubr.bf16.mxu0 0
  %2797 = vmatmul.mubr.bf16.gmra.mrb[0].mxu0 %v2565
  %v2798 = vpop.f32.mrb[0].mxu0
  %v2799 = vadd.f32 0.0, %v2798
  %v2800 = vpop.f32.mrb[0].mxu0
  %v2801 = vpop.f32.mrb[0].mxu0
  %v2802 = vadd.f32 0.0, %v2801
  %v2803 = vpop.f32.mrb[0].mxu0
  %2804 = vmatprep.mubr.bf16.mxu0 0
  %2805 = vmatmul.mubr.bf16.gmra.mrb[0].mxu0 %v2568
  %v2806 = vpop.f32.mrb[0].mxu0
  %v2807 = vadd.f32 0.0, %v2806
  %v2808 = vpop.f32.mrb[0].mxu0
  %v2809 = vpop.f32.mrb[0].mxu0
  %v2810 = vadd.f32 0.0, %v2809
  %v2811 = vpop.f32.mrb[0].mxu0
  %2812 = vmatprep.mubr.bf16.mxu0 0
  %2813 = vmatmul.mubr.bf16.gmra.mrb[0].mxu0 %v2571
  %v2814 = vpop.f32.mrb[0].mxu0
  %v2815 = vadd.f32 0.0, %v2814
  %v2816 = vpop.f32.mrb[0].mxu0
  %v2817 = vpop.f32.mrb[0].mxu0
  %v2818 = vadd.f32 0.0, %v2817
  %v2819 = vpop.f32.mrb[0].mxu0
  %2820 = vmatprep.mubr.bf16.mxu0 0
  %2821 = vmatmul.mubr.bf16.gmra.mrb[0].mxu0 %v2574
  %v2822 = vpop.f32.mrb[0].mxu0
  %v2823 = vadd.f32 0.0, %v2822
  %v2824 = vpop.f32.mrb[0].mxu0
  %v2825 = vpop.f32.mrb[0].mxu0
  %v2826 = vadd.f32 0.0, %v2825
  %v2827 = vpop.f32.mrb[0].mxu0
  %2828 = vmatprep.mubr.bf16.mxu0 0
  %2829 = vmatmul.mubr.bf16.gmra.mrb[0].mxu0 %v2577
  %v2830 = vpop.f32.mrb[0].mxu0
  %v2831 = vadd.f32 0.0, %v2830
  %v2832 = vpop.f32.mrb[0].mxu0
  %v2833 = vpop.f32.mrb[0].mxu0
  %v2834 = vadd.f32 0.0, %v2833
  %v2835 = vpop.f32.mrb[0].mxu0
  %2836 = vmatprep.mubr.bf16.mxu0 0
  %2837 = vmatmul.mubr.bf16.gmra.mrb[0].mxu0 %v2580
  %v2838 = vpop.f32.mrb[0].mxu0
  %v2839 = vadd.f32 0.0, %v2838
  %v2840 = vpop.f32.mrb[0].mxu0
  %v2841 = vpop.f32.mrb[0].mxu0
  %v2842 = vadd.f32 0.0, %v2841
  %v2843 = vpop.f32.mrb[0].mxu0
  %2844 = vmatprep.mubr.bf16.mxu0 0
  %2845 = vmatmul.mubr.bf16.gmra.mrb[0].mxu0 %v2583
  %v2846 = vpop.f32.mrb[0].mxu0
  %v2847 = vadd.f32 0.0, %v2846
  %v2848 = vpop.f32.mrb[0].mxu0
  %v2849 = vpop.f32.mrb[0].mxu0
  %v2850 = vadd.f32 0.0, %v2849
  %v2851 = vpop.f32.mrb[0].mxu0
  %2852 = vmatprep.mubr.bf16.mxu0 0
  %2853 = vmatmul.mubr.bf16.gmra.mrb[0].mxu0 %v2586
  %v2854 = vpop.f32.mrb[0].mxu0
  %v2855 = vadd.f32 0.0, %v2854
  %v2856 = vpop.f32.mrb[0].mxu0
  %v2857 = vpop.f32.mrb[0].mxu0
  %v2858 = vadd.f32 0.0, %v2857
  %v2859 = vpop.f32.mrb[0].mxu0
  %2860 = vmatprep.mubr.bf16.mxu0 0
  %2861 = vmatmul.mubr.bf16.gmra.mrb[0].mxu0 %v2589
  %v2862 = vpop.f32.mrb[0].mxu0
  %v2863 = vadd.f32 0.0, %v2862
  %v2864 = vpop.f32.mrb[0].mxu0
  %v2865 = vpop.f32.mrb[0].mxu0
  %v2866 = vadd.f32 0.0, %v2865
  %v2867 = vpop.f32.mrb[0].mxu0
  %2868 = vmatprep.mubr.bf16.mxu0 0
  %2869 = vmatmul.mubr.bf16.gmra.mrb[0].mxu0 %v2592
  %v2870 = vpop.f32.mrb[0].mxu0
  %v2871 = vadd.f32 0.0, %v2870
  %v2872 = vpop.f32.mrb[0].mxu0
  %v2873 = vpop.f32.mrb[0].mxu0
  %v2874 = vadd.f32 0.0, %v2873
  %v2875 = vpop.f32.mrb[0].mxu0
  %2876 = vmatprep.mubr.bf16.mxu0 0
  %2877 = vmatmul.mubr.bf16.gmra.mrb[0].mxu0 %v2595
  %v2878 = vpop.f32.mrb[0].mxu0
  %v2879 = vadd.f32 0.0, %v2878
  %v2880 = vpop.f32.mrb[0].mxu0
  %v2881 = vpop.f32.mrb[0].mxu0
  %v2882 = vadd.f32 0.0, %v2881
  %v2883 = vpop.f32.mrb[0].mxu0
  %2884 = vmatprep.mubr.bf16.mxu0 0
  %2885 = vmatmul.mubr.bf16.gmra.mrb[0].mxu0 %v2598
  %v2886 = vpop.f32.mrb[0].mxu0
  %v2887 = vadd.f32 0.0, %v2886
  %v2888 = vpop.f32.mrb[0].mxu0
  %v2889 = vpop.f32.mrb[0].mxu0
  %v2890 = vadd.f32 0.0, %v2889
  %v2891 = vpop.f32.mrb[0].mxu0
  %2892 = vdwg.mxu0
  %v2893 = vld [vmem:[%s2] sm:$0x1]
  %v2894 = vld [vmem:[%s3] sm:$0x1]
  %v2895 = vsel %vm27, %v2639, 0.0
  %v2896 = vsel %vm27, %v2642, 0.0
  %v2897 = vadd.f32 %v2895, %v2896
  %v2898 = vsel %vm27, %v2647, 0.0
  %v2899 = vadd.f32 %v2897, %v2898
  %v2900 = vsel %vm27, %v2650, 0.0
  %v2901 = vadd.f32 %v2899, %v2900
  %v2902 = vsel %vm27, %v2655, 0.0
  %v2903 = vadd.f32 %v2901, %v2902
  %v2904 = vsel %vm27, %v2658, 0.0
  %v2905 = vadd.f32 %v2903, %v2904
  %v2906 = vsel %vm27, %v2663, 0.0
  %v2907 = vadd.f32 %v2905, %v2906
  %v2908 = vsel %vm27, %v2666, 0.0
  %v2909 = vadd.f32 %v2907, %v2908
  %v2910 = vsel %vm27, %v2671, 0.0
  %v2911 = vadd.f32 %v2909, %v2910
  %v2912 = vsel %vm27, %v2674, 0.0
  %v2913 = vadd.f32 %v2911, %v2912
  %v2914 = vsel %vm27, %v2679, 0.0
  %v2915 = vadd.f32 %v2913, %v2914
  %v2916 = vsel %vm27, %v2682, 0.0
  %v2917 = vadd.f32 %v2915, %v2916
  %v2918 = vsel %vm27, %v2687, 0.0
  %v2919 = vadd.f32 %v2917, %v2918
  %v2920 = vsel %vm27, %v2690, 0.0
  %v2921 = vadd.f32 %v2919, %v2920
  %v2922 = vsel %vm27, %v2695, 0.0
  %v2923 = vadd.f32 %v2921, %v2922
  %v2924 = vsel %vm27, %v2698, 0.0
  %v2925 = vadd.f32 %v2923, %v2924
  %v2926 = vsel %vm27, %v2703, 0.0
  %v2927 = vadd.f32 %v2925, %v2926
  %v2928 = vsel %vm27, %v2706, 0.0
  %v2929 = vadd.f32 %v2927, %v2928
  %v2930 = vsel %vm27, %v2711, 0.0
  %v2931 = vadd.f32 %v2929, %v2930
  %v2932 = vsel %vm27, %v2714, 0.0
  %v2933 = vadd.f32 %v2931, %v2932
  %v2934 = vsel %vm27, %v2719, 0.0
  %v2935 = vadd.f32 %v2933, %v2934
  %v2936 = vsel %vm27, %v2722, 0.0
  %v2937 = vadd.f32 %v2935, %v2936
  %v2938 = vsel %vm27, %v2727, 0.0
  %v2939 = vadd.f32 %v2937, %v2938
  %v2940 = vsel %vm27, %v2730, 0.0
  %v2941 = vadd.f32 %v2939, %v2940
  %v2942 = vsel %vm27, %v2735, 0.0
  %v2943 = vadd.f32 %v2941, %v2942
  %v2944 = vsel %vm27, %v2738, 0.0
  %v2945 = vadd.f32 %v2943, %v2944
  %v2946 = vsel %vm27, %v2743, 0.0
  %v2947 = vadd.f32 %v2945, %v2946
  %v2948 = vsel %vm27, %v2746, 0.0
  %v2949 = vadd.f32 %v2947, %v2948
  %v2950 = vsel %vm27, %v2751, 0.0
  %v2951 = vadd.f32 %v2949, %v2950
  %v2952 = vsel %vm27, %v2754, 0.0
  %v2953 = vadd.f32 %v2951, %v2952
  %v2954 = vsel %vm27, %v2759, 0.0
  %v2955 = vadd.f32 %v2953, %v2954
  %v2956 = vsel %vm27, %v2762, 0.0
  %v2957 = vadd.f32 %v2955, %v2956
  %v2958 = vsel %vm27, %v2767, 0.0
  %v2959 = vadd.f32 %v2957, %v2958
  %v2960 = vsel %vm27, %v2770, 0.0
  %v2961 = vadd.f32 %v2959, %v2960
  %v2962 = vsel %vm27, %v2775, 0.0
  %v2963 = vadd.f32 %v2961, %v2962
  %v2964 = vsel %vm27, %v2778, 0.0
  %v2965 = vadd.f32 %v2963, %v2964
  %v2966 = vsel %vm27, %v2783, 0.0
  %v2967 = vadd.f32 %v2965, %v2966
  %v2968 = vsel %vm27, %v2786, 0.0
  %v2969 = vadd.f32 %v2967, %v2968
  %v2970 = vsel %vm27, %v2791, 0.0
  %v2971 = vadd.f32 %v2969, %v2970
  %v2972 = vsel %vm27, %v2794, 0.0
  %v2973 = vadd.f32 %v2971, %v2972
  %v2974 = vsel %vm27, %v2799, 0.0
  %v2975 = vadd.f32 %v2973, %v2974
  %v2976 = vsel %vm27, %v2802, 0.0
  %v2977 = vadd.f32 %v2975, %v2976
  %v2978 = vsel %vm27, %v2807, 0.0
  %v2979 = vadd.f32 %v2977, %v2978
  %v2980 = vsel %vm27, %v2810, 0.0
  %v2981 = vadd.f32 %v2979, %v2980
  %v2982 = vsel %vm27, %v2815, 0.0
  %v2983 = vadd.f32 %v2981, %v2982
  %v2984 = vsel %vm27, %v2818, 0.0
  %v2985 = vadd.f32 %v2983, %v2984
  %v2986 = vsel %vm27, %v2823, 0.0
  %v2987 = vadd.f32 %v2985, %v2986
  %v2988 = vsel %vm27, %v2826, 0.0
  %v2989 = vadd.f32 %v2987, %v2988
  %v2990 = vsel %vm27, %v2831, 0.0
  %v2991 = vadd.f32 %v2989, %v2990
  %v2992 = vsel %vm27, %v2834, 0.0
  %v2993 = vadd.f32 %v2991, %v2992
  %v2994 = vsel %vm27, %v2839, 0.0
  %v2995 = vadd.f32 %v2993, %v2994
  %v2996 = vsel %vm27, %v2842, 0.0
  %v2997 = vadd.f32 %v2995, %v2996
  %v2998 = vsel %vm27, %v2847, 0.0
  %v2999 = vadd.f32 %v2997, %v2998
  %v3000 = vsel %vm27, %v2850, 0.0
  %v3001 = vadd.f32 %v2999, %v3000
  %v3002 = vsel %vm27, %v2855, 0.0
  %v3003 = vadd.f32 %v3001, %v3002
  %v3004 = vsel %vm27, %v2858, 0.0
  %v3005 = vadd.f32 %v3003, %v3004
  %v3006 = vsel %vm27, %v2863, 0.0
  %v3007 = vadd.f32 %v3005, %v3006
  %v3008 = vsel %vm27, %v2866, 0.0
  %v3009 = vadd.f32 %v3007, %v3008
  %v3010 = vsel %vm27, %v2871, 0.0
  %v3011 = vadd.f32 %v3009, %v3010
  %v3012 = vsel %vm27, %v2874, 0.0
  %v3013 = vadd.f32 %v3011, %v3012
  %v3014 = vsel %vm27, %v2879, 0.0
  %v3015 = vadd.f32 %v3013, %v3014
  %v3016 = vsel %vm27, %v2882, 0.0
  %v3017 = vadd.f32 %v3015, %v3016
  %v3018 = vsel %vm27, %v2887, 0.0
  %v3019 = vadd.f32 %v3017, %v3018
  %v3020 = vsel %vm27, %v2890, 0.0
  %v3021 = vadd.f32 %v3019, %v3020
  %v3022 = vrot.slane %v3021, 4
  %v3023 = vadd.f32 %v3021, %v3022
  %v3024 = vrot.slane %v3023, 2
  %v3025 = vadd.f32 %v3023, %v3024
  %v3026 = vrot.slane %v3025, 1
  %v3027 = vadd.f32 %v3025, %v3026
  %v3028 = vmul.f32 %v3027, 0.001953125
  %v3029 = vmul.f32 %v2639, %v2639
  %v3030 = vmul.f32 %v2642, %v2642
  %v3031 = vmul.f32 %v2647, %v2647
  %v3032 = vmul.f32 %v2650, %v2650
  %v3033 = vmul.f32 %v2655, %v2655
  %v3034 = vmul.f32 %v2658, %v2658
  %v3035 = vmul.f32 %v2663, %v2663
  %v3036 = vmul.f32 %v2666, %v2666
  %v3037 = vmul.f32 %v2671, %v2671
  %v3038 = vmul.f32 %v2674, %v2674
  %v3039 = vmul.f32 %v2679, %v2679
  %v3040 = vmul.f32 %v2682, %v2682
  %v3041 = vmul.f32 %v2687, %v2687
  %v3042 = vmul.f32 %v2690, %v2690
  %v3043 = vmul.f32 %v2695, %v2695
  %v3044 = vmul.f32 %v2698, %v2698
  %v3045 = vmul.f32 %v2703, %v2703
  %v3046 = vmul.f32 %v2706, %v2706
  %v3047 = vmul.f32 %v2711, %v2711
  %v3048 = vmul.f32 %v2714, %v2714
  %v3049 = vmul.f32 %v2719, %v2719
  %v3050 = vmul.f32 %v2722, %v2722
  %v3051 = vmul.f32 %v2727, %v2727
  %v3052 = vmul.f32 %v2730, %v2730
  %v3053 = vmul.f32 %v2735, %v2735
  %v3054 = vmul.f32 %v2738, %v2738
  %v3055 = vmul.f32 %v2743, %v2743
  %v3056 = vmul.f32 %v2746, %v2746
  %v3057 = vmul.f32 %v2751, %v2751
  %v3058 = vmul.f32 %v2754, %v2754
  %v3059 = vmul.f32 %v2759, %v2759
  %v3060 = vmul.f32 %v2762, %v2762
  %v3061 = vmul.f32 %v2767, %v2767
  %v3062 = vmul.f32 %v2770, %v2770
  %v3063 = vmul.f32 %v2775, %v2775
  %v3064 = vmul.f32 %v2778, %v2778
  %v3065 = vmul.f32 %v2783, %v2783
  %v3066 = vmul.f32 %v2786, %v2786
  %v3067 = vmul.f32 %v2791, %v2791
  %v3068 = vmul.f32 %v2794, %v2794
  %v3069 = vmul.f32 %v2799, %v2799
  %v3070 = vmul.f32 %v2802, %v2802
  %v3071 = vmul.f32 %v2807, %v2807
  %v3072 = vmul.f32 %v2810, %v2810
  %v3073 = vmul.f32 %v2815, %v2815
  %v3074 = vmul.f32 %v2818, %v2818
  %v3075 = vmul.f32 %v2823, %v2823
  %v3076 = vmul.f32 %v2826, %v2826
  %v3077 = vmul.f32 %v2831, %v2831
  %v3078 = vmul.f32 %v2834, %v2834
  %v3079 = vmul.f32 %v2839, %v2839
  %v3080 = vmul.f32 %v2842, %v2842
  %v3081 = vmul.f32 %v2847, %v2847
  %v3082 = vmul.f32 %v2850, %v2850
  %v3083 = vmul.f32 %v2855, %v2855
  %v3084 = vmul.f32 %v2858, %v2858
  %v3085 = vmul.f32 %v2863, %v2863
  %v3086 = vmul.f32 %v2866, %v2866
  %v3087 = vmul.f32 %v2871, %v2871
  %v3088 = vmul.f32 %v2874, %v2874
  %v3089 = vmul.f32 %v2879, %v2879
  %v3090 = vmul.f32 %v2882, %v2882
  %v3091 = vmul.f32 %v2887, %v2887
  %v3092 = vmul.f32 %v2890, %v2890
  %v3093 = vsel %vm27, %v3029, 0.0
  %v3094 = vsel %vm27, %v3030, 0.0
  %v3095 = vadd.f32 %v3093, %v3094
  %v3096 = vsel %vm27, %v3031, 0.0
  %v3097 = vadd.f32 %v3095, %v3096
  %v3098 = vsel %vm27, %v3032, 0.0
  %v3099 = vadd.f32 %v3097, %v3098
  %v3100 = vsel %vm27, %v3033, 0.0
  %v3101 = vadd.f32 %v3099, %v3100
  %v3102 = vsel %vm27, %v3034, 0.0
  %v3103 = vadd.f32 %v3101, %v3102
  %v3104 = vsel %vm27, %v3035, 0.0
  %v3105 = vadd.f32 %v3103, %v3104
  %v3106 = vsel %vm27, %v3036, 0.0
  %v3107 = vadd.f32 %v3105, %v3106
  %v3108 = vsel %vm27, %v3037, 0.0
  %v3109 = vadd.f32 %v3107, %v3108
  %v3110 = vsel %vm27, %v3038, 0.0
  %v3111 = vadd.f32 %v3109, %v3110
  %v3112 = vsel %vm27, %v3039, 0.0
  %v3113 = vadd.f32 %v3111, %v3112
  %v3114 = vsel %vm27, %v3040, 0.0
  %v3115 = vadd.f32 %v3113, %v3114
  %v3116 = vsel %vm27, %v3041, 0.0
  %v3117 = vadd.f32 %v3115, %v3116
  %v3118 = vsel %vm27, %v3042, 0.0
  %v3119 = vadd.f32 %v3117, %v3118
  %v3120 = vsel %vm27, %v3043, 0.0
  %v3121 = vadd.f32 %v3119, %v3120
  %v3122 = vsel %vm27, %v3044, 0.0
  %v3123 = vadd.f32 %v3121, %v3122
  %v3124 = vsel %vm27, %v3045, 0.0
  %v3125 = vadd.f32 %v3123, %v3124
  %v3126 = vsel %vm27, %v3046, 0.0
  %v3127 = vadd.f32 %v3125, %v3126
  %v3128 = vsel %vm27, %v3047, 0.0
  %v3129 = vadd.f32 %v3127, %v3128
  %v3130 = vsel %vm27, %v3048, 0.0
  %v3131 = vadd.f32 %v3129, %v3130
  %v3132 = vsel %vm27, %v3049, 0.0
  %v3133 = vadd.f32 %v3131, %v3132
  %v3134 = vsel %vm27, %v3050, 0.0
  %v3135 = vadd.f32 %v3133, %v3134
  %v3136 = vsel %vm27, %v3051, 0.0
  %v3137 = vadd.f32 %v3135, %v3136
  %v3138 = vsel %vm27, %v3052, 0.0
  %v3139 = vadd.f32 %v3137, %v3138
  %v3140 = vsel %vm27, %v3053, 0.0
  %v3141 = vadd.f32 %v3139, %v3140
  %v3142 = vsel %vm27, %v3054, 0.0
  %v3143 = vadd.f32 %v3141, %v3142
  %v3144 = vsel %vm27, %v3055, 0.0
  %v3145 = vadd.f32 %v3143, %v3144
  %v3146 = vsel %vm27, %v3056, 0.0
  %v3147 = vadd.f32 %v3145, %v3146
  %v3148 = vsel %vm27, %v3057, 0.0
  %v3149 = vadd.f32 %v3147, %v3148
  %v3150 = vsel %vm27, %v3058, 0.0
  %v3151 = vadd.f32 %v3149, %v3150
  %v3152 = vsel %vm27, %v3059, 0.0
  %v3153 = vadd.f32 %v3151, %v3152
  %v3154 = vsel %vm27, %v3060, 0.0
  %v3155 = vadd.f32 %v3153, %v3154
  %v3156 = vsel %vm27, %v3061, 0.0
  %v3157 = vadd.f32 %v3155, %v3156
  %v3158 = vsel %vm27, %v3062, 0.0
  %v3159 = vadd.f32 %v3157, %v3158
  %v3160 = vsel %vm27, %v3063, 0.0
  %v3161 = vadd.f32 %v3159, %v3160
  %v3162 = vsel %vm27, %v3064, 0.0
  %v3163 = vadd.f32 %v3161, %v3162
  %v3164 = vsel %vm27, %v3065, 0.0
  %v3165 = vadd.f32 %v3163, %v3164
  %v3166 = vsel %vm27, %v3066, 0.0
  %v3167 = vadd.f32 %v3165, %v3166
  %v3168 = vsel %vm27, %v3067, 0.0
  %v3169 = vadd.f32 %v3167, %v3168
  %v3170 = vsel %vm27, %v3068, 0.0
  %v3171 = vadd.f32 %v3169, %v3170
  %v3172 = vsel %vm27, %v3069, 0.0
  %v3173 = vadd.f32 %v3171, %v3172
  %v3174 = vsel %vm27, %v3070, 0.0
  %v3175 = vadd.f32 %v3173, %v3174
  %v3176 = vsel %vm27, %v3071, 0.0
  %v3177 = vadd.f32 %v3175, %v3176
  %v3178 = vsel %vm27, %v3072, 0.0
  %v3179 = vadd.f32 %v3177, %v3178
  %v3180 = vsel %vm27, %v3073, 0.0
  %v3181 = vadd.f32 %v3179, %v3180
  %v3182 = vsel %vm27, %v3074, 0.0
  %v3183 = vadd.f32 %v3181, %v3182
  %v3184 = vsel %vm27, %v3075, 0.0
  %v3185 = vadd.f32 %v3183, %v3184
  %v3186 = vsel %vm27, %v3076, 0.0
  %v3187 = vadd.f32 %v3185, %v3186
  %v3188 = vsel %vm27, %v3077, 0.0
  %v3189 = vadd.f32 %v3187, %v3188
  %v3190 = vsel %vm27, %v3078, 0.0
  %v3191 = vadd.f32 %v3189, %v3190
  %v3192 = vsel %vm27, %v3079, 0.0
  %v3193 = vadd.f32 %v3191, %v3192
  %v3194 = vsel %vm27, %v3080, 0.0
  %v3195 = vadd.f32 %v3193, %v3194
  %v3196 = vsel %vm27, %v3081, 0.0
  %v3197 = vadd.f32 %v3195, %v3196
  %v3198 = vsel %vm27, %v3082, 0.0
  %v3199 = vadd.f32 %v3197, %v3198
  %v3200 = vsel %vm27, %v3083, 0.0
  %v3201 = vadd.f32 %v3199, %v3200
  %v3202 = vsel %vm27, %v3084, 0.0
  %v3203 = vadd.f32 %v3201, %v3202
  %v3204 = vsel %vm27, %v3085, 0.0
  %v3205 = vadd.f32 %v3203, %v3204
  %v3206 = vsel %vm27, %v3086, 0.0
  %v3207 = vadd.f32 %v3205, %v3206
  %v3208 = vsel %vm27, %v3087, 0.0
  %v3209 = vadd.f32 %v3207, %v3208
  %v3210 = vsel %vm27, %v3088, 0.0
  %v3211 = vadd.f32 %v3209, %v3210
  %v3212 = vsel %vm27, %v3089, 0.0
  %v3213 = vadd.f32 %v3211, %v3212
  %v3214 = vsel %vm27, %v3090, 0.0
  %v3215 = vadd.f32 %v3213, %v3214
  %v3216 = vsel %vm27, %v3091, 0.0
  %v3217 = vadd.f32 %v3215, %v3216
  %v3218 = vsel %vm27, %v3092, 0.0
  %v3219 = vadd.f32 %v3217, %v3218
  %v3220 = vrot.slane %v3219, 4
  %v3221 = vadd.f32 %v3219, %v3220
  %v3222 = vrot.slane %v3221, 2
  %v3223 = vadd.f32 %v3221, %v3222
  %v3224 = vrot.slane %v3223, 1
  %v3225 = vadd.f32 %v3223, %v3224
  %v3226 = vmul.f32 %v3225, 0.001953125
  %v3227 = vmul.f32 %v3028, %v3028
  %v3228 = vsub.f32 %v3226, %v3227
  %v3229 = vadd.f32 %v3228, 1e-05
  %v3230 = vrsqrt.pop %v3229
  %v3231 = vmul.f32 %v2893, %v3230
  %v3232 = vmul.f32 %v3028, %v3231
  %v3233 = vsub.f32 %v2894, %v3232
  %v3235 = vlaneseq
  %v3236 = vshrl.u32 %v3235, 7
  %v3237 = vsub.s32 0, %v3236
  %v3238 = vrot.slane %v3231, %v3237
  %v3240 = vmul.f32 %v2639, %v3238
  %v3241 = vmul.f32 %v2642, %v3238
  %v3242 = vmul.f32 %v2647, %v3238
  %v3243 = vmul.f32 %v2650, %v3238
  %v3244 = vmul.f32 %v2655, %v3238
  %v3245 = vmul.f32 %v2658, %v3238
  %v3246 = vmul.f32 %v2663, %v3238
  %v3247 = vmul.f32 %v2666, %v3238
  %v3248 = vmul.f32 %v2671, %v3238
  %v3249 = vmul.f32 %v2674, %v3238
  %v3250 = vmul.f32 %v2679, %v3238
  %v3251 = vmul.f32 %v2682, %v3238
  %v3252 = vmul.f32 %v2687, %v3238
  %v3253 = vmul.f32 %v2690, %v3238
  %v3254 = vmul.f32 %v2695, %v3238
  %v3255 = vmul.f32 %v2698, %v3238
  %v3256 = vmul.f32 %v2703, %v3238
  %v3257 = vmul.f32 %v2706, %v3238
  %v3258 = vmul.f32 %v2711, %v3238
  %v3259 = vmul.f32 %v2714, %v3238
  %v3260 = vmul.f32 %v2719, %v3238
  %v3261 = vmul.f32 %v2722, %v3238
  %v3262 = vmul.f32 %v2727, %v3238
  %v3263 = vmul.f32 %v2730, %v3238
  %v3264 = vmul.f32 %v2735, %v3238
  %v3265 = vmul.f32 %v2738, %v3238
  %v3266 = vmul.f32 %v2743, %v3238
  %v3267 = vmul.f32 %v2746, %v3238
  %v3268 = vmul.f32 %v2751, %v3238
  %v3269 = vmul.f32 %v2754, %v3238
  %v3270 = vmul.f32 %v2759, %v3238
  %v3271 = vmul.f32 %v2762, %v3238
  %v3272 = vmul.f32 %v2767, %v3238
  %v3273 = vmul.f32 %v2770, %v3238
  %v3274 = vmul.f32 %v2775, %v3238
  %v3275 = vmul.f32 %v2778, %v3238
  %v3276 = vmul.f32 %v2783, %v3238
  %v3277 = vmul.f32 %v2786, %v3238
  %v3278 = vmul.f32 %v2791, %v3238
  %v3279 = vmul.f32 %v2794, %v3238
  %v3280 = vmul.f32 %v2799, %v3238
  %v3281 = vmul.f32 %v2802, %v3238
  %v3282 = vmul.f32 %v2807, %v3238
  %v3283 = vmul.f32 %v2810, %v3238
  %v3284 = vmul.f32 %v2815, %v3238
  %v3285 = vmul.f32 %v2818, %v3238
  %v3286 = vmul.f32 %v2823, %v3238
  %v3287 = vmul.f32 %v2826, %v3238
  %v3288 = vmul.f32 %v2831, %v3238
  %v3289 = vmul.f32 %v2834, %v3238
  %v3290 = vmul.f32 %v2839, %v3238
  %v3291 = vmul.f32 %v2842, %v3238
  %v3292 = vmul.f32 %v2847, %v3238
  %v3293 = vmul.f32 %v2850, %v3238
  %v3294 = vmul.f32 %v2855, %v3238
  %v3295 = vmul.f32 %v2858, %v3238
  %v3296 = vmul.f32 %v2863, %v3238
  %v3297 = vmul.f32 %v2866, %v3238
  %v3298 = vmul.f32 %v2871, %v3238
  %v3299 = vmul.f32 %v2874, %v3238
  %v3300 = vmul.f32 %v2879, %v3238
  %v3301 = vmul.f32 %v2882, %v3238
  %v3302 = vmul.f32 %v2887, %v3238
  %v3303 = vmul.f32 %v2890, %v3238
  %v3305 = vlaneseq
  %v3306 = vshrl.u32 %v3305, 7
  %v3307 = vsub.s32 0, %v3306
  %v3308 = vrot.slane %v3233, %v3307
  %v3310 = vadd.f32 %v3240, %v3308
  %v3311 = vadd.f32 %v3241, %v3308
  %v3312 = vadd.f32 %v3242, %v3308
  %v3313 = vadd.f32 %v3243, %v3308
  %v3314 = vadd.f32 %v3244, %v3308
  %v3315 = vadd.f32 %v3245, %v3308
  %v3316 = vadd.f32 %v3246, %v3308
  %v3317 = vadd.f32 %v3247, %v3308
  %v3318 = vadd.f32 %v3248, %v3308
  %v3319 = vadd.f32 %v3249, %v3308
  %v3320 = vadd.f32 %v3250, %v3308
  %v3321 = vadd.f32 %v3251, %v3308
  %v3322 = vadd.f32 %v3252, %v3308
  %v3323 = vadd.f32 %v3253, %v3308
  %v3324 = vadd.f32 %v3254, %v3308
  %v3325 = vadd.f32 %v3255, %v3308
  %v3326 = vadd.f32 %v3256, %v3308
  %v3327 = vadd.f32 %v3257, %v3308
  %v3328 = vadd.f32 %v3258, %v3308
  %v3329 = vadd.f32 %v3259, %v3308
  %v3330 = vadd.f32 %v3260, %v3308
  %v3331 = vadd.f32 %v3261, %v3308
  %v3332 = vadd.f32 %v3262, %v3308
  %v3333 = vadd.f32 %v3263, %v3308
  %v3334 = vadd.f32 %v3264, %v3308
  %v3335 = vadd.f32 %v3265, %v3308
  %v3336 = vadd.f32 %v3266, %v3308
  %v3337 = vadd.f32 %v3267, %v3308
  %v3338 = vadd.f32 %v3268, %v3308
  %v3339 = vadd.f32 %v3269, %v3308
  %v3340 = vadd.f32 %v3270, %v3308
  %v3341 = vadd.f32 %v3271, %v3308
  %v3342 = vadd.f32 %v3272, %v3308
  %v3343 = vadd.f32 %v3273, %v3308
  %v3344 = vadd.f32 %v3274, %v3308
  %v3345 = vadd.f32 %v3275, %v3308
  %v3346 = vadd.f32 %v3276, %v3308
  %v3347 = vadd.f32 %v3277, %v3308
  %v3348 = vadd.f32 %v3278, %v3308
  %v3349 = vadd.f32 %v3279, %v3308
  %v3350 = vadd.f32 %v3280, %v3308
  %v3351 = vadd.f32 %v3281, %v3308
  %v3352 = vadd.f32 %v3282, %v3308
  %v3353 = vadd.f32 %v3283, %v3308
  %v3354 = vadd.f32 %v3284, %v3308
  %v3355 = vadd.f32 %v3285, %v3308
  %v3356 = vadd.f32 %v3286, %v3308
  %v3357 = vadd.f32 %v3287, %v3308
  %v3358 = vadd.f32 %v3288, %v3308
  %v3359 = vadd.f32 %v3289, %v3308
  %v3360 = vadd.f32 %v3290, %v3308
  %v3361 = vadd.f32 %v3291, %v3308
  %v3362 = vadd.f32 %v3292, %v3308
  %v3363 = vadd.f32 %v3293, %v3308
  %v3364 = vadd.f32 %v3294, %v3308
  %v3365 = vadd.f32 %v3295, %v3308
  %v3366 = vadd.f32 %v3296, %v3308
  %v3367 = vadd.f32 %v3297, %v3308
  %v3368 = vadd.f32 %v3298, %v3308
  %v3369 = vadd.f32 %v3299, %v3308
  %v3370 = vadd.f32 %v3300, %v3308
  %v3371 = vadd.f32 %v3301, %v3308
  %v3372 = vadd.f32 %v3302, %v3308
  %v3373 = vadd.f32 %v3303, %v3308
  %vm3374 = vcmp.ge.f32.partialorder %v3310, 0.0
  %vm3375 = vcmp.ge.f32.partialorder %v3311, 0.0
  %vm3376 = vcmp.ge.f32.partialorder %v3312, 0.0
  %vm3377 = vcmp.ge.f32.partialorder %v3313, 0.0
  %vm3378 = vcmp.ge.f32.partialorder %v3314, 0.0
  %vm3379 = vcmp.ge.f32.partialorder %v3315, 0.0
  %vm3380 = vcmp.ge.f32.partialorder %v3316, 0.0
  %vm3381 = vcmp.ge.f32.partialorder %v3317, 0.0
  %vm3382 = vcmp.ge.f32.partialorder %v3318, 0.0
  %vm3383 = vcmp.ge.f32.partialorder %v3319, 0.0
  %vm3384 = vcmp.ge.f32.partialorder %v3320, 0.0
  %vm3385 = vcmp.ge.f32.partialorder %v3321, 0.0
  %vm3386 = vcmp.ge.f32.partialorder %v3322, 0.0
  %vm3387 = vcmp.ge.f32.partialorder %v3323, 0.0
  %vm3388 = vcmp.ge.f32.partialorder %v3324, 0.0
  %vm3389 = vcmp.ge.f32.partialorder %v3325, 0.0
  %vm3390 = vcmp.ge.f32.partialorder %v3326, 0.0
  %vm3391 = vcmp.ge.f32.partialorder %v3327, 0.0
  %vm3392 = vcmp.ge.f32.partialorder %v3328, 0.0
  %vm3393 = vcmp.ge.f32.partialorder %v3329, 0.0
  %vm3394 = vcmp.ge.f32.partialorder %v3330, 0.0
  %vm3395 = vcmp.ge.f32.partialorder %v3331, 0.0
  %vm3396 = vcmp.ge.f32.partialorder %v3332, 0.0
  %vm3397 = vcmp.ge.f32.partialorder %v3333, 0.0
  %vm3398 = vcmp.ge.f32.partialorder %v3334, 0.0
  %vm3399 = vcmp.ge.f32.partialorder %v3335, 0.0
  %vm3400 = vcmp.ge.f32.partialorder %v3336, 0.0
  %vm3401 = vcmp.ge.f32.partialorder %v3337, 0.0
  %vm3402 = vcmp.ge.f32.partialorder %v3338, 0.0
  %vm3403 = vcmp.ge.f32.partialorder %v3339, 0.0
  %vm3404 = vcmp.ge.f32.partialorder %v3340, 0.0
  %vm3405 = vcmp.ge.f32.partialorder %v3341, 0.0
  %vm3406 = vcmp.ge.f32.partialorder %v3342, 0.0
  %vm3407 = vcmp.ge.f32.partialorder %v3343, 0.0
  %vm3408 = vcmp.ge.f32.partialorder %v3344, 0.0
  %vm3409 = vcmp.ge.f32.partialorder %v3345, 0.0
  %vm3410 = vcmp.ge.f32.partialorder %v3346, 0.0
  %vm3411 = vcmp.ge.f32.partialorder %v3347, 0.0
  %vm3412 = vcmp.ge.f32.partialorder %v3348, 0.0
  %vm3413 = vcmp.ge.f32.partialorder %v3349, 0.0
  %vm3414 = vcmp.ge.f32.partialorder %v3350, 0.0
  %vm3415 = vcmp.ge.f32.partialorder %v3351, 0.0
  %vm3416 = vcmp.ge.f32.partialorder %v3352, 0.0
  %vm3417 = vcmp.ge.f32.partialorder %v3353, 0.0
  %vm3418 = vcmp.ge.f32.partialorder %v3354, 0.0
  %vm3419 = vcmp.ge.f32.partialorder %v3355, 0.0
  %vm3420 = vcmp.ge.f32.partialorder %v3356, 0.0
  %vm3421 = vcmp.ge.f32.partialorder %v3357, 0.0
  %vm3422 = vcmp.ge.f32.partialorder %v3358, 0.0
  %vm3423 = vcmp.ge.f32.partialorder %v3359, 0.0
  %vm3424 = vcmp.ge.f32.partialorder %v3360, 0.0
  %vm3425 = vcmp.ge.f32.partialorder %v3361, 0.0
  %vm3426 = vcmp.ge.f32.partialorder %v3362, 0.0
  %vm3427 = vcmp.ge.f32.partialorder %v3363, 0.0
  %vm3428 = vcmp.ge.f32.partialorder %v3364, 0.0
  %vm3429 = vcmp.ge.f32.partialorder %v3365, 0.0
  %vm3430 = vcmp.ge.f32.partialorder %v3366, 0.0
  %vm3431 = vcmp.ge.f32.partialorder %v3367, 0.0
  %vm3432 = vcmp.ge.f32.partialorder %v3368, 0.0
  %vm3433 = vcmp.ge.f32.partialorder %v3369, 0.0
  %vm3434 = vcmp.ge.f32.partialorder %v3370, 0.0
  %vm3435 = vcmp.ge.f32.partialorder %v3371, 0.0
  %vm3436 = vcmp.ge.f32.partialorder %v3372, 0.0
  %vm3437 = vcmp.ge.f32.partialorder %v3373, 0.0
  %v3438 = vmul.f32 %v3310, 0.01
  %v3439 = vmul.f32 %v3311, 0.01
  %v3440 = vmul.f32 %v3312, 0.01
  %v3441 = vmul.f32 %v3313, 0.01
  %v3442 = vmul.f32 %v3314, 0.01
  %v3443 = vmul.f32 %v3315, 0.01
  %v3444 = vmul.f32 %v3316, 0.01
  %v3445 = vmul.f32 %v3317, 0.01
  %v3446 = vmul.f32 %v3318, 0.01
  %v3447 = vmul.f32 %v3319, 0.01
  %v3448 = vmul.f32 %v3320, 0.01
  %v3449 = vmul.f32 %v3321, 0.01
  %v3450 = vmul.f32 %v3322, 0.01
  %v3451 = vmul.f32 %v3323, 0.01
  %v3452 = vmul.f32 %v3324, 0.01
  %v3453 = vmul.f32 %v3325, 0.01
  %v3454 = vmul.f32 %v3326, 0.01
  %v3455 = vmul.f32 %v3327, 0.01
  %v3456 = vmul.f32 %v3328, 0.01
  %v3457 = vmul.f32 %v3329, 0.01
  %v3458 = vmul.f32 %v3330, 0.01
  %v3459 = vmul.f32 %v3331, 0.01
  %v3460 = vmul.f32 %v3332, 0.01
  %v3461 = vmul.f32 %v3333, 0.01
  %v3462 = vmul.f32 %v3334, 0.01
  %v3463 = vmul.f32 %v3335, 0.01
  %v3464 = vmul.f32 %v3336, 0.01
  %v3465 = vmul.f32 %v3337, 0.01
  %v3466 = vmul.f32 %v3338, 0.01
  %v3467 = vmul.f32 %v3339, 0.01
  %v3468 = vmul.f32 %v3340, 0.01
  %v3469 = vmul.f32 %v3341, 0.01
  %v3470 = vmul.f32 %v3342, 0.01
  %v3471 = vmul.f32 %v3343, 0.01
  %v3472 = vmul.f32 %v3344, 0.01
  %v3473 = vmul.f32 %v3345, 0.01
  %v3474 = vmul.f32 %v3346, 0.01
  %v3475 = vmul.f32 %v3347, 0.01
  %v3476 = vmul.f32 %v3348, 0.01
  %v3477 = vmul.f32 %v3349, 0.01
  %v3478 = vmul.f32 %v3350, 0.01
  %v3479 = vmul.f32 %v3351, 0.01
  %v3480 = vmul.f32 %v3352, 0.01
  %v3481 = vmul.f32 %v3353, 0.01
  %v3482 = vmul.f32 %v3354, 0.01
  %v3483 = vmul.f32 %v3355, 0.01
  %v3484 = vmul.f32 %v3356, 0.01
  %v3485 = vmul.f32 %v3357, 0.01
  %v3486 = vmul.f32 %v3358, 0.01
  %v3487 = vmul.f32 %v3359, 0.01
  %v3488 = vmul.f32 %v3360, 0.01
  %v3489 = vmul.f32 %v3361, 0.01
  %v3490 = vmul.f32 %v3362, 0.01
  %v3491 = vmul.f32 %v3363, 0.01
  %v3492 = vmul.f32 %v3364, 0.01
  %v3493 = vmul.f32 %v3365, 0.01
  %v3494 = vmul.f32 %v3366, 0.01
  %v3495 = vmul.f32 %v3367, 0.01
  %v3496 = vmul.f32 %v3368, 0.01
  %v3497 = vmul.f32 %v3369, 0.01
  %v3498 = vmul.f32 %v3370, 0.01
  %v3499 = vmul.f32 %v3371, 0.01
  %v3500 = vmul.f32 %v3372, 0.01
  %v3501 = vmul.f32 %v3373, 0.01
  %v3502 = vsel %vm3374, %v3310, %v3438
  %v3503 = vsel %vm3375, %v3311, %v3439
  %v3504 = vsel %vm3376, %v3312, %v3440
  %v3505 = vsel %vm3377, %v3313, %v3441
  %v3506 = vsel %vm3378, %v3314, %v3442
  %v3507 = vsel %vm3379, %v3315, %v3443
  %v3508 = vsel %vm3380, %v3316, %v3444
  %v3509 = vsel %vm3381, %v3317, %v3445
  %v3510 = vsel %vm3382, %v3318, %v3446
  %v3511 = vsel %vm3383, %v3319, %v3447
  %v3512 = vsel %vm3384, %v3320, %v3448
  %v3513 = vsel %vm3385, %v3321, %v3449
  %v3514 = vsel %vm3386, %v3322, %v3450
  %v3515 = vsel %vm3387, %v3323, %v3451
  %v3516 = vsel %vm3388, %v3324, %v3452
  %v3517 = vsel %vm3389, %v3325, %v3453
  %v3518 = vsel %vm3390, %v3326, %v3454
  %v3519 = vsel %vm3391, %v3327, %v3455
  %v3520 = vsel %vm3392, %v3328, %v3456
  %v3521 = vsel %vm3393, %v3329, %v3457
  %v3522 = vsel %vm3394, %v3330, %v3458
  %v3523 = vsel %vm3395, %v3331, %v3459
  %v3524 = vsel %vm3396, %v3332, %v3460
  %v3525 = vsel %vm3397, %v3333, %v3461
  %v3526 = vsel %vm3398, %v3334, %v3462
  %v3527 = vsel %vm3399, %v3335, %v3463
  %v3528 = vsel %vm3400, %v3336, %v3464
  %v3529 = vsel %vm3401, %v3337, %v3465
  %v3530 = vsel %vm3402, %v3338, %v3466
  %v3531 = vsel %vm3403, %v3339, %v3467
  %v3532 = vsel %vm3404, %v3340, %v3468
  %v3533 = vsel %vm3405, %v3341, %v3469
  %v3534 = vsel %vm3406, %v3342, %v3470
  %v3535 = vsel %vm3407, %v3343, %v3471
  %v3536 = vsel %vm3408, %v3344, %v3472
  %v3537 = vsel %vm3409, %v3345, %v3473
  %v3538 = vsel %vm3410, %v3346, %v3474
  %v3539 = vsel %vm3411, %v3347, %v3475
  %v3540 = vsel %vm3412, %v3348, %v3476
  %v3541 = vsel %vm3413, %v3349, %v3477
  %v3542 = vsel %vm3414, %v3350, %v3478
  %v3543 = vsel %vm3415, %v3351, %v3479
  %v3544 = vsel %vm3416, %v3352, %v3480
  %v3545 = vsel %vm3417, %v3353, %v3481
  %v3546 = vsel %vm3418, %v3354, %v3482
  %v3547 = vsel %vm3419, %v3355, %v3483
  %v3548 = vsel %vm3420, %v3356, %v3484
  %v3549 = vsel %vm3421, %v3357, %v3485
  %v3550 = vsel %vm3422, %v3358, %v3486
  %v3551 = vsel %vm3423, %v3359, %v3487
  %v3552 = vsel %vm3424, %v3360, %v3488
  %v3553 = vsel %vm3425, %v3361, %v3489
  %v3554 = vsel %vm3426, %v3362, %v3490
  %v3555 = vsel %vm3427, %v3363, %v3491
  %v3556 = vsel %vm3428, %v3364, %v3492
  %v3557 = vsel %vm3429, %v3365, %v3493
  %v3558 = vsel %vm3430, %v3366, %v3494
  %v3559 = vsel %vm3431, %v3367, %v3495
  %v3560 = vsel %vm3432, %v3368, %v3496
  %v3561 = vsel %vm3433, %v3369, %v3497
  %v3562 = vsel %vm3434, %v3370, %v3498
  %v3563 = vsel %vm3435, %v3371, %v3499
  %v3564 = vsel %vm3436, %v3372, %v3500
  %v3565 = vsel %vm3437, %v3373, %v3501
  %3566 = vst.msk [vmem:[%s201 + $0x1] sm:$0xff] %vm27, %v3502
  %3567 = vst.msk [vmem:[%s201 + $0x9] sm:$0xff] %vm27, %v3503
  %3568 = vst.msk [vmem:[%s201 + $0x19] sm:$0xff] %vm27, %v3504
  %3569 = vst.msk [vmem:[%s201 + $0x21] sm:$0xff] %vm27, %v3505
  %3570 = vst.msk [vmem:[%s201 + $0x31] sm:$0xff] %vm27, %v3506
  %3571 = vst.msk [vmem:[%s201 + $0x39] sm:$0xff] %vm27, %v3507
  %3572 = vst.msk [vmem:[%s201 + $0x49] sm:$0xff] %vm27, %v3508
  %3573 = vst.msk [vmem:[%s201 + $0x51] sm:$0xff] %vm27, %v3509
  %3574 = vst.msk [vmem:[%s201 + $0x61] sm:$0xff] %vm27, %v3510
  %3575 = vst.msk [vmem:[%s201 + $0x69] sm:$0xff] %vm27, %v3511
  %3576 = vst.msk [vmem:[%s201 + $0x79] sm:$0xff] %vm27, %v3512
  %3577 = vst.msk [vmem:[%s201 + $0x81] sm:$0xff] %vm27, %v3513
  %3578 = vst.msk [vmem:[%s201 + $0x91] sm:$0xff] %vm27, %v3514
  %3579 = vst.msk [vmem:[%s201 + $0x99] sm:$0xff] %vm27, %v3515
  %3580 = vst.msk [vmem:[%s201 + $0xa9] sm:$0xff] %vm27, %v3516
  %3581 = vst.msk [vmem:[%s201 + $0xb1] sm:$0xff] %vm27, %v3517
  %3582 = vst.msk [vmem:[%s201 + $0xc1] sm:$0xff] %vm27, %v3518
  %3583 = vst.msk [vmem:[%s201 + $0xc9] sm:$0xff] %vm27, %v3519
  %3584 = vst.msk [vmem:[%s201 + $0xd9] sm:$0xff] %vm27, %v3520
  %3585 = vst.msk [vmem:[%s201 + $0xe1] sm:$0xff] %vm27, %v3521
  %3586 = vst.msk [vmem:[%s201 + $0xf1] sm:$0xff] %vm27, %v3522
  %3587 = vst.msk [vmem:[%s201 + $0xf9] sm:$0xff] %vm27, %v3523
  %3588 = vst.msk [vmem:[%s201 + $0x109] sm:$0xff] %vm27, %v3524
  %3589 = vst.msk [vmem:[%s201 + $0x111] sm:$0xff] %vm27, %v3525
  %3590 = vst.msk [vmem:[%s201 + $0x121] sm:$0xff] %vm27, %v3526
  %3591 = vst.msk [vmem:[%s201 + $0x129] sm:$0xff] %vm27, %v3527
  %3592 = vst.msk [vmem:[%s201 + $0x139] sm:$0xff] %vm27, %v3528
  %3593 = vst.msk [vmem:[%s201 + $0x141] sm:$0xff] %vm27, %v3529
  %3594 = vst.msk [vmem:[%s201 + $0x151] sm:$0xff] %vm27, %v3530
  %3595 = vst.msk [vmem:[%s201 + $0x159] sm:$0xff] %vm27, %v3531
  %3596 = vst.msk [vmem:[%s201 + $0x169] sm:$0xff] %vm27, %v3532
  %3597 = vst.msk [vmem:[%s201 + $0x171] sm:$0xff] %vm27, %v3533
  %3598 = vst.msk [vmem:[%s201 + $0x1b1] sm:$0xff] %vm27, %v3534
  %3599 = vst.msk [vmem:[%s201 + $0x1b9] sm:$0xff] %vm27, %v3535
  %3600 = vst.msk [vmem:[%s201 + $0x1c9] sm:$0xff] %vm27, %v3536
  %3601 = vst.msk [vmem:[%s201 + $0x1d1] sm:$0xff] %vm27, %v3537
  %3602 = vst.msk [vmem:[%s201 + $0x1e1] sm:$0xff] %vm27, %v3538
  %3603 = vst.msk [vmem:[%s201 + $0x1e9] sm:$0xff] %vm27, %v3539
  %3604 = vst.msk [vmem:[%s201 + $0x1f9] sm:$0xff] %vm27, %v3540
  %3605 = vst.msk [vmem:[%s201 + $0x201] sm:$0xff] %vm27, %v3541
  %3606 = vst.msk [vmem:[%s201 + $0x211] sm:$0xff] %vm27, %v3542
  %3607 = vst.msk [vmem:[%s201 + $0x219] sm:$0xff] %vm27, %v3543
  %3608 = vst.msk [vmem:[%s201 + $0x229] sm:$0xff] %vm27, %v3544
  %3609 = vst.msk [vmem:[%s201 + $0x231] sm:$0xff] %vm27, %v3545
  %3610 = vst.msk [vmem:[%s201 + $0x241] sm:$0xff] %vm27, %v3546
  %3611 = vst.msk [vmem:[%s201 + $0x249] sm:$0xff] %vm27, %v3547
  %3612 = vst.msk [vmem:[%s201 + $0x259] sm:$0xff] %vm27, %v3548
  %3613 = vst.msk [vmem:[%s201 + $0x261] sm:$0xff] %vm27, %v3549
  %3614 = vst.msk [vmem:[%s201 + $0x271] sm:$0xff] %vm27, %v3550
  %3615 = vst.msk [vmem:[%s201 + $0x279] sm:$0xff] %vm27, %v3551
  %3616 = vst.msk [vmem:[%s201 + $0x289] sm:$0xff] %vm27, %v3552
  %3617 = vst.msk [vmem:[%s201 + $0x291] sm:$0xff] %vm27, %v3553
  %3618 = vst.msk [vmem:[%s201 + $0x2a1] sm:$0xff] %vm27, %v3554
  %3619 = vst.msk [vmem:[%s201 + $0x2a9] sm:$0xff] %vm27, %v3555
  %3620 = vst.msk [vmem:[%s201 + $0x2b9] sm:$0xff] %vm27, %v3556
  %3621 = vst.msk [vmem:[%s201 + $0x2c1] sm:$0xff] %vm27, %v3557
  %3622 = vst.msk [vmem:[%s201 + $0x2d1] sm:$0xff] %vm27, %v3558
  %3623 = vst.msk [vmem:[%s201 + $0x2d9] sm:$0xff] %vm27, %v3559
  %3624 = vst.msk [vmem:[%s201 + $0x2e9] sm:$0xff] %vm27, %v3560
  %3625 = vst.msk [vmem:[%s201 + $0x2f1] sm:$0xff] %vm27, %v3561
  %3626 = vst.msk [vmem:[%s201 + $0x301] sm:$0xff] %vm27, %v3562
  %3627 = vst.msk [vmem:[%s201 + $0x309] sm:$0xff] %vm27, %v3563
  %3628 = vst.msk [vmem:[%s201 + $0x319] sm:$0xff] %vm27, %v3564
  %3629 = vst.msk [vmem:[%s201 + $0x321] sm:$0xff] %vm27, %v3565
  %v3630 = vld [vmem:[#allocation2] sm:$0xff]
  %v3631 = vld [vmem:[#allocation2 + $0x8] sm:$0xff]
  %v3632 = vld [vmem:[#allocation2 + $0x18] sm:$0xff]
  %v3633 = vld [vmem:[#allocation2 + $0x20] sm:$0xff]
  %v3634 = vld [vmem:[#allocation2 + $0x30] sm:$0xff]
  %v3635 = vld [vmem:[#allocation2 + $0x38] sm:$0xff]
  %v3636 = vld [vmem:[#allocation2 + $0x48] sm:$0xff]
  %v3637 = vld [vmem:[#allocation2 + $0x50] sm:$0xff]
  %v3638 = vld [vmem:[#allocation2 + $0x60] sm:$0xff]
  %v3639 = vld [vmem:[#allocation2 + $0x68] sm:$0xff]
  %v3640 = vld [vmem:[#allocation2 + $0x78] sm:$0xff]
  %v3641 = vld [vmem:[#allocation2 + $0x80] sm:$0xff]
  %v3642 = vld [vmem:[#allocation2 + $0x90] sm:$0xff]
  %v3643 = vld [vmem:[#allocation2 + $0x98] sm:$0xff]
  %v3644 = vld [vmem:[#allocation2 + $0xa8] sm:$0xff]
  %v3645 = vld [vmem:[#allocation2 + $0xb0] sm:$0xff]
  %v3646 = vld [vmem:[#allocation2 + $0xc0] sm:$0xff]
  %v3647 = vld [vmem:[#allocation2 + $0xc8] sm:$0xff]
  %v3648 = vld [vmem:[#allocation2 + $0xd8] sm:$0xff]
  %v3649 = vld [vmem:[#allocation2 + $0xe0] sm:$0xff]
  %v3650 = vld [vmem:[#allocation2 + $0xf0] sm:$0xff]
  %v3651 = vld [vmem:[#allocation2 + $0xf8] sm:$0xff]
  %v3652 = vld [vmem:[#allocation2 + $0x108] sm:$0xff]
  %v3653 = vld [vmem:[#allocation2 + $0x110] sm:$0xff]
  %v3654 = vld [vmem:[#allocation2 + $0x120] sm:$0xff]
  %v3655 = vld [vmem:[#allocation2 + $0x128] sm:$0xff]
  %v3656 = vld [vmem:[#allocation2 + $0x138] sm:$0xff]
  %v3657 = vld [vmem:[#allocation2 + $0x140] sm:$0xff]
  %v3658 = vld [vmem:[#allocation2 + $0x150] sm:$0xff]
  %v3659 = vld [vmem:[#allocation2 + $0x158] sm:$0xff]
  %v3660 = vld [vmem:[#allocation2 + $0x168] sm:$0xff]
  %v3661 = vld [vmem:[#allocation2 + $0x170] sm:$0xff]
  %v3662 = vld [vmem:[#allocation2 + $0x1b0] sm:$0xff]
  %v3663 = vld [vmem:[#allocation2 + $0x1b8] sm:$0xff]
  %v3664 = vld [vmem:[#allocation2 + $0x1c8] sm:$0xff]
  %v3665 = vld [vmem:[#allocation2 + $0x1d0] sm:$0xff]
  %v3666 = vld [vmem:[#allocation2 + $0x1e0] sm:$0xff]
  %v3667 = vld [vmem:[#allocation2 + $0x1e8] sm:$0xff]
  %v3668 = vld [vmem:[#allocation2 + $0x1f8] sm:$0xff]
  %v3669 = vld [vmem:[#allocation2 + $0x200] sm:$0xff]
  %v3670 = vld [vmem:[#allocation2 + $0x210] sm:$0xff]
  %v3671 = vld [vmem:[#allocation2 + $0x218] sm:$0xff]
  %v3672 = vld [vmem:[#allocation2 + $0x228] sm:$0xff]
  %v3673 = vld [vmem:[#allocation2 + $0x230] sm:$0xff]
  %v3674 = vld [vmem:[#allocation2 + $0x240] sm:$0xff]
  %v3675 = vld [vmem:[#allocation2 + $0x248] sm:$0xff]
  %v3676 = vld [vmem:[#allocation2 + $0x258] sm:$0xff]
  %v3677 = vld [vmem:[#allocation2 + $0x260] sm:$0xff]
  %v3678 = vld [vmem:[#allocation2 + $0x270] sm:$0xff]
  %v3679 = vld [vmem:[#allocation2 + $0x278] sm:$0xff]
  %v3680 = vld [vmem:[#allocation2 + $0x288] sm:$0xff]
  %v3681 = vld [vmem:[#allocation2 + $0x290] sm:$0xff]
  %v3682 = vld [vmem:[#allocation2 + $0x2a0] sm:$0xff]
  %v3683 = vld [vmem:[#allocation2 + $0x2a8] sm:$0xff]
  %v3684 = vld [vmem:[#allocation2 + $0x2b8] sm:$0xff]
  %v3685 = vld [vmem:[#allocation2 + $0x2c0] sm:$0xff]
  %v3686 = vld [vmem:[#allocation2 + $0x2d0] sm:$0xff]
  %v3687 = vld [vmem:[#allocation2 + $0x2d8] sm:$0xff]
  %v3688 = vld [vmem:[#allocation2 + $0x2e8] sm:$0xff]
  %v3689 = vld [vmem:[#allocation2 + $0x2f0] sm:$0xff]
  %v3690 = vld [vmem:[#allocation2 + $0x300] sm:$0xff]
  %v3691 = vld [vmem:[#allocation2 + $0x308] sm:$0xff]
  %v3692 = vld [vmem:[#allocation2 + $0x318] sm:$0xff]
  %v3693 = vld [vmem:[#allocation2 + $0x320] sm:$0xff]
  %v3694 = vpack.c.bf16 %v3631, %v3630
  %v3695 = vpack.c.bf16 %v3633, %v3632
  %v3696 = vpack.c.bf16 %v3635, %v3634
  %v3697 = vpack.c.bf16 %v3637, %v3636
  %v3698 = vpack.c.bf16 %v3639, %v3638
  %v3699 = vpack.c.bf16 %v3641, %v3640
  %v3700 = vpack.c.bf16 %v3643, %v3642
  %v3701 = vpack.c.bf16 %v3645, %v3644
  %v3702 = vpack.c.bf16 %v3647, %v3646
  %v3703 = vpack.c.bf16 %v3649, %v3648
  %v3704 = vpack.c.bf16 %v3651, %v3650
  %v3705 = vpack.c.bf16 %v3653, %v3652
  %v3706 = vpack.c.bf16 %v3655, %v3654
  %v3707 = vpack.c.bf16 %v3657, %v3656
  %v3708 = vpack.c.bf16 %v3659, %v3658
  %v3709 = vpack.c.bf16 %v3661, %v3660
  %v3710 = vpack.c.bf16 %v3663, %v3662
  %v3711 = vpack.c.bf16 %v3665, %v3664
  %v3712 = vpack.c.bf16 %v3667, %v3666
  %v3713 = vpack.c.bf16 %v3669, %v3668
  %v3714 = vpack.c.bf16 %v3671, %v3670
  %v3715 = vpack.c.bf16 %v3673, %v3672
  %v3716 = vpack.c.bf16 %v3675, %v3674
  %v3717 = vpack.c.bf16 %v3677, %v3676
  %v3718 = vpack.c.bf16 %v3679, %v3678
  %v3719 = vpack.c.bf16 %v3681, %v3680
  %v3720 = vpack.c.bf16 %v3683, %v3682
  %v3721 = vpack.c.bf16 %v3685, %v3684
  %v3722 = vpack.c.bf16 %v3687, %v3686
  %v3723 = vpack.c.bf16 %v3689, %v3688
  %v3724 = vpack.c.bf16 %v3691, %v3690
  %v3725 = vpack.c.bf16 %v3693, %v3692
  %3726 = vst.msk [vmem:[#allocation3] sm:$0xff] %vm27, %v3694
  %3727 = vst.msk [vmem:[#allocation3 + $0x8] sm:$0xff] %vm27, %v3695
  %3728 = vst.msk [vmem:[#allocation3 + $0x10] sm:$0xff] %vm27, %v3696
  %3729 = vst.msk [vmem:[#allocation3 + $0x18] sm:$0xff] %vm27, %v3697
  %3730 = vst.msk [vmem:[#allocation3 + $0x20] sm:$0xff] %vm27, %v3698
  %3731 = vst.msk [vmem:[#allocation3 + $0x28] sm:$0xff] %vm27, %v3699
  %3732 = vst.msk [vmem:[#allocation3 + $0x30] sm:$0xff] %vm27, %v3700
  %3733 = vst.msk [vmem:[#allocation3 + $0x38] sm:$0xff] %vm27, %v3701
  %3734 = vst.msk [vmem:[#allocation3 + $0x40] sm:$0xff] %vm27, %v3702
  %3735 = vst.msk [vmem:[#allocation3 + $0x48] sm:$0xff] %vm27, %v3703
  %3736 = vst.msk [vmem:[#allocation3 + $0x50] sm:$0xff] %vm27, %v3704
  %3737 = vst.msk [vmem:[#allocation3 + $0x58] sm:$0xff] %vm27, %v3705
  %3738 = vst.msk [vmem:[#allocation3 + $0x60] sm:$0xff] %vm27, %v3706
  %3739 = vst.msk [vmem:[#allocation3 + $0x68] sm:$0xff] %vm27, %v3707
  %3740 = vst.msk [vmem:[#allocation3 + $0x70] sm:$0xff] %vm27, %v3708
  %3741 = vst.msk [vmem:[#allocation3 + $0x78] sm:$0xff] %vm27, %v3709
  %3742 = vst.msk [vmem:[#allocation3 + $0x80] sm:$0xff] %vm27, %v3710
  %3743 = vst.msk [vmem:[#allocation3 + $0x88] sm:$0xff] %vm27, %v3711
  %3744 = vst.msk [vmem:[#allocation3 + $0x90] sm:$0xff] %vm27, %v3712
  %3745 = vst.msk [vmem:[#allocation3 + $0x98] sm:$0xff] %vm27, %v3713
  %3746 = vst.msk [vmem:[#allocation3 + $0xa0] sm:$0xff] %vm27, %v3714
  %3747 = vst.msk [vmem:[#allocation3 + $0xa8] sm:$0xff] %vm27, %v3715
  %3748 = vst.msk [vmem:[#allocation3 + $0xb0] sm:$0xff] %vm27, %v3716
  %3749 = vst.msk [vmem:[#allocation3 + $0xb8] sm:$0xff] %vm27, %v3717
  %3750 = vst.msk [vmem:[#allocation3 + $0xc0] sm:$0xff] %vm27, %v3718
  %3751 = vst.msk [vmem:[#allocation3 + $0xc8] sm:$0xff] %vm27, %v3719
  %3752 = vst.msk [vmem:[#allocation3 + $0xd0] sm:$0xff] %vm27, %v3720
  %3753 = vst.msk [vmem:[#allocation3 + $0xd8] sm:$0xff] %vm27, %v3721
  %3754 = vst.msk [vmem:[#allocation3 + $0xe0] sm:$0xff] %vm27, %v3722
  %3755 = vst.msk [vmem:[#allocation3 + $0xe8] sm:$0xff] %vm27, %v3723
  %3756 = vst.msk [vmem:[#allocation3 + $0xf0] sm:$0xff] %vm27, %v3724
  %3757 = vst.msk [vmem:[#allocation3 + $0xf8] sm:$0xff] %vm27, %v3725
  %v3758 = vld [vmem:[#allocation2 + $0x1] sm:$0xff]
  %v3759 = vld [vmem:[#allocation2 + $0x9] sm:$0xff]
  %v3760 = vld [vmem:[#allocation2 + $0x19] sm:$0xff]
  %v3761 = vld [vmem:[#allocation2 + $0x21] sm:$0xff]
  %v3762 = vld [vmem:[#allocation2 + $0x31] sm:$0xff]
  %v3763 = vld [vmem:[#allocation2 + $0x39] sm:$0xff]
  %v3764 = vld [vmem:[#allocation2 + $0x49] sm:$0xff]
  %v3765 = vld [vmem:[#allocation2 + $0x51] sm:$0xff]
  %v3766 = vld [vmem:[#allocation2 + $0x61] sm:$0xff]
  %v3767 = vld [vmem:[#allocation2 + $0x69] sm:$0xff]
  %v3768 = vld [vmem:[#allocation2 + $0x79] sm:$0xff]
  %v3769 = vld [vmem:[#allocation2 + $0x81] sm:$0xff]
  %v3770 = vld [vmem:[#allocation2 + $0x91] sm:$0xff]
  %v3771 = vld [vmem:[#allocation2 + $0x99] sm:$0xff]
  %v3772 = vld [vmem:[#allocation2 + $0xa9] sm:$0xff]
  %v3773 = vld [vmem:[#allocation2 + $0xb1] sm:$0xff]
  %v3774 = vld [vmem:[#allocation2 + $0xc1] sm:$0xff]
  %v3775 = vld [vmem:[#allocation2 + $0xc9] sm:$0xff]
  %v3776 = vld [vmem:[#allocation2 + $0xd9] sm:$0xff]
  %v3777 = vld [vmem:[#allocation2 + $0xe1] sm:$0xff]
  %v3778 = vld [vmem:[#allocation2 + $0xf1] sm:$0xff]
  %v3779 = vld [vmem:[#allocation2 + $0xf9] sm:$0xff]
  %v3780 = vld [vmem:[#allocation2 + $0x109] sm:$0xff]
  %v3781 = vld [vmem:[#allocation2 + $0x111] sm:$0xff]
  %v3782 = vld [vmem:[#allocation2 + $0x121] sm:$0xff]
  %v3783 = vld [vmem:[#allocation2 + $0x129] sm:$0xff]
  %v3784 = vld [vmem:[#allocation2 + $0x139] sm:$0xff]
  %v3785 = vld [vmem:[#allocation2 + $0x141] sm:$0xff]
  %v3786 = vld [vmem:[#allocation2 + $0x151] sm:$0xff]
  %v3787 = vld [vmem:[#allocation2 + $0x159] sm:$0xff]
  %v3788 = vld [vmem:[#allocation2 + $0x169] sm:$0xff]
  %v3789 = vld [vmem:[#allocation2 + $0x171] sm:$0xff]
  %v3790 = vld [vmem:[#allocation2 + $0x1b1] sm:$0xff]
  %v3791 = vld [vmem:[#allocation2 + $0x1b9] sm:$0xff]
  %v3792 = vld [vmem:[#allocation2 + $0x1c9] sm:$0xff]
  %v3793 = vld [vmem:[#allocation2 + $0x1d1] sm:$0xff]
  %v3794 = vld [vmem:[#allocation2 + $0x1e1] sm:$0xff]
  %v3795 = vld [vmem:[#allocation2 + $0x1e9] sm:$0xff]
  %v3796 = vld [vmem:[#allocation2 + $0x1f9] sm:$0xff]
  %v3797 = vld [vmem:[#allocation2 + $0x201] sm:$0xff]
  %v3798 = vld [vmem:[#allocation2 + $0x211] sm:$0xff]
  %v3799 = vld [vmem:[#allocation2 + $0x219] sm:$0xff]
  %v3800 = vld [vmem:[#allocation2 + $0x229] sm:$0xff]
  %v3801 = vld [vmem:[#allocation2 + $0x231] sm:$0xff]
  %v3802 = vld [vmem:[#allocation2 + $0x241] sm:$0xff]
  %v3803 = vld [vmem:[#allocation2 + $0x249] sm:$0xff]
  %v3804 = vld [vmem:[#allocation2 + $0x259] sm:$0xff]
  %v3805 = vld [vmem:[#allocation2 + $0x261] sm:$0xff]
  %v3806 = vld [vmem:[#allocation2 + $0x271] sm:$0xff]
  %v3807 = vld [vmem:[#allocation2 + $0x279] sm:$0xff]
  %v3808 = vld [vmem:[#allocation2 + $0x289] sm:$0xff]
  %v3809 = vld [vmem:[#allocation2 + $0x291] sm:$0xff]
  %v3810 = vld [vmem:[#allocation2 + $0x2a1] sm:$0xff]
  %v3811 = vld [vmem:[#allocation2 + $0x2a9] sm:$0xff]
  %v3812 = vld [vmem:[#allocation2 + $0x2b9] sm:$0xff]
  %v3813 = vld [vmem:[#allocation2 + $0x2c1] sm:$0xff]
  %v3814 = vld [vmem:[#allocation2 + $0x2d1] sm:$0xff]
  %v3815 = vld [vmem:[#allocation2 + $0x2d9] sm:$0xff]
  %v3816 = vld [vmem:[#allocation2 + $0x2e9] sm:$0xff]
  %v3817 = vld [vmem:[#allocation2 + $0x2f1] sm:$0xff]
  %v3818 = vld [vmem:[#allocation2 + $0x301] sm:$0xff]
  %v3819 = vld [vmem:[#allocation2 + $0x309] sm:$0xff]
  %v3820 = vld [vmem:[#allocation2 + $0x319] sm:$0xff]
  %v3821 = vld [vmem:[#allocation2 + $0x321] sm:$0xff]
  %v3822 = vpack.c.bf16 %v3759, %v3758
  %v3823 = vpack.c.bf16 %v3761, %v3760
  %v3824 = vpack.c.bf16 %v3763, %v3762
  %v3825 = vpack.c.bf16 %v3765, %v3764
  %v3826 = vpack.c.bf16 %v3767, %v3766
  %v3827 = vpack.c.bf16 %v3769, %v3768
  %v3828 = vpack.c.bf16 %v3771, %v3770
  %v3829 = vpack.c.bf16 %v3773, %v3772
  %v3830 = vpack.c.bf16 %v3775, %v3774
  %v3831 = vpack.c.bf16 %v3777, %v3776
  %v3832 = vpack.c.bf16 %v3779, %v3778
  %v3833 = vpack.c.bf16 %v3781, %v3780
  %v3834 = vpack.c.bf16 %v3783, %v3782
  %v3835 = vpack.c.bf16 %v3785, %v3784
  %v3836 = vpack.c.bf16 %v3787, %v3786
  %v3837 = vpack.c.bf16 %v3789, %v3788
  %v3838 = vpack.c.bf16 %v3791, %v3790
  %v3839 = vpack.c.bf16 %v3793, %v3792
  %v3840 = vpack.c.bf16 %v3795, %v3794
  %v3841 = vpack.c.bf16 %v3797, %v3796
  %v3842 = vpack.c.bf16 %v3799, %v3798
  %v3843 = vpack.c.bf16 %v3801, %v3800
  %v3844 = vpack.c.bf16 %v3803, %v3802
  %v3845 = vpack.c.bf16 %v3805, %v3804
  %v3846 = vpack.c.bf16 %v3807, %v3806
  %v3847 = vpack.c.bf16 %v3809, %v3808
  %v3848 = vpack.c.bf16 %v3811, %v3810
  %v3849 = vpack.c.bf16 %v3813, %v3812
  %v3850 = vpack.c.bf16 %v3815, %v3814
  %v3851 = vpack.c.bf16 %v3817, %v3816
  %v3852 = vpack.c.bf16 %v3819, %v3818
  %v3853 = vpack.c.bf16 %v3821, %v3820
  %3886 = vrot.lane.b32.xlu0 %v3822, 4
  %v3887 = vpop.permute.xlu0 %3886
  %3888 = vrot.lane.b32.xlu0 %v3823, 4
  %v3889 = vpop.permute.xlu0 %3888
  %3890 = vrot.lane.b32.xlu0 %v3824, 4
  %v3891 = vpop.permute.xlu0 %3890
  %3892 = vrot.lane.b32.xlu0 %v3825, 4
  %v3893 = vpop.permute.xlu0 %3892
  %3894 = vrot.lane.b32.xlu0 %v3826, 4
  %v3895 = vpop.permute.xlu0 %3894
  %3896 = vrot.lane.b32.xlu0 %v3827, 4
  %v3897 = vpop.permute.xlu0 %3896
  %3898 = vrot.lane.b32.xlu0 %v3828, 4
  %v3899 = vpop.permute.xlu0 %3898
  %3900 = vrot.lane.b32.xlu0 %v3829, 4
  %v3901 = vpop.permute.xlu0 %3900
  %3902 = vrot.lane.b32.xlu0 %v3830, 4
  %v3903 = vpop.permute.xlu0 %3902
  %3904 = vrot.lane.b32.xlu0 %v3831, 4
  %v3905 = vpop.permute.xlu0 %3904
  %3906 = vrot.lane.b32.xlu0 %v3832, 4
  %v3907 = vpop.permute.xlu0 %3906
  %3908 = vrot.lane.b32.xlu0 %v3833, 4
  %v3909 = vpop.permute.xlu0 %3908
  %3910 = vrot.lane.b32.xlu0 %v3834, 4
  %v3911 = vpop.permute.xlu0 %3910
  %3912 = vrot.lane.b32.xlu0 %v3835, 4
  %v3913 = vpop.permute.xlu0 %3912
  %3914 = vrot.lane.b32.xlu0 %v3836, 4
  %v3915 = vpop.permute.xlu0 %3914
  %3916 = vrot.lane.b32.xlu0 %v3837, 4
  %v3917 = vpop.permute.xlu0 %3916
  %3918 = vrot.lane.b32.xlu0 %v3838, 4
  %v3919 = vpop.permute.xlu0 %3918
  %3920 = vrot.lane.b32.xlu0 %v3839, 4
  %v3921 = vpop.permute.xlu0 %3920
  %3922 = vrot.lane.b32.xlu0 %v3840, 4
  %v3923 = vpop.permute.xlu0 %3922
  %3924 = vrot.lane.b32.xlu0 %v3841, 4
  %v3925 = vpop.permute.xlu0 %3924
  %3926 = vrot.lane.b32.xlu0 %v3842, 4
  %v3927 = vpop.permute.xlu0 %3926
  %3928 = vrot.lane.b32.xlu0 %v3843, 4
  %v3929 = vpop.permute.xlu0 %3928
  %3930 = vrot.lane.b32.xlu0 %v3844, 4
  %v3931 = vpop.permute.xlu0 %3930
  %3932 = vrot.lane.b32.xlu0 %v3845, 4
  %v3933 = vpop.permute.xlu0 %3932
  %3934 = vrot.lane.b32.xlu0 %v3846, 4
  %v3935 = vpop.permute.xlu0 %3934
  %3936 = vrot.lane.b32.xlu0 %v3847, 4
  %v3937 = vpop.permute.xlu0 %3936
  %3938 = vrot.lane.b32.xlu0 %v3848, 4
  %v3939 = vpop.permute.xlu0 %3938
  %3940 = vrot.lane.b32.xlu0 %v3849, 4
  %v3941 = vpop.permute.xlu0 %3940
  %3942 = vrot.lane.b32.xlu0 %v3850, 4
  %v3943 = vpop.permute.xlu0 %3942
  %3944 = vrot.lane.b32.xlu0 %v3851, 4
  %v3945 = vpop.permute.xlu0 %3944
  %3946 = vrot.lane.b32.xlu0 %v3852, 4
  %v3947 = vpop.permute.xlu0 %3946
  %3948 = vrot.lane.b32.xlu0 %v3853, 4
  %v3949 = vpop.permute.xlu0 %3948
  %3982 = vst.msk [vmem:[#allocation3] sm:$0xff] %vm618, %v3887
  %3983 = vst.msk [vmem:[#allocation3 + $0x8] sm:$0xff] %vm618, %v3889
  %3984 = vst.msk [vmem:[#allocation3 + $0x10] sm:$0xff] %vm618, %v3891
  %3985 = vst.msk [vmem:[#allocation3 + $0x18] sm:$0xff] %vm618, %v3893
  %3986 = vst.msk [vmem:[#allocation3 + $0x20] sm:$0xff] %vm618, %v3895
  %3987 = vst.msk [vmem:[#allocation3 + $0x28] sm:$0xff] %vm618, %v3897
  %3988 = vst.msk [vmem:[#allocation3 + $0x30] sm:$0xff] %vm618, %v3899
  %3989 = vst.msk [vmem:[#allocation3 + $0x38] sm:$0xff] %vm618, %v3901
  %3990 = vst.msk [vmem:[#allocation3 + $0x40] sm:$0xff] %vm618, %v3903
  %3991 = vst.msk [vmem:[#allocation3 + $0x48] sm:$0xff] %vm618, %v3905
  %3992 = vst.msk [vmem:[#allocation3 + $0x50] sm:$0xff] %vm618, %v3907
  %3993 = vst.msk [vmem:[#allocation3 + $0x58] sm:$0xff] %vm618, %v3909
  %3994 = vst.msk [vmem:[#allocation3 + $0x60] sm:$0xff] %vm618, %v3911
  %3995 = vst.msk [vmem:[#allocation3 + $0x68] sm:$0xff] %vm618, %v3913
  %3996 = vst.msk [vmem:[#allocation3 + $0x70] sm:$0xff] %vm618, %v3915
  %3997 = vst.msk [vmem:[#allocation3 + $0x78] sm:$0xff] %vm618, %v3917
  %3998 = vst.msk [vmem:[#allocation3 + $0x80] sm:$0xff] %vm618, %v3919
  %3999 = vst.msk [vmem:[#allocation3 + $0x88] sm:$0xff] %vm618, %v3921
  %4000 = vst.msk [vmem:[#allocation3 + $0x90] sm:$0xff] %vm618, %v3923
  %4001 = vst.msk [vmem:[#allocation3 + $0x98] sm:$0xff] %vm618, %v3925
  %4002 = vst.msk [vmem:[#allocation3 + $0xa0] sm:$0xff] %vm618, %v3927
  %4003 = vst.msk [vmem:[#allocation3 + $0xa8] sm:$0xff] %vm618, %v3929
  %4004 = vst.msk [vmem:[#allocation3 + $0xb0] sm:$0xff] %vm618, %v3931
  %4005 = vst.msk [vmem:[#allocation3 + $0xb8] sm:$0xff] %vm618, %v3933
  %4006 = vst.msk [vmem:[#allocation3 + $0xc0] sm:$0xff] %vm618, %v3935
  %4007 = vst.msk [vmem:[#allocation3 + $0xc8] sm:$0xff] %vm618, %v3937
  %4008 = vst.msk [vmem:[#allocation3 + $0xd0] sm:$0xff] %vm618, %v3939
  %4009 = vst.msk [vmem:[#allocation3 + $0xd8] sm:$0xff] %vm618, %v3941
  %4010 = vst.msk [vmem:[#allocation3 + $0xe0] sm:$0xff] %vm618, %v3943
  %4011 = vst.msk [vmem:[#allocation3 + $0xe8] sm:$0xff] %vm618, %v3945
  %4012 = vst.msk [vmem:[#allocation3 + $0xf0] sm:$0xff] %vm618, %v3947
  %4013 = vst.msk [vmem:[#allocation3 + $0xf8] sm:$0xff] %vm618, %v3949
  %v4014 = vld [vmem:[#allocation2 + $0x2] sm:$0xff]
  %v4015 = vld [vmem:[#allocation2 + $0xa] sm:$0xff]
  %v4016 = vld [vmem:[#allocation2 + $0x1a] sm:$0xff]
  %v4017 = vld [vmem:[#allocation2 + $0x22] sm:$0xff]
  %v4018 = vld [vmem:[#allocation2 + $0x32] sm:$0xff]
  %v4019 = vld [vmem:[#allocation2 + $0x3a] sm:$0xff]
  %v4020 = vld [vmem:[#allocation2 + $0x4a] sm:$0xff]
  %v4021 = vld [vmem:[#allocation2 + $0x52] sm:$0xff]
  %v4022 = vld [vmem:[#allocation2 + $0x62] sm:$0xff]
  %v4023 = vld [vmem:[#allocation2 + $0x6a] sm:$0xff]
  %v4024 = vld [vmem:[#allocation2 + $0x7a] sm:$0xff]
  %v4025 = vld [vmem:[#allocation2 + $0x82] sm:$0xff]
  %v4026 = vld [vmem:[#allocation2 + $0x92] sm:$0xff]
  %v4027 = vld [vmem:[#allocation2 + $0x9a] sm:$0xff]
  %v4028 = vld [vmem:[#allocation2 + $0xaa] sm:$0xff]
  %v4029 = vld [vmem:[#allocation2 + $0xb2] sm:$0xff]
  %v4030 = vld [vmem:[#allocation2 + $0xc2] sm:$0xff]
  %v4031 = vld [vmem:[#allocation2 + $0xca] sm:$0xff]
  %v4032 = vld [vmem:[#allocation2 + $0xda] sm:$0xff]
  %v4033 = vld [vmem:[#allocation2 + $0xe2] sm:$0xff]
  %v4034 = vld [vmem:[#allocation2 + $0xf2] sm:$0xff]
  %v4035 = vld [vmem:[#allocation2 + $0xfa] sm:$0xff]
  %v4036 = vld [vmem:[#allocation2 + $0x10a] sm:$0xff]
  %v4037 = vld [vmem:[#allocation2 + $0x112] sm:$0xff]
  %v4038 = vld [vmem:[#allocation2 + $0x122] sm:$0xff]
  %v4039 = vld [vmem:[#allocation2 + $0x12a] sm:$0xff]
  %v4040 = vld [vmem:[#allocation2 + $0x13a] sm:$0xff]
  %v4041 = vld [vmem:[#allocation2 + $0x142] sm:$0xff]
  %v4042 = vld [vmem:[#allocation2 + $0x152] sm:$0xff]
  %v4043 = vld [vmem:[#allocation2 + $0x15a] sm:$0xff]
  %v4044 = vld [vmem:[#allocation2 + $0x16a] sm:$0xff]
  %v4045 = vld [vmem:[#allocation2 + $0x172] sm:$0xff]
  %v4046 = vld [vmem:[#allocation2 + $0x1b2] sm:$0xff]
  %v4047 = vld [vmem:[#allocation2 + $0x1ba] sm:$0xff]
  %v4048 = vld [vmem:[#allocation2 + $0x1ca] sm:$0xff]
  %v4049 = vld [vmem:[#allocation2 + $0x1d2] sm:$0xff]
  %v4050 = vld [vmem:[#allocation2 + $0x1e2] sm:$0xff]
  %v4051 = vld [vmem:[#allocation2 + $0x1ea] sm:$0xff]
  %v4052 = vld [vmem:[#allocation2 + $0x1fa] sm:$0xff]
  %v4053 = vld [vmem:[#allocation2 + $0x202] sm:$0xff]
  %v4054 = vld [vmem:[#allocation2 + $0x212] sm:$0xff]
  %v4055 = vld [vmem:[#allocation2 + $0x21a] sm:$0xff]
  %v4056 = vld [vmem:[#allocation2 + $0x22a] sm:$0xff]
  %v4057 = vld [vmem:[#allocation2 + $0x232] sm:$0xff]
  %v4058 = vld [vmem:[#allocation2 + $0x242] sm:$0xff]
  %v4059 = vld [vmem:[#allocation2 + $0x24a] sm:$0xff]
  %v4060 = vld [vmem:[#allocation2 + $0x25a] sm:$0xff]
  %v4061 = vld [vmem:[#allocation2 + $0x262] sm:$0xff]
  %v4062 = vld [vmem:[#allocation2 + $0x272] sm:$0xff]
  %v4063 = vld [vmem:[#allocation2 + $0x27a] sm:$0xff]
  %v4064 = vld [vmem:[#allocation2 + $0x28a] sm:$0xff]
  %v4065 = vld [vmem:[#allocation2 + $0x292] sm:$0xff]
  %v4066 = vld [vmem:[#allocation2 + $0x2a2] sm:$0xff]
  %v4067 = vld [vmem:[#allocation2 + $0x2aa] sm:$0xff]
  %v4068 = vld [vmem:[#allocation2 + $0x2ba] sm:$0xff]
  %v4069 = vld [vmem:[#allocation2 + $0x2c2] sm:$0xff]
  %v4070 = vld [vmem:[#allocation2 + $0x2d2] sm:$0xff]
  %v4071 = vld [vmem:[#allocation2 + $0x2da] sm:$0xff]
  %v4072 = vld [vmem:[#allocation2 + $0x2ea] sm:$0xff]
  %v4073 = vld [vmem:[#allocation2 + $0x2f2] sm:$0xff]
  %v4074 = vld [vmem:[#allocation2 + $0x302] sm:$0xff]
  %v4075 = vld [vmem:[#allocation2 + $0x30a] sm:$0xff]
  %v4076 = vld [vmem:[#allocation2 + $0x31a] sm:$0xff]
  %v4077 = vld [vmem:[#allocation2 + $0x322] sm:$0xff]
  %v4078 = vpack.c.bf16 %v4015, %v4014
  %v4079 = vpack.c.bf16 %v4017, %v4016
  %v4080 = vpack.c.bf16 %v4019, %v4018
  %v4081 = vpack.c.bf16 %v4021, %v4020
  %v4082 = vpack.c.bf16 %v4023, %v4022
  %v4083 = vpack.c.bf16 %v4025, %v4024
  %v4084 = vpack.c.bf16 %v4027, %v4026
  %v4085 = vpack.c.bf16 %v4029, %v4028
  %v4086 = vpack.c.bf16 %v4031, %v4030
  %v4087 = vpack.c.bf16 %v4033, %v4032
  %v4088 = vpack.c.bf16 %v4035, %v4034
  %v4089 = vpack.c.bf16 %v4037, %v4036
  %v4090 = vpack.c.bf16 %v4039, %v4038
  %v4091 = vpack.c.bf16 %v4041, %v4040
  %v4092 = vpack.c.bf16 %v4043, %v4042
  %v4093 = vpack.c.bf16 %v4045, %v4044
  %v4094 = vpack.c.bf16 %v4047, %v4046
  %v4095 = vpack.c.bf16 %v4049, %v4048
  %v4096 = vpack.c.bf16 %v4051, %v4050
  %v4097 = vpack.c.bf16 %v4053, %v4052
  %v4098 = vpack.c.bf16 %v4055, %v4054
  %v4099 = vpack.c.bf16 %v4057, %v4056
  %v4100 = vpack.c.bf16 %v4059, %v4058
  %v4101 = vpack.c.bf16 %v4061, %v4060
  %v4102 = vpack.c.bf16 %v4063, %v4062
  %v4103 = vpack.c.bf16 %v4065, %v4064
  %v4104 = vpack.c.bf16 %v4067, %v4066
  %v4105 = vpack.c.bf16 %v4069, %v4068
  %v4106 = vpack.c.bf16 %v4071, %v4070
  %v4107 = vpack.c.bf16 %v4073, %v4072
  %v4108 = vpack.c.bf16 %v4075, %v4074
  %v4109 = vpack.c.bf16 %v4077, %v4076
  %4142 = vrot.lane.b32.xlu0 %v4078, 8
  %v4143 = vpop.permute.xlu0 %4142
  %4144 = vrot.lane.b32.xlu0 %v4079, 8
  %v4145 = vpop.permute.xlu0 %4144
  %4146 = vrot.lane.b32.xlu0 %v4080, 8
  %v4147 = vpop.permute.xlu0 %4146
  %4148 = vrot.lane.b32.xlu0 %v4081, 8
  %v4149 = vpop.permute.xlu0 %4148
  %4150 = vrot.lane.b32.xlu0 %v4082, 8
  %v4151 = vpop.permute.xlu0 %4150
  %4152 = vrot.lane.b32.xlu0 %v4083, 8
  %v4153 = vpop.permute.xlu0 %4152
  %4154 = vrot.lane.b32.xlu0 %v4084, 8
  %v4155 = vpop.permute.xlu0 %4154
  %4156 = vrot.lane.b32.xlu0 %v4085, 8
  %v4157 = vpop.permute.xlu0 %4156
  %4158 = vrot.lane.b32.xlu0 %v4086, 8
  %v4159 = vpop.permute.xlu0 %4158
  %4160 = vrot.lane.b32.xlu0 %v4087, 8
  %v4161 = vpop.permute.xlu0 %4160
  %4162 = vrot.lane.b32.xlu0 %v4088, 8
  %v4163 = vpop.permute.xlu0 %4162
  %4164 = vrot.lane.b32.xlu0 %v4089, 8
  %v4165 = vpop.permute.xlu0 %4164
  %4166 = vrot.lane.b32.xlu0 %v4090, 8
  %v4167 = vpop.permute.xlu0 %4166
  %4168 = vrot.lane.b32.xlu0 %v4091, 8
  %v4169 = vpop.permute.xlu0 %4168
  %4170 = vrot.lane.b32.xlu0 %v4092, 8
  %v4171 = vpop.permute.xlu0 %4170
  %4172 = vrot.lane.b32.xlu0 %v4093, 8
  %v4173 = vpop.permute.xlu0 %4172
  %4174 = vrot.lane.b32.xlu0 %v4094, 8
  %v4175 = vpop.permute.xlu0 %4174
  %4176 = vrot.lane.b32.xlu0 %v4095, 8
  %v4177 = vpop.permute.xlu0 %4176
  %4178 = vrot.lane.b32.xlu0 %v4096, 8
  %v4179 = vpop.permute.xlu0 %4178
  %4180 = vrot.lane.b32.xlu0 %v4097, 8
  %v4181 = vpop.permute.xlu0 %4180
  %4182 = vrot.lane.b32.xlu0 %v4098, 8
  %v4183 = vpop.permute.xlu0 %4182
  %4184 = vrot.lane.b32.xlu0 %v4099, 8
  %v4185 = vpop.permute.xlu0 %4184
  %4186 = vrot.lane.b32.xlu0 %v4100, 8
  %v4187 = vpop.permute.xlu0 %4186
  %4188 = vrot.lane.b32.xlu0 %v4101, 8
  %v4189 = vpop.permute.xlu0 %4188
  %4190 = vrot.lane.b32.xlu0 %v4102, 8
  %v4191 = vpop.permute.xlu0 %4190
  %4192 = vrot.lane.b32.xlu0 %v4103, 8
  %v4193 = vpop.permute.xlu0 %4192
  %4194 = vrot.lane.b32.xlu0 %v4104, 8
  %v4195 = vpop.permute.xlu0 %4194
  %4196 = vrot.lane.b32.xlu0 %v4105, 8
  %v4197 = vpop.permute.xlu0 %4196
  %4198 = vrot.lane.b32.xlu0 %v4106, 8
  %v4199 = vpop.permute.xlu0 %4198
  %4200 = vrot.lane.b32.xlu0 %v4107, 8
  %v4201 = vpop.permute.xlu0 %4200
  %4202 = vrot.lane.b32.xlu0 %v4108, 8
  %v4203 = vpop.permute.xlu0 %4202
  %4204 = vrot.lane.b32.xlu0 %v4109, 8
  %v4205 = vpop.permute.xlu0 %4204
  %4238 = vst.msk [vmem:[#allocation3] sm:$0xff] %vm875, %v4143
  %4239 = vst.msk [vmem:[#allocation3 + $0x8] sm:$0xff] %vm875, %v4145
  %4240 = vst.msk [vmem:[#allocation3 + $0x10] sm:$0xff] %vm875, %v4147
  %4241 = vst.msk [vmem:[#allocation3 + $0x18] sm:$0xff] %vm875, %v4149
  %4242 = vst.msk [vmem:[#allocation3 + $0x20] sm:$0xff] %vm875, %v4151
  %4243 = vst.msk [vmem:[#allocation3 + $0x28] sm:$0xff] %vm875, %v4153
  %4244 = vst.msk [vmem:[#allocation3 + $0x30] sm:$0xff] %vm875, %v4155
  %4245 = vst.msk [vmem:[#allocation3 + $0x38] sm:$0xff] %vm875, %v4157
  %4246 = vst.msk [vmem:[#allocation3 + $0x40] sm:$0xff] %vm875, %v4159
  %4247 = vst.msk [vmem:[#allocation3 + $0x48] sm:$0xff] %vm875, %v4161
  %4248 = vst.msk [vmem:[#allocation3 + $0x50] sm:$0xff] %vm875, %v4163
  %4249 = vst.msk [vmem:[#allocation3 + $0x58] sm:$0xff] %vm875, %v4165
  %4250 = vst.msk [vmem:[#allocation3 + $0x60] sm:$0xff] %vm875, %v4167
  %4251 = vst.msk [vmem:[#allocation3 + $0x68] sm:$0xff] %vm875, %v4169
  %4252 = vst.msk [vmem:[#allocation3 + $0x70] sm:$0xff] %vm875, %v4171
  %4253 = vst.msk [vmem:[#allocation3 + $0x78] sm:$0xff] %vm875, %v4173
  %4254 = vst.msk [vmem:[#allocation3 + $0x80] sm:$0xff] %vm875, %v4175
  %4255 = vst.msk [vmem:[#allocation3 + $0x88] sm:$0xff] %vm875, %v4177
  %4256 = vst.msk [vmem:[#allocation3 + $0x90] sm:$0xff] %vm875, %v4179
  %4257 = vst.msk [vmem:[#allocation3 + $0x98] sm:$0xff] %vm875, %v4181
  %4258 = vst.msk [vmem:[#allocation3 + $0xa0] sm:$0xff] %vm875, %v4183
  %4259 = vst.msk [vmem:[#allocation3 + $0xa8] sm:$0xff] %vm875, %v4185
  %4260 = vst.msk [vmem:[#allocation3 + $0xb0] sm:$0xff] %vm875, %v4187
  %4261 = vst.msk [vmem:[#allocation3 + $0xb8] sm:$0xff] %vm875, %v4189
  %4262 = vst.msk [vmem:[#allocation3 + $0xc0] sm:$0xff] %vm875, %v4191
  %4263 = vst.msk [vmem:[#allocation3 + $0xc8] sm:$0xff] %vm875, %v4193
  %4264 = vst.msk [vmem:[#allocation3 + $0xd0] sm:$0xff] %vm875, %v4195
  %4265 = vst.msk [vmem:[#allocation3 + $0xd8] sm:$0xff] %vm875, %v4197
  %4266 = vst.msk [vmem:[#allocation3 + $0xe0] sm:$0xff] %vm875, %v4199
  %4267 = vst.msk [vmem:[#allocation3 + $0xe8] sm:$0xff] %vm875, %v4201
  %4268 = vst.msk [vmem:[#allocation3 + $0xf0] sm:$0xff] %vm875, %v4203
  %4269 = vst.msk [vmem:[#allocation3 + $0xf8] sm:$0xff] %vm875, %v4205
  %v4270 = vld [vmem:[%s201] sm:$0xff]
  %v4271 = vld [vmem:[%s201 + $0x8] sm:$0xff]
  %v4272 = vld [vmem:[%s201 + $0x18] sm:$0xff]
  %v4273 = vld [vmem:[%s201 + $0x20] sm:$0xff]
  %v4274 = vld [vmem:[%s201 + $0x30] sm:$0xff]
  %v4275 = vld [vmem:[%s201 + $0x38] sm:$0xff]
  %v4276 = vld [vmem:[%s201 + $0x48] sm:$0xff]
  %v4277 = vld [vmem:[%s201 + $0x50] sm:$0xff]
  %v4278 = vld [vmem:[%s201 + $0x60] sm:$0xff]
  %v4279 = vld [vmem:[%s201 + $0x68] sm:$0xff]
  %v4280 = vld [vmem:[%s201 + $0x78] sm:$0xff]
  %v4281 = vld [vmem:[%s201 + $0x80] sm:$0xff]
  %v4282 = vld [vmem:[%s201 + $0x90] sm:$0xff]
  %v4283 = vld [vmem:[%s201 + $0x98] sm:$0xff]
  %v4284 = vld [vmem:[%s201 + $0xa8] sm:$0xff]
  %v4285 = vld [vmem:[%s201 + $0xb0] sm:$0xff]
  %v4286 = vld [vmem:[%s201 + $0xc0] sm:$0xff]
  %v4287 = vld [vmem:[%s201 + $0xc8] sm:$0xff]
  %v4288 = vld [vmem:[%s201 + $0xd8] sm:$0xff]
  %v4289 = vld [vmem:[%s201 + $0xe0] sm:$0xff]
  %v4290 = vld [vmem:[%s201 + $0xf0] sm:$0xff]
  %v4291 = vld [vmem:[%s201 + $0xf8] sm:$0xff]
  %v4292 = vld [vmem:[%s201 + $0x108] sm:$0xff]
  %v4293 = vld [vmem:[%s201 + $0x110] sm:$0xff]
  %v4294 = vld [vmem:[%s201 + $0x120] sm:$0xff]
  %v4295 = vld [vmem:[%s201 + $0x128] sm:$0xff]
  %v4296 = vld [vmem:[%s201 + $0x138] sm:$0xff]
  %v4297 = vld [vmem:[%s201 + $0x140] sm:$0xff]
  %v4298 = vld [vmem:[%s201 + $0x150] sm:$0xff]
  %v4299 = vld [vmem:[%s201 + $0x158] sm:$0xff]
  %v4300 = vld [vmem:[%s201 + $0x168] sm:$0xff]
  %v4301 = vld [vmem:[%s201 + $0x170] sm:$0xff]
  %v4302 = vld [vmem:[%s201 + $0x1b0] sm:$0xff]
  %v4303 = vld [vmem:[%s201 + $0x1b8] sm:$0xff]
  %v4304 = vld [vmem:[%s201 + $0x1c8] sm:$0xff]
  %v4305 = vld [vmem:[%s201 + $0x1d0] sm:$0xff]
  %v4306 = vld [vmem:[%s201 + $0x1e0] sm:$0xff]
  %v4307 = vld [vmem:[%s201 + $0x1e8] sm:$0xff]
  %v4308 = vld [vmem:[%s201 + $0x1f8] sm:$0xff]
  %v4309 = vld [vmem:[%s201 + $0x200] sm:$0xff]
  %v4310 = vld [vmem:[%s201 + $0x210] sm:$0xff]
  %v4311 = vld [vmem:[%s201 + $0x218] sm:$0xff]
  %v4312 = vld [vmem:[%s201 + $0x228] sm:$0xff]
  %v4313 = vld [vmem:[%s201 + $0x230] sm:$0xff]
  %v4314 = vld [vmem:[%s201 + $0x240] sm:$0xff]
  %v4315 = vld [vmem:[%s201 + $0x248] sm:$0xff]
  %v4316 = vld [vmem:[%s201 + $0x258] sm:$0xff]
  %v4317 = vld [vmem:[%s201 + $0x260] sm:$0xff]
  %v4318 = vld [vmem:[%s201 + $0x270] sm:$0xff]
  %v4319 = vld [vmem:[%s201 + $0x278] sm:$0xff]
  %v4320 = vld [vmem:[%s201 + $0x288] sm:$0xff]
  %v4321 = vld [vmem:[%s201 + $0x290] sm:$0xff]
  %v4322 = vld [vmem:[%s201 + $0x2a0] sm:$0xff]
  %v4323 = vld [vmem:[%s201 + $0x2a8] sm:$0xff]
  %v4324 = vld [vmem:[%s201 + $0x2b8] sm:$0xff]
  %v4325 = vld [vmem:[%s201 + $0x2c0] sm:$0xff]
  %v4326 = vld [vmem:[%s201 + $0x2d0] sm:$0xff]
  %v4327 = vld [vmem:[%s201 + $0x2d8] sm:$0xff]
  %v4328 = vld [vmem:[%s201 + $0x2e8] sm:$0xff]
  %v4329 = vld [vmem:[%s201 + $0x2f0] sm:$0xff]
  %v4330 = vld [vmem:[%s201 + $0x300] sm:$0xff]
  %v4331 = vld [vmem:[%s201 + $0x308] sm:$0xff]
  %v4332 = vld [vmem:[%s201 + $0x318] sm:$0xff]
  %v4333 = vld [vmem:[%s201 + $0x320] sm:$0xff]
  %v4334 = vpack.c.bf16 %v4271, %v4270
  %v4335 = vpack.c.bf16 %v4273, %v4272
  %v4336 = vpack.c.bf16 %v4275, %v4274
  %v4337 = vpack.c.bf16 %v4277, %v4276
  %v4338 = vpack.c.bf16 %v4279, %v4278
  %v4339 = vpack.c.bf16 %v4281, %v4280
  %v4340 = vpack.c.bf16 %v4283, %v4282
  %v4341 = vpack.c.bf16 %v4285, %v4284
  %v4342 = vpack.c.bf16 %v4287, %v4286
  %v4343 = vpack.c.bf16 %v4289, %v4288
  %v4344 = vpack.c.bf16 %v4291, %v4290
  %v4345 = vpack.c.bf16 %v4293, %v4292
  %v4346 = vpack.c.bf16 %v4295, %v4294
  %v4347 = vpack.c.bf16 %v4297, %v4296
  %v4348 = vpack.c.bf16 %v4299, %v4298
  %v4349 = vpack.c.bf16 %v4301, %v4300
  %v4350 = vpack.c.bf16 %v4303, %v4302
  %v4351 = vpack.c.bf16 %v4305, %v4304
  %v4352 = vpack.c.bf16 %v4307, %v4306
  %v4353 = vpack.c.bf16 %v4309, %v4308
  %v4354 = vpack.c.bf16 %v4311, %v4310
  %v4355 = vpack.c.bf16 %v4313, %v4312
  %v4356 = vpack.c.bf16 %v4315, %v4314
  %v4357 = vpack.c.bf16 %v4317, %v4316
  %v4358 = vpack.c.bf16 %v4319, %v4318
  %v4359 = vpack.c.bf16 %v4321, %v4320
  %v4360 = vpack.c.bf16 %v4323, %v4322
  %v4361 = vpack.c.bf16 %v4325, %v4324
  %v4362 = vpack.c.bf16 %v4327, %v4326
  %v4363 = vpack.c.bf16 %v4329, %v4328
  %v4364 = vpack.c.bf16 %v4331, %v4330
  %v4365 = vpack.c.bf16 %v4333, %v4332
  %4398 = vrot.lane.b32.xlu0 %v4334, 12
  %v4399 = vpop.permute.xlu0 %4398
  %4400 = vrot.lane.b32.xlu0 %v4335, 12
  %v4401 = vpop.permute.xlu0 %4400
  %4402 = vrot.lane.b32.xlu0 %v4336, 12
  %v4403 = vpop.permute.xlu0 %4402
  %4404 = vrot.lane.b32.xlu0 %v4337, 12
  %v4405 = vpop.permute.xlu0 %4404
  %4406 = vrot.lane.b32.xlu0 %v4338, 12
  %v4407 = vpop.permute.xlu0 %4406
  %4408 = vrot.lane.b32.xlu0 %v4339, 12
  %v4409 = vpop.permute.xlu0 %4408
  %4410 = vrot.lane.b32.xlu0 %v4340, 12
  %v4411 = vpop.permute.xlu0 %4410
  %4412 = vrot.lane.b32.xlu0 %v4341, 12
  %v4413 = vpop.permute.xlu0 %4412
  %4414 = vrot.lane.b32.xlu0 %v4342, 12
  %v4415 = vpop.permute.xlu0 %4414
  %4416 = vrot.lane.b32.xlu0 %v4343, 12
  %v4417 = vpop.permute.xlu0 %4416
  %4418 = vrot.lane.b32.xlu0 %v4344, 12
  %v4419 = vpop.permute.xlu0 %4418
  %4420 = vrot.lane.b32.xlu0 %v4345, 12
  %v4421 = vpop.permute.xlu0 %4420
  %4422 = vrot.lane.b32.xlu0 %v4346, 12
  %v4423 = vpop.permute.xlu0 %4422
  %4424 = vrot.lane.b32.xlu0 %v4347, 12
  %v4425 = vpop.permute.xlu0 %4424
  %4426 = vrot.lane.b32.xlu0 %v4348, 12
  %v4427 = vpop.permute.xlu0 %4426
  %4428 = vrot.lane.b32.xlu0 %v4349, 12
  %v4429 = vpop.permute.xlu0 %4428
  %4430 = vrot.lane.b32.xlu0 %v4350, 12
  %v4431 = vpop.permute.xlu0 %4430
  %4432 = vrot.lane.b32.xlu0 %v4351, 12
  %v4433 = vpop.permute.xlu0 %4432
  %4434 = vrot.lane.b32.xlu0 %v4352, 12
  %v4435 = vpop.permute.xlu0 %4434
  %4436 = vrot.lane.b32.xlu0 %v4353, 12
  %v4437 = vpop.permute.xlu0 %4436
  %4438 = vrot.lane.b32.xlu0 %v4354, 12
  %v4439 = vpop.permute.xlu0 %4438
  %4440 = vrot.lane.b32.xlu0 %v4355, 12
  %v4441 = vpop.permute.xlu0 %4440
  %4442 = vrot.lane.b32.xlu0 %v4356, 12
  %v4443 = vpop.permute.xlu0 %4442
  %4444 = vrot.lane.b32.xlu0 %v4357, 12
  %v4445 = vpop.permute.xlu0 %4444
  %4446 = vrot.lane.b32.xlu0 %v4358, 12
  %v4447 = vpop.permute.xlu0 %4446
  %4448 = vrot.lane.b32.xlu0 %v4359, 12
  %v4449 = vpop.permute.xlu0 %4448
  %4450 = vrot.lane.b32.xlu0 %v4360, 12
  %v4451 = vpop.permute.xlu0 %4450
  %4452 = vrot.lane.b32.xlu0 %v4361, 12
  %v4453 = vpop.permute.xlu0 %4452
  %4454 = vrot.lane.b32.xlu0 %v4362, 12
  %v4455 = vpop.permute.xlu0 %4454
  %4456 = vrot.lane.b32.xlu0 %v4363, 12
  %v4457 = vpop.permute.xlu0 %4456
  %4458 = vrot.lane.b32.xlu0 %v4364, 12
  %v4459 = vpop.permute.xlu0 %4458
  %4460 = vrot.lane.b32.xlu0 %v4365, 12
  %v4461 = vpop.permute.xlu0 %4460
  %4494 = vst.msk [vmem:[#allocation3] sm:$0xff] %vm1132, %v4399
  %4495 = vst.msk [vmem:[#allocation3 + $0x8] sm:$0xff] %vm1132, %v4401
  %4496 = vst.msk [vmem:[#allocation3 + $0x10] sm:$0xff] %vm1132, %v4403
  %4497 = vst.msk [vmem:[#allocation3 + $0x18] sm:$0xff] %vm1132, %v4405
  %4498 = vst.msk [vmem:[#allocation3 + $0x20] sm:$0xff] %vm1132, %v4407
  %4499 = vst.msk [vmem:[#allocation3 + $0x28] sm:$0xff] %vm1132, %v4409
  %4500 = vst.msk [vmem:[#allocation3 + $0x30] sm:$0xff] %vm1132, %v4411
  %4501 = vst.msk [vmem:[#allocation3 + $0x38] sm:$0xff] %vm1132, %v4413
  %4502 = vst.msk [vmem:[#allocation3 + $0x40] sm:$0xff] %vm1132, %v4415
  %4503 = vst.msk [vmem:[#allocation3 + $0x48] sm:$0xff] %vm1132, %v4417
  %4504 = vst.msk [vmem:[#allocation3 + $0x50] sm:$0xff] %vm1132, %v4419
  %4505 = vst.msk [vmem:[#allocation3 + $0x58] sm:$0xff] %vm1132, %v4421
  %4506 = vst.msk [vmem:[#allocation3 + $0x60] sm:$0xff] %vm1132, %v4423
  %4507 = vst.msk [vmem:[#allocation3 + $0x68] sm:$0xff] %vm1132, %v4425
  %4508 = vst.msk [vmem:[#allocation3 + $0x70] sm:$0xff] %vm1132, %v4427
  %4509 = vst.msk [vmem:[#allocation3 + $0x78] sm:$0xff] %vm1132, %v4429
  %4510 = vst.msk [vmem:[#allocation3 + $0x80] sm:$0xff] %vm1132, %v4431
  %4511 = vst.msk [vmem:[#allocation3 + $0x88] sm:$0xff] %vm1132, %v4433
  %4512 = vst.msk [vmem:[#allocation3 + $0x90] sm:$0xff] %vm1132, %v4435
  %4513 = vst.msk [vmem:[#allocation3 + $0x98] sm:$0xff] %vm1132, %v4437
  %4514 = vst.msk [vmem:[#allocation3 + $0xa0] sm:$0xff] %vm1132, %v4439
  %4515 = vst.msk [vmem:[#allocation3 + $0xa8] sm:$0xff] %vm1132, %v4441
  %4516 = vst.msk [vmem:[#allocation3 + $0xb0] sm:$0xff] %vm1132, %v4443
  %4517 = vst.msk [vmem:[#allocation3 + $0xb8] sm:$0xff] %vm1132, %v4445
  %4518 = vst.msk [vmem:[#allocation3 + $0xc0] sm:$0xff] %vm1132, %v4447
  %4519 = vst.msk [vmem:[#allocation3 + $0xc8] sm:$0xff] %vm1132, %v4449
  %4520 = vst.msk [vmem:[#allocation3 + $0xd0] sm:$0xff] %vm1132, %v4451
  %4521 = vst.msk [vmem:[#allocation3 + $0xd8] sm:$0xff] %vm1132, %v4453
  %4522 = vst.msk [vmem:[#allocation3 + $0xe0] sm:$0xff] %vm1132, %v4455
  %4523 = vst.msk [vmem:[#allocation3 + $0xe8] sm:$0xff] %vm1132, %v4457
  %4524 = vst.msk [vmem:[#allocation3 + $0xf0] sm:$0xff] %vm1132, %v4459
  %4525 = vst.msk [vmem:[#allocation3 + $0xf8] sm:$0xff] %vm1132, %v4461
  %v4526 = vld [vmem:[%s201 + $0x1] sm:$0xff]
  %v4527 = vld [vmem:[%s201 + $0x9] sm:$0xff]
  %v4528 = vld [vmem:[%s201 + $0x19] sm:$0xff]
  %v4529 = vld [vmem:[%s201 + $0x21] sm:$0xff]
  %v4530 = vld [vmem:[%s201 + $0x31] sm:$0xff]
  %v4531 = vld [vmem:[%s201 + $0x39] sm:$0xff]
  %v4532 = vld [vmem:[%s201 + $0x49] sm:$0xff]
  %v4533 = vld [vmem:[%s201 + $0x51] sm:$0xff]
  %v4534 = vld [vmem:[%s201 + $0x61] sm:$0xff]
  %v4535 = vld [vmem:[%s201 + $0x69] sm:$0xff]
  %v4536 = vld [vmem:[%s201 + $0x79] sm:$0xff]
  %v4537 = vld [vmem:[%s201 + $0x81] sm:$0xff]
  %v4538 = vld [vmem:[%s201 + $0x91] sm:$0xff]
  %v4539 = vld [vmem:[%s201 + $0x99] sm:$0xff]
  %v4540 = vld [vmem:[%s201 + $0xa9] sm:$0xff]
  %v4541 = vld [vmem:[%s201 + $0xb1] sm:$0xff]
  %v4542 = vld [vmem:[%s201 + $0xc1] sm:$0xff]
  %v4543 = vld [vmem:[%s201 + $0xc9] sm:$0xff]
  %v4544 = vld [vmem:[%s201 + $0xd9] sm:$0xff]
  %v4545 = vld [vmem:[%s201 + $0xe1] sm:$0xff]
  %v4546 = vld [vmem:[%s201 + $0xf1] sm:$0xff]
  %v4547 = vld [vmem:[%s201 + $0xf9] sm:$0xff]
  %v4548 = vld [vmem:[%s201 + $0x109] sm:$0xff]
  %v4549 = vld [vmem:[%s201 + $0x111] sm:$0xff]
  %v4550 = vld [vmem:[%s201 + $0x121] sm:$0xff]
  %v4551 = vld [vmem:[%s201 + $0x129] sm:$0xff]
  %v4552 = vld [vmem:[%s201 + $0x139] sm:$0xff]
  %v4553 = vld [vmem:[%s201 + $0x141] sm:$0xff]
  %v4554 = vld [vmem:[%s201 + $0x151] sm:$0xff]
  %v4555 = vld [vmem:[%s201 + $0x159] sm:$0xff]
  %v4556 = vld [vmem:[%s201 + $0x169] sm:$0xff]
  %v4557 = vld [vmem:[%s201 + $0x171] sm:$0xff]
  %v4558 = vld [vmem:[%s201 + $0x1b1] sm:$0xff]
  %v4559 = vld [vmem:[%s201 + $0x1b9] sm:$0xff]
  %v4560 = vld [vmem:[%s201 + $0x1c9] sm:$0xff]
  %v4561 = vld [vmem:[%s201 + $0x1d1] sm:$0xff]
  %v4562 = vld [vmem:[%s201 + $0x1e1] sm:$0xff]
  %v4563 = vld [vmem:[%s201 + $0x1e9] sm:$0xff]
  %v4564 = vld [vmem:[%s201 + $0x1f9] sm:$0xff]
  %v4565 = vld [vmem:[%s201 + $0x201] sm:$0xff]
  %v4566 = vld [vmem:[%s201 + $0x211] sm:$0xff]
  %v4567 = vld [vmem:[%s201 + $0x219] sm:$0xff]
  %v4568 = vld [vmem:[%s201 + $0x229] sm:$0xff]
  %v4569 = vld [vmem:[%s201 + $0x231] sm:$0xff]
  %v4570 = vld [vmem:[%s201 + $0x241] sm:$0xff]
  %v4571 = vld [vmem:[%s201 + $0x249] sm:$0xff]
  %v4572 = vld [vmem:[%s201 + $0x259] sm:$0xff]
  %v4573 = vld [vmem:[%s201 + $0x261] sm:$0xff]
  %v4574 = vld [vmem:[%s201 + $0x271] sm:$0xff]
  %v4575 = vld [vmem:[%s201 + $0x279] sm:$0xff]
  %v4576 = vld [vmem:[%s201 + $0x289] sm:$0xff]
  %v4577 = vld [vmem:[%s201 + $0x291] sm:$0xff]
  %v4578 = vld [vmem:[%s201 + $0x2a1] sm:$0xff]
  %v4579 = vld [vmem:[%s201 + $0x2a9] sm:$0xff]
  %v4580 = vld [vmem:[%s201 + $0x2b9] sm:$0xff]
  %v4581 = vld [vmem:[%s201 + $0x2c1] sm:$0xff]
  %v4582 = vld [vmem:[%s201 + $0x2d1] sm:$0xff]
  %v4583 = vld [vmem:[%s201 + $0x2d9] sm:$0xff]
  %v4584 = vld [vmem:[%s201 + $0x2e9] sm:$0xff]
  %v4585 = vld [vmem:[%s201 + $0x2f1] sm:$0xff]
  %v4586 = vld [vmem:[%s201 + $0x301] sm:$0xff]
  %v4587 = vld [vmem:[%s201 + $0x309] sm:$0xff]
  %v4588 = vld [vmem:[%s201 + $0x319] sm:$0xff]
  %v4589 = vld [vmem:[%s201 + $0x321] sm:$0xff]
  %v4590 = vpack.c.bf16 %v4527, %v4526
  %v4591 = vpack.c.bf16 %v4529, %v4528
  %v4592 = vpack.c.bf16 %v4531, %v4530
  %v4593 = vpack.c.bf16 %v4533, %v4532
  %v4594 = vpack.c.bf16 %v4535, %v4534
  %v4595 = vpack.c.bf16 %v4537, %v4536
  %v4596 = vpack.c.bf16 %v4539, %v4538
  %v4597 = vpack.c.bf16 %v4541, %v4540
  %v4598 = vpack.c.bf16 %v4543, %v4542
  %v4599 = vpack.c.bf16 %v4545, %v4544
  %v4600 = vpack.c.bf16 %v4547, %v4546
  %v4601 = vpack.c.bf16 %v4549, %v4548
  %v4602 = vpack.c.bf16 %v4551, %v4550
  %v4603 = vpack.c.bf16 %v4553, %v4552
  %v4604 = vpack.c.bf16 %v4555, %v4554
  %v4605 = vpack.c.bf16 %v4557, %v4556
  %v4606 = vpack.c.bf16 %v4559, %v4558
  %v4607 = vpack.c.bf16 %v4561, %v4560
  %v4608 = vpack.c.bf16 %v4563, %v4562
  %v4609 = vpack.c.bf16 %v4565, %v4564
  %v4610 = vpack.c.bf16 %v4567, %v4566
  %v4611 = vpack.c.bf16 %v4569, %v4568
  %v4612 = vpack.c.bf16 %v4571, %v4570
  %v4613 = vpack.c.bf16 %v4573, %v4572
  %v4614 = vpack.c.bf16 %v4575, %v4574
  %v4615 = vpack.c.bf16 %v4577, %v4576
  %v4616 = vpack.c.bf16 %v4579, %v4578
  %v4617 = vpack.c.bf16 %v4581, %v4580
  %v4618 = vpack.c.bf16 %v4583, %v4582
  %v4619 = vpack.c.bf16 %v4585, %v4584
  %v4620 = vpack.c.bf16 %v4587, %v4586
  %v4621 = vpack.c.bf16 %v4589, %v4588
  %4654 = vrot.lane.b32.xlu0 %v4590, 16
  %v4655 = vpop.permute.xlu0 %4654
  %4656 = vrot.lane.b32.xlu0 %v4591, 16
  %v4657 = vpop.permute.xlu0 %4656
  %4658 = vrot.lane.b32.xlu0 %v4592, 16
  %v4659 = vpop.permute.xlu0 %4658
  %4660 = vrot.lane.b32.xlu0 %v4593, 16
  %v4661 = vpop.permute.xlu0 %4660
  %4662 = vrot.lane.b32.xlu0 %v4594, 16
  %v4663 = vpop.permute.xlu0 %4662
  %4664 = vrot.lane.b32.xlu0 %v4595, 16
  %v4665 = vpop.permute.xlu0 %4664
  %4666 = vrot.lane.b32.xlu0 %v4596, 16
  %v4667 = vpop.permute.xlu0 %4666
  %4668 = vrot.lane.b32.xlu0 %v4597, 16
  %v4669 = vpop.permute.xlu0 %4668
  %4670 = vrot.lane.b32.xlu0 %v4598, 16
  %v4671 = vpop.permute.xlu0 %4670
  %4672 = vrot.lane.b32.xlu0 %v4599, 16
  %v4673 = vpop.permute.xlu0 %4672
  %4674 = vrot.lane.b32.xlu0 %v4600, 16
  %v4675 = vpop.permute.xlu0 %4674
  %4676 = vrot.lane.b32.xlu0 %v4601, 16
  %v4677 = vpop.permute.xlu0 %4676
  %4678 = vrot.lane.b32.xlu0 %v4602, 16
  %v4679 = vpop.permute.xlu0 %4678
  %4680 = vrot.lane.b32.xlu0 %v4603, 16
  %v4681 = vpop.permute.xlu0 %4680
  %4682 = vrot.lane.b32.xlu0 %v4604, 16
  %v4683 = vpop.permute.xlu0 %4682
  %4684 = vrot.lane.b32.xlu0 %v4605, 16
  %v4685 = vpop.permute.xlu0 %4684
  %4686 = vrot.lane.b32.xlu0 %v4606, 16
  %v4687 = vpop.permute.xlu0 %4686
  %4688 = vrot.lane.b32.xlu0 %v4607, 16
  %v4689 = vpop.permute.xlu0 %4688
  %4690 = vrot.lane.b32.xlu0 %v4608, 16
  %v4691 = vpop.permute.xlu0 %4690
  %4692 = vrot.lane.b32.xlu0 %v4609, 16
  %v4693 = vpop.permute.xlu0 %4692
  %4694 = vrot.lane.b32.xlu0 %v4610, 16
  %v4695 = vpop.permute.xlu0 %4694
  %4696 = vrot.lane.b32.xlu0 %v4611, 16
  %v4697 = vpop.permute.xlu0 %4696
  %4698 = vrot.lane.b32.xlu0 %v4612, 16
  %v4699 = vpop.permute.xlu0 %4698
  %4700 = vrot.lane.b32.xlu0 %v4613, 16
  %v4701 = vpop.permute.xlu0 %4700
  %4702 = vrot.lane.b32.xlu0 %v4614, 16
  %v4703 = vpop.permute.xlu0 %4702
  %4704 = vrot.lane.b32.xlu0 %v4615, 16
  %v4705 = vpop.permute.xlu0 %4704
  %4706 = vrot.lane.b32.xlu0 %v4616, 16
  %v4707 = vpop.permute.xlu0 %4706
  %4708 = vrot.lane.b32.xlu0 %v4617, 16
  %v4709 = vpop.permute.xlu0 %4708
  %4710 = vrot.lane.b32.xlu0 %v4618, 16
  %v4711 = vpop.permute.xlu0 %4710
  %4712 = vrot.lane.b32.xlu0 %v4619, 16
  %v4713 = vpop.permute.xlu0 %4712
  %4714 = vrot.lane.b32.xlu0 %v4620, 16
  %v4715 = vpop.permute.xlu0 %4714
  %4716 = vrot.lane.b32.xlu0 %v4621, 16
  %v4717 = vpop.permute.xlu0 %4716
  %4750 = vst.msk [vmem:[#allocation3] sm:$0xff] %vm1389, %v4655
  %4751 = vst.msk [vmem:[#allocation3 + $0x8] sm:$0xff] %vm1389, %v4657
  %4752 = vst.msk [vmem:[#allocation3 + $0x10] sm:$0xff] %vm1389, %v4659
  %4753 = vst.msk [vmem:[#allocation3 + $0x18] sm:$0xff] %vm1389, %v4661
  %4754 = vst.msk [vmem:[#allocation3 + $0x20] sm:$0xff] %vm1389, %v4663
  %4755 = vst.msk [vmem:[#allocation3 + $0x28] sm:$0xff] %vm1389, %v4665
  %4756 = vst.msk [vmem:[#allocation3 + $0x30] sm:$0xff] %vm1389, %v4667
  %4757 = vst.msk [vmem:[#allocation3 + $0x38] sm:$0xff] %vm1389, %v4669
  %4758 = vst.msk [vmem:[#allocation3 + $0x40] sm:$0xff] %vm1389, %v4671
  %4759 = vst.msk [vmem:[#allocation3 + $0x48] sm:$0xff] %vm1389, %v4673
  %4760 = vst.msk [vmem:[#allocation3 + $0x50] sm:$0xff] %vm1389, %v4675
  %4761 = vst.msk [vmem:[#allocation3 + $0x58] sm:$0xff] %vm1389, %v4677
  %4762 = vst.msk [vmem:[#allocation3 + $0x60] sm:$0xff] %vm1389, %v4679
  %4763 = vst.msk [vmem:[#allocation3 + $0x68] sm:$0xff] %vm1389, %v4681
  %4764 = vst.msk [vmem:[#allocation3 + $0x70] sm:$0xff] %vm1389, %v4683
  %4765 = vst.msk [vmem:[#allocation3 + $0x78] sm:$0xff] %vm1389, %v4685
  %4766 = vst.msk [vmem:[#allocation3 + $0x80] sm:$0xff] %vm1389, %v4687
  %4767 = vst.msk [vmem:[#allocation3 + $0x88] sm:$0xff] %vm1389, %v4689
  %4768 = vst.msk [vmem:[#allocation3 + $0x90] sm:$0xff] %vm1389, %v4691
  %4769 = vst.msk [vmem:[#allocation3 + $0x98] sm:$0xff] %vm1389, %v4693
  %4770 = vst.msk [vmem:[#allocation3 + $0xa0] sm:$0xff] %vm1389, %v4695
  %4771 = vst.msk [vmem:[#allocation3 + $0xa8] sm:$0xff] %vm1389, %v4697
  %4772 = vst.msk [vmem:[#allocation3 + $0xb0] sm:$0xff] %vm1389, %v4699
  %4773 = vst.msk [vmem:[#allocation3 + $0xb8] sm:$0xff] %vm1389, %v4701
  %4774 = vst.msk [vmem:[#allocation3 + $0xc0] sm:$0xff] %vm1389, %v4703
  %4775 = vst.msk [vmem:[#allocation3 + $0xc8] sm:$0xff] %vm1389, %v4705
  %4776 = vst.msk [vmem:[#allocation3 + $0xd0] sm:$0xff] %vm1389, %v4707
  %4777 = vst.msk [vmem:[#allocation3 + $0xd8] sm:$0xff] %vm1389, %v4709
  %4778 = vst.msk [vmem:[#allocation3 + $0xe0] sm:$0xff] %vm1389, %v4711
  %4779 = vst.msk [vmem:[#allocation3 + $0xe8] sm:$0xff] %vm1389, %v4713
  %4780 = vst.msk [vmem:[#allocation3 + $0xf0] sm:$0xff] %vm1389, %v4715
  %4781 = vst.msk [vmem:[#allocation3 + $0xf8] sm:$0xff] %vm1389, %v4717
  %v4782 = vld [vmem:[%s201 + $0x2] sm:$0xff]
  %v4783 = vld [vmem:[%s201 + $0xa] sm:$0xff]
  %v4784 = vld [vmem:[%s201 + $0x1a] sm:$0xff]
  %v4785 = vld [vmem:[%s201 + $0x22] sm:$0xff]
  %v4786 = vld [vmem:[%s201 + $0x32] sm:$0xff]
  %v4787 = vld [vmem:[%s201 + $0x3a] sm:$0xff]
  %v4788 = vld [vmem:[%s201 + $0x4a] sm:$0xff]
  %v4789 = vld [vmem:[%s201 + $0x52] sm:$0xff]
  %v4790 = vld [vmem:[%s201 + $0x62] sm:$0xff]
  %v4791 = vld [vmem:[%s201 + $0x6a] sm:$0xff]
  %v4792 = vld [vmem:[%s201 + $0x7a] sm:$0xff]
  %v4793 = vld [vmem:[%s201 + $0x82] sm:$0xff]
  %v4794 = vld [vmem:[%s201 + $0x92] sm:$0xff]
  %v4795 = vld [vmem:[%s201 + $0x9a] sm:$0xff]
  %v4796 = vld [vmem:[%s201 + $0xaa] sm:$0xff]
  %v4797 = vld [vmem:[%s201 + $0xb2] sm:$0xff]
  %v4798 = vld [vmem:[%s201 + $0xc2] sm:$0xff]
  %v4799 = vld [vmem:[%s201 + $0xca] sm:$0xff]
  %v4800 = vld [vmem:[%s201 + $0xda] sm:$0xff]
  %v4801 = vld [vmem:[%s201 + $0xe2] sm:$0xff]
  %v4802 = vld [vmem:[%s201 + $0xf2] sm:$0xff]
  %v4803 = vld [vmem:[%s201 + $0xfa] sm:$0xff]
  %v4804 = vld [vmem:[%s201 + $0x10a] sm:$0xff]
  %v4805 = vld [vmem:[%s201 + $0x112] sm:$0xff]
  %v4806 = vld [vmem:[%s201 + $0x122] sm:$0xff]
  %v4807 = vld [vmem:[%s201 + $0x12a] sm:$0xff]
  %v4808 = vld [vmem:[%s201 + $0x13a] sm:$0xff]
  %v4809 = vld [vmem:[%s201 + $0x142] sm:$0xff]
  %v4810 = vld [vmem:[%s201 + $0x152] sm:$0xff]
  %v4811 = vld [vmem:[%s201 + $0x15a] sm:$0xff]
  %v4812 = vld [vmem:[%s201 + $0x16a] sm:$0xff]
  %v4813 = vld [vmem:[%s201 + $0x172] sm:$0xff]
  %v4814 = vld [vmem:[%s201 + $0x1b2] sm:$0xff]
  %v4815 = vld [vmem:[%s201 + $0x1ba] sm:$0xff]
  %v4816 = vld [vmem:[%s201 + $0x1ca] sm:$0xff]
  %v4817 = vld [vmem:[%s201 + $0x1d2] sm:$0xff]
  %v4818 = vld [vmem:[%s201 + $0x1e2] sm:$0xff]
  %v4819 = vld [vmem:[%s201 + $0x1ea] sm:$0xff]
  %v4820 = vld [vmem:[%s201 + $0x1fa] sm:$0xff]
  %v4821 = vld [vmem:[%s201 + $0x202] sm:$0xff]
  %v4822 = vld [vmem:[%s201 + $0x212] sm:$0xff]
  %v4823 = vld [vmem:[%s201 + $0x21a] sm:$0xff]
  %v4824 = vld [vmem:[%s201 + $0x22a] sm:$0xff]
  %v4825 = vld [vmem:[%s201 + $0x232] sm:$0xff]
  %v4826 = vld [vmem:[%s201 + $0x242] sm:$0xff]
  %v4827 = vld [vmem:[%s201 + $0x24a] sm:$0xff]
  %v4828 = vld [vmem:[%s201 + $0x25a] sm:$0xff]
  %v4829 = vld [vmem:[%s201 + $0x262] sm:$0xff]
  %v4830 = vld [vmem:[%s201 + $0x272] sm:$0xff]
  %v4831 = vld [vmem:[%s201 + $0x27a] sm:$0xff]
  %v4832 = vld [vmem:[%s201 + $0x28a] sm:$0xff]
  %v4833 = vld [vmem:[%s201 + $0x292] sm:$0xff]
  %v4834 = vld [vmem:[%s201 + $0x2a2] sm:$0xff]
  %v4835 = vld [vmem:[%s201 + $0x2aa] sm:$0xff]
  %v4836 = vld [vmem:[%s201 + $0x2ba] sm:$0xff]
  %v4837 = vld [vmem:[%s201 + $0x2c2] sm:$0xff]
  %v4838 = vld [vmem:[%s201 + $0x2d2] sm:$0xff]
  %v4839 = vld [vmem:[%s201 + $0x2da] sm:$0xff]
  %v4840 = vld [vmem:[%s201 + $0x2ea] sm:$0xff]
  %v4841 = vld [vmem:[%s201 + $0x2f2] sm:$0xff]
  %v4842 = vld [vmem:[%s201 + $0x302] sm:$0xff]
  %v4843 = vld [vmem:[%s201 + $0x30a] sm:$0xff]
  %v4844 = vld [vmem:[%s201 + $0x31a] sm:$0xff]
  %v4845 = vld [vmem:[%s201 + $0x322] sm:$0xff]
  %v4846 = vpack.c.bf16 %v4783, %v4782
  %v4847 = vpack.c.bf16 %v4785, %v4784
  %v4848 = vpack.c.bf16 %v4787, %v4786
  %v4849 = vpack.c.bf16 %v4789, %v4788
  %v4850 = vpack.c.bf16 %v4791, %v4790
  %v4851 = vpack.c.bf16 %v4793, %v4792
  %v4852 = vpack.c.bf16 %v4795, %v4794
  %v4853 = vpack.c.bf16 %v4797, %v4796
  %v4854 = vpack.c.bf16 %v4799, %v4798
  %v4855 = vpack.c.bf16 %v4801, %v4800
  %v4856 = vpack.c.bf16 %v4803, %v4802
  %v4857 = vpack.c.bf16 %v4805, %v4804
  %v4858 = vpack.c.bf16 %v4807, %v4806
  %v4859 = vpack.c.bf16 %v4809, %v4808
  %v4860 = vpack.c.bf16 %v4811, %v4810
  %v4861 = vpack.c.bf16 %v4813, %v4812
  %v4862 = vpack.c.bf16 %v4815, %v4814
  %v4863 = vpack.c.bf16 %v4817, %v4816
  %v4864 = vpack.c.bf16 %v4819, %v4818
  %v4865 = vpack.c.bf16 %v4821, %v4820
  %v4866 = vpack.c.bf16 %v4823, %v4822
  %v4867 = vpack.c.bf16 %v4825, %v4824
  %v4868 = vpack.c.bf16 %v4827, %v4826
  %v4869 = vpack.c.bf16 %v4829, %v4828
  %v4870 = vpack.c.bf16 %v4831, %v4830
  %v4871 = vpack.c.bf16 %v4833, %v4832
  %v4872 = vpack.c.bf16 %v4835, %v4834
  %v4873 = vpack.c.bf16 %v4837, %v4836
  %v4874 = vpack.c.bf16 %v4839, %v4838
  %v4875 = vpack.c.bf16 %v4841, %v4840
  %v4876 = vpack.c.bf16 %v4843, %v4842
  %v4877 = vpack.c.bf16 %v4845, %v4844
  %4910 = vrot.lane.b32.xlu0 %v4846, 20
  %v4911 = vpop.permute.xlu0 %4910
  %4912 = vrot.lane.b32.xlu0 %v4847, 20
  %v4913 = vpop.permute.xlu0 %4912
  %4914 = vrot.lane.b32.xlu0 %v4848, 20
  %v4915 = vpop.permute.xlu0 %4914
  %4916 = vrot.lane.b32.xlu0 %v4849, 20
  %v4917 = vpop.permute.xlu0 %4916
  %4918 = vrot.lane.b32.xlu0 %v4850, 20
  %v4919 = vpop.permute.xlu0 %4918
  %4920 = vrot.lane.b32.xlu0 %v4851, 20
  %v4921 = vpop.permute.xlu0 %4920
  %4922 = vrot.lane.b32.xlu0 %v4852, 20
  %v4923 = vpop.permute.xlu0 %4922
  %4924 = vrot.lane.b32.xlu0 %v4853, 20
  %v4925 = vpop.permute.xlu0 %4924
  %4926 = vrot.lane.b32.xlu0 %v4854, 20
  %v4927 = vpop.permute.xlu0 %4926
  %4928 = vrot.lane.b32.xlu0 %v4855, 20
  %v4929 = vpop.permute.xlu0 %4928
  %4930 = vrot.lane.b32.xlu0 %v4856, 20
  %v4931 = vpop.permute.xlu0 %4930
  %4932 = vrot.lane.b32.xlu0 %v4857, 20
  %v4933 = vpop.permute.xlu0 %4932
  %4934 = vrot.lane.b32.xlu0 %v4858, 20
  %v4935 = vpop.permute.xlu0 %4934
  %4936 = vrot.lane.b32.xlu0 %v4859, 20
  %v4937 = vpop.permute.xlu0 %4936
  %4938 = vrot.lane.b32.xlu0 %v4860, 20
  %v4939 = vpop.permute.xlu0 %4938
  %4940 = vrot.lane.b32.xlu0 %v4861, 20
  %v4941 = vpop.permute.xlu0 %4940
  %4942 = vrot.lane.b32.xlu0 %v4862, 20
  %v4943 = vpop.permute.xlu0 %4942
  %4944 = vrot.lane.b32.xlu0 %v4863, 20
  %v4945 = vpop.permute.xlu0 %4944
  %4946 = vrot.lane.b32.xlu0 %v4864, 20
  %v4947 = vpop.permute.xlu0 %4946
  %4948 = vrot.lane.b32.xlu0 %v4865, 20
  %v4949 = vpop.permute.xlu0 %4948
  %4950 = vrot.lane.b32.xlu0 %v4866, 20
  %v4951 = vpop.permute.xlu0 %4950
  %4952 = vrot.lane.b32.xlu0 %v4867, 20
  %v4953 = vpop.permute.xlu0 %4952
  %4954 = vrot.lane.b32.xlu0 %v4868, 20
  %v4955 = vpop.permute.xlu0 %4954
  %4956 = vrot.lane.b32.xlu0 %v4869, 20
  %v4957 = vpop.permute.xlu0 %4956
  %4958 = vrot.lane.b32.xlu0 %v4870, 20
  %v4959 = vpop.permute.xlu0 %4958
  %4960 = vrot.lane.b32.xlu0 %v4871, 20
  %v4961 = vpop.permute.xlu0 %4960
  %4962 = vrot.lane.b32.xlu0 %v4872, 20
  %v4963 = vpop.permute.xlu0 %4962
  %4964 = vrot.lane.b32.xlu0 %v4873, 20
  %v4965 = vpop.permute.xlu0 %4964
  %4966 = vrot.lane.b32.xlu0 %v4874, 20
  %v4967 = vpop.permute.xlu0 %4966
  %4968 = vrot.lane.b32.xlu0 %v4875, 20
  %v4969 = vpop.permute.xlu0 %4968
  %4970 = vrot.lane.b32.xlu0 %v4876, 20
  %v4971 = vpop.permute.xlu0 %4970
  %4972 = vrot.lane.b32.xlu0 %v4877, 20
  %v4973 = vpop.permute.xlu0 %4972
  %5006 = vst.msk [vmem:[#allocation3] sm:$0xff] %vm1646, %v4911
  %5007 = vst.msk [vmem:[#allocation3 + $0x8] sm:$0xff] %vm1646, %v4913
  %5008 = vst.msk [vmem:[#allocation3 + $0x10] sm:$0xff] %vm1646, %v4915
  %5009 = vst.msk [vmem:[#allocation3 + $0x18] sm:$0xff] %vm1646, %v4917
  %5010 = vst.msk [vmem:[#allocation3 + $0x20] sm:$0xff] %vm1646, %v4919
  %5011 = vst.msk [vmem:[#allocation3 + $0x28] sm:$0xff] %vm1646, %v4921
  %5012 = vst.msk [vmem:[#allocation3 + $0x30] sm:$0xff] %vm1646, %v4923
  %5013 = vst.msk [vmem:[#allocation3 + $0x38] sm:$0xff] %vm1646, %v4925
  %5014 = vst.msk [vmem:[#allocation3 + $0x40] sm:$0xff] %vm1646, %v4927
  %5015 = vst.msk [vmem:[#allocation3 + $0x48] sm:$0xff] %vm1646, %v4929
  %5016 = vst.msk [vmem:[#allocation3 + $0x50] sm:$0xff] %vm1646, %v4931
  %5017 = vst.msk [vmem:[#allocation3 + $0x58] sm:$0xff] %vm1646, %v4933
  %5018 = vst.msk [vmem:[#allocation3 + $0x60] sm:$0xff] %vm1646, %v4935
  %5019 = vst.msk [vmem:[#allocation3 + $0x68] sm:$0xff] %vm1646, %v4937
  %5020 = vst.msk [vmem:[#allocation3 + $0x70] sm:$0xff] %vm1646, %v4939
  %5021 = vst.msk [vmem:[#allocation3 + $0x78] sm:$0xff] %vm1646, %v4941
  %5022 = vst.msk [vmem:[#allocation3 + $0x80] sm:$0xff] %vm1646, %v4943
  %5023 = vst.msk [vmem:[#allocation3 + $0x88] sm:$0xff] %vm1646, %v4945
  %5024 = vst.msk [vmem:[#allocation3 + $0x90] sm:$0xff] %vm1646, %v4947
  %5025 = vst.msk [vmem:[#allocation3 + $0x98] sm:$0xff] %vm1646, %v4949
  %5026 = vst.msk [vmem:[#allocation3 + $0xa0] sm:$0xff] %vm1646, %v4951
  %5027 = vst.msk [vmem:[#allocation3 + $0xa8] sm:$0xff] %vm1646, %v4953
  %5028 = vst.msk [vmem:[#allocation3 + $0xb0] sm:$0xff] %vm1646, %v4955
  %5029 = vst.msk [vmem:[#allocation3 + $0xb8] sm:$0xff] %vm1646, %v4957
  %5030 = vst.msk [vmem:[#allocation3 + $0xc0] sm:$0xff] %vm1646, %v4959
  %5031 = vst.msk [vmem:[#allocation3 + $0xc8] sm:$0xff] %vm1646, %v4961
  %5032 = vst.msk [vmem:[#allocation3 + $0xd0] sm:$0xff] %vm1646, %v4963
  %5033 = vst.msk [vmem:[#allocation3 + $0xd8] sm:$0xff] %vm1646, %v4965
  %5034 = vst.msk [vmem:[#allocation3 + $0xe0] sm:$0xff] %vm1646, %v4967
  %5035 = vst.msk [vmem:[#allocation3 + $0xe8] sm:$0xff] %vm1646, %v4969
  %5036 = vst.msk [vmem:[#allocation3 + $0xf0] sm:$0xff] %vm1646, %v4971
  %5037 = vst.msk [vmem:[#allocation3 + $0xf8] sm:$0xff] %vm1646, %v4973
  %v5038 = vld [vmem:[%s1679] sm:$0xff]
  %v5039 = vld [vmem:[%s1679 + $0x8] sm:$0xff]
  %v5040 = vld [vmem:[%s1679 + $0x18] sm:$0xff]
  %v5041 = vld [vmem:[%s1679 + $0x20] sm:$0xff]
  %v5042 = vld [vmem:[%s1679 + $0x30] sm:$0xff]
  %v5043 = vld [vmem:[%s1679 + $0x38] sm:$0xff]
  %v5044 = vld [vmem:[%s1679 + $0x48] sm:$0xff]
  %v5045 = vld [vmem:[%s1679 + $0x50] sm:$0xff]
  %v5046 = vld [vmem:[%s1679 + $0x60] sm:$0xff]
  %v5047 = vld [vmem:[%s1679 + $0x68] sm:$0xff]
  %v5048 = vld [vmem:[%s1679 + $0x78] sm:$0xff]
  %v5049 = vld [vmem:[%s1679 + $0x80] sm:$0xff]
  %v5050 = vld [vmem:[%s1679 + $0x90] sm:$0xff]
  %v5051 = vld [vmem:[%s1679 + $0x98] sm:$0xff]
  %v5052 = vld [vmem:[%s1679 + $0xa8] sm:$0xff]
  %v5053 = vld [vmem:[%s1679 + $0xb0] sm:$0xff]
  %v5054 = vld [vmem:[%s1679 + $0xc0] sm:$0xff]
  %v5055 = vld [vmem:[%s1679 + $0xc8] sm:$0xff]
  %v5056 = vld [vmem:[%s1679 + $0xd8] sm:$0xff]
  %v5057 = vld [vmem:[%s1679 + $0xe0] sm:$0xff]
  %v5058 = vld [vmem:[%s1679 + $0xf0] sm:$0xff]
  %v5059 = vld [vmem:[%s1679 + $0xf8] sm:$0xff]
  %v5060 = vld [vmem:[%s1679 + $0x108] sm:$0xff]
  %v5061 = vld [vmem:[%s1679 + $0x110] sm:$0xff]
  %v5062 = vld [vmem:[%s1679 + $0x120] sm:$0xff]
  %v5063 = vld [vmem:[%s1679 + $0x128] sm:$0xff]
  %v5064 = vld [vmem:[%s1679 + $0x138] sm:$0xff]
  %v5065 = vld [vmem:[%s1679 + $0x140] sm:$0xff]
  %v5066 = vld [vmem:[%s1679 + $0x150] sm:$0xff]
  %v5067 = vld [vmem:[%s1679 + $0x158] sm:$0xff]
  %v5068 = vld [vmem:[%s1679 + $0x168] sm:$0xff]
  %v5069 = vld [vmem:[%s1679 + $0x170] sm:$0xff]
  %v5070 = vld [vmem:[%s1679 + $0x1b0] sm:$0xff]
  %v5071 = vld [vmem:[%s1679 + $0x1b8] sm:$0xff]
  %v5072 = vld [vmem:[%s1679 + $0x1c8] sm:$0xff]
  %v5073 = vld [vmem:[%s1679 + $0x1d0] sm:$0xff]
  %v5074 = vld [vmem:[%s1679 + $0x1e0] sm:$0xff]
  %v5075 = vld [vmem:[%s1679 + $0x1e8] sm:$0xff]
  %v5076 = vld [vmem:[%s1679 + $0x1f8] sm:$0xff]
  %v5077 = vld [vmem:[%s1679 + $0x200] sm:$0xff]
  %v5078 = vld [vmem:[%s1679 + $0x210] sm:$0xff]
  %v5079 = vld [vmem:[%s1679 + $0x218] sm:$0xff]
  %v5080 = vld [vmem:[%s1679 + $0x228] sm:$0xff]
  %v5081 = vld [vmem:[%s1679 + $0x230] sm:$0xff]
  %v5082 = vld [vmem:[%s1679 + $0x240] sm:$0xff]
  %v5083 = vld [vmem:[%s1679 + $0x248] sm:$0xff]
  %v5084 = vld [vmem:[%s1679 + $0x258] sm:$0xff]
  %v5085 = vld [vmem:[%s1679 + $0x260] sm:$0xff]
  %v5086 = vld [vmem:[%s1679 + $0x270] sm:$0xff]
  %v5087 = vld [vmem:[%s1679 + $0x278] sm:$0xff]
  %v5088 = vld [vmem:[%s1679 + $0x288] sm:$0xff]
  %v5089 = vld [vmem:[%s1679 + $0x290] sm:$0xff]
  %v5090 = vld [vmem:[%s1679 + $0x2a0] sm:$0xff]
  %v5091 = vld [vmem:[%s1679 + $0x2a8] sm:$0xff]
  %v5092 = vld [vmem:[%s1679 + $0x2b8] sm:$0xff]
  %v5093 = vld [vmem:[%s1679 + $0x2c0] sm:$0xff]
  %v5094 = vld [vmem:[%s1679 + $0x2d0] sm:$0xff]
  %v5095 = vld [vmem:[%s1679 + $0x2d8] sm:$0xff]
  %v5096 = vld [vmem:[%s1679 + $0x2e8] sm:$0xff]
  %v5097 = vld [vmem:[%s1679 + $0x2f0] sm:$0xff]
  %v5098 = vld [vmem:[%s1679 + $0x300] sm:$0xff]
  %v5099 = vld [vmem:[%s1679 + $0x308] sm:$0xff]
  %v5100 = vld [vmem:[%s1679 + $0x318] sm:$0xff]
  %v5101 = vld [vmem:[%s1679 + $0x320] sm:$0xff]
  %v5102 = vpack.c.bf16 %v5039, %v5038
  %v5103 = vpack.c.bf16 %v5041, %v5040
  %v5104 = vpack.c.bf16 %v5043, %v5042
  %v5105 = vpack.c.bf16 %v5045, %v5044
  %v5106 = vpack.c.bf16 %v5047, %v5046
  %v5107 = vpack.c.bf16 %v5049, %v5048
  %v5108 = vpack.c.bf16 %v5051, %v5050
  %v5109 = vpack.c.bf16 %v5053, %v5052
  %v5110 = vpack.c.bf16 %v5055, %v5054
  %v5111 = vpack.c.bf16 %v5057, %v5056
  %v5112 = vpack.c.bf16 %v5059, %v5058
  %v5113 = vpack.c.bf16 %v5061, %v5060
  %v5114 = vpack.c.bf16 %v5063, %v5062
  %v5115 = vpack.c.bf16 %v5065, %v5064
  %v5116 = vpack.c.bf16 %v5067, %v5066
  %v5117 = vpack.c.bf16 %v5069, %v5068
  %v5118 = vpack.c.bf16 %v5071, %v5070
  %v5119 = vpack.c.bf16 %v5073, %v5072
  %v5120 = vpack.c.bf16 %v5075, %v5074
  %v5121 = vpack.c.bf16 %v5077, %v5076
  %v5122 = vpack.c.bf16 %v5079, %v5078
  %v5123 = vpack.c.bf16 %v5081, %v5080
  %v5124 = vpack.c.bf16 %v5083, %v5082
  %v5125 = vpack.c.bf16 %v5085, %v5084
  %v5126 = vpack.c.bf16 %v5087, %v5086
  %v5127 = vpack.c.bf16 %v5089, %v5088
  %v5128 = vpack.c.bf16 %v5091, %v5090
  %v5129 = vpack.c.bf16 %v5093, %v5092
  %v5130 = vpack.c.bf16 %v5095, %v5094
  %v5131 = vpack.c.bf16 %v5097, %v5096
  %v5132 = vpack.c.bf16 %v5099, %v5098
  %v5133 = vpack.c.bf16 %v5101, %v5100
  %5166 = vrot.lane.b32.xlu0 %v5102, 24
  %v5167 = vpop.permute.xlu0 %5166
  %5168 = vrot.lane.b32.xlu0 %v5103, 24
  %v5169 = vpop.permute.xlu0 %5168
  %5170 = vrot.lane.b32.xlu0 %v5104, 24
  %v5171 = vpop.permute.xlu0 %5170
  %5172 = vrot.lane.b32.xlu0 %v5105, 24
  %v5173 = vpop.permute.xlu0 %5172
  %5174 = vrot.lane.b32.xlu0 %v5106, 24
  %v5175 = vpop.permute.xlu0 %5174
  %5176 = vrot.lane.b32.xlu0 %v5107, 24
  %v5177 = vpop.permute.xlu0 %5176
  %5178 = vrot.lane.b32.xlu0 %v5108, 24
  %v5179 = vpop.permute.xlu0 %5178
  %5180 = vrot.lane.b32.xlu0 %v5109, 24
  %v5181 = vpop.permute.xlu0 %5180
  %5182 = vrot.lane.b32.xlu0 %v5110, 24
  %v5183 = vpop.permute.xlu0 %5182
  %5184 = vrot.lane.b32.xlu0 %v5111, 24
  %v5185 = vpop.permute.xlu0 %5184
  %5186 = vrot.lane.b32.xlu0 %v5112, 24
  %v5187 = vpop.permute.xlu0 %5186
  %5188 = vrot.lane.b32.xlu0 %v5113, 24
  %v5189 = vpop.permute.xlu0 %5188
  %5190 = vrot.lane.b32.xlu0 %v5114, 24
  %v5191 = vpop.permute.xlu0 %5190
  %5192 = vrot.lane.b32.xlu0 %v5115, 24
  %v5193 = vpop.permute.xlu0 %5192
  %5194 = vrot.lane.b32.xlu0 %v5116, 24
  %v5195 = vpop.permute.xlu0 %5194
  %5196 = vrot.lane.b32.xlu0 %v5117, 24
  %v5197 = vpop.permute.xlu0 %5196
  %5198 = vrot.lane.b32.xlu0 %v5118, 24
  %v5199 = vpop.permute.xlu0 %5198
  %5200 = vrot.lane.b32.xlu0 %v5119, 24
  %v5201 = vpop.permute.xlu0 %5200
  %5202 = vrot.lane.b32.xlu0 %v5120, 24
  %v5203 = vpop.permute.xlu0 %5202
  %5204 = vrot.lane.b32.xlu0 %v5121, 24
  %v5205 = vpop.permute.xlu0 %5204
  %5206 = vrot.lane.b32.xlu0 %v5122, 24
  %v5207 = vpop.permute.xlu0 %5206
  %5208 = vrot.lane.b32.xlu0 %v5123, 24
  %v5209 = vpop.permute.xlu0 %5208
  %5210 = vrot.lane.b32.xlu0 %v5124, 24
  %v5211 = vpop.permute.xlu0 %5210
  %5212 = vrot.lane.b32.xlu0 %v5125, 24
  %v5213 = vpop.permute.xlu0 %5212
  %5214 = vrot.lane.b32.xlu0 %v5126, 24
  %v5215 = vpop.permute.xlu0 %5214
  %5216 = vrot.lane.b32.xlu0 %v5127, 24
  %v5217 = vpop.permute.xlu0 %5216
  %5218 = vrot.lane.b32.xlu0 %v5128, 24
  %v5219 = vpop.permute.xlu0 %5218
  %5220 = vrot.lane.b32.xlu0 %v5129, 24
  %v5221 = vpop.permute.xlu0 %5220
  %5222 = vrot.lane.b32.xlu0 %v5130, 24
  %v5223 = vpop.permute.xlu0 %5222
  %5224 = vrot.lane.b32.xlu0 %v5131, 24
  %v5225 = vpop.permute.xlu0 %5224
  %5226 = vrot.lane.b32.xlu0 %v5132, 24
  %v5227 = vpop.permute.xlu0 %5226
  %5228 = vrot.lane.b32.xlu0 %v5133, 24
  %v5229 = vpop.permute.xlu0 %5228
  %5262 = vst.msk [vmem:[#allocation3] sm:$0xff] %vm1904, %v5167
  %5263 = vst.msk [vmem:[#allocation3 + $0x8] sm:$0xff] %vm1904, %v5169
  %5264 = vst.msk [vmem:[#allocation3 + $0x10] sm:$0xff] %vm1904, %v5171
  %5265 = vst.msk [vmem:[#allocation3 + $0x18] sm:$0xff] %vm1904, %v5173
  %5266 = vst.msk [vmem:[#allocation3 + $0x20] sm:$0xff] %vm1904, %v5175
  %5267 = vst.msk [vmem:[#allocation3 + $0x28] sm:$0xff] %vm1904, %v5177
  %5268 = vst.msk [vmem:[#allocation3 + $0x30] sm:$0xff] %vm1904, %v5179
  %5269 = vst.msk [vmem:[#allocation3 + $0x38] sm:$0xff] %vm1904, %v5181
  %5270 = vst.msk [vmem:[#allocation3 + $0x40] sm:$0xff] %vm1904, %v5183
  %5271 = vst.msk [vmem:[#allocation3 + $0x48] sm:$0xff] %vm1904, %v5185
  %5272 = vst.msk [vmem:[#allocation3 + $0x50] sm:$0xff] %vm1904, %v5187
  %5273 = vst.msk [vmem:[#allocation3 + $0x58] sm:$0xff] %vm1904, %v5189
  %5274 = vst.msk [vmem:[#allocation3 + $0x60] sm:$0xff] %vm1904, %v5191
  %5275 = vst.msk [vmem:[#allocation3 + $0x68] sm:$0xff] %vm1904, %v5193
  %5276 = vst.msk [vmem:[#allocation3 + $0x70] sm:$0xff] %vm1904, %v5195
  %5277 = vst.msk [vmem:[#allocation3 + $0x78] sm:$0xff] %vm1904, %v5197
  %5278 = vst.msk [vmem:[#allocation3 + $0x80] sm:$0xff] %vm1904, %v5199
  %5279 = vst.msk [vmem:[#allocation3 + $0x88] sm:$0xff] %vm1904, %v5201
  %5280 = vst.msk [vmem:[#allocation3 + $0x90] sm:$0xff] %vm1904, %v5203
  %5281 = vst.msk [vmem:[#allocation3 + $0x98] sm:$0xff] %vm1904, %v5205
  %5282 = vst.msk [vmem:[#allocation3 + $0xa0] sm:$0xff] %vm1904, %v5207
  %5283 = vst.msk [vmem:[#allocation3 + $0xa8] sm:$0xff] %vm1904, %v5209
  %5284 = vst.msk [vmem:[#allocation3 + $0xb0] sm:$0xff] %vm1904, %v5211
  %5285 = vst.msk [vmem:[#allocation3 + $0xb8] sm:$0xff] %vm1904, %v5213
  %5286 = vst.msk [vmem:[#allocation3 + $0xc0] sm:$0xff] %vm1904, %v5215
  %5287 = vst.msk [vmem:[#allocation3 + $0xc8] sm:$0xff] %vm1904, %v5217
  %5288 = vst.msk [vmem:[#allocation3 + $0xd0] sm:$0xff] %vm1904, %v5219
  %5289 = vst.msk [vmem:[#allocation3 + $0xd8] sm:$0xff] %vm1904, %v5221
  %5290 = vst.msk [vmem:[#allocation3 + $0xe0] sm:$0xff] %vm1904, %v5223
  %5291 = vst.msk [vmem:[#allocation3 + $0xe8] sm:$0xff] %vm1904, %v5225
  %5292 = vst.msk [vmem:[#allocation3 + $0xf0] sm:$0xff] %vm1904, %v5227
  %5293 = vst.msk [vmem:[#allocation3 + $0xf8] sm:$0xff] %vm1904, %v5229
  %v5294 = vld [vmem:[%s1679 + $0x1] sm:$0xff]
  %v5295 = vld [vmem:[%s1679 + $0x9] sm:$0xff]
  %v5296 = vld [vmem:[%s1679 + $0x19] sm:$0xff]
  %v5297 = vld [vmem:[%s1679 + $0x21] sm:$0xff]
  %v5298 = vld [vmem:[%s1679 + $0x31] sm:$0xff]
  %v5299 = vld [vmem:[%s1679 + $0x39] sm:$0xff]
  %v5300 = vld [vmem:[%s1679 + $0x49] sm:$0xff]
  %v5301 = vld [vmem:[%s1679 + $0x51] sm:$0xff]
  %v5302 = vld [vmem:[%s1679 + $0x61] sm:$0xff]
  %v5303 = vld [vmem:[%s1679 + $0x69] sm:$0xff]
  %v5304 = vld [vmem:[%s1679 + $0x79] sm:$0xff]
  %v5305 = vld [vmem:[%s1679 + $0x81] sm:$0xff]
  %v5306 = vld [vmem:[%s1679 + $0x91] sm:$0xff]
  %v5307 = vld [vmem:[%s1679 + $0x99] sm:$0xff]
  %v5308 = vld [vmem:[%s1679 + $0xa9] sm:$0xff]
  %v5309 = vld [vmem:[%s1679 + $0xb1] sm:$0xff]
  %v5310 = vld [vmem:[%s1679 + $0xc1] sm:$0xff]
  %v5311 = vld [vmem:[%s1679 + $0xc9] sm:$0xff]
  %v5312 = vld [vmem:[%s1679 + $0xd9] sm:$0xff]
  %v5313 = vld [vmem:[%s1679 + $0xe1] sm:$0xff]
  %v5314 = vld [vmem:[%s1679 + $0xf1] sm:$0xff]
  %v5315 = vld [vmem:[%s1679 + $0xf9] sm:$0xff]
  %v5316 = vld [vmem:[%s1679 + $0x109] sm:$0xff]
  %v5317 = vld [vmem:[%s1679 + $0x111] sm:$0xff]
  %v5318 = vld [vmem:[%s1679 + $0x121] sm:$0xff]
  %v5319 = vld [vmem:[%s1679 + $0x129] sm:$0xff]
  %v5320 = vld [vmem:[%s1679 + $0x139] sm:$0xff]
  %v5321 = vld [vmem:[%s1679 + $0x141] sm:$0xff]
  %v5322 = vld [vmem:[%s1679 + $0x151] sm:$0xff]
  %v5323 = vld [vmem:[%s1679 + $0x159] sm:$0xff]
  %v5324 = vld [vmem:[%s1679 + $0x169] sm:$0xff]
  %v5325 = vld [vmem:[%s1679 + $0x171] sm:$0xff]
  %v5326 = vld [vmem:[%s1679 + $0x1b1] sm:$0xff]
  %v5327 = vld [vmem:[%s1679 + $0x1b9] sm:$0xff]
  %v5328 = vld [vmem:[%s1679 + $0x1c9] sm:$0xff]
  %v5329 = vld [vmem:[%s1679 + $0x1d1] sm:$0xff]
  %v5330 = vld [vmem:[%s1679 + $0x1e1] sm:$0xff]
  %v5331 = vld [vmem:[%s1679 + $0x1e9] sm:$0xff]
  %v5332 = vld [vmem:[%s1679 + $0x1f9] sm:$0xff]
  %v5333 = vld [vmem:[%s1679 + $0x201] sm:$0xff]
  %v5334 = vld [vmem:[%s1679 + $0x211] sm:$0xff]
  %v5335 = vld [vmem:[%s1679 + $0x219] sm:$0xff]
  %v5336 = vld [vmem:[%s1679 + $0x229] sm:$0xff]
  %v5337 = vld [vmem:[%s1679 + $0x231] sm:$0xff]
  %v5338 = vld [vmem:[%s1679 + $0x241] sm:$0xff]
  %v5339 = vld [vmem:[%s1679 + $0x249] sm:$0xff]
  %v5340 = vld [vmem:[%s1679 + $0x259] sm:$0xff]
  %v5341 = vld [vmem:[%s1679 + $0x261] sm:$0xff]
  %v5342 = vld [vmem:[%s1679 + $0x271] sm:$0xff]
  %v5343 = vld [vmem:[%s1679 + $0x279] sm:$0xff]
  %v5344 = vld [vmem:[%s1679 + $0x289] sm:$0xff]
  %v5345 = vld [vmem:[%s1679 + $0x291] sm:$0xff]
  %v5346 = vld [vmem:[%s1679 + $0x2a1] sm:$0xff]
  %v5347 = vld [vmem:[%s1679 + $0x2a9] sm:$0xff]
  %v5348 = vld [vmem:[%s1679 + $0x2b9] sm:$0xff]
  %v5349 = vld [vmem:[%s1679 + $0x2c1] sm:$0xff]
  %v5350 = vld [vmem:[%s1679 + $0x2d1] sm:$0xff]
  %v5351 = vld [vmem:[%s1679 + $0x2d9] sm:$0xff]
  %v5352 = vld [vmem:[%s1679 + $0x2e9] sm:$0xff]
  %v5353 = vld [vmem:[%s1679 + $0x2f1] sm:$0xff]
  %v5354 = vld [vmem:[%s1679 + $0x301] sm:$0xff]
  %v5355 = vld [vmem:[%s1679 + $0x309] sm:$0xff]
  %v5356 = vld [vmem:[%s1679 + $0x319] sm:$0xff]
  %v5357 = vld [vmem:[%s1679 + $0x321] sm:$0xff]
  %v5358 = vpack.c.bf16 %v5295, %v5294
  %v5359 = vpack.c.bf16 %v5297, %v5296
  %v5360 = vpack.c.bf16 %v5299, %v5298
  %v5361 = vpack.c.bf16 %v5301, %v5300
  %v5362 = vpack.c.bf16 %v5303, %v5302
  %v5363 = vpack.c.bf16 %v5305, %v5304
  %v5364 = vpack.c.bf16 %v5307, %v5306
  %v5365 = vpack.c.bf16 %v5309, %v5308
  %v5366 = vpack.c.bf16 %v5311, %v5310
  %v5367 = vpack.c.bf16 %v5313, %v5312
  %v5368 = vpack.c.bf16 %v5315, %v5314
  %v5369 = vpack.c.bf16 %v5317, %v5316
  %v5370 = vpack.c.bf16 %v5319, %v5318
  %v5371 = vpack.c.bf16 %v5321, %v5320
  %v5372 = vpack.c.bf16 %v5323, %v5322
  %v5373 = vpack.c.bf16 %v5325, %v5324
  %v5374 = vpack.c.bf16 %v5327, %v5326
  %v5375 = vpack.c.bf16 %v5329, %v5328
  %v5376 = vpack.c.bf16 %v5331, %v5330
  %v5377 = vpack.c.bf16 %v5333, %v5332
  %v5378 = vpack.c.bf16 %v5335, %v5334
  %v5379 = vpack.c.bf16 %v5337, %v5336
  %v5380 = vpack.c.bf16 %v5339, %v5338
  %v5381 = vpack.c.bf16 %v5341, %v5340
  %v5382 = vpack.c.bf16 %v5343, %v5342
  %v5383 = vpack.c.bf16 %v5345, %v5344
  %v5384 = vpack.c.bf16 %v5347, %v5346
  %v5385 = vpack.c.bf16 %v5349, %v5348
  %v5386 = vpack.c.bf16 %v5351, %v5350
  %v5387 = vpack.c.bf16 %v5353, %v5352
  %v5388 = vpack.c.bf16 %v5355, %v5354
  %v5389 = vpack.c.bf16 %v5357, %v5356
  %5422 = vrot.lane.b32.xlu0 %v5358, 28
  %v5423 = vpop.permute.xlu0 %5422
  %5424 = vrot.lane.b32.xlu0 %v5359, 28
  %v5425 = vpop.permute.xlu0 %5424
  %5426 = vrot.lane.b32.xlu0 %v5360, 28
  %v5427 = vpop.permute.xlu0 %5426
  %5428 = vrot.lane.b32.xlu0 %v5361, 28
  %v5429 = vpop.permute.xlu0 %5428
  %5430 = vrot.lane.b32.xlu0 %v5362, 28
  %v5431 = vpop.permute.xlu0 %5430
  %5432 = vrot.lane.b32.xlu0 %v5363, 28
  %v5433 = vpop.permute.xlu0 %5432
  %5434 = vrot.lane.b32.xlu0 %v5364, 28
  %v5435 = vpop.permute.xlu0 %5434
  %5436 = vrot.lane.b32.xlu0 %v5365, 28
  %v5437 = vpop.permute.xlu0 %5436
  %5438 = vrot.lane.b32.xlu0 %v5366, 28
  %v5439 = vpop.permute.xlu0 %5438
  %5440 = vrot.lane.b32.xlu0 %v5367, 28
  %v5441 = vpop.permute.xlu0 %5440
  %5442 = vrot.lane.b32.xlu0 %v5368, 28
  %v5443 = vpop.permute.xlu0 %5442
  %5444 = vrot.lane.b32.xlu0 %v5369, 28
  %v5445 = vpop.permute.xlu0 %5444
  %5446 = vrot.lane.b32.xlu0 %v5370, 28
  %v5447 = vpop.permute.xlu0 %5446
  %5448 = vrot.lane.b32.xlu0 %v5371, 28
  %v5449 = vpop.permute.xlu0 %5448
  %5450 = vrot.lane.b32.xlu0 %v5372, 28
  %v5451 = vpop.permute.xlu0 %5450
  %5452 = vrot.lane.b32.xlu0 %v5373, 28
  %v5453 = vpop.permute.xlu0 %5452
  %5454 = vrot.lane.b32.xlu0 %v5374, 28
  %v5455 = vpop.permute.xlu0 %5454
  %5456 = vrot.lane.b32.xlu0 %v5375, 28
  %v5457 = vpop.permute.xlu0 %5456
  %5458 = vrot.lane.b32.xlu0 %v5376, 28
  %v5459 = vpop.permute.xlu0 %5458
  %5460 = vrot.lane.b32.xlu0 %v5377, 28
  %v5461 = vpop.permute.xlu0 %5460
  %5462 = vrot.lane.b32.xlu0 %v5378, 28
  %v5463 = vpop.permute.xlu0 %5462
  %5464 = vrot.lane.b32.xlu0 %v5379, 28
  %v5465 = vpop.permute.xlu0 %5464
  %5466 = vrot.lane.b32.xlu0 %v5380, 28
  %v5467 = vpop.permute.xlu0 %5466
  %5468 = vrot.lane.b32.xlu0 %v5381, 28
  %v5469 = vpop.permute.xlu0 %5468
  %5470 = vrot.lane.b32.xlu0 %v5382, 28
  %v5471 = vpop.permute.xlu0 %5470
  %5472 = vrot.lane.b32.xlu0 %v5383, 28
  %v5473 = vpop.permute.xlu0 %5472
  %5474 = vrot.lane.b32.xlu0 %v5384, 28
  %v5475 = vpop.permute.xlu0 %5474
  %5476 = vrot.lane.b32.xlu0 %v5385, 28
  %v5477 = vpop.permute.xlu0 %5476
  %5478 = vrot.lane.b32.xlu0 %v5386, 28
  %v5479 = vpop.permute.xlu0 %5478
  %5480 = vrot.lane.b32.xlu0 %v5387, 28
  %v5481 = vpop.permute.xlu0 %5480
  %5482 = vrot.lane.b32.xlu0 %v5388, 28
  %v5483 = vpop.permute.xlu0 %5482
  %5484 = vrot.lane.b32.xlu0 %v5389, 28
  %v5485 = vpop.permute.xlu0 %5484
  %5518 = vst.msk [vmem:[#allocation3] sm:$0xff] %vm2161, %v5423
  %5519 = vst.msk [vmem:[#allocation3 + $0x8] sm:$0xff] %vm2161, %v5425
  %5520 = vst.msk [vmem:[#allocation3 + $0x10] sm:$0xff] %vm2161, %v5427
  %5521 = vst.msk [vmem:[#allocation3 + $0x18] sm:$0xff] %vm2161, %v5429
  %5522 = vst.msk [vmem:[#allocation3 + $0x20] sm:$0xff] %vm2161, %v5431
  %5523 = vst.msk [vmem:[#allocation3 + $0x28] sm:$0xff] %vm2161, %v5433
  %5524 = vst.msk [vmem:[#allocation3 + $0x30] sm:$0xff] %vm2161, %v5435
  %5525 = vst.msk [vmem:[#allocation3 + $0x38] sm:$0xff] %vm2161, %v5437
  %5526 = vst.msk [vmem:[#allocation3 + $0x40] sm:$0xff] %vm2161, %v5439
  %5527 = vst.msk [vmem:[#allocation3 + $0x48] sm:$0xff] %vm2161, %v5441
  %5528 = vst.msk [vmem:[#allocation3 + $0x50] sm:$0xff] %vm2161, %v5443
  %5529 = vst.msk [vmem:[#allocation3 + $0x58] sm:$0xff] %vm2161, %v5445
  %5530 = vst.msk [vmem:[#allocation3 + $0x60] sm:$0xff] %vm2161, %v5447
  %5531 = vst.msk [vmem:[#allocation3 + $0x68] sm:$0xff] %vm2161, %v5449
  %5532 = vst.msk [vmem:[#allocation3 + $0x70] sm:$0xff] %vm2161, %v5451
  %5533 = vst.msk [vmem:[#allocation3 + $0x78] sm:$0xff] %vm2161, %v5453
  %5534 = vst.msk [vmem:[#allocation3 + $0x80] sm:$0xff] %vm2161, %v5455
  %5535 = vst.msk [vmem:[#allocation3 + $0x88] sm:$0xff] %vm2161, %v5457
  %5536 = vst.msk [vmem:[#allocation3 + $0x90] sm:$0xff] %vm2161, %v5459
  %5537 = vst.msk [vmem:[#allocation3 + $0x98] sm:$0xff] %vm2161, %v5461
  %5538 = vst.msk [vmem:[#allocation3 + $0xa0] sm:$0xff] %vm2161, %v5463
  %5539 = vst.msk [vmem:[#allocation3 + $0xa8] sm:$0xff] %vm2161, %v5465
  %5540 = vst.msk [vmem:[#allocation3 + $0xb0] sm:$0xff] %vm2161, %v5467
  %5541 = vst.msk [vmem:[#allocation3 + $0xb8] sm:$0xff] %vm2161, %v5469
  %5542 = vst.msk [vmem:[#allocation3 + $0xc0] sm:$0xff] %vm2161, %v5471
  %5543 = vst.msk [vmem:[#allocation3 + $0xc8] sm:$0xff] %vm2161, %v5473
  %5544 = vst.msk [vmem:[#allocation3 + $0xd0] sm:$0xff] %vm2161, %v5475
  %5545 = vst.msk [vmem:[#allocation3 + $0xd8] sm:$0xff] %vm2161, %v5477
  %5546 = vst.msk [vmem:[#allocation3 + $0xe0] sm:$0xff] %vm2161, %v5479
  %5547 = vst.msk [vmem:[#allocation3 + $0xe8] sm:$0xff] %vm2161, %v5481
  %5548 = vst.msk [vmem:[#allocation3 + $0xf0] sm:$0xff] %vm2161, %v5483
  %5549 = vst.msk [vmem:[#allocation3 + $0xf8] sm:$0xff] %vm2161, %v5485
  %v5550 = vld [vmem:[%s1679 + $0x2] sm:$0xff]
  %v5551 = vld [vmem:[%s1679 + $0xa] sm:$0xff]
  %v5552 = vld [vmem:[%s1679 + $0x1a] sm:$0xff]
  %v5553 = vld [vmem:[%s1679 + $0x22] sm:$0xff]
  %v5554 = vld [vmem:[%s1679 + $0x32] sm:$0xff]
  %v5555 = vld [vmem:[%s1679 + $0x3a] sm:$0xff]
  %v5556 = vld [vmem:[%s1679 + $0x4a] sm:$0xff]
  %v5557 = vld [vmem:[%s1679 + $0x52] sm:$0xff]
  %v5558 = vld [vmem:[%s1679 + $0x62] sm:$0xff]
  %v5559 = vld [vmem:[%s1679 + $0x6a] sm:$0xff]
  %v5560 = vld [vmem:[%s1679 + $0x7a] sm:$0xff]
  %v5561 = vld [vmem:[%s1679 + $0x82] sm:$0xff]
  %v5562 = vld [vmem:[%s1679 + $0x92] sm:$0xff]
  %v5563 = vld [vmem:[%s1679 + $0x9a] sm:$0xff]
  %v5564 = vld [vmem:[%s1679 + $0xaa] sm:$0xff]
  %v5565 = vld [vmem:[%s1679 + $0xb2] sm:$0xff]
  %v5566 = vld [vmem:[%s1679 + $0xc2] sm:$0xff]
  %v5567 = vld [vmem:[%s1679 + $0xca] sm:$0xff]
  %v5568 = vld [vmem:[%s1679 + $0xda] sm:$0xff]
  %v5569 = vld [vmem:[%s1679 + $0xe2] sm:$0xff]
  %v5570 = vld [vmem:[%s1679 + $0xf2] sm:$0xff]
  %v5571 = vld [vmem:[%s1679 + $0xfa] sm:$0xff]
  %v5572 = vld [vmem:[%s1679 + $0x10a] sm:$0xff]
  %v5573 = vld [vmem:[%s1679 + $0x112] sm:$0xff]
  %v5574 = vld [vmem:[%s1679 + $0x122] sm:$0xff]
  %v5575 = vld [vmem:[%s1679 + $0x12a] sm:$0xff]
  %v5576 = vld [vmem:[%s1679 + $0x13a] sm:$0xff]
  %v5577 = vld [vmem:[%s1679 + $0x142] sm:$0xff]
  %v5578 = vld [vmem:[%s1679 + $0x152] sm:$0xff]
  %v5579 = vld [vmem:[%s1679 + $0x15a] sm:$0xff]
  %v5580 = vld [vmem:[%s1679 + $0x16a] sm:$0xff]
  %v5581 = vld [vmem:[%s1679 + $0x172] sm:$0xff]
  %v5582 = vld [vmem:[%s1679 + $0x1b2] sm:$0xff]
  %v5583 = vld [vmem:[%s1679 + $0x1ba] sm:$0xff]
  %v5584 = vld [vmem:[%s1679 + $0x1ca] sm:$0xff]
  %v5585 = vld [vmem:[%s1679 + $0x1d2] sm:$0xff]
  %v5586 = vld [vmem:[%s1679 + $0x1e2] sm:$0xff]
  %v5587 = vld [vmem:[%s1679 + $0x1ea] sm:$0xff]
  %v5588 = vld [vmem:[%s1679 + $0x1fa] sm:$0xff]
  %v5589 = vld [vmem:[%s1679 + $0x202] sm:$0xff]
  %v5590 = vld [vmem:[%s1679 + $0x212] sm:$0xff]
  %v5591 = vld [vmem:[%s1679 + $0x21a] sm:$0xff]
  %v5592 = vld [vmem:[%s1679 + $0x22a] sm:$0xff]
  %v5593 = vld [vmem:[%s1679 + $0x232] sm:$0xff]
  %v5594 = vld [vmem:[%s1679 + $0x242] sm:$0xff]
  %v5595 = vld [vmem:[%s1679 + $0x24a] sm:$0xff]
  %v5596 = vld [vmem:[%s1679 + $0x25a] sm:$0xff]
  %v5597 = vld [vmem:[%s1679 + $0x262] sm:$0xff]
  %v5598 = vld [vmem:[%s1679 + $0x272] sm:$0xff]
  %v5599 = vld [vmem:[%s1679 + $0x27a] sm:$0xff]
  %v5600 = vld [vmem:[%s1679 + $0x28a] sm:$0xff]
  %v5601 = vld [vmem:[%s1679 + $0x292] sm:$0xff]
  %v5602 = vld [vmem:[%s1679 + $0x2a2] sm:$0xff]
  %v5603 = vld [vmem:[%s1679 + $0x2aa] sm:$0xff]
  %v5604 = vld [vmem:[%s1679 + $0x2ba] sm:$0xff]
  %v5605 = vld [vmem:[%s1679 + $0x2c2] sm:$0xff]
  %v5606 = vld [vmem:[%s1679 + $0x2d2] sm:$0xff]
  %v5607 = vld [vmem:[%s1679 + $0x2da] sm:$0xff]
  %v5608 = vld [vmem:[%s1679 + $0x2ea] sm:$0xff]
  %v5609 = vld [vmem:[%s1679 + $0x2f2] sm:$0xff]
  %v5610 = vld [vmem:[%s1679 + $0x302] sm:$0xff]
  %v5611 = vld [vmem:[%s1679 + $0x30a] sm:$0xff]
  %v5612 = vld [vmem:[%s1679 + $0x31a] sm:$0xff]
  %v5613 = vld [vmem:[%s1679 + $0x322] sm:$0xff]
  %v5614 = vpack.c.bf16 %v5551, %v5550
  %v5615 = vpack.c.bf16 %v5553, %v5552
  %v5616 = vpack.c.bf16 %v5555, %v5554
  %v5617 = vpack.c.bf16 %v5557, %v5556
  %v5618 = vpack.c.bf16 %v5559, %v5558
  %v5619 = vpack.c.bf16 %v5561, %v5560
  %v5620 = vpack.c.bf16 %v5563, %v5562
  %v5621 = vpack.c.bf16 %v5565, %v5564
  %v5622 = vpack.c.bf16 %v5567, %v5566
  %v5623 = vpack.c.bf16 %v5569, %v5568
  %v5624 = vpack.c.bf16 %v5571, %v5570
  %v5625 = vpack.c.bf16 %v5573, %v5572
  %v5626 = vpack.c.bf16 %v5575, %v5574
  %v5627 = vpack.c.bf16 %v5577, %v5576
  %v5628 = vpack.c.bf16 %v5579, %v5578
  %v5629 = vpack.c.bf16 %v5581, %v5580
  %v5630 = vpack.c.bf16 %v5583, %v5582
  %v5631 = vpack.c.bf16 %v5585, %v5584
  %v5632 = vpack.c.bf16 %v5587, %v5586
  %v5633 = vpack.c.bf16 %v5589, %v5588
  %v5634 = vpack.c.bf16 %v5591, %v5590
  %v5635 = vpack.c.bf16 %v5593, %v5592
  %v5636 = vpack.c.bf16 %v5595, %v5594
  %v5637 = vpack.c.bf16 %v5597, %v5596
  %v5638 = vpack.c.bf16 %v5599, %v5598
  %v5639 = vpack.c.bf16 %v5601, %v5600
  %v5640 = vpack.c.bf16 %v5603, %v5602
  %v5641 = vpack.c.bf16 %v5605, %v5604
  %v5642 = vpack.c.bf16 %v5607, %v5606
  %v5643 = vpack.c.bf16 %v5609, %v5608
  %v5644 = vpack.c.bf16 %v5611, %v5610
  %v5645 = vpack.c.bf16 %v5613, %v5612
  %5678 = vrot.lane.b32.xlu0 %v5614, 32
  %v5679 = vpop.permute.xlu0 %5678
  %5680 = vrot.lane.b32.xlu0 %v5615, 32
  %v5681 = vpop.permute.xlu0 %5680
  %5682 = vrot.lane.b32.xlu0 %v5616, 32
  %v5683 = vpop.permute.xlu0 %5682
  %5684 = vrot.lane.b32.xlu0 %v5617, 32
  %v5685 = vpop.permute.xlu0 %5684
  %5686 = vrot.lane.b32.xlu0 %v5618, 32
  %v5687 = vpop.permute.xlu0 %5686
  %5688 = vrot.lane.b32.xlu0 %v5619, 32
  %v5689 = vpop.permute.xlu0 %5688
  %5690 = vrot.lane.b32.xlu0 %v5620, 32
  %v5691 = vpop.permute.xlu0 %5690
  %5692 = vrot.lane.b32.xlu0 %v5621, 32
  %v5693 = vpop.permute.xlu0 %5692
  %5694 = vrot.lane.b32.xlu0 %v5622, 32
  %v5695 = vpop.permute.xlu0 %5694
  %5696 = vrot.lane.b32.xlu0 %v5623, 32
  %v5697 = vpop.permute.xlu0 %5696
  %5698 = vrot.lane.b32.xlu0 %v5624, 32
  %v5699 = vpop.permute.xlu0 %5698
  %5700 = vrot.lane.b32.xlu0 %v5625, 32
  %v5701 = vpop.permute.xlu0 %5700
  %5702 = vrot.lane.b32.xlu0 %v5626, 32
  %v5703 = vpop.permute.xlu0 %5702
  %5704 = vrot.lane.b32.xlu0 %v5627, 32
  %v5705 = vpop.permute.xlu0 %5704
  %5706 = vrot.lane.b32.xlu0 %v5628, 32
  %v5707 = vpop.permute.xlu0 %5706
  %5708 = vrot.lane.b32.xlu0 %v5629, 32
  %v5709 = vpop.permute.xlu0 %5708
  %5710 = vrot.lane.b32.xlu0 %v5630, 32
  %v5711 = vpop.permute.xlu0 %5710
  %5712 = vrot.lane.b32.xlu0 %v5631, 32
  %v5713 = vpop.permute.xlu0 %5712
  %5714 = vrot.lane.b32.xlu0 %v5632, 32
  %v5715 = vpop.permute.xlu0 %5714
  %5716 = vrot.lane.b32.xlu0 %v5633, 32
  %v5717 = vpop.permute.xlu0 %5716
  %5718 = vrot.lane.b32.xlu0 %v5634, 32
  %v5719 = vpop.permute.xlu0 %5718
  %5720 = vrot.lane.b32.xlu0 %v5635, 32
  %v5721 = vpop.permute.xlu0 %5720
  %5722 = vrot.lane.b32.xlu0 %v5636, 32
  %v5723 = vpop.permute.xlu0 %5722
  %5724 = vrot.lane.b32.xlu0 %v5637, 32
  %v5725 = vpop.permute.xlu0 %5724
  %5726 = vrot.lane.b32.xlu0 %v5638, 32
  %v5727 = vpop.permute.xlu0 %5726
  %5728 = vrot.lane.b32.xlu0 %v5639, 32
  %v5729 = vpop.permute.xlu0 %5728
  %5730 = vrot.lane.b32.xlu0 %v5640, 32
  %v5731 = vpop.permute.xlu0 %5730
  %5732 = vrot.lane.b32.xlu0 %v5641, 32
  %v5733 = vpop.permute.xlu0 %5732
  %5734 = vrot.lane.b32.xlu0 %v5642, 32
  %v5735 = vpop.permute.xlu0 %5734
  %5736 = vrot.lane.b32.xlu0 %v5643, 32
  %v5737 = vpop.permute.xlu0 %5736
  %5738 = vrot.lane.b32.xlu0 %v5644, 32
  %v5739 = vpop.permute.xlu0 %5738
  %5740 = vrot.lane.b32.xlu0 %v5645, 32
  %v5741 = vpop.permute.xlu0 %5740
  %5774 = vst.msk [vmem:[#allocation3] sm:$0xff] %vm2418, %v5679
  %5775 = vst.msk [vmem:[#allocation3 + $0x8] sm:$0xff] %vm2418, %v5681
  %5776 = vst.msk [vmem:[#allocation3 + $0x10] sm:$0xff] %vm2418, %v5683
  %5777 = vst.msk [vmem:[#allocation3 + $0x18] sm:$0xff] %vm2418, %v5685
  %5778 = vst.msk [vmem:[#allocation3 + $0x20] sm:$0xff] %vm2418, %v5687
  %5779 = vst.msk [vmem:[#allocation3 + $0x28] sm:$0xff] %vm2418, %v5689
  %5780 = vst.msk [vmem:[#allocation3 + $0x30] sm:$0xff] %vm2418, %v5691
  %5781 = vst.msk [vmem:[#allocation3 + $0x38] sm:$0xff] %vm2418, %v5693
  %5782 = vst.msk [vmem:[#allocation3 + $0x40] sm:$0xff] %vm2418, %v5695
  %5783 = vst.msk [vmem:[#allocation3 + $0x48] sm:$0xff] %vm2418, %v5697
  %5784 = vst.msk [vmem:[#allocation3 + $0x50] sm:$0xff] %vm2418, %v5699
  %5785 = vst.msk [vmem:[#allocation3 + $0x58] sm:$0xff] %vm2418, %v5701
  %5786 = vst.msk [vmem:[#allocation3 + $0x60] sm:$0xff] %vm2418, %v5703
  %5787 = vst.msk [vmem:[#allocation3 + $0x68] sm:$0xff] %vm2418, %v5705
  %5788 = vst.msk [vmem:[#allocation3 + $0x70] sm:$0xff] %vm2418, %v5707
  %5789 = vst.msk [vmem:[#allocation3 + $0x78] sm:$0xff] %vm2418, %v5709
  %5790 = vst.msk [vmem:[#allocation3 + $0x80] sm:$0xff] %vm2418, %v5711
  %5791 = vst.msk [vmem:[#allocation3 + $0x88] sm:$0xff] %vm2418, %v5713
  %5792 = vst.msk [vmem:[#allocation3 + $0x90] sm:$0xff] %vm2418, %v5715
  %5793 = vst.msk [vmem:[#allocation3 + $0x98] sm:$0xff] %vm2418, %v5717
  %5794 = vst.msk [vmem:[#allocation3 + $0xa0] sm:$0xff] %vm2418, %v5719
  %5795 = vst.msk [vmem:[#allocation3 + $0xa8] sm:$0xff] %vm2418, %v5721
  %5796 = vst.msk [vmem:[#allocation3 + $0xb0] sm:$0xff] %vm2418, %v5723
  %5797 = vst.msk [vmem:[#allocation3 + $0xb8] sm:$0xff] %vm2418, %v5725
  %5798 = vst.msk [vmem:[#allocation3 + $0xc0] sm:$0xff] %vm2418, %v5727
  %5799 = vst.msk [vmem:[#allocation3 + $0xc8] sm:$0xff] %vm2418, %v5729
  %5800 = vst.msk [vmem:[#allocation3 + $0xd0] sm:$0xff] %vm2418, %v5731
  %5801 = vst.msk [vmem:[#allocation3 + $0xd8] sm:$0xff] %vm2418, %v5733
  %5802 = vst.msk [vmem:[#allocation3 + $0xe0] sm:$0xff] %vm2418, %v5735
  %5803 = vst.msk [vmem:[#allocation3 + $0xe8] sm:$0xff] %vm2418, %v5737
  %5804 = vst.msk [vmem:[#allocation3 + $0xf0] sm:$0xff] %vm2418, %v5739
  %5805 = vst.msk [vmem:[#allocation3 + $0xf8] sm:$0xff] %vm2418, %v5741
  %v5806 = vld [vmem:[#allocation3] sm:$0xff]
  %v5807 = vld [vmem:[#allocation3 + $0x8] sm:$0xff]
  %v5808 = vld [vmem:[#allocation3 + $0x10] sm:$0xff]
  %v5809 = vld [vmem:[#allocation3 + $0x18] sm:$0xff]
  %v5810 = vld [vmem:[#allocation3 + $0x20] sm:$0xff]
  %v5811 = vld [vmem:[#allocation3 + $0x28] sm:$0xff]
  %v5812 = vld [vmem:[#allocation3 + $0x30] sm:$0xff]
  %v5813 = vld [vmem:[#allocation3 + $0x38] sm:$0xff]
  %v5814 = vld [vmem:[#allocation3 + $0x40] sm:$0xff]
  %v5815 = vld [vmem:[#allocation3 + $0x48] sm:$0xff]
  %v5816 = vld [vmem:[#allocation3 + $0x50] sm:$0xff]
  %v5817 = vld [vmem:[#allocation3 + $0x58] sm:$0xff]
  %v5818 = vld [vmem:[#allocation3 + $0x60] sm:$0xff]
  %v5819 = vld [vmem:[#allocation3 + $0x68] sm:$0xff]
  %v5820 = vld [vmem:[#allocation3 + $0x70] sm:$0xff]
  %v5821 = vld [vmem:[#allocation3 + $0x78] sm:$0xff]
  %v5822 = vld [vmem:[#allocation3 + $0x80] sm:$0xff]
  %v5823 = vld [vmem:[#allocation3 + $0x88] sm:$0xff]
  %v5824 = vld [vmem:[#allocation3 + $0x90] sm:$0xff]
  %v5825 = vld [vmem:[#allocation3 + $0x98] sm:$0xff]
  %v5826 = vld [vmem:[#allocation3 + $0xa0] sm:$0xff]
  %v5827 = vld [vmem:[#allocation3 + $0xa8] sm:$0xff]
  %v5828 = vld [vmem:[#allocation3 + $0xb0] sm:$0xff]
  %v5829 = vld [vmem:[#allocation3 + $0xb8] sm:$0xff]
  %v5830 = vld [vmem:[#allocation3 + $0xc0] sm:$0xff]
  %v5831 = vld [vmem:[#allocation3 + $0xc8] sm:$0xff]
  %v5832 = vld [vmem:[#allocation3 + $0xd0] sm:$0xff]
  %v5833 = vld [vmem:[#allocation3 + $0xd8] sm:$0xff]
  %v5834 = vld [vmem:[#allocation3 + $0xe0] sm:$0xff]
  %v5835 = vld [vmem:[#allocation3 + $0xe8] sm:$0xff]
  %v5836 = vld [vmem:[#allocation3 + $0xf0] sm:$0xff]
  %v5837 = vld [vmem:[#allocation3 + $0xf8] sm:$0xff]
  %v5838 = vld [vmem:[%s4] sm:$0xf]
  %v5839 = vld [vmem:[%s4 + $0x4] sm:$0xf]
  %v5840 = vld [vmem:[%s4 + $0x8] sm:$0xf]
  %v5841 = vld [vmem:[%s4 + $0xc] sm:$0xf]
  %v5842 = vld [vmem:[%s4 + $0x10] sm:$0x3]
  %v5848 = vunpack.c.l.b16 %v5838
  %v5849 = vunpack.c.l.b16 %v5839
  %v5850 = vunpack.c.l.b16 %v5840
  %v5851 = vunpack.c.l.b16 %v5841
  %v5852 = vunpack.c.l.b16 %v5842
  %v5853 = vpack.c.b16 %v5849, %v5848
  %v5854 = vpack.c.b16 %v5851, %v5850
  %v5855 = vpack.c.b16 %v5852, %v5852
  %v5859 = vsel %vm2503, %v5806, 0
  %v5862 = vsel %vm2503, %v5807, 0
  %v5865 = vsel %vm2503, %v5808, 0
  %v5868 = vsel %vm2503, %v5809, 0
  %v5871 = vsel %vm2503, %v5810, 0
  %v5874 = vsel %vm2503, %v5811, 0
  %v5877 = vsel %vm2503, %v5812, 0
  %v5880 = vsel %vm2503, %v5813, 0
  %v5883 = vsel %vm2503, %v5814, 0
  %v5886 = vsel %vm2503, %v5815, 0
  %v5889 = vsel %vm2503, %v5816, 0
  %v5892 = vsel %vm2503, %v5817, 0
  %v5895 = vsel %vm2503, %v5818, 0
  %v5898 = vsel %vm2503, %v5819, 0
  %v5901 = vsel %vm2503, %v5820, 0
  %v5904 = vsel %vm2503, %v5821, 0
  %v5907 = vsel %vm2503, %v5822, 0
  %v5910 = vsel %vm2503, %v5823, 0
  %v5913 = vsel %vm2503, %v5824, 0
  %v5916 = vsel %vm2503, %v5825, 0
  %v5919 = vsel %vm2503, %v5826, 0
  %v5922 = vsel %vm2503, %v5827, 0
  %v5925 = vsel %vm2503, %v5828, 0
  %v5928 = vsel %vm2503, %v5829, 0
  %v5931 = vsel %vm2503, %v5830, 0
  %v5934 = vsel %vm2503, %v5831, 0
  %v5937 = vsel %vm2503, %v5832, 0
  %v5940 = vsel %vm2503, %v5833, 0
  %v5943 = vsel %vm2503, %v5834, 0
  %v5946 = vsel %vm2503, %v5835, 0
  %v5949 = vsel %vm2503, %v5836, 0
  %v5952 = vsel %vm2503, %v5837, 0
  %v5955 = vsel %vm2600, %v5855, 0
  %5957 = vmatprep.subr.bf16.mxu0 0
  %5958 = vmatpush1.bf16.msra.mxu0 %v5853
  %5959 = vmatprep.subr.bf16.mxu0 0
  %5960 = vmatpush1.bf16.msra.mxu0 %v5854
  %5961 = vmatprep.subr.bf16.mxu0 0
  %5962 = vmatpush1.bf16.msra.mxu0 %v5955
  %5963 = vmatprep.subr.bf16.mxu0 0
  %5964 = vmatpush1.bf16.msra.mxu0 0
  %5965 = vmatprep.subr.bf16.mxu0 0
  %5966 = vmatpush1.bf16.msra.mxu0 0
  %5967 = vmatprep.subr.bf16.mxu0 0
  %5968 = vmatpush1.bf16.msra.mxu0 0
  %5969 = vmatprep.subr.bf16.mxu0 0
  %5970 = vmatpush1.bf16.msra.mxu0 0
  %5971 = vmatprep.subr.bf16.mxu0 0
  %5972 = vmatpush1.bf16.msra.mxu0 0
  %5973 = vmatprep.subr.bf16.mxu0 0
  %5974 = vmatpush1.bf16.msra.mxu0 0
  %5975 = vmatprep.subr.bf16.mxu0 0
  %5976 = vmatpush1.bf16.msra.mxu0 0
  %5977 = vmatprep.subr.bf16.mxu0 0
  %5978 = vmatpush1.bf16.msra.mxu0 0
  %5979 = vmatprep.subr.bf16.mxu0 0
  %5980 = vmatpush1.bf16.msra.mxu0 0
  %5981 = vmatprep.subr.bf16.mxu0 0
  %5982 = vmatpush1.bf16.msra.mxu0 0
  %5983 = vmatprep.subr.bf16.mxu0 0
  %5984 = vmatpush1.bf16.msra.mxu0 0
  %5985 = vmatprep.subr.bf16.mxu0 0
  %5986 = vmatpush1.bf16.msra.mxu0 0
  %5987 = vmatprep.subr.bf16.mxu0 0
  %5988 = vmatpush1.bf16.msra.mxu0 0
  %5989 = vmatprep.mubr.bf16.mxu0 0
  %5990 = vmatmul.mubr.bf16.gmra.mrb[0].mxu0 %v5859
  %v5991 = vpop.f32.mrb[0].mxu0
  %v5992 = vadd.f32 0.0, %v5991
  %v5993 = vpop.f32.mrb[0].mxu0
  %v5994 = vpop.f32.mrb[0].mxu0
  %v5995 = vadd.f32 0.0, %v5994
  %v5996 = vpop.f32.mrb[0].mxu0
  %5997 = vmatprep.mubr.bf16.mxu0 0
  %5998 = vmatmul.mubr.bf16.gmra.mrb[0].mxu0 %v5862
  %v5999 = vpop.f32.mrb[0].mxu0
  %v6000 = vadd.f32 0.0, %v5999
  %v6001 = vpop.f32.mrb[0].mxu0
  %v6002 = vpop.f32.mrb[0].mxu0
  %v6003 = vadd.f32 0.0, %v6002
  %v6004 = vpop.f32.mrb[0].mxu0
  %6005 = vmatprep.mubr.bf16.mxu0 0
  %6006 = vmatmul.mubr.bf16.gmra.mrb[0].mxu0 %v5865
  %v6007 = vpop.f32.mrb[0].mxu0
  %v6008 = vadd.f32 0.0, %v6007
  %v6009 = vpop.f32.mrb[0].mxu0
  %v6010 = vpop.f32.mrb[0].mxu0
  %v6011 = vadd.f32 0.0, %v6010
  %v6012 = vpop.f32.mrb[0].mxu0
  %6013 = vmatprep.mubr.bf16.mxu0 0
  %6014 = vmatmul.mubr.bf16.gmra.mrb[0].mxu0 %v5868
  %v6015 = vpop.f32.mrb[0].mxu0
  %v6016 = vadd.f32 0.0, %v6015
  %v6017 = vpop.f32.mrb[0].mxu0
  %v6018 = vpop.f32.mrb[0].mxu0
  %v6019 = vadd.f32 0.0, %v6018
  %v6020 = vpop.f32.mrb[0].mxu0
  %6021 = vmatprep.mubr.bf16.mxu0 0
  %6022 = vmatmul.mubr.bf16.gmra.mrb[0].mxu0 %v5871
  %v6023 = vpop.f32.mrb[0].mxu0
  %v6024 = vadd.f32 0.0, %v6023
  %v6025 = vpop.f32.mrb[0].mxu0
  %v6026 = vpop.f32.mrb[0].mxu0
  %v6027 = vadd.f32 0.0, %v6026
  %v6028 = vpop.f32.mrb[0].mxu0
  %6029 = vmatprep.mubr.bf16.mxu0 0
  %6030 = vmatmul.mubr.bf16.gmra.mrb[0].mxu0 %v5874
  %v6031 = vpop.f32.mrb[0].mxu0
  %v6032 = vadd.f32 0.0, %v6031
  %v6033 = vpop.f32.mrb[0].mxu0
  %v6034 = vpop.f32.mrb[0].mxu0
  %v6035 = vadd.f32 0.0, %v6034
  %v6036 = vpop.f32.mrb[0].mxu0
  %6037 = vmatprep.mubr.bf16.mxu0 0
  %6038 = vmatmul.mubr.bf16.gmra.mrb[0].mxu0 %v5877
  %v6039 = vpop.f32.mrb[0].mxu0
  %v6040 = vadd.f32 0.0, %v6039
  %v6041 = vpop.f32.mrb[0].mxu0
  %v6042 = vpop.f32.mrb[0].mxu0
  %v6043 = vadd.f32 0.0, %v6042
  %v6044 = vpop.f32.mrb[0].mxu0
  %6045 = vmatprep.mubr.bf16.mxu0 0
  %6046 = vmatmul.mubr.bf16.gmra.mrb[0].mxu0 %v5880
  %v6047 = vpop.f32.mrb[0].mxu0
  %v6048 = vadd.f32 0.0, %v6047
  %v6049 = vpop.f32.mrb[0].mxu0
  %v6050 = vpop.f32.mrb[0].mxu0
  %v6051 = vadd.f32 0.0, %v6050
  %v6052 = vpop.f32.mrb[0].mxu0
  %6053 = vmatprep.mubr.bf16.mxu0 0
  %6054 = vmatmul.mubr.bf16.gmra.mrb[0].mxu0 %v5883
  %v6055 = vpop.f32.mrb[0].mxu0
  %v6056 = vadd.f32 0.0, %v6055
  %v6057 = vpop.f32.mrb[0].mxu0
  %v6058 = vpop.f32.mrb[0].mxu0
  %v6059 = vadd.f32 0.0, %v6058
  %v6060 = vpop.f32.mrb[0].mxu0
  %6061 = vmatprep.mubr.bf16.mxu0 0
  %6062 = vmatmul.mubr.bf16.gmra.mrb[0].mxu0 %v5886
  %v6063 = vpop.f32.mrb[0].mxu0
  %v6064 = vadd.f32 0.0, %v6063
  %v6065 = vpop.f32.mrb[0].mxu0
  %v6066 = vpop.f32.mrb[0].mxu0
  %v6067 = vadd.f32 0.0, %v6066
  %v6068 = vpop.f32.mrb[0].mxu0
  %6069 = vmatprep.mubr.bf16.mxu0 0
  %6070 = vmatmul.mubr.bf16.gmra.mrb[0].mxu0 %v5889
  %v6071 = vpop.f32.mrb[0].mxu0
  %v6072 = vadd.f32 0.0, %v6071
  %v6073 = vpop.f32.mrb[0].mxu0
  %v6074 = vpop.f32.mrb[0].mxu0
  %v6075 = vadd.f32 0.0, %v6074
  %v6076 = vpop.f32.mrb[0].mxu0
  %6077 = vmatprep.mubr.bf16.mxu0 0
  %6078 = vmatmul.mubr.bf16.gmra.mrb[0].mxu0 %v5892
  %v6079 = vpop.f32.mrb[0].mxu0
  %v6080 = vadd.f32 0.0, %v6079
  %v6081 = vpop.f32.mrb[0].mxu0
  %v6082 = vpop.f32.mrb[0].mxu0
  %v6083 = vadd.f32 0.0, %v6082
  %v6084 = vpop.f32.mrb[0].mxu0
  %6085 = vmatprep.mubr.bf16.mxu0 0
  %6086 = vmatmul.mubr.bf16.gmra.mrb[0].mxu0 %v5895
  %v6087 = vpop.f32.mrb[0].mxu0
  %v6088 = vadd.f32 0.0, %v6087
  %v6089 = vpop.f32.mrb[0].mxu0
  %v6090 = vpop.f32.mrb[0].mxu0
  %v6091 = vadd.f32 0.0, %v6090
  %v6092 = vpop.f32.mrb[0].mxu0
  %6093 = vmatprep.mubr.bf16.mxu0 0
  %6094 = vmatmul.mubr.bf16.gmra.mrb[0].mxu0 %v5898
  %v6095 = vpop.f32.mrb[0].mxu0
  %v6096 = vadd.f32 0.0, %v6095
  %v6097 = vpop.f32.mrb[0].mxu0
  %v6098 = vpop.f32.mrb[0].mxu0
  %v6099 = vadd.f32 0.0, %v6098
  %v6100 = vpop.f32.mrb[0].mxu0
  %6101 = vmatprep.mubr.bf16.mxu0 0
  %6102 = vmatmul.mubr.bf16.gmra.mrb[0].mxu0 %v5901
  %v6103 = vpop.f32.mrb[0].mxu0
  %v6104 = vadd.f32 0.0, %v6103
  %v6105 = vpop.f32.mrb[0].mxu0
  %v6106 = vpop.f32.mrb[0].mxu0
  %v6107 = vadd.f32 0.0, %v6106
  %v6108 = vpop.f32.mrb[0].mxu0
  %6109 = vmatprep.mubr.bf16.mxu0 0
  %6110 = vmatmul.mubr.bf16.gmra.mrb[0].mxu0 %v5904
  %v6111 = vpop.f32.mrb[0].mxu0
  %v6112 = vadd.f32 0.0, %v6111
  %v6113 = vpop.f32.mrb[0].mxu0
  %v6114 = vpop.f32.mrb[0].mxu0
  %v6115 = vadd.f32 0.0, %v6114
  %v6116 = vpop.f32.mrb[0].mxu0
  %6117 = vmatprep.mubr.bf16.mxu0 0
  %6118 = vmatmul.mubr.bf16.gmra.mrb[0].mxu0 %v5907
  %v6119 = vpop.f32.mrb[0].mxu0
  %v6120 = vadd.f32 0.0, %v6119
  %v6121 = vpop.f32.mrb[0].mxu0
  %v6122 = vpop.f32.mrb[0].mxu0
  %v6123 = vadd.f32 0.0, %v6122
  %v6124 = vpop.f32.mrb[0].mxu0
  %6125 = vmatprep.mubr.bf16.mxu0 0
  %6126 = vmatmul.mubr.bf16.gmra.mrb[0].mxu0 %v5910
  %v6127 = vpop.f32.mrb[0].mxu0
  %v6128 = vadd.f32 0.0, %v6127
  %v6129 = vpop.f32.mrb[0].mxu0
  %v6130 = vpop.f32.mrb[0].mxu0
  %v6131 = vadd.f32 0.0, %v6130
  %v6132 = vpop.f32.mrb[0].mxu0
  %6133 = vmatprep.mubr.bf16.mxu0 0
  %6134 = vmatmul.mubr.bf16.gmra.mrb[0].mxu0 %v5913
  %v6135 = vpop.f32.mrb[0].mxu0
  %v6136 = vadd.f32 0.0, %v6135
  %v6137 = vpop.f32.mrb[0].mxu0
  %v6138 = vpop.f32.mrb[0].mxu0
  %v6139 = vadd.f32 0.0, %v6138
  %v6140 = vpop.f32.mrb[0].mxu0
  %6141 = vmatprep.mubr.bf16.mxu0 0
  %6142 = vmatmul.mubr.bf16.gmra.mrb[0].mxu0 %v5916
  %v6143 = vpop.f32.mrb[0].mxu0
  %v6144 = vadd.f32 0.0, %v6143
  %v6145 = vpop.f32.mrb[0].mxu0
  %v6146 = vpop.f32.mrb[0].mxu0
  %v6147 = vadd.f32 0.0, %v6146
  %v6148 = vpop.f32.mrb[0].mxu0
  %6149 = vmatprep.mubr.bf16.mxu0 0
  %6150 = vmatmul.mubr.bf16.gmra.mrb[0].mxu0 %v5919
  %v6151 = vpop.f32.mrb[0].mxu0
  %v6152 = vadd.f32 0.0, %v6151
  %v6153 = vpop.f32.mrb[0].mxu0
  %v6154 = vpop.f32.mrb[0].mxu0
  %v6155 = vadd.f32 0.0, %v6154
  %v6156 = vpop.f32.mrb[0].mxu0
  %6157 = vmatprep.mubr.bf16.mxu0 0
  %6158 = vmatmul.mubr.bf16.gmra.mrb[0].mxu0 %v5922
  %v6159 = vpop.f32.mrb[0].mxu0
  %v6160 = vadd.f32 0.0, %v6159
  %v6161 = vpop.f32.mrb[0].mxu0
  %v6162 = vpop.f32.mrb[0].mxu0
  %v6163 = vadd.f32 0.0, %v6162
  %v6164 = vpop.f32.mrb[0].mxu0
  %6165 = vmatprep.mubr.bf16.mxu0 0
  %6166 = vmatmul.mubr.bf16.gmra.mrb[0].mxu0 %v5925
  %v6167 = vpop.f32.mrb[0].mxu0
  %v6168 = vadd.f32 0.0, %v6167
  %v6169 = vpop.f32.mrb[0].mxu0
  %v6170 = vpop.f32.mrb[0].mxu0
  %v6171 = vadd.f32 0.0, %v6170
  %v6172 = vpop.f32.mrb[0].mxu0
  %6173 = vmatprep.mubr.bf16.mxu0 0
  %6174 = vmatmul.mubr.bf16.gmra.mrb[0].mxu0 %v5928
  %v6175 = vpop.f32.mrb[0].mxu0
  %v6176 = vadd.f32 0.0, %v6175
  %v6177 = vpop.f32.mrb[0].mxu0
  %v6178 = vpop.f32.mrb[0].mxu0
  %v6179 = vadd.f32 0.0, %v6178
  %v6180 = vpop.f32.mrb[0].mxu0
  %6181 = vmatprep.mubr.bf16.mxu0 0
  %6182 = vmatmul.mubr.bf16.gmra.mrb[0].mxu0 %v5931
  %v6183 = vpop.f32.mrb[0].mxu0
  %v6184 = vadd.f32 0.0, %v6183
  %v6185 = vpop.f32.mrb[0].mxu0
  %v6186 = vpop.f32.mrb[0].mxu0
  %v6187 = vadd.f32 0.0, %v6186
  %v6188 = vpop.f32.mrb[0].mxu0
  %6189 = vmatprep.mubr.bf16.mxu0 0
  %6190 = vmatmul.mubr.bf16.gmra.mrb[0].mxu0 %v5934
  %v6191 = vpop.f32.mrb[0].mxu0
  %v6192 = vadd.f32 0.0, %v6191
  %v6193 = vpop.f32.mrb[0].mxu0
  %v6194 = vpop.f32.mrb[0].mxu0
  %v6195 = vadd.f32 0.0, %v6194
  %v6196 = vpop.f32.mrb[0].mxu0
  %6197 = vmatprep.mubr.bf16.mxu0 0
  %6198 = vmatmul.mubr.bf16.gmra.mrb[0].mxu0 %v5937
  %v6199 = vpop.f32.mrb[0].mxu0
  %v6200 = vadd.f32 0.0, %v6199
  %v6201 = vpop.f32.mrb[0].mxu0
  %v6202 = vpop.f32.mrb[0].mxu0
  %v6203 = vadd.f32 0.0, %v6202
  %v6204 = vpop.f32.mrb[0].mxu0
  %6205 = vmatprep.mubr.bf16.mxu0 0
  %6206 = vmatmul.mubr.bf16.gmra.mrb[0].mxu0 %v5940
  %v6207 = vpop.f32.mrb[0].mxu0
  %v6208 = vadd.f32 0.0, %v6207
  %v6209 = vpop.f32.mrb[0].mxu0
  %v6210 = vpop.f32.mrb[0].mxu0
  %v6211 = vadd.f32 0.0, %v6210
  %v6212 = vpop.f32.mrb[0].mxu0
  %6213 = vmatprep.mubr.bf16.mxu0 0
  %6214 = vmatmul.mubr.bf16.gmra.mrb[0].mxu0 %v5943
  %v6215 = vpop.f32.mrb[0].mxu0
  %v6216 = vadd.f32 0.0, %v6215
  %v6217 = vpop.f32.mrb[0].mxu0
  %v6218 = vpop.f32.mrb[0].mxu0
  %v6219 = vadd.f32 0.0, %v6218
  %v6220 = vpop.f32.mrb[0].mxu0
  %6221 = vmatprep.mubr.bf16.mxu0 0
  %6222 = vmatmul.mubr.bf16.gmra.mrb[0].mxu0 %v5946
  %v6223 = vpop.f32.mrb[0].mxu0
  %v6224 = vadd.f32 0.0, %v6223
  %v6225 = vpop.f32.mrb[0].mxu0
  %v6226 = vpop.f32.mrb[0].mxu0
  %v6227 = vadd.f32 0.0, %v6226
  %v6228 = vpop.f32.mrb[0].mxu0
  %6229 = vmatprep.mubr.bf16.mxu0 0
  %6230 = vmatmul.mubr.bf16.gmra.mrb[0].mxu0 %v5949
  %v6231 = vpop.f32.mrb[0].mxu0
  %v6232 = vadd.f32 0.0, %v6231
  %v6233 = vpop.f32.mrb[0].mxu0
  %v6234 = vpop.f32.mrb[0].mxu0
  %v6235 = vadd.f32 0.0, %v6234
  %v6236 = vpop.f32.mrb[0].mxu0
  %6237 = vmatprep.mubr.bf16.mxu0 0
  %6238 = vmatmul.mubr.bf16.gmra.mrb[0].mxu0 %v5952
  %v6239 = vpop.f32.mrb[0].mxu0
  %v6240 = vadd.f32 0.0, %v6239
  %v6241 = vpop.f32.mrb[0].mxu0
  %v6242 = vpop.f32.mrb[0].mxu0
  %v6243 = vadd.f32 0.0, %v6242
  %v6244 = vpop.f32.mrb[0].mxu0
  %6245 = vdwg.mxu0
  %v6246 = vld [vmem:[%s5] sm:$0x1]
  %v6247 = vld [vmem:[%s6] sm:$0x1]
  %v6248 = vsel %vm27, %v5992, 0.0
  %v6249 = vsel %vm27, %v5995, 0.0
  %v6250 = vadd.f32 %v6248, %v6249
  %v6251 = vsel %vm27, %v6000, 0.0
  %v6252 = vadd.f32 %v6250, %v6251
  %v6253 = vsel %vm27, %v6003, 0.0
  %v6254 = vadd.f32 %v6252, %v6253
  %v6255 = vsel %vm27, %v6008, 0.0
  %v6256 = vadd.f32 %v6254, %v6255
  %v6257 = vsel %vm27, %v6011, 0.0
  %v6258 = vadd.f32 %v6256, %v6257
  %v6259 = vsel %vm27, %v6016, 0.0
  %v6260 = vadd.f32 %v6258, %v6259
  %v6261 = vsel %vm27, %v6019, 0.0
  %v6262 = vadd.f32 %v6260, %v6261
  %v6263 = vsel %vm27, %v6024, 0.0
  %v6264 = vadd.f32 %v6262, %v6263
  %v6265 = vsel %vm27, %v6027, 0.0
  %v6266 = vadd.f32 %v6264, %v6265
  %v6267 = vsel %vm27, %v6032, 0.0
  %v6268 = vadd.f32 %v6266, %v6267
  %v6269 = vsel %vm27, %v6035, 0.0
  %v6270 = vadd.f32 %v6268, %v6269
  %v6271 = vsel %vm27, %v6040, 0.0
  %v6272 = vadd.f32 %v6270, %v6271
  %v6273 = vsel %vm27, %v6043, 0.0
  %v6274 = vadd.f32 %v6272, %v6273
  %v6275 = vsel %vm27, %v6048, 0.0
  %v6276 = vadd.f32 %v6274, %v6275
  %v6277 = vsel %vm27, %v6051, 0.0
  %v6278 = vadd.f32 %v6276, %v6277
  %v6279 = vsel %vm27, %v6056, 0.0
  %v6280 = vadd.f32 %v6278, %v6279
  %v6281 = vsel %vm27, %v6059, 0.0
  %v6282 = vadd.f32 %v6280, %v6281
  %v6283 = vsel %vm27, %v6064, 0.0
  %v6284 = vadd.f32 %v6282, %v6283
  %v6285 = vsel %vm27, %v6067, 0.0
  %v6286 = vadd.f32 %v6284, %v6285
  %v6287 = vsel %vm27, %v6072, 0.0
  %v6288 = vadd.f32 %v6286, %v6287
  %v6289 = vsel %vm27, %v6075, 0.0
  %v6290 = vadd.f32 %v6288, %v6289
  %v6291 = vsel %vm27, %v6080, 0.0
  %v6292 = vadd.f32 %v6290, %v6291
  %v6293 = vsel %vm27, %v6083, 0.0
  %v6294 = vadd.f32 %v6292, %v6293
  %v6295 = vsel %vm27, %v6088, 0.0
  %v6296 = vadd.f32 %v6294, %v6295
  %v6297 = vsel %vm27, %v6091, 0.0
  %v6298 = vadd.f32 %v6296, %v6297
  %v6299 = vsel %vm27, %v6096, 0.0
  %v6300 = vadd.f32 %v6298, %v6299
  %v6301 = vsel %vm27, %v6099, 0.0
  %v6302 = vadd.f32 %v6300, %v6301
  %v6303 = vsel %vm27, %v6104, 0.0
  %v6304 = vadd.f32 %v6302, %v6303
  %v6305 = vsel %vm27, %v6107, 0.0
  %v6306 = vadd.f32 %v6304, %v6305
  %v6307 = vsel %vm27, %v6112, 0.0
  %v6308 = vadd.f32 %v6306, %v6307
  %v6309 = vsel %vm27, %v6115, 0.0
  %v6310 = vadd.f32 %v6308, %v6309
  %v6311 = vsel %vm27, %v6120, 0.0
  %v6312 = vadd.f32 %v6310, %v6311
  %v6313 = vsel %vm27, %v6123, 0.0
  %v6314 = vadd.f32 %v6312, %v6313
  %v6315 = vsel %vm27, %v6128, 0.0
  %v6316 = vadd.f32 %v6314, %v6315
  %v6317 = vsel %vm27, %v6131, 0.0
  %v6318 = vadd.f32 %v6316, %v6317
  %v6319 = vsel %vm27, %v6136, 0.0
  %v6320 = vadd.f32 %v6318, %v6319
  %v6321 = vsel %vm27, %v6139, 0.0
  %v6322 = vadd.f32 %v6320, %v6321
  %v6323 = vsel %vm27, %v6144, 0.0
  %v6324 = vadd.f32 %v6322, %v6323
  %v6325 = vsel %vm27, %v6147, 0.0
  %v6326 = vadd.f32 %v6324, %v6325
  %v6327 = vsel %vm27, %v6152, 0.0
  %v6328 = vadd.f32 %v6326, %v6327
  %v6329 = vsel %vm27, %v6155, 0.0
  %v6330 = vadd.f32 %v6328, %v6329
  %v6331 = vsel %vm27, %v6160, 0.0
  %v6332 = vadd.f32 %v6330, %v6331
  %v6333 = vsel %vm27, %v6163, 0.0
  %v6334 = vadd.f32 %v6332, %v6333
  %v6335 = vsel %vm27, %v6168, 0.0
  %v6336 = vadd.f32 %v6334, %v6335
  %v6337 = vsel %vm27, %v6171, 0.0
  %v6338 = vadd.f32 %v6336, %v6337
  %v6339 = vsel %vm27, %v6176, 0.0
  %v6340 = vadd.f32 %v6338, %v6339
  %v6341 = vsel %vm27, %v6179, 0.0
  %v6342 = vadd.f32 %v6340, %v6341
  %v6343 = vsel %vm27, %v6184, 0.0
  %v6344 = vadd.f32 %v6342, %v6343
  %v6345 = vsel %vm27, %v6187, 0.0
  %v6346 = vadd.f32 %v6344, %v6345
  %v6347 = vsel %vm27, %v6192, 0.0
  %v6348 = vadd.f32 %v6346, %v6347
  %v6349 = vsel %vm27, %v6195, 0.0
  %v6350 = vadd.f32 %v6348, %v6349
  %v6351 = vsel %vm27, %v6200, 0.0
  %v6352 = vadd.f32 %v6350, %v6351
  %v6353 = vsel %vm27, %v6203, 0.0
  %v6354 = vadd.f32 %v6352, %v6353
  %v6355 = vsel %vm27, %v6208, 0.0
  %v6356 = vadd.f32 %v6354, %v6355
  %v6357 = vsel %vm27, %v6211, 0.0
  %v6358 = vadd.f32 %v6356, %v6357
  %v6359 = vsel %vm27, %v6216, 0.0
  %v6360 = vadd.f32 %v6358, %v6359
  %v6361 = vsel %vm27, %v6219, 0.0
  %v6362 = vadd.f32 %v6360, %v6361
  %v6363 = vsel %vm27, %v6224, 0.0
  %v6364 = vadd.f32 %v6362, %v6363
  %v6365 = vsel %vm27, %v6227, 0.0
  %v6366 = vadd.f32 %v6364, %v6365
  %v6367 = vsel %vm27, %v6232, 0.0
  %v6368 = vadd.f32 %v6366, %v6367
  %v6369 = vsel %vm27, %v6235, 0.0
  %v6370 = vadd.f32 %v6368, %v6369
  %v6371 = vsel %vm27, %v6240, 0.0
  %v6372 = vadd.f32 %v6370, %v6371
  %v6373 = vsel %vm27, %v6243, 0.0
  %v6374 = vadd.f32 %v6372, %v6373
  %v6375 = vrot.slane %v6374, 4
  %v6376 = vadd.f32 %v6374, %v6375
  %v6377 = vrot.slane %v6376, 2
  %v6378 = vadd.f32 %v6376, %v6377
  %v6379 = vrot.slane %v6378, 1
  %v6380 = vadd.f32 %v6378, %v6379
  %v6381 = vmul.f32 %v6380, 0.001953125
  %v6382 = vmul.f32 %v5992, %v5992
  %v6383 = vmul.f32 %v5995, %v5995
  %v6384 = vmul.f32 %v6000, %v6000
  %v6385 = vmul.f32 %v6003, %v6003
  %v6386 = vmul.f32 %v6008, %v6008
  %v6387 = vmul.f32 %v6011, %v6011
  %v6388 = vmul.f32 %v6016, %v6016
  %v6389 = vmul.f32 %v6019, %v6019
  %v6390 = vmul.f32 %v6024, %v6024
  %v6391 = vmul.f32 %v6027, %v6027
  %v6392 = vmul.f32 %v6032, %v6032
  %v6393 = vmul.f32 %v6035, %v6035
  %v6394 = vmul.f32 %v6040, %v6040
  %v6395 = vmul.f32 %v6043, %v6043
  %v6396 = vmul.f32 %v6048, %v6048
  %v6397 = vmul.f32 %v6051, %v6051
  %v6398 = vmul.f32 %v6056, %v6056
  %v6399 = vmul.f32 %v6059, %v6059
  %v6400 = vmul.f32 %v6064, %v6064
  %v6401 = vmul.f32 %v6067, %v6067
  %v6402 = vmul.f32 %v6072, %v6072
  %v6403 = vmul.f32 %v6075, %v6075
  %v6404 = vmul.f32 %v6080, %v6080
  %v6405 = vmul.f32 %v6083, %v6083
  %v6406 = vmul.f32 %v6088, %v6088
  %v6407 = vmul.f32 %v6091, %v6091
  %v6408 = vmul.f32 %v6096, %v6096
  %v6409 = vmul.f32 %v6099, %v6099
  %v6410 = vmul.f32 %v6104, %v6104
  %v6411 = vmul.f32 %v6107, %v6107
  %v6412 = vmul.f32 %v6112, %v6112
  %v6413 = vmul.f32 %v6115, %v6115
  %v6414 = vmul.f32 %v6120, %v6120
  %v6415 = vmul.f32 %v6123, %v6123
  %v6416 = vmul.f32 %v6128, %v6128
  %v6417 = vmul.f32 %v6131, %v6131
  %v6418 = vmul.f32 %v6136, %v6136
  %v6419 = vmul.f32 %v6139, %v6139
  %v6420 = vmul.f32 %v6144, %v6144
  %v6421 = vmul.f32 %v6147, %v6147
  %v6422 = vmul.f32 %v6152, %v6152
  %v6423 = vmul.f32 %v6155, %v6155
  %v6424 = vmul.f32 %v6160, %v6160
  %v6425 = vmul.f32 %v6163, %v6163
  %v6426 = vmul.f32 %v6168, %v6168
  %v6427 = vmul.f32 %v6171, %v6171
  %v6428 = vmul.f32 %v6176, %v6176
  %v6429 = vmul.f32 %v6179, %v6179
  %v6430 = vmul.f32 %v6184, %v6184
  %v6431 = vmul.f32 %v6187, %v6187
  %v6432 = vmul.f32 %v6192, %v6192
  %v6433 = vmul.f32 %v6195, %v6195
  %v6434 = vmul.f32 %v6200, %v6200
  %v6435 = vmul.f32 %v6203, %v6203
  %v6436 = vmul.f32 %v6208, %v6208
  %v6437 = vmul.f32 %v6211, %v6211
  %v6438 = vmul.f32 %v6216, %v6216
  %v6439 = vmul.f32 %v6219, %v6219
  %v6440 = vmul.f32 %v6224, %v6224
  %v6441 = vmul.f32 %v6227, %v6227
  %v6442 = vmul.f32 %v6232, %v6232
  %v6443 = vmul.f32 %v6235, %v6235
  %v6444 = vmul.f32 %v6240, %v6240
  %v6445 = vmul.f32 %v6243, %v6243
  %v6446 = vsel %vm27, %v6382, 0.0
  %v6447 = vsel %vm27, %v6383, 0.0
  %v6448 = vadd.f32 %v6446, %v6447
  %v6449 = vsel %vm27, %v6384, 0.0
  %v6450 = vadd.f32 %v6448, %v6449
  %v6451 = vsel %vm27, %v6385, 0.0
  %v6452 = vadd.f32 %v6450, %v6451
  %v6453 = vsel %vm27, %v6386, 0.0
  %v6454 = vadd.f32 %v6452, %v6453
  %v6455 = vsel %vm27, %v6387, 0.0
  %v6456 = vadd.f32 %v6454, %v6455
  %v6457 = vsel %vm27, %v6388, 0.0
  %v6458 = vadd.f32 %v6456, %v6457
  %v6459 = vsel %vm27, %v6389, 0.0
  %v6460 = vadd.f32 %v6458, %v6459
  %v6461 = vsel %vm27, %v6390, 0.0
  %v6462 = vadd.f32 %v6460, %v6461
  %v6463 = vsel %vm27, %v6391, 0.0
  %v6464 = vadd.f32 %v6462, %v6463
  %v6465 = vsel %vm27, %v6392, 0.0
  %v6466 = vadd.f32 %v6464, %v6465
  %v6467 = vsel %vm27, %v6393, 0.0
  %v6468 = vadd.f32 %v6466, %v6467
  %v6469 = vsel %vm27, %v6394, 0.0
  %v6470 = vadd.f32 %v6468, %v6469
  %v6471 = vsel %vm27, %v6395, 0.0
  %v6472 = vadd.f32 %v6470, %v6471
  %v6473 = vsel %vm27, %v6396, 0.0
  %v6474 = vadd.f32 %v6472, %v6473
  %v6475 = vsel %vm27, %v6397, 0.0
  %v6476 = vadd.f32 %v6474, %v6475
  %v6477 = vsel %vm27, %v6398, 0.0
  %v6478 = vadd.f32 %v6476, %v6477
  %v6479 = vsel %vm27, %v6399, 0.0
  %v6480 = vadd.f32 %v6478, %v6479
  %v6481 = vsel %vm27, %v6400, 0.0
  %v6482 = vadd.f32 %v6480, %v6481
  %v6483 = vsel %vm27, %v6401, 0.0
  %v6484 = vadd.f32 %v6482, %v6483
  %v6485 = vsel %vm27, %v6402, 0.0
  %v6486 = vadd.f32 %v6484, %v6485
  %v6487 = vsel %vm27, %v6403, 0.0
  %v6488 = vadd.f32 %v6486, %v6487
  %v6489 = vsel %vm27, %v6404, 0.0
  %v6490 = vadd.f32 %v6488, %v6489
  %v6491 = vsel %vm27, %v6405, 0.0
  %v6492 = vadd.f32 %v6490, %v6491
  %v6493 = vsel %vm27, %v6406, 0.0
  %v6494 = vadd.f32 %v6492, %v6493
  %v6495 = vsel %vm27, %v6407, 0.0
  %v6496 = vadd.f32 %v6494, %v6495
  %v6497 = vsel %vm27, %v6408, 0.0
  %v6498 = vadd.f32 %v6496, %v6497
  %v6499 = vsel %vm27, %v6409, 0.0
  %v6500 = vadd.f32 %v6498, %v6499
  %v6501 = vsel %vm27, %v6410, 0.0
  %v6502 = vadd.f32 %v6500, %v6501
  %v6503 = vsel %vm27, %v6411, 0.0
  %v6504 = vadd.f32 %v6502, %v6503
  %v6505 = vsel %vm27, %v6412, 0.0
  %v6506 = vadd.f32 %v6504, %v6505
  %v6507 = vsel %vm27, %v6413, 0.0
  %v6508 = vadd.f32 %v6506, %v6507
  %v6509 = vsel %vm27, %v6414, 0.0
  %v6510 = vadd.f32 %v6508, %v6509
  %v6511 = vsel %vm27, %v6415, 0.0
  %v6512 = vadd.f32 %v6510, %v6511
  %v6513 = vsel %vm27, %v6416, 0.0
  %v6514 = vadd.f32 %v6512, %v6513
  %v6515 = vsel %vm27, %v6417, 0.0
  %v6516 = vadd.f32 %v6514, %v6515
  %v6517 = vsel %vm27, %v6418, 0.0
  %v6518 = vadd.f32 %v6516, %v6517
  %v6519 = vsel %vm27, %v6419, 0.0
  %v6520 = vadd.f32 %v6518, %v6519
  %v6521 = vsel %vm27, %v6420, 0.0
  %v6522 = vadd.f32 %v6520, %v6521
  %v6523 = vsel %vm27, %v6421, 0.0
  %v6524 = vadd.f32 %v6522, %v6523
  %v6525 = vsel %vm27, %v6422, 0.0
  %v6526 = vadd.f32 %v6524, %v6525
  %v6527 = vsel %vm27, %v6423, 0.0
  %v6528 = vadd.f32 %v6526, %v6527
  %v6529 = vsel %vm27, %v6424, 0.0
  %v6530 = vadd.f32 %v6528, %v6529
  %v6531 = vsel %vm27, %v6425, 0.0
  %v6532 = vadd.f32 %v6530, %v6531
  %v6533 = vsel %vm27, %v6426, 0.0
  %v6534 = vadd.f32 %v6532, %v6533
  %v6535 = vsel %vm27, %v6427, 0.0
  %v6536 = vadd.f32 %v6534, %v6535
  %v6537 = vsel %vm27, %v6428, 0.0
  %v6538 = vadd.f32 %v6536, %v6537
  %v6539 = vsel %vm27, %v6429, 0.0
  %v6540 = vadd.f32 %v6538, %v6539
  %v6541 = vsel %vm27, %v6430, 0.0
  %v6542 = vadd.f32 %v6540, %v6541
  %v6543 = vsel %vm27, %v6431, 0.0
  %v6544 = vadd.f32 %v6542, %v6543
  %v6545 = vsel %vm27, %v6432, 0.0
  %v6546 = vadd.f32 %v6544, %v6545
  %v6547 = vsel %vm27, %v6433, 0.0
  %v6548 = vadd.f32 %v6546, %v6547
  %v6549 = vsel %vm27, %v6434, 0.0
  %v6550 = vadd.f32 %v6548, %v6549
  %v6551 = vsel %vm27, %v6435, 0.0
  %v6552 = vadd.f32 %v6550, %v6551
  %v6553 = vsel %vm27, %v6436, 0.0
  %v6554 = vadd.f32 %v6552, %v6553
  %v6555 = vsel %vm27, %v6437, 0.0
  %v6556 = vadd.f32 %v6554, %v6555
  %v6557 = vsel %vm27, %v6438, 0.0
  %v6558 = vadd.f32 %v6556, %v6557
  %v6559 = vsel %vm27, %v6439, 0.0
  %v6560 = vadd.f32 %v6558, %v6559
  %v6561 = vsel %vm27, %v6440, 0.0
  %v6562 = vadd.f32 %v6560, %v6561
  %v6563 = vsel %vm27, %v6441, 0.0
  %v6564 = vadd.f32 %v6562, %v6563
  %v6565 = vsel %vm27, %v6442, 0.0
  %v6566 = vadd.f32 %v6564, %v6565
  %v6567 = vsel %vm27, %v6443, 0.0
  %v6568 = vadd.f32 %v6566, %v6567
  %v6569 = vsel %vm27, %v6444, 0.0
  %v6570 = vadd.f32 %v6568, %v6569
  %v6571 = vsel %vm27, %v6445, 0.0
  %v6572 = vadd.f32 %v6570, %v6571
  %v6573 = vrot.slane %v6572, 4
  %v6574 = vadd.f32 %v6572, %v6573
  %v6575 = vrot.slane %v6574, 2
  %v6576 = vadd.f32 %v6574, %v6575
  %v6577 = vrot.slane %v6576, 1
  %v6578 = vadd.f32 %v6576, %v6577
  %v6579 = vmul.f32 %v6578, 0.001953125
  %v6580 = vmul.f32 %v6381, %v6381
  %v6581 = vsub.f32 %v6579, %v6580
  %v6582 = vadd.f32 %v6581, 1e-05
  %v6583 = vrsqrt.pop %v6582
  %v6584 = vmul.f32 %v6246, %v6583
  %v6585 = vmul.f32 %v6381, %v6584
  %v6586 = vsub.f32 %v6247, %v6585
  %v6588 = vlaneseq
  %v6589 = vshrl.u32 %v6588, 7
  %v6590 = vsub.s32 0, %v6589
  %v6591 = vrot.slane %v6584, %v6590
  %v6593 = vmul.f32 %v5992, %v6591
  %v6594 = vmul.f32 %v5995, %v6591
  %v6595 = vmul.f32 %v6000, %v6591
  %v6596 = vmul.f32 %v6003, %v6591
  %v6597 = vmul.f32 %v6008, %v6591
  %v6598 = vmul.f32 %v6011, %v6591
  %v6599 = vmul.f32 %v6016, %v6591
  %v6600 = vmul.f32 %v6019, %v6591
  %v6601 = vmul.f32 %v6024, %v6591
  %v6602 = vmul.f32 %v6027, %v6591
  %v6603 = vmul.f32 %v6032, %v6591
  %v6604 = vmul.f32 %v6035, %v6591
  %v6605 = vmul.f32 %v6040, %v6591
  %v6606 = vmul.f32 %v6043, %v6591
  %v6607 = vmul.f32 %v6048, %v6591
  %v6608 = vmul.f32 %v6051, %v6591
  %v6609 = vmul.f32 %v6056, %v6591
  %v6610 = vmul.f32 %v6059, %v6591
  %v6611 = vmul.f32 %v6064, %v6591
  %v6612 = vmul.f32 %v6067, %v6591
  %v6613 = vmul.f32 %v6072, %v6591
  %v6614 = vmul.f32 %v6075, %v6591
  %v6615 = vmul.f32 %v6080, %v6591
  %v6616 = vmul.f32 %v6083, %v6591
  %v6617 = vmul.f32 %v6088, %v6591
  %v6618 = vmul.f32 %v6091, %v6591
  %v6619 = vmul.f32 %v6096, %v6591
  %v6620 = vmul.f32 %v6099, %v6591
  %v6621 = vmul.f32 %v6104, %v6591
  %v6622 = vmul.f32 %v6107, %v6591
  %v6623 = vmul.f32 %v6112, %v6591
  %v6624 = vmul.f32 %v6115, %v6591
  %v6625 = vmul.f32 %v6120, %v6591
  %v6626 = vmul.f32 %v6123, %v6591
  %v6627 = vmul.f32 %v6128, %v6591
  %v6628 = vmul.f32 %v6131, %v6591
  %v6629 = vmul.f32 %v6136, %v6591
  %v6630 = vmul.f32 %v6139, %v6591
  %v6631 = vmul.f32 %v6144, %v6591
  %v6632 = vmul.f32 %v6147, %v6591
  %v6633 = vmul.f32 %v6152, %v6591
  %v6634 = vmul.f32 %v6155, %v6591
  %v6635 = vmul.f32 %v6160, %v6591
  %v6636 = vmul.f32 %v6163, %v6591
  %v6637 = vmul.f32 %v6168, %v6591
  %v6638 = vmul.f32 %v6171, %v6591
  %v6639 = vmul.f32 %v6176, %v6591
  %v6640 = vmul.f32 %v6179, %v6591
  %v6641 = vmul.f32 %v6184, %v6591
  %v6642 = vmul.f32 %v6187, %v6591
  %v6643 = vmul.f32 %v6192, %v6591
  %v6644 = vmul.f32 %v6195, %v6591
  %v6645 = vmul.f32 %v6200, %v6591
  %v6646 = vmul.f32 %v6203, %v6591
  %v6647 = vmul.f32 %v6208, %v6591
  %v6648 = vmul.f32 %v6211, %v6591
  %v6649 = vmul.f32 %v6216, %v6591
  %v6650 = vmul.f32 %v6219, %v6591
  %v6651 = vmul.f32 %v6224, %v6591
  %v6652 = vmul.f32 %v6227, %v6591
  %v6653 = vmul.f32 %v6232, %v6591
  %v6654 = vmul.f32 %v6235, %v6591
  %v6655 = vmul.f32 %v6240, %v6591
  %v6656 = vmul.f32 %v6243, %v6591
  %v6658 = vlaneseq
  %v6659 = vshrl.u32 %v6658, 7
  %v6660 = vsub.s32 0, %v6659
  %v6661 = vrot.slane %v6586, %v6660
  %v6663 = vadd.f32 %v6593, %v6661
  %v6664 = vadd.f32 %v6594, %v6661
  %v6665 = vadd.f32 %v6595, %v6661
  %v6666 = vadd.f32 %v6596, %v6661
  %v6667 = vadd.f32 %v6597, %v6661
  %v6668 = vadd.f32 %v6598, %v6661
  %v6669 = vadd.f32 %v6599, %v6661
  %v6670 = vadd.f32 %v6600, %v6661
  %v6671 = vadd.f32 %v6601, %v6661
  %v6672 = vadd.f32 %v6602, %v6661
  %v6673 = vadd.f32 %v6603, %v6661
  %v6674 = vadd.f32 %v6604, %v6661
  %v6675 = vadd.f32 %v6605, %v6661
  %v6676 = vadd.f32 %v6606, %v6661
  %v6677 = vadd.f32 %v6607, %v6661
  %v6678 = vadd.f32 %v6608, %v6661
  %v6679 = vadd.f32 %v6609, %v6661
  %v6680 = vadd.f32 %v6610, %v6661
  %v6681 = vadd.f32 %v6611, %v6661
  %v6682 = vadd.f32 %v6612, %v6661
  %v6683 = vadd.f32 %v6613, %v6661
  %v6684 = vadd.f32 %v6614, %v6661
  %v6685 = vadd.f32 %v6615, %v6661
  %v6686 = vadd.f32 %v6616, %v6661
  %v6687 = vadd.f32 %v6617, %v6661
  %v6688 = vadd.f32 %v6618, %v6661
  %v6689 = vadd.f32 %v6619, %v6661
  %v6690 = vadd.f32 %v6620, %v6661
  %v6691 = vadd.f32 %v6621, %v6661
  %v6692 = vadd.f32 %v6622, %v6661
  %v6693 = vadd.f32 %v6623, %v6661
  %v6694 = vadd.f32 %v6624, %v6661
  %v6695 = vadd.f32 %v6625, %v6661
  %v6696 = vadd.f32 %v6626, %v6661
  %v6697 = vadd.f32 %v6627, %v6661
  %v6698 = vadd.f32 %v6628, %v6661
  %v6699 = vadd.f32 %v6629, %v6661
  %v6700 = vadd.f32 %v6630, %v6661
  %v6701 = vadd.f32 %v6631, %v6661
  %v6702 = vadd.f32 %v6632, %v6661
  %v6703 = vadd.f32 %v6633, %v6661
  %v6704 = vadd.f32 %v6634, %v6661
  %v6705 = vadd.f32 %v6635, %v6661
  %v6706 = vadd.f32 %v6636, %v6661
  %v6707 = vadd.f32 %v6637, %v6661
  %v6708 = vadd.f32 %v6638, %v6661
  %v6709 = vadd.f32 %v6639, %v6661
  %v6710 = vadd.f32 %v6640, %v6661
  %v6711 = vadd.f32 %v6641, %v6661
  %v6712 = vadd.f32 %v6642, %v6661
  %v6713 = vadd.f32 %v6643, %v6661
  %v6714 = vadd.f32 %v6644, %v6661
  %v6715 = vadd.f32 %v6645, %v6661
  %v6716 = vadd.f32 %v6646, %v6661
  %v6717 = vadd.f32 %v6647, %v6661
  %v6718 = vadd.f32 %v6648, %v6661
  %v6719 = vadd.f32 %v6649, %v6661
  %v6720 = vadd.f32 %v6650, %v6661
  %v6721 = vadd.f32 %v6651, %v6661
  %v6722 = vadd.f32 %v6652, %v6661
  %v6723 = vadd.f32 %v6653, %v6661
  %v6724 = vadd.f32 %v6654, %v6661
  %v6725 = vadd.f32 %v6655, %v6661
  %v6726 = vadd.f32 %v6656, %v6661
  %v6727 = vld [vmem:[%s0] sm:$0xff]
  %v6728 = vld [vmem:[%s0 + $0x8] sm:$0xff]
  %v6729 = vld [vmem:[%s0 + $0x10] sm:$0xff]
  %v6730 = vld [vmem:[%s0 + $0x18] sm:$0xff]
  %v6731 = vld [vmem:[%s0 + $0x20] sm:$0xff]
  %v6732 = vld [vmem:[%s0 + $0x28] sm:$0xff]
  %v6733 = vld [vmem:[%s0 + $0x30] sm:$0xff]
  %v6734 = vld [vmem:[%s0 + $0x38] sm:$0xff]
  %v6735 = vld [vmem:[%s0 + $0x40] sm:$0xff]
  %v6736 = vld [vmem:[%s0 + $0x48] sm:$0xff]
  %v6737 = vld [vmem:[%s0 + $0x50] sm:$0xff]
  %v6738 = vld [vmem:[%s0 + $0x58] sm:$0xff]
  %v6739 = vld [vmem:[%s0 + $0x60] sm:$0xff]
  %v6740 = vld [vmem:[%s0 + $0x68] sm:$0xff]
  %v6741 = vld [vmem:[%s0 + $0x70] sm:$0xff]
  %v6742 = vld [vmem:[%s0 + $0x78] sm:$0xff]
  %v6743 = vld [vmem:[%s0 + $0x80] sm:$0xff]
  %v6744 = vld [vmem:[%s0 + $0x88] sm:$0xff]
  %v6745 = vld [vmem:[%s0 + $0x90] sm:$0xff]
  %v6746 = vld [vmem:[%s0 + $0x98] sm:$0xff]
  %v6747 = vld [vmem:[%s0 + $0xa0] sm:$0xff]
  %v6748 = vld [vmem:[%s0 + $0xa8] sm:$0xff]
  %v6749 = vld [vmem:[%s0 + $0xb0] sm:$0xff]
  %v6750 = vld [vmem:[%s0 + $0xb8] sm:$0xff]
  %v6751 = vld [vmem:[%s0 + $0xc0] sm:$0xff]
  %v6752 = vld [vmem:[%s0 + $0xc8] sm:$0xff]
  %v6753 = vld [vmem:[%s0 + $0xd0] sm:$0xff]
  %v6754 = vld [vmem:[%s0 + $0xd8] sm:$0xff]
  %v6755 = vld [vmem:[%s0 + $0xe0] sm:$0xff]
  %v6756 = vld [vmem:[%s0 + $0xe8] sm:$0xff]
  %v6757 = vld [vmem:[%s0 + $0xf0] sm:$0xff]
  %v6758 = vld [vmem:[%s0 + $0xf8] sm:$0xff]
  %v6759 = vld [vmem:[%s0 + $0x100] sm:$0xff]
  %v6760 = vld [vmem:[%s0 + $0x108] sm:$0xff]
  %v6761 = vld [vmem:[%s0 + $0x110] sm:$0xff]
  %v6762 = vld [vmem:[%s0 + $0x118] sm:$0xff]
  %v6763 = vld [vmem:[%s0 + $0x120] sm:$0xff]
  %v6764 = vld [vmem:[%s0 + $0x128] sm:$0xff]
  %v6765 = vld [vmem:[%s0 + $0x130] sm:$0xff]
  %v6766 = vld [vmem:[%s0 + $0x138] sm:$0xff]
  %v6767 = vld [vmem:[%s0 + $0x140] sm:$0xff]
  %v6768 = vld [vmem:[%s0 + $0x148] sm:$0xff]
  %v6769 = vld [vmem:[%s0 + $0x150] sm:$0xff]
  %v6770 = vld [vmem:[%s0 + $0x158] sm:$0xff]
  %v6771 = vld [vmem:[%s0 + $0x160] sm:$0xff]
  %v6772 = vld [vmem:[%s0 + $0x168] sm:$0xff]
  %v6773 = vld [vmem:[%s0 + $0x170] sm:$0xff]
  %v6774 = vld [vmem:[%s0 + $0x178] sm:$0xff]
  %v6775 = vld [vmem:[%s0 + $0x180] sm:$0xff]
  %v6776 = vld [vmem:[%s0 + $0x188] sm:$0xff]
  %v6777 = vld [vmem:[%s0 + $0x190] sm:$0xff]
  %v6778 = vld [vmem:[%s0 + $0x198] sm:$0xff]
  %v6779 = vld [vmem:[%s0 + $0x1a0] sm:$0xff]
  %v6780 = vld [vmem:[%s0 + $0x1a8] sm:$0xff]
  %v6781 = vld [vmem:[%s0 + $0x1b0] sm:$0xff]
  %v6782 = vld [vmem:[%s0 + $0x1b8] sm:$0xff]
  %v6783 = vld [vmem:[%s0 + $0x1c0] sm:$0xff]
  %v6784 = vld [vmem:[%s0 + $0x1c8] sm:$0xff]
  %v6785 = vld [vmem:[%s0 + $0x1d0] sm:$0xff]
  %v6786 = vld [vmem:[%s0 + $0x1d8] sm:$0xff]
  %v6787 = vld [vmem:[%s0 + $0x1e0] sm:$0xff]
  %v6788 = vld [vmem:[%s0 + $0x1e8] sm:$0xff]
  %v6789 = vld [vmem:[%s0 + $0x1f0] sm:$0xff]
  %v6790 = vld [vmem:[%s0 + $0x1f8] sm:$0xff]
  %v6791 = vadd.f32 %v6663, %v6727
  %v6792 = vadd.f32 %v6664, %v6728
  %v6793 = vadd.f32 %v6665, %v6729
  %v6794 = vadd.f32 %v6666, %v6730
  %v6795 = vadd.f32 %v6667, %v6731
  %v6796 = vadd.f32 %v6668, %v6732
  %v6797 = vadd.f32 %v6669, %v6733
  %v6798 = vadd.f32 %v6670, %v6734
  %v6799 = vadd.f32 %v6671, %v6735
  %v6800 = vadd.f32 %v6672, %v6736
  %v6801 = vadd.f32 %v6673, %v6737
  %v6802 = vadd.f32 %v6674, %v6738
  %v6803 = vadd.f32 %v6675, %v6739
  %v6804 = vadd.f32 %v6676, %v6740
  %v6805 = vadd.f32 %v6677, %v6741
  %v6806 = vadd.f32 %v6678, %v6742
  %v6807 = vadd.f32 %v6679, %v6743
  %v6808 = vadd.f32 %v6680, %v6744
  %v6809 = vadd.f32 %v6681, %v6745
  %v6810 = vadd.f32 %v6682, %v6746
  %v6811 = vadd.f32 %v6683, %v6747
  %v6812 = vadd.f32 %v6684, %v6748
  %v6813 = vadd.f32 %v6685, %v6749
  %v6814 = vadd.f32 %v6686, %v6750
  %v6815 = vadd.f32 %v6687, %v6751
  %v6816 = vadd.f32 %v6688, %v6752
  %v6817 = vadd.f32 %v6689, %v6753
  %v6818 = vadd.f32 %v6690, %v6754
  %v6819 = vadd.f32 %v6691, %v6755
  %v6820 = vadd.f32 %v6692, %v6756
  %v6821 = vadd.f32 %v6693, %v6757
  %v6822 = vadd.f32 %v6694, %v6758
  %v6823 = vadd.f32 %v6695, %v6759
  %v6824 = vadd.f32 %v6696, %v6760
  %v6825 = vadd.f32 %v6697, %v6761
  %v6826 = vadd.f32 %v6698, %v6762
  %v6827 = vadd.f32 %v6699, %v6763
  %v6828 = vadd.f32 %v6700, %v6764
  %v6829 = vadd.f32 %v6701, %v6765
  %v6830 = vadd.f32 %v6702, %v6766
  %v6831 = vadd.f32 %v6703, %v6767
  %v6832 = vadd.f32 %v6704, %v6768
  %v6833 = vadd.f32 %v6705, %v6769
  %v6834 = vadd.f32 %v6706, %v6770
  %v6835 = vadd.f32 %v6707, %v6771
  %v6836 = vadd.f32 %v6708, %v6772
  %v6837 = vadd.f32 %v6709, %v6773
  %v6838 = vadd.f32 %v6710, %v6774
  %v6839 = vadd.f32 %v6711, %v6775
  %v6840 = vadd.f32 %v6712, %v6776
  %v6841 = vadd.f32 %v6713, %v6777
  %v6842 = vadd.f32 %v6714, %v6778
  %v6843 = vadd.f32 %v6715, %v6779
  %v6844 = vadd.f32 %v6716, %v6780
  %v6845 = vadd.f32 %v6717, %v6781
  %v6846 = vadd.f32 %v6718, %v6782
  %v6847 = vadd.f32 %v6719, %v6783
  %v6848 = vadd.f32 %v6720, %v6784
  %v6849 = vadd.f32 %v6721, %v6785
  %v6850 = vadd.f32 %v6722, %v6786
  %v6851 = vadd.f32 %v6723, %v6787
  %v6852 = vadd.f32 %v6724, %v6788
  %v6853 = vadd.f32 %v6725, %v6789
  %v6854 = vadd.f32 %v6726, %v6790
  %vm6855 = vcmp.ge.f32.partialorder %v6791, 0.0
  %vm6856 = vcmp.ge.f32.partialorder %v6792, 0.0
  %vm6857 = vcmp.ge.f32.partialorder %v6793, 0.0
  %vm6858 = vcmp.ge.f32.partialorder %v6794, 0.0
  %vm6859 = vcmp.ge.f32.partialorder %v6795, 0.0
  %vm6860 = vcmp.ge.f32.partialorder %v6796, 0.0
  %vm6861 = vcmp.ge.f32.partialorder %v6797, 0.0
  %vm6862 = vcmp.ge.f32.partialorder %v6798, 0.0
  %vm6863 = vcmp.ge.f32.partialorder %v6799, 0.0
  %vm6864 = vcmp.ge.f32.partialorder %v6800, 0.0
  %vm6865 = vcmp.ge.f32.partialorder %v6801, 0.0
  %vm6866 = vcmp.ge.f32.partialorder %v6802, 0.0
  %vm6867 = vcmp.ge.f32.partialorder %v6803, 0.0
  %vm6868 = vcmp.ge.f32.partialorder %v6804, 0.0
  %vm6869 = vcmp.ge.f32.partialorder %v6805, 0.0
  %vm6870 = vcmp.ge.f32.partialorder %v6806, 0.0
  %vm6871 = vcmp.ge.f32.partialorder %v6807, 0.0
  %vm6872 = vcmp.ge.f32.partialorder %v6808, 0.0
  %vm6873 = vcmp.ge.f32.partialorder %v6809, 0.0
  %vm6874 = vcmp.ge.f32.partialorder %v6810, 0.0
  %vm6875 = vcmp.ge.f32.partialorder %v6811, 0.0
  %vm6876 = vcmp.ge.f32.partialorder %v6812, 0.0
  %vm6877 = vcmp.ge.f32.partialorder %v6813, 0.0
  %vm6878 = vcmp.ge.f32.partialorder %v6814, 0.0
  %vm6879 = vcmp.ge.f32.partialorder %v6815, 0.0
  %vm6880 = vcmp.ge.f32.partialorder %v6816, 0.0
  %vm6881 = vcmp.ge.f32.partialorder %v6817, 0.0
  %vm6882 = vcmp.ge.f32.partialorder %v6818, 0.0
  %vm6883 = vcmp.ge.f32.partialorder %v6819, 0.0
  %vm6884 = vcmp.ge.f32.partialorder %v6820, 0.0
  %vm6885 = vcmp.ge.f32.partialorder %v6821, 0.0
  %vm6886 = vcmp.ge.f32.partialorder %v6822, 0.0
  %vm6887 = vcmp.ge.f32.partialorder %v6823, 0.0
  %vm6888 = vcmp.ge.f32.partialorder %v6824, 0.0
  %vm6889 = vcmp.ge.f32.partialorder %v6825, 0.0
  %vm6890 = vcmp.ge.f32.partialorder %v6826, 0.0
  %vm6891 = vcmp.ge.f32.partialorder %v6827, 0.0
  %vm6892 = vcmp.ge.f32.partialorder %v6828, 0.0
  %vm6893 = vcmp.ge.f32.partialorder %v6829, 0.0
  %vm6894 = vcmp.ge.f32.partialorder %v6830, 0.0
  %vm6895 = vcmp.ge.f32.partialorder %v6831, 0.0
  %vm6896 = vcmp.ge.f32.partialorder %v6832, 0.0
  %vm6897 = vcmp.ge.f32.partialorder %v6833, 0.0
  %vm6898 = vcmp.ge.f32.partialorder %v6834, 0.0
  %vm6899 = vcmp.ge.f32.partialorder %v6835, 0.0
  %vm6900 = vcmp.ge.f32.partialorder %v6836, 0.0
  %vm6901 = vcmp.ge.f32.partialorder %v6837, 0.0
  %vm6902 = vcmp.ge.f32.partialorder %v6838, 0.0
  %vm6903 = vcmp.ge.f32.partialorder %v6839, 0.0
  %vm6904 = vcmp.ge.f32.partialorder %v6840, 0.0
  %vm6905 = vcmp.ge.f32.partialorder %v6841, 0.0
  %vm6906 = vcmp.ge.f32.partialorder %v6842, 0.0
  %vm6907 = vcmp.ge.f32.partialorder %v6843, 0.0
  %vm6908 = vcmp.ge.f32.partialorder %v6844, 0.0
  %vm6909 = vcmp.ge.f32.partialorder %v6845, 0.0
  %vm6910 = vcmp.ge.f32.partialorder %v6846, 0.0
  %vm6911 = vcmp.ge.f32.partialorder %v6847, 0.0
  %vm6912 = vcmp.ge.f32.partialorder %v6848, 0.0
  %vm6913 = vcmp.ge.f32.partialorder %v6849, 0.0
  %vm6914 = vcmp.ge.f32.partialorder %v6850, 0.0
  %vm6915 = vcmp.ge.f32.partialorder %v6851, 0.0
  %vm6916 = vcmp.ge.f32.partialorder %v6852, 0.0
  %vm6917 = vcmp.ge.f32.partialorder %v6853, 0.0
  %vm6918 = vcmp.ge.f32.partialorder %v6854, 0.0
  %v6919 = vmul.f32 %v6791, 0.01
  %v6920 = vmul.f32 %v6792, 0.01
  %v6921 = vmul.f32 %v6793, 0.01
  %v6922 = vmul.f32 %v6794, 0.01
  %v6923 = vmul.f32 %v6795, 0.01
  %v6924 = vmul.f32 %v6796, 0.01
  %v6925 = vmul.f32 %v6797, 0.01
  %v6926 = vmul.f32 %v6798, 0.01
  %v6927 = vmul.f32 %v6799, 0.01
  %v6928 = vmul.f32 %v6800, 0.01
  %v6929 = vmul.f32 %v6801, 0.01
  %v6930 = vmul.f32 %v6802, 0.01
  %v6931 = vmul.f32 %v6803, 0.01
  %v6932 = vmul.f32 %v6804, 0.01
  %v6933 = vmul.f32 %v6805, 0.01
  %v6934 = vmul.f32 %v6806, 0.01
  %v6935 = vmul.f32 %v6807, 0.01
  %v6936 = vmul.f32 %v6808, 0.01
  %v6937 = vmul.f32 %v6809, 0.01
  %v6938 = vmul.f32 %v6810, 0.01
  %v6939 = vmul.f32 %v6811, 0.01
  %v6940 = vmul.f32 %v6812, 0.01
  %v6941 = vmul.f32 %v6813, 0.01
  %v6942 = vmul.f32 %v6814, 0.01
  %v6943 = vmul.f32 %v6815, 0.01
  %v6944 = vmul.f32 %v6816, 0.01
  %v6945 = vmul.f32 %v6817, 0.01
  %v6946 = vmul.f32 %v6818, 0.01
  %v6947 = vmul.f32 %v6819, 0.01
  %v6948 = vmul.f32 %v6820, 0.01
  %v6949 = vmul.f32 %v6821, 0.01
  %v6950 = vmul.f32 %v6822, 0.01
  %v6951 = vmul.f32 %v6823, 0.01
  %v6952 = vmul.f32 %v6824, 0.01
  %v6953 = vmul.f32 %v6825, 0.01
  %v6954 = vmul.f32 %v6826, 0.01
  %v6955 = vmul.f32 %v6827, 0.01
  %v6956 = vmul.f32 %v6828, 0.01
  %v6957 = vmul.f32 %v6829, 0.01
  %v6958 = vmul.f32 %v6830, 0.01
  %v6959 = vmul.f32 %v6831, 0.01
  %v6960 = vmul.f32 %v6832, 0.01
  %v6961 = vmul.f32 %v6833, 0.01
  %v6962 = vmul.f32 %v6834, 0.01
  %v6963 = vmul.f32 %v6835, 0.01
  %v6964 = vmul.f32 %v6836, 0.01
  %v6965 = vmul.f32 %v6837, 0.01
  %v6966 = vmul.f32 %v6838, 0.01
  %v6967 = vmul.f32 %v6839, 0.01
  %v6968 = vmul.f32 %v6840, 0.01
  %v6969 = vmul.f32 %v6841, 0.01
  %v6970 = vmul.f32 %v6842, 0.01
  %v6971 = vmul.f32 %v6843, 0.01
  %v6972 = vmul.f32 %v6844, 0.01
  %v6973 = vmul.f32 %v6845, 0.01
  %v6974 = vmul.f32 %v6846, 0.01
  %v6975 = vmul.f32 %v6847, 0.01
  %v6976 = vmul.f32 %v6848, 0.01
  %v6977 = vmul.f32 %v6849, 0.01
  %v6978 = vmul.f32 %v6850, 0.01
  %v6979 = vmul.f32 %v6851, 0.01
  %v6980 = vmul.f32 %v6852, 0.01
  %v6981 = vmul.f32 %v6853, 0.01
  %v6982 = vmul.f32 %v6854, 0.01
  %v6983 = vsel %vm6855, %v6791, %v6919
  %v6984 = vsel %vm6856, %v6792, %v6920
  %v6985 = vsel %vm6857, %v6793, %v6921
  %v6986 = vsel %vm6858, %v6794, %v6922
  %v6987 = vsel %vm6859, %v6795, %v6923
  %v6988 = vsel %vm6860, %v6796, %v6924
  %v6989 = vsel %vm6861, %v6797, %v6925
  %v6990 = vsel %vm6862, %v6798, %v6926
  %v6991 = vsel %vm6863, %v6799, %v6927
  %v6992 = vsel %vm6864, %v6800, %v6928
  %v6993 = vsel %vm6865, %v6801, %v6929
  %v6994 = vsel %vm6866, %v6802, %v6930
  %v6995 = vsel %vm6867, %v6803, %v6931
  %v6996 = vsel %vm6868, %v6804, %v6932
  %v6997 = vsel %vm6869, %v6805, %v6933
  %v6998 = vsel %vm6870, %v6806, %v6934
  %v6999 = vsel %vm6871, %v6807, %v6935
  %v7000 = vsel %vm6872, %v6808, %v6936
  %v7001 = vsel %vm6873, %v6809, %v6937
  %v7002 = vsel %vm6874, %v6810, %v6938
  %v7003 = vsel %vm6875, %v6811, %v6939
  %v7004 = vsel %vm6876, %v6812, %v6940
  %v7005 = vsel %vm6877, %v6813, %v6941
  %v7006 = vsel %vm6878, %v6814, %v6942
  %v7007 = vsel %vm6879, %v6815, %v6943
  %v7008 = vsel %vm6880, %v6816, %v6944
  %v7009 = vsel %vm6881, %v6817, %v6945
  %v7010 = vsel %vm6882, %v6818, %v6946
  %v7011 = vsel %vm6883, %v6819, %v6947
  %v7012 = vsel %vm6884, %v6820, %v6948
  %v7013 = vsel %vm6885, %v6821, %v6949
  %v7014 = vsel %vm6886, %v6822, %v6950
  %v7015 = vsel %vm6887, %v6823, %v6951
  %v7016 = vsel %vm6888, %v6824, %v6952
  %v7017 = vsel %vm6889, %v6825, %v6953
  %v7018 = vsel %vm6890, %v6826, %v6954
  %v7019 = vsel %vm6891, %v6827, %v6955
  %v7020 = vsel %vm6892, %v6828, %v6956
  %v7021 = vsel %vm6893, %v6829, %v6957
  %v7022 = vsel %vm6894, %v6830, %v6958
  %v7023 = vsel %vm6895, %v6831, %v6959
  %v7024 = vsel %vm6896, %v6832, %v6960
  %v7025 = vsel %vm6897, %v6833, %v6961
  %v7026 = vsel %vm6898, %v6834, %v6962
  %v7027 = vsel %vm6899, %v6835, %v6963
  %v7028 = vsel %vm6900, %v6836, %v6964
  %v7029 = vsel %vm6901, %v6837, %v6965
  %v7030 = vsel %vm6902, %v6838, %v6966
  %v7031 = vsel %vm6903, %v6839, %v6967
  %v7032 = vsel %vm6904, %v6840, %v6968
  %v7033 = vsel %vm6905, %v6841, %v6969
  %v7034 = vsel %vm6906, %v6842, %v6970
  %v7035 = vsel %vm6907, %v6843, %v6971
  %v7036 = vsel %vm6908, %v6844, %v6972
  %v7037 = vsel %vm6909, %v6845, %v6973
  %v7038 = vsel %vm6910, %v6846, %v6974
  %v7039 = vsel %vm6911, %v6847, %v6975
  %v7040 = vsel %vm6912, %v6848, %v6976
  %v7041 = vsel %vm6913, %v6849, %v6977
  %v7042 = vsel %vm6914, %v6850, %v6978
  %v7043 = vsel %vm6915, %v6851, %v6979
  %v7044 = vsel %vm6916, %v6852, %v6980
  %v7045 = vsel %vm6917, %v6853, %v6981
  %v7046 = vsel %vm6918, %v6854, %v6982
  %7047 = vst.msk [vmem:[%s7] sm:$0xff] %vm27, %v6983
  %7048 = vst.msk [vmem:[%s7 + $0x8] sm:$0xff] %vm27, %v6984
  %7049 = vst.msk [vmem:[%s7 + $0x10] sm:$0xff] %vm27, %v6985
  %7050 = vst.msk [vmem:[%s7 + $0x18] sm:$0xff] %vm27, %v6986
  %7051 = vst.msk [vmem:[%s7 + $0x20] sm:$0xff] %vm27, %v6987
  %7052 = vst.msk [vmem:[%s7 + $0x28] sm:$0xff] %vm27, %v6988
  %7053 = vst.msk [vmem:[%s7 + $0x30] sm:$0xff] %vm27, %v6989
  %7054 = vst.msk [vmem:[%s7 + $0x38] sm:$0xff] %vm27, %v6990
  %7055 = vst.msk [vmem:[%s7 + $0x40] sm:$0xff] %vm27, %v6991
  %7056 = vst.msk [vmem:[%s7 + $0x48] sm:$0xff] %vm27, %v6992
  %7057 = vst.msk [vmem:[%s7 + $0x50] sm:$0xff] %vm27, %v6993
  %7058 = vst.msk [vmem:[%s7 + $0x58] sm:$0xff] %vm27, %v6994
  %7059 = vst.msk [vmem:[%s7 + $0x60] sm:$0xff] %vm27, %v6995
  %7060 = vst.msk [vmem:[%s7 + $0x68] sm:$0xff] %vm27, %v6996
  %7061 = vst.msk [vmem:[%s7 + $0x70] sm:$0xff] %vm27, %v6997
  %7062 = vst.msk [vmem:[%s7 + $0x78] sm:$0xff] %vm27, %v6998
  %7063 = vst.msk [vmem:[%s7 + $0x80] sm:$0xff] %vm27, %v6999
  %7064 = vst.msk [vmem:[%s7 + $0x88] sm:$0xff] %vm27, %v7000
  %7065 = vst.msk [vmem:[%s7 + $0x90] sm:$0xff] %vm27, %v7001
  %7066 = vst.msk [vmem:[%s7 + $0x98] sm:$0xff] %vm27, %v7002
  %7067 = vst.msk [vmem:[%s7 + $0xa0] sm:$0xff] %vm27, %v7003
  %7068 = vst.msk [vmem:[%s7 + $0xa8] sm:$0xff] %vm27, %v7004
  %7069 = vst.msk [vmem:[%s7 + $0xb0] sm:$0xff] %vm27, %v7005
  %7070 = vst.msk [vmem:[%s7 + $0xb8] sm:$0xff] %vm27, %v7006
  %7071 = vst.msk [vmem:[%s7 + $0xc0] sm:$0xff] %vm27, %v7007
  %7072 = vst.msk [vmem:[%s7 + $0xc8] sm:$0xff] %vm27, %v7008
  %7073 = vst.msk [vmem:[%s7 + $0xd0] sm:$0xff] %vm27, %v7009
  %7074 = vst.msk [vmem:[%s7 + $0xd8] sm:$0xff] %vm27, %v7010
  %7075 = vst.msk [vmem:[%s7 + $0xe0] sm:$0xff] %vm27, %v7011
  %7076 = vst.msk [vmem:[%s7 + $0xe8] sm:$0xff] %vm27, %v7012
  %7077 = vst.msk [vmem:[%s7 + $0xf0] sm:$0xff] %vm27, %v7013
  %7078 = vst.msk [vmem:[%s7 + $0xf8] sm:$0xff] %vm27, %v7014
  %7079 = vst.msk [vmem:[%s7 + $0x100] sm:$0xff] %vm27, %v7015
  %7080 = vst.msk [vmem:[%s7 + $0x108] sm:$0xff] %vm27, %v7016
  %7081 = vst.msk [vmem:[%s7 + $0x110] sm:$0xff] %vm27, %v7017
  %7082 = vst.msk [vmem:[%s7 + $0x118] sm:$0xff] %vm27, %v7018
  %7083 = vst.msk [vmem:[%s7 + $0x120] sm:$0xff] %vm27, %v7019
  %7084 = vst.msk [vmem:[%s7 + $0x128] sm:$0xff] %vm27, %v7020
  %7085 = vst.msk [vmem:[%s7 + $0x130] sm:$0xff] %vm27, %v7021
  %7086 = vst.msk [vmem:[%s7 + $0x138] sm:$0xff] %vm27, %v7022
  %7087 = vst.msk [vmem:[%s7 + $0x140] sm:$0xff] %vm27, %v7023
  %7088 = vst.msk [vmem:[%s7 + $0x148] sm:$0xff] %vm27, %v7024
  %7089 = vst.msk [vmem:[%s7 + $0x150] sm:$0xff] %vm27, %v7025
  %7090 = vst.msk [vmem:[%s7 + $0x158] sm:$0xff] %vm27, %v7026
  %7091 = vst.msk [vmem:[%s7 + $0x160] sm:$0xff] %vm27, %v7027
  %7092 = vst.msk [vmem:[%s7 + $0x168] sm:$0xff] %vm27, %v7028
  %7093 = vst.msk [vmem:[%s7 + $0x170] sm:$0xff] %vm27, %v7029
  %7094 = vst.msk [vmem:[%s7 + $0x178] sm:$0xff] %vm27, %v7030
  %7095 = vst.msk [vmem:[%s7 + $0x180] sm:$0xff] %vm27, %v7031
  %7096 = vst.msk [vmem:[%s7 + $0x188] sm:$0xff] %vm27, %v7032
  %7097 = vst.msk [vmem:[%s7 + $0x190] sm:$0xff] %vm27, %v7033
  %7098 = vst.msk [vmem:[%s7 + $0x198] sm:$0xff] %vm27, %v7034
  %7099 = vst.msk [vmem:[%s7 + $0x1a0] sm:$0xff] %vm27, %v7035
  %7100 = vst.msk [vmem:[%s7 + $0x1a8] sm:$0xff] %vm27, %v7036
  %7101 = vst.msk [vmem:[%s7 + $0x1b0] sm:$0xff] %vm27, %v7037
  %7102 = vst.msk [vmem:[%s7 + $0x1b8] sm:$0xff] %vm27, %v7038
  %7103 = vst.msk [vmem:[%s7 + $0x1c0] sm:$0xff] %vm27, %v7039
  %7104 = vst.msk [vmem:[%s7 + $0x1c8] sm:$0xff] %vm27, %v7040
  %7105 = vst.msk [vmem:[%s7 + $0x1d0] sm:$0xff] %vm27, %v7041
  %7106 = vst.msk [vmem:[%s7 + $0x1d8] sm:$0xff] %vm27, %v7042
  %7107 = vst.msk [vmem:[%s7 + $0x1e0] sm:$0xff] %vm27, %v7043
  %7108 = vst.msk [vmem:[%s7 + $0x1e8] sm:$0xff] %vm27, %v7044
  %7109 = vst.msk [vmem:[%s7 + $0x1f0] sm:$0xff] %vm27, %v7045
  %7110 = vst.msk [vmem:[%s7 + $0x1f8] sm:$0xff] %vm27, %v7046
  // Predicated region
  $region30: #{tpu_custom_call.1} parent=0 // pred_check
    _
  $region31: #{tpu_custom_call.1} parent=0 // pred_check_branch
    %7112 = sbr.rel (0) target = $region33
  $region32: #{tpu_custom_call.1} parent=0 // pred_region
    _
  $region33: #{tpu_custom_call.1} parent=0 // pred_fallthru
    _
  // Predicated region
  $region34: #{tpu_custom_call.1} parent=0 // pred_check
    _
  $region35: #{tpu_custom_call.1} parent=0 // pred_check_branch
    %7114 = sbr.rel (0) target = $region37
  $region36: #{tpu_custom_call.1} parent=0 // pred_region
    _
  $region37: #{tpu_custom_call.1} parent=0 // pred_fallthru
    _

</llo_original>
